<compile_context>
chip_gen: v7x
topology: tpu7x:2x2x1
jax: 0.10.0
libtpu: 0.0.40
codegen_flags: <defaults>
</compile_context>

<pallas_src>
import functools

import jax
import jax.numpy as jnp
from jax.experimental import pallas as pl
from jax.experimental.pallas import tpu as pltpu


def _round_up(n, m):
    return ((n + m - 1) // m) * m


# ----------------------------- fused UHDB kernel -----------------------------

def uhdb_kernel(*refs, W, n_feats, ch_pad, lpad, group_in_units):
    """One batch element of the whole UHDB (6 dense blocks + residuals).

    refs = [x, <24 packed weights>, out, zp_scratch, patches_scratch]
      x / out           : (1, n_feats, H*W) f32
      unit weights      : (ch_pad, 9*cin_pad) bf16 (im2col-flattened 3x3)
      gate weights      : (n_feats, cin_gate_pad) bf16
      gate bias         : (n_feats, 1) f32
      zp_scratch        : (cin_gate_max, lpad + H*W + lpad) f32  (zero halo)
      patches_scratch   : (9 * cin_unit_max, H*W) f32            (im2col buf)
    """
    n_w = sum(n + 2 for n in group_in_units)
    x_ref = refs[0]
    w_refs = refs[1:1 + n_w]
    o_ref = refs[1 + n_w]
    zp_ref = refs[2 + n_w]
    patches_ref = refs[3 + n_w]

    HW = x_ref.shape[2]

    # Column-within-row coordinate: masks the horizontal (dx) taps that would
    # otherwise wrap across row boundaries in the flattened H*W layout.
    w_idx = jax.lax.broadcasted_iota(jnp.int32, (1, HW), 1) % W
    ok_left = w_idx >= 1           # dx = -1 valid on these lanes
    ok_right = w_idx < (W - 1)     # dx = +1 valid on these lanes

    # Zero the halo buffer once; only the centre columns are ever rewritten so
    # the left/right halo columns stay zero for every conv in every block.
    zp_ref[...] = jnp.zeros_like(zp_ref)

    def conv3x3_relu(cin_pad, w_flat):
        # im2col: 9 shifted copies of the (cin_pad, HW) slab stacked on the
        # sublane axis -> a single MXU pass with K = 9 * cin_pad.
        t = 0
        for dy in (-1, 0, 1):
            for dx in (-1, 0, 1):
                s = dy * W + dx
                tap = zp_ref[0:cin_pad, lpad + s:lpad + s + HW]
                if dx == -1:
                    tap = jnp.where(ok_left, tap, 0.0)
                elif dx == 1:
                    tap = jnp.where(ok_right, tap, 0.0)
                patches_ref[t * cin_pad:(t + 1) * cin_pad, :] = tap
                t += 1
        patches = patches_ref[0:9 * cin_pad, :].astype(jnp.bfloat16)
        acc = jnp.dot(w_flat, patches, preferred_element_type=jnp.float32)
        return jnp.maximum(acc, 0.0)               # (ch_pad, HW) f32

    def dense_block(z_in, unit_ws, gate_w, gate_b):
        # Stage the block input in the zero-haloed concat buffer.
        zp_ref[0:n_feats, lpad:lpad + HW] = z_in
        for u, w_flat in enumerate(unit_ws):
            cin_pad = w_flat.shape[1] // 9
            out = conv3x3_relu(cin_pad, w_flat)    # padded out rows are exact 0
            r0 = n_feats + u * ch_pad
            zp_ref[r0:r0 + ch_pad, lpad:lpad + HW] = out
        cin_gate = gate_w.shape[1]
        z = zp_ref[0:cin_gate, lpad:lpad + HW].astype(jnp.bfloat16)
        y = jnp.dot(gate_w, z, preferred_element_type=jnp.float32)
        return y + gate_b                          # (n_feats, HW) f32

    # Unpack per-block weights (bf16 matmul operands, f32 gate bias).
    blocks = []
    idx = 0
    for n_units_db in group_in_units:
        unit_ws = [w_refs[idx + u][...] for u in range(n_units_db)]
        gate_w = w_refs[idx + n_units_db][...]
        gate_b = w_refs[idx + n_units_db + 1][...]
        idx += n_units_db + 2
        blocks.append((unit_ws, gate_w, gate_b))

    x = x_ref[0]                                   # (n_feats, HW) f32
    x1 = dense_block(x, *blocks[0])
    x2 = dense_block(x1, *blocks[1])
    x3 = dense_block(x2, *blocks[2])
    x4 = dense_block(x3, *blocks[3]) + x2
    x5 = dense_block(x4, *blocks[4]) + x1
    o_ref[0] = dense_block(x5, *blocks[5]) + x


# ----------------------------- wrapper -----------------------------

def uhdb_forward(x_nchw, packed_params, *, growth_rate, group_in_units):
    """x_nchw: (B, n_feats, H, W) f32 -> (B, n_feats, H, W) f32."""
    B, C, H, W = x_nchw.shape
    assert C % 8 == 0, "n_feats must be a multiple of 8 (sublane alignment)"
    HW = H * W
    ch_pad = _round_up(growth_rate, 8)
    lpad = _round_up(W + 1, 128)                   # halo width, lane-aligned

    flat_ws = []
    for p in packed_params:
        flat_ws.extend(p["unit_weights"])
        flat_ws.append(p["gate_w"])
        flat_ws.append(p["gate_b"])

    cin_unit_max = C + (max(group_in_units) - 1) * ch_pad
    cin_gate_max = C + max(group_in_units) * ch_pad

    # Flattened-NCHW layout: channels on sublanes, H*W on lanes (lane-dense).
    x = x_nchw.reshape(B, C, HW).astype(jnp.float32)

    const_spec = lambda shape: pl.BlockSpec(shape, lambda b: (0, 0))
    in_specs = [pl.BlockSpec((1, C, HW), lambda b: (b, 0, 0))]
    in_specs += [const_spec(w.shape) for w in flat_ws]

    kernel = functools.partial(
        uhdb_kernel, W=W, n_feats=C, ch_pad=ch_pad, lpad=lpad,
        group_in_units=tuple(group_in_units))

    y = pl.pallas_call(
        kernel,
        out_shape=jax.ShapeDtypeStruct((B, C, HW), jnp.float32),
        grid=(B,),
        in_specs=in_specs,
        out_specs=pl.BlockSpec((1, C, HW), lambda b: (b, 0, 0)),
        scratch_shapes=[
            pltpu.VMEM((cin_gate_max, 2 * lpad + HW), jnp.float32),  # halo/concat
            pltpu.VMEM((9 * cin_unit_max, HW), jnp.float32),         # im2col
        ],
        compiler_params=pltpu.CompilerParams(
            dimension_semantics=("parallel",)),
    )(x, *flat_ws)
    return y.reshape(B, C, H, W)


# ----------------------------- parameters -----------------------------

def init_uhdb_params(key, n_feats, growth_rate, group_in_units):
    """'True' (unpadded) parameters.

    Conversion from PyTorch:
      3x3 conv weight : here (growth, 3, 3, cin) = torch_OIHW.transpose(0, 2, 3, 1)
      1x1 gate weight : here (n_feats, cin_gate) = torch_w[:, :, 0, 0]
      gate bias       : (n_feats,)
    """
    params = []
    for n_units_db in group_in_units:
        unit_weights = []
        for u in range(n_units_db):
            cin = n_feats + u * growth_rate
            key, k = jax.random.split(key)
            unit_weights.append(
                jax.random.normal(k, (growth_rate, 3, 3, cin), jnp.float32) * 0.05)
        cin_gate = n_feats + n_units_db * growth_rate
        key, kw, kb = jax.random.split(key, 3)
        params.append({
            "unit_weights": unit_weights,
            "gate_w": jax.random.normal(kw, (n_feats, cin_gate), jnp.float32) * 0.05,
            "gate_b": jax.random.normal(kb, (n_feats,), jnp.float32) * 0.01,
        })
    return params


def pack_uhdb_params(params, n_feats, growth_rate):
    """Pack to the padded, kernel-friendly layout:
       * each growth chunk of the dense-concat channel axis is zero-padded to
         ch_pad (multiple of 8 sublanes); conv out-channels padded with zero
         rows so padded activations are exactly 0,
       * 3x3 weights flattened to (ch_pad, 9*cin_pad) im2col matrices,
       * matmul operands stored as bf16 (f32 accumulation in-kernel)."""
    ch_pad = _round_up(growth_rate, 8)

    def pad_in_channels(w, n_prev_units):
        # trailing channel axis: [x(n_feats) | u0(growth) | u1(growth) | ...]
        #                     -> [x(n_feats) | u0(ch_pad) | u1(ch_pad) | ...]
        pieces = [w[..., :n_feats]]
        for k in range(n_prev_units):
            lo = n_feats + k * growth_rate
            chunk = w[..., lo:lo + growth_rate]
            zpad = jnp.zeros(chunk.shape[:-1] + (ch_pad - growth_rate,), w.dtype)
            pieces.append(jnp.concatenate([chunk, zpad], axis=-1))
        return jnp.concatenate(pieces, axis=-1)

    packed = []
    for p in params:
        n_units_db = len(p["unit_weights"])
        unit_ws = []
        for u, w in enumerate(p["unit_weights"]):      # (growth, 3, 3, cin)
            w = pad_in_channels(w, u)                  # (growth, 3, 3, cin_pad)
            w = jnp.concatenate(
                [w, jnp.zeros((ch_pad - growth_rate,) + w.shape[1:], w.dtype)],
                axis=0)                                # (ch_pad, 3, 3, cin_pad)
            cin_pad = w.shape[-1]
            unit_ws.append(w.reshape(ch_pad, 9 * cin_pad).astype(jnp.bfloat16))
        gate_w = pad_in_channels(p["gate_w"], n_units_db).astype(jnp.bfloat16)
        gate_b = p["gate_b"].reshape(-1, 1).astype(jnp.float32)
        packed.append({"unit_weights": unit_ws, "gate_w": gate_w, "gate_b": gate_b})
    return packed


# ----------------------------- pure-JAX reference -----------------------------

def uhdb_reference(x_nchw, params):
    """Matches the PyTorch forward; bf16 matmul operands + f32 accumulation,
    like the kernel."""
    def conv(x, w_oihw, pad):
        return jax.lax.conv_general_dilated(
            x.astype(jnp.bfloat16), w_oihw.astype(jnp.bfloat16),
            window_strides=(1, 1), padding=((pad, pad), (pad, pad)),
            dimension_numbers=("NCHW", "OIHW", "NCHW"),
            preferred_element_type=jnp.float32)

    def block(x, p):
        z = x
        for w in p["unit_weights"]:                    # (growth, 3, 3, cin)
            w_oihw = jnp.transpose(w, (0, 3, 1, 2))
            z = jnp.concatenate(
                [z, jnp.maximum(conv(z, w_oihw, 1), 0.0)], axis=1)
        gw = p["gate_w"][:, :, None, None]             # (n_feats, cin_gate, 1, 1)
        return conv(z, gw, 0) + p["gate_b"].reshape(1, -1, 1, 1)

    x = x_nchw.astype(jnp.float32)
    x1 = block(x, params[0])
    x2 = block(x1, params[1])
    x3 = block(x2, params[2])
    x4 = block(x3, params[3]) + x2
    x5 = block(x4, params[4]) + x1
    return block(x5, params[5]) + x


if __name__ == "__main__":
    # Config consistent with the module: n_feats=8, n_units=6 (UHDB.forward
    # uses body[0..5]), group_in_units=[2]*6, growth_rate=4, act=ReLU,
    # use_CoMo=False.
    B, n_feats, Hs, Ws = 2, 8, 16, 16
    growth_rate = 4
    group_in_units = (2, 2, 2, 2, 2, 2)

    key = jax.random.PRNGKey(0)
    key, kx = jax.random.split(key)
    x = jax.random.normal(kx, (B, n_feats, Hs, Ws), jnp.float32)   # NCHW input

    params = init_uhdb_params(key, n_feats, growth_rate, group_in_units)
    packed = pack_uhdb_params(params, n_feats, growth_rate)

    fwd = jax.jit(functools.partial(
        uhdb_forward, growth_rate=growth_rate, group_in_units=group_in_units))
    y = jax.block_until_ready(fwd(x, packed))

    assert y.shape == (B, n_feats, Hs, Ws), y.shape
    assert bool(jnp.all(jnp.isfinite(y)))

    y_ref = uhdb_reference(x, params)
    max_err = float(jnp.max(jnp.abs(y - y_ref)))
    assert bool(jnp.allclose(y, y_ref, rtol=5e-2, atol=5e-2)), max_err

    print("KERNEL_OK")
</pallas_src>

<mosaic_0001>
module attributes {stable_mosaic.version = 11 : i64} {
  func.func @uhdb_kernel(%arg0: i32, %arg1: memref<1x8x256xf32, #tpu.memory_space<vmem>>, %arg2: memref<8x72xbf16, #tpu.memory_space<vmem>>, %arg3: memref<8x144xbf16, #tpu.memory_space<vmem>>, %arg4: memref<8x24xbf16, #tpu.memory_space<vmem>>, %arg5: memref<8x1xf32, #tpu.memory_space<vmem>>, %arg6: memref<8x72xbf16, #tpu.memory_space<vmem>>, %arg7: memref<8x144xbf16, #tpu.memory_space<vmem>>, %arg8: memref<8x24xbf16, #tpu.memory_space<vmem>>, %arg9: memref<8x1xf32, #tpu.memory_space<vmem>>, %arg10: memref<8x72xbf16, #tpu.memory_space<vmem>>, %arg11: memref<8x144xbf16, #tpu.memory_space<vmem>>, %arg12: memref<8x24xbf16, #tpu.memory_space<vmem>>, %arg13: memref<8x1xf32, #tpu.memory_space<vmem>>, %arg14: memref<8x72xbf16, #tpu.memory_space<vmem>>, %arg15: memref<8x144xbf16, #tpu.memory_space<vmem>>, %arg16: memref<8x24xbf16, #tpu.memory_space<vmem>>, %arg17: memref<8x1xf32, #tpu.memory_space<vmem>>, %arg18: memref<8x72xbf16, #tpu.memory_space<vmem>>, %arg19: memref<8x144xbf16, #tpu.memory_space<vmem>>, %arg20: memref<8x24xbf16, #tpu.memory_space<vmem>>, %arg21: memref<8x1xf32, #tpu.memory_space<vmem>>, %arg22: memref<8x72xbf16, #tpu.memory_space<vmem>>, %arg23: memref<8x144xbf16, #tpu.memory_space<vmem>>, %arg24: memref<8x24xbf16, #tpu.memory_space<vmem>>, %arg25: memref<8x1xf32, #tpu.memory_space<vmem>>, %arg26: memref<1x8x256xf32, #tpu.memory_space<vmem>>, %arg27: memref<24x512xf32, #tpu.memory_space<vmem>>, %arg28: memref<144x256xf32, #tpu.memory_space<vmem>>) attributes {dimension_semantics = [#tpu.dimension_semantics<parallel>], iteration_bounds = array<i64: 2>, scalar_prefetch = 0 : i64, scratch_operands = 2 : i64, tpu.core_type = #tpu.core_type<tc>, window_params = [{transform_indices = @transform_0, window_bounds = array<i64: 1, 8, 256>}, {pipeline_mode = #tpu.pipeline_mode<synchronous>, transform_indices = @transform_1, window_bounds = array<i64: 8, 72>}, {pipeline_mode = #tpu.pipeline_mode<synchronous>, transform_indices = @transform_2, window_bounds = array<i64: 8, 144>}, {pipeline_mode = #tpu.pipeline_mode<synchronous>, transform_indices = @transform_3, window_bounds = array<i64: 8, 24>}, {pipeline_mode = #tpu.pipeline_mode<synchronous>, transform_indices = @transform_4, window_bounds = array<i64: 8, 1>}, {pipeline_mode = #tpu.pipeline_mode<synchronous>, transform_indices = @transform_5, window_bounds = array<i64: 8, 72>}, {pipeline_mode = #tpu.pipeline_mode<synchronous>, transform_indices = @transform_6, window_bounds = array<i64: 8, 144>}, {pipeline_mode = #tpu.pipeline_mode<synchronous>, transform_indices = @transform_7, window_bounds = array<i64: 8, 24>}, {pipeline_mode = #tpu.pipeline_mode<synchronous>, transform_indices = @transform_8, window_bounds = array<i64: 8, 1>}, {pipeline_mode = #tpu.pipeline_mode<synchronous>, transform_indices = @transform_9, window_bounds = array<i64: 8, 72>}, {pipeline_mode = #tpu.pipeline_mode<synchronous>, transform_indices = @transform_10, window_bounds = array<i64: 8, 144>}, {pipeline_mode = #tpu.pipeline_mode<synchronous>, transform_indices = @transform_11, window_bounds = array<i64: 8, 24>}, {pipeline_mode = #tpu.pipeline_mode<synchronous>, transform_indices = @transform_12, window_bounds = array<i64: 8, 1>}, {pipeline_mode = #tpu.pipeline_mode<synchronous>, transform_indices = @transform_13, window_bounds = array<i64: 8, 72>}, {pipeline_mode = #tpu.pipeline_mode<synchronous>, transform_indices = @transform_14, window_bounds = array<i64: 8, 144>}, {pipeline_mode = #tpu.pipeline_mode<synchronous>, transform_indices = @transform_15, window_bounds = array<i64: 8, 24>}, {pipeline_mode = #tpu.pipeline_mode<synchronous>, transform_indices = @transform_16, window_bounds = array<i64: 8, 1>}, {pipeline_mode = #tpu.pipeline_mode<synchronous>, transform_indices = @transform_17, window_bounds = array<i64: 8, 72>}, {pipeline_mode = #tpu.pipeline_mode<synchronous>, transform_indices = @transform_18, window_bounds = array<i64: 8, 144>}, {pipeline_mode = #tpu.pipeline_mode<synchronous>, transform_indices = @transform_19, window_bounds = array<i64: 8, 24>}, {pipeline_mode = #tpu.pipeline_mode<synchronous>, transform_indices = @transform_20, window_bounds = array<i64: 8, 1>}, {pipeline_mode = #tpu.pipeline_mode<synchronous>, transform_indices = @transform_21, window_bounds = array<i64: 8, 72>}, {pipeline_mode = #tpu.pipeline_mode<synchronous>, transform_indices = @transform_22, window_bounds = array<i64: 8, 144>}, {pipeline_mode = #tpu.pipeline_mode<synchronous>, transform_indices = @transform_23, window_bounds = array<i64: 8, 24>}, {pipeline_mode = #tpu.pipeline_mode<synchronous>, transform_indices = @transform_24, window_bounds = array<i64: 8, 1>}, {transform_indices = @transform_25, window_bounds = array<i64: 1, 8, 256>}]} {
    %0 = tpu.iota {dimensions = array<i32: 1>} : vector<1x256xi32>
    %c16_i32 = arith.constant 16 : i32
    %c0_i32 = arith.constant 0 : i32
    %1 = arith.cmpi eq, %c16_i32, %c0_i32 : i32
    %c1_i32 = arith.constant 1 : i32
    %2 = arith.select %1, %c1_i32, %c16_i32 : i32
    %3 = vector.broadcast %2 : i32 to vector<1x256xi32>
    %4 = arith.remsi %0, %3 : vector<1x256xi32>
    %c0_i32_0 = arith.constant 0 : i32
    %5 = vector.broadcast %c0_i32_0 : i32 to vector<1x256xi32>
    %6 = arith.cmpi ne, %4, %5 : vector<1x256xi32>
    %c0_i32_1 = arith.constant 0 : i32
    %7 = vector.broadcast %c0_i32_1 : i32 to vector<1x256xi32>
    %8 = arith.cmpi slt, %4, %7 : vector<1x256xi32>
    %c0_i32_2 = arith.constant 0 : i32
    %9 = arith.cmpi slt, %2, %c0_i32_2 : i32
    %10 = vector.broadcast %9 : i1 to vector<1x256xi1>
    %11 = vector.broadcast %10 : vector<1x256xi1> to vector<1x256xi1>
    %12 = arith.xori %8, %11 : vector<1x256xi1>
    %13 = arith.andi %12, %6 : vector<1x256xi1>
    %14 = vector.broadcast %2 : i32 to vector<1x256xi32>
    %15 = arith.addi %4, %14 : vector<1x256xi32>
    %16 = arith.select %13, %15, %4 : vector<1x256xi1>, vector<1x256xi32>
    %c1_i32_3 = arith.constant 1 : i32
    %17 = vector.broadcast %c1_i32_3 : i32 to vector<1x256xi32>
    %18 = arith.cmpi sge, %16, %17 : vector<1x256xi32>
    %c15_i32 = arith.constant 15 : i32
    %19 = vector.broadcast %c15_i32 : i32 to vector<1x256xi32>
    %20 = arith.cmpi slt, %16, %19 : vector<1x256xi32>
    %cst = arith.constant 0.000000e+00 : f32
    %21 = vector.broadcast %cst : f32 to vector<24x512xf32>
    %c0 = arith.constant 0 : index
    %c0_4 = arith.constant 0 : index
    %22 = vector.load %arg27[%c0, %c0_4] : memref<24x512xf32, #tpu.memory_space<vmem>>, vector<24x512xf32>
    tpu.vector_store %arg27[%c0, %c0_4], %21 {strides = array<i32>} : memref<24x512xf32, #tpu.memory_space<vmem>>, vector<24x512xf32>,
    %c0_5 = arith.constant 0 : index
    %c0_6 = arith.constant 0 : index
    %23 = vector.load %arg2[%c0_5, %c0_6] : memref<8x72xbf16, #tpu.memory_space<vmem>>, vector<8x72xbf16>
    %c0_7 = arith.constant 0 : index
    %c0_8 = arith.constant 0 : index
    %24 = vector.load %arg3[%c0_7, %c0_8] : memref<8x144xbf16, #tpu.memory_space<vmem>>, vector<8x144xbf16>
    %c0_9 = arith.constant 0 : index
    %c0_10 = arith.constant 0 : index
    %25 = vector.load %arg4[%c0_9, %c0_10] : memref<8x24xbf16, #tpu.memory_space<vmem>>, vector<8x24xbf16>
    %c0_11 = arith.constant 0 : index
    %c0_12 = arith.constant 0 : index
    %26 = vector.load %arg5[%c0_11, %c0_12] : memref<8x1xf32, #tpu.memory_space<vmem>>, vector<8x1xf32>
    %c0_13 = arith.constant 0 : index
    %c0_14 = arith.constant 0 : index
    %27 = vector.load %arg6[%c0_13, %c0_14] : memref<8x72xbf16, #tpu.memory_space<vmem>>, vector<8x72xbf16>
    %c0_15 = arith.constant 0 : index
    %c0_16 = arith.constant 0 : index
    %28 = vector.load %arg7[%c0_15, %c0_16] : memref<8x144xbf16, #tpu.memory_space<vmem>>, vector<8x144xbf16>
    %c0_17 = arith.constant 0 : index
    %c0_18 = arith.constant 0 : index
    %29 = vector.load %arg8[%c0_17, %c0_18] : memref<8x24xbf16, #tpu.memory_space<vmem>>, vector<8x24xbf16>
    %c0_19 = arith.constant 0 : index
    %c0_20 = arith.constant 0 : index
    %30 = vector.load %arg9[%c0_19, %c0_20] : memref<8x1xf32, #tpu.memory_space<vmem>>, vector<8x1xf32>
    %c0_21 = arith.constant 0 : index
    %c0_22 = arith.constant 0 : index
    %31 = vector.load %arg10[%c0_21, %c0_22] : memref<8x72xbf16, #tpu.memory_space<vmem>>, vector<8x72xbf16>
    %c0_23 = arith.constant 0 : index
    %c0_24 = arith.constant 0 : index
    %32 = vector.load %arg11[%c0_23, %c0_24] : memref<8x144xbf16, #tpu.memory_space<vmem>>, vector<8x144xbf16>
    %c0_25 = arith.constant 0 : index
    %c0_26 = arith.constant 0 : index
    %33 = vector.load %arg12[%c0_25, %c0_26] : memref<8x24xbf16, #tpu.memory_space<vmem>>, vector<8x24xbf16>
    %c0_27 = arith.constant 0 : index
    %c0_28 = arith.constant 0 : index
    %34 = vector.load %arg13[%c0_27, %c0_28] : memref<8x1xf32, #tpu.memory_space<vmem>>, vector<8x1xf32>
    %c0_29 = arith.constant 0 : index
    %c0_30 = arith.constant 0 : index
    %35 = vector.load %arg14[%c0_29, %c0_30] : memref<8x72xbf16, #tpu.memory_space<vmem>>, vector<8x72xbf16>
    %c0_31 = arith.constant 0 : index
    %c0_32 = arith.constant 0 : index
    %36 = vector.load %arg15[%c0_31, %c0_32] : memref<8x144xbf16, #tpu.memory_space<vmem>>, vector<8x144xbf16>
    %c0_33 = arith.constant 0 : index
    %c0_34 = arith.constant 0 : index
    %37 = vector.load %arg16[%c0_33, %c0_34] : memref<8x24xbf16, #tpu.memory_space<vmem>>, vector<8x24xbf16>
    %c0_35 = arith.constant 0 : index
    %c0_36 = arith.constant 0 : index
    %38 = vector.load %arg17[%c0_35, %c0_36] : memref<8x1xf32, #tpu.memory_space<vmem>>, vector<8x1xf32>
    %c0_37 = arith.constant 0 : index
    %c0_38 = arith.constant 0 : index
    %39 = vector.load %arg18[%c0_37, %c0_38] : memref<8x72xbf16, #tpu.memory_space<vmem>>, vector<8x72xbf16>
    %c0_39 = arith.constant 0 : index
    %c0_40 = arith.constant 0 : index
    %40 = vector.load %arg19[%c0_39, %c0_40] : memref<8x144xbf16, #tpu.memory_space<vmem>>, vector<8x144xbf16>
    %c0_41 = arith.constant 0 : index
    %c0_42 = arith.constant 0 : index
    %41 = vector.load %arg20[%c0_41, %c0_42] : memref<8x24xbf16, #tpu.memory_space<vmem>>, vector<8x24xbf16>
    %c0_43 = arith.constant 0 : index
    %c0_44 = arith.constant 0 : index
    %42 = vector.load %arg21[%c0_43, %c0_44] : memref<8x1xf32, #tpu.memory_space<vmem>>, vector<8x1xf32>
    %c0_45 = arith.constant 0 : index
    %c0_46 = arith.constant 0 : index
    %43 = vector.load %arg22[%c0_45, %c0_46] : memref<8x72xbf16, #tpu.memory_space<vmem>>, vector<8x72xbf16>
    %c0_47 = arith.constant 0 : index
    %c0_48 = arith.constant 0 : index
    %44 = vector.load %arg23[%c0_47, %c0_48] : memref<8x144xbf16, #tpu.memory_space<vmem>>, vector<8x144xbf16>
    %c0_49 = arith.constant 0 : index
    %c0_50 = arith.constant 0 : index
    %45 = vector.load %arg24[%c0_49, %c0_50] : memref<8x24xbf16, #tpu.memory_space<vmem>>, vector<8x24xbf16>
    %c0_51 = arith.constant 0 : index
    %c0_52 = arith.constant 0 : index
    %46 = vector.load %arg25[%c0_51, %c0_52] : memref<8x1xf32, #tpu.memory_space<vmem>>, vector<8x1xf32>
    %c0_53 = arith.constant 0 : index
    %c0_54 = arith.constant 0 : index
    %c0_55 = arith.constant 0 : index
    %47 = vector.load %arg1[%c0_53, %c0_54, %c0_55] : memref<1x8x256xf32, #tpu.memory_space<vmem>>, vector<1x8x256xf32>
    %48 = vector.shape_cast %47 : vector<1x8x256xf32> to vector<8x256xf32>
    %c0_56 = arith.constant 0 : index
    %c128 = arith.constant 128 : index
    %49 = vector.load %arg27[%c0_56, %c128] : memref<24x512xf32, #tpu.memory_space<vmem>>, vector<8x256xf32>
    tpu.vector_store %arg27[%c0_56, %c128], %48 {strides = array<i32>} : memref<24x512xf32, #tpu.memory_space<vmem>>, vector<8x256xf32>,
    %c0_57 = arith.constant 0 : index
    %c111 = arith.constant 111 : index
    %50 = vector.load %arg27[%c0_57, %c111] : memref<24x512xf32, #tpu.memory_space<vmem>>, vector<8x256xf32>
    %cst_58 = arith.constant 0.000000e+00 : f32
    %51 = vector.shape_cast %18 : vector<1x256xi1> to vector<1x256xi1>
    %52 = vector.broadcast %51 : vector<1x256xi1> to vector<8x256xi1>
    %53 = vector.broadcast %cst_58 : f32 to vector<8x256xf32>
    %54 = arith.select %52, %50, %53 : vector<8x256xi1>, vector<8x256xf32>
    %c0_59 = arith.constant 0 : index
    %c0_60 = arith.constant 0 : index
    %55 = vector.load %arg28[%c0_59, %c0_60] : memref<144x256xf32, #tpu.memory_space<vmem>>, vector<8x256xf32>
    tpu.vector_store %arg28[%c0_59, %c0_60], %54 {strides = array<i32>} : memref<144x256xf32, #tpu.memory_space<vmem>>, vector<8x256xf32>,
    %c0_61 = arith.constant 0 : index
    %c112 = arith.constant 112 : index
    %56 = vector.load %arg27[%c0_61, %c112] : memref<24x512xf32, #tpu.memory_space<vmem>>, vector<8x256xf32>
    %c8 = arith.constant 8 : index
    %c0_62 = arith.constant 0 : index
    %57 = vector.load %arg28[%c8, %c0_62] : memref<144x256xf32, #tpu.memory_space<vmem>>, vector<8x256xf32>
    tpu.vector_store %arg28[%c8, %c0_62], %56 {strides = array<i32>} : memref<144x256xf32, #tpu.memory_space<vmem>>, vector<8x256xf32>,
    %c0_63 = arith.constant 0 : index
    %c113 = arith.constant 113 : index
    %58 = vector.load %arg27[%c0_63, %c113] : memref<24x512xf32, #tpu.memory_space<vmem>>, vector<8x256xf32>
    %cst_64 = arith.constant 0.000000e+00 : f32
    %59 = vector.shape_cast %20 : vector<1x256xi1> to vector<1x256xi1>
    %60 = vector.broadcast %59 : vector<1x256xi1> to vector<8x256xi1>
    %61 = vector.broadcast %cst_64 : f32 to vector<8x256xf32>
    %62 = arith.select %60, %58, %61 : vector<8x256xi1>, vector<8x256xf32>
    %c16 = arith.constant 16 : index
    %c0_65 = arith.constant 0 : index
    %63 = vector.load %arg28[%c16, %c0_65] : memref<144x256xf32, #tpu.memory_space<vmem>>, vector<8x256xf32>
    tpu.vector_store %arg28[%c16, %c0_65], %62 {strides = array<i32>} : memref<144x256xf32, #tpu.memory_space<vmem>>, vector<8x256xf32>,
    %c0_66 = arith.constant 0 : index
    %c127 = arith.constant 127 : index
    %64 = vector.load %arg27[%c0_66, %c127] : memref<24x512xf32, #tpu.memory_space<vmem>>, vector<8x256xf32>
    %cst_67 = arith.constant 0.000000e+00 : f32
    %65 = vector.shape_cast %18 : vector<1x256xi1> to vector<1x256xi1>
    %66 = vector.broadcast %65 : vector<1x256xi1> to vector<8x256xi1>
    %67 = vector.broadcast %cst_67 : f32 to vector<8x256xf32>
    %68 = arith.select %66, %64, %67 : vector<8x256xi1>, vector<8x256xf32>
    %c24 = arith.constant 24 : index
    %c0_68 = arith.constant 0 : index
    %69 = vector.load %arg28[%c24, %c0_68] : memref<144x256xf32, #tpu.memory_space<vmem>>, vector<8x256xf32>
    tpu.vector_store %arg28[%c24, %c0_68], %68 {strides = array<i32>} : memref<144x256xf32, #tpu.memory_space<vmem>>, vector<8x256xf32>,
    %c0_69 = arith.constant 0 : index
    %c128_70 = arith.constant 128 : index
    %70 = vector.load %arg27[%c0_69, %c128_70] : memref<24x512xf32, #tpu.memory_space<vmem>>, vector<8x256xf32>
    %c32 = arith.constant 32 : index
    %c0_71 = arith.constant 0 : index
    %71 = vector.load %arg28[%c32, %c0_71] : memref<144x256xf32, #tpu.memory_space<vmem>>, vector<8x256xf32>
    tpu.vector_store %arg28[%c32, %c0_71], %70 {strides = array<i32>} : memref<144x256xf32, #tpu.memory_space<vmem>>, vector<8x256xf32>,
    %c0_72 = arith.constant 0 : index
    %c129 = arith.constant 129 : index
    %72 = vector.load %arg27[%c0_72, %c129] : memref<24x512xf32, #tpu.memory_space<vmem>>, vector<8x256xf32>
    %cst_73 = arith.constant 0.000000e+00 : f32
    %73 = vector.shape_cast %20 : vector<1x256xi1> to vector<1x256xi1>
    %74 = vector.broadcast %73 : vector<1x256xi1> to vector<8x256xi1>
    %75 = vector.broadcast %cst_73 : f32 to vector<8x256xf32>
    %76 = arith.select %74, %72, %75 : vector<8x256xi1>, vector<8x256xf32>
    %c40 = arith.constant 40 : index
    %c0_74 = arith.constant 0 : index
    %77 = vector.load %arg28[%c40, %c0_74] : memref<144x256xf32, #tpu.memory_space<vmem>>, vector<8x256xf32>
    tpu.vector_store %arg28[%c40, %c0_74], %76 {strides = array<i32>} : memref<144x256xf32, #tpu.memory_space<vmem>>, vector<8x256xf32>,
    %c0_75 = arith.constant 0 : index
    %c143 = arith.constant 143 : index
    %78 = vector.load %arg27[%c0_75, %c143] : memref<24x512xf32, #tpu.memory_space<vmem>>, vector<8x256xf32>
    %cst_76 = arith.constant 0.000000e+00 : f32
    %79 = vector.shape_cast %18 : vector<1x256xi1> to vector<1x256xi1>
    %80 = vector.broadcast %79 : vector<1x256xi1> to vector<8x256xi1>
    %81 = vector.broadcast %cst_76 : f32 to vector<8x256xf32>
    %82 = arith.select %80, %78, %81 : vector<8x256xi1>, vector<8x256xf32>
    %c48 = arith.constant 48 : index
    %c0_77 = arith.constant 0 : index
    %83 = vector.load %arg28[%c48, %c0_77] : memref<144x256xf32, #tpu.memory_space<vmem>>, vector<8x256xf32>
    tpu.vector_store %arg28[%c48, %c0_77], %82 {strides = array<i32>} : memref<144x256xf32, #tpu.memory_space<vmem>>, vector<8x256xf32>,
    %c0_78 = arith.constant 0 : index
    %c144 = arith.constant 144 : index
    %84 = vector.load %arg27[%c0_78, %c144] : memref<24x512xf32, #tpu.memory_space<vmem>>, vector<8x256xf32>
    %c56 = arith.constant 56 : index
    %c0_79 = arith.constant 0 : index
    %85 = vector.load %arg28[%c56, %c0_79] : memref<144x256xf32, #tpu.memory_space<vmem>>, vector<8x256xf32>
    tpu.vector_store %arg28[%c56, %c0_79], %84 {strides = array<i32>} : memref<144x256xf32, #tpu.memory_space<vmem>>, vector<8x256xf32>,
    %c0_80 = arith.constant 0 : index
    %c145 = arith.constant 145 : index
    %86 = vector.load %arg27[%c0_80, %c145] : memref<24x512xf32, #tpu.memory_space<vmem>>, vector<8x256xf32>
    %cst_81 = arith.constant 0.000000e+00 : f32
    %87 = vector.shape_cast %20 : vector<1x256xi1> to vector<1x256xi1>
    %88 = vector.broadcast %87 : vector<1x256xi1> to vector<8x256xi1>
    %89 = vector.broadcast %cst_81 : f32 to vector<8x256xf32>
    %90 = arith.select %88, %86, %89 : vector<8x256xi1>, vector<8x256xf32>
    %c64 = arith.constant 64 : index
    %c0_82 = arith.constant 0 : index
    %91 = vector.load %arg28[%c64, %c0_82] : memref<144x256xf32, #tpu.memory_space<vmem>>, vector<8x256xf32>
    tpu.vector_store %arg28[%c64, %c0_82], %90 {strides = array<i32>} : memref<144x256xf32, #tpu.memory_space<vmem>>, vector<8x256xf32>,
    %c0_83 = arith.constant 0 : index
    %c0_84 = arith.constant 0 : index
    %92 = vector.load %arg28[%c0_83, %c0_84] : memref<144x256xf32, #tpu.memory_space<vmem>>, vector<72x256xf32>
    %93 = arith.truncf %92 : vector<72x256xf32> to vector<72x256xbf16>
    %cst_85 = arith.constant dense<0.000000e+00> : vector<8x256xf32>
    %94 = tpu.matmul %23, %93, %cst_85 {dimension_numbers = #tpu.dot_dimension_numbers<[1], [0], [0], [1], [0, 0, 1, 1], [], []>} : vector<8x72xbf16>, vector<72x256xbf16>, vector<8x256xf32> -> vector<8x256xf32>
    %cst_86 = arith.constant 0.000000e+00 : f32
    %95 = vector.broadcast %cst_86 : f32 to vector<8x256xf32>
    %96 = arith.maximumf %94, %95 : vector<8x256xf32>
    %c8_87 = arith.constant 8 : index
    %c128_88 = arith.constant 128 : index
    %97 = vector.load %arg27[%c8_87, %c128_88] : memref<24x512xf32, #tpu.memory_space<vmem>>, vector<8x256xf32>
    tpu.vector_store %arg27[%c8_87, %c128_88], %96 {strides = array<i32>} : memref<24x512xf32, #tpu.memory_space<vmem>>, vector<8x256xf32>,
    %c0_89 = arith.constant 0 : index
    %c111_90 = arith.constant 111 : index
    %98 = vector.load %arg27[%c0_89, %c111_90] : memref<24x512xf32, #tpu.memory_space<vmem>>, vector<16x256xf32>
    %cst_91 = arith.constant 0.000000e+00 : f32
    %99 = vector.shape_cast %18 : vector<1x256xi1> to vector<1x256xi1>
    %100 = vector.broadcast %99 : vector<1x256xi1> to vector<16x256xi1>
    %101 = vector.broadcast %cst_91 : f32 to vector<16x256xf32>
    %102 = arith.select %100, %98, %101 : vector<16x256xi1>, vector<16x256xf32>
    %c0_92 = arith.constant 0 : index
    %c0_93 = arith.constant 0 : index
    %103 = vector.load %arg28[%c0_92, %c0_93] : memref<144x256xf32, #tpu.memory_space<vmem>>, vector<16x256xf32>
    tpu.vector_store %arg28[%c0_92, %c0_93], %102 {strides = array<i32>} : memref<144x256xf32, #tpu.memory_space<vmem>>, vector<16x256xf32>,
    %c0_94 = arith.constant 0 : index
    %c112_95 = arith.constant 112 : index
    %104 = vector.load %arg27[%c0_94, %c112_95] : memref<24x512xf32, #tpu.memory_space<vmem>>, vector<16x256xf32>
    %c16_96 = arith.constant 16 : index
    %c0_97 = arith.constant 0 : index
    %105 = vector.load %arg28[%c16_96, %c0_97] : memref<144x256xf32, #tpu.memory_space<vmem>>, vector<16x256xf32>
    tpu.vector_store %arg28[%c16_96, %c0_97], %104 {strides = array<i32>} : memref<144x256xf32, #tpu.memory_space<vmem>>, vector<16x256xf32>,
    %c0_98 = arith.constant 0 : index
    %c113_99 = arith.constant 113 : index
    %106 = vector.load %arg27[%c0_98, %c113_99] : memref<24x512xf32, #tpu.memory_space<vmem>>, vector<16x256xf32>
    %cst_100 = arith.constant 0.000000e+00 : f32
    %107 = vector.shape_cast %20 : vector<1x256xi1> to vector<1x256xi1>
    %108 = vector.broadcast %107 : vector<1x256xi1> to vector<16x256xi1>
    %109 = vector.broadcast %cst_100 : f32 to vector<16x256xf32>
    %110 = arith.select %108, %106, %109 : vector<16x256xi1>, vector<16x256xf32>
    %c32_101 = arith.constant 32 : index
    %c0_102 = arith.constant 0 : index
    %111 = vector.load %arg28[%c32_101, %c0_102] : memref<144x256xf32, #tpu.memory_space<vmem>>, vector<16x256xf32>
    tpu.vector_store %arg28[%c32_101, %c0_102], %110 {strides = array<i32>} : memref<144x256xf32, #tpu.memory_space<vmem>>, vector<16x256xf32>,
    %c0_103 = arith.constant 0 : index
    %c127_104 = arith.constant 127 : index
    %112 = vector.load %arg27[%c0_103, %c127_104] : memref<24x512xf32, #tpu.memory_space<vmem>>, vector<16x256xf32>
    %cst_105 = arith.constant 0.000000e+00 : f32
    %113 = vector.shape_cast %18 : vector<1x256xi1> to vector<1x256xi1>
    %114 = vector.broadcast %113 : vector<1x256xi1> to vector<16x256xi1>
    %115 = vector.broadcast %cst_105 : f32 to vector<16x256xf32>
    %116 = arith.select %114, %112, %115 : vector<16x256xi1>, vector<16x256xf32>
    %c48_106 = arith.constant 48 : index
    %c0_107 = arith.constant 0 : index
    %117 = vector.load %arg28[%c48_106, %c0_107] : memref<144x256xf32, #tpu.memory_space<vmem>>, vector<16x256xf32>
    tpu.vector_store %arg28[%c48_106, %c0_107], %116 {strides = array<i32>} : memref<144x256xf32, #tpu.memory_space<vmem>>, vector<16x256xf32>,
    %c0_108 = arith.constant 0 : index
    %c128_109 = arith.constant 128 : index
    %118 = vector.load %arg27[%c0_108, %c128_109] : memref<24x512xf32, #tpu.memory_space<vmem>>, vector<16x256xf32>
    %c64_110 = arith.constant 64 : index
    %c0_111 = arith.constant 0 : index
    %119 = vector.load %arg28[%c64_110, %c0_111] : memref<144x256xf32, #tpu.memory_space<vmem>>, vector<16x256xf32>
    tpu.vector_store %arg28[%c64_110, %c0_111], %118 {strides = array<i32>} : memref<144x256xf32, #tpu.memory_space<vmem>>, vector<16x256xf32>,
    %c0_112 = arith.constant 0 : index
    %c129_113 = arith.constant 129 : index
    %120 = vector.load %arg27[%c0_112, %c129_113] : memref<24x512xf32, #tpu.memory_space<vmem>>, vector<16x256xf32>
    %cst_114 = arith.constant 0.000000e+00 : f32
    %121 = vector.shape_cast %20 : vector<1x256xi1> to vector<1x256xi1>
    %122 = vector.broadcast %121 : vector<1x256xi1> to vector<16x256xi1>
    %123 = vector.broadcast %cst_114 : f32 to vector<16x256xf32>
    %124 = arith.select %122, %120, %123 : vector<16x256xi1>, vector<16x256xf32>
    %c80 = arith.constant 80 : index
    %c0_115 = arith.constant 0 : index
    %125 = vector.load %arg28[%c80, %c0_115] : memref<144x256xf32, #tpu.memory_space<vmem>>, vector<16x256xf32>
    tpu.vector_store %arg28[%c80, %c0_115], %124 {strides = array<i32>} : memref<144x256xf32, #tpu.memory_space<vmem>>, vector<16x256xf32>,
    %c0_116 = arith.constant 0 : index
    %c143_117 = arith.constant 143 : index
    %126 = vector.load %arg27[%c0_116, %c143_117] : memref<24x512xf32, #tpu.memory_space<vmem>>, vector<16x256xf32>
    %cst_118 = arith.constant 0.000000e+00 : f32
    %127 = vector.shape_cast %18 : vector<1x256xi1> to vector<1x256xi1>
    %128 = vector.broadcast %127 : vector<1x256xi1> to vector<16x256xi1>
    %129 = vector.broadcast %cst_118 : f32 to vector<16x256xf32>
    %130 = arith.select %128, %126, %129 : vector<16x256xi1>, vector<16x256xf32>
    %c96 = arith.constant 96 : index
    %c0_119 = arith.constant 0 : index
    %131 = vector.load %arg28[%c96, %c0_119] : memref<144x256xf32, #tpu.memory_space<vmem>>, vector<16x256xf32>
    tpu.vector_store %arg28[%c96, %c0_119], %130 {strides = array<i32>} : memref<144x256xf32, #tpu.memory_space<vmem>>, vector<16x256xf32>,
    %c0_120 = arith.constant 0 : index
    %c144_121 = arith.constant 144 : index
    %132 = vector.load %arg27[%c0_120, %c144_121] : memref<24x512xf32, #tpu.memory_space<vmem>>, vector<16x256xf32>
    %c112_122 = arith.constant 112 : index
    %c0_123 = arith.constant 0 : index
    %133 = vector.load %arg28[%c112_122, %c0_123] : memref<144x256xf32, #tpu.memory_space<vmem>>, vector<16x256xf32>
    tpu.vector_store %arg28[%c112_122, %c0_123], %132 {strides = array<i32>} : memref<144x256xf32, #tpu.memory_space<vmem>>, vector<16x256xf32>,
    %c0_124 = arith.constant 0 : index
    %c145_125 = arith.constant 145 : index
    %134 = vector.load %arg27[%c0_124, %c145_125] : memref<24x512xf32, #tpu.memory_space<vmem>>, vector<16x256xf32>
    %cst_126 = arith.constant 0.000000e+00 : f32
    %135 = vector.shape_cast %20 : vector<1x256xi1> to vector<1x256xi1>
    %136 = vector.broadcast %135 : vector<1x256xi1> to vector<16x256xi1>
    %137 = vector.broadcast %cst_126 : f32 to vector<16x256xf32>
    %138 = arith.select %136, %134, %137 : vector<16x256xi1>, vector<16x256xf32>
    %c128_127 = arith.constant 128 : index
    %c0_128 = arith.constant 0 : index
    %139 = vector.load %arg28[%c128_127, %c0_128] : memref<144x256xf32, #tpu.memory_space<vmem>>, vector<16x256xf32>
    tpu.vector_store %arg28[%c128_127, %c0_128], %138 {strides = array<i32>} : memref<144x256xf32, #tpu.memory_space<vmem>>, vector<16x256xf32>,
    %c0_129 = arith.constant 0 : index
    %c0_130 = arith.constant 0 : index
    %140 = vector.load %arg28[%c0_129, %c0_130] : memref<144x256xf32, #tpu.memory_space<vmem>>, vector<144x256xf32>
    %141 = arith.truncf %140 : vector<144x256xf32> to vector<144x256xbf16>
    %cst_131 = arith.constant dense<0.000000e+00> : vector<8x256xf32>
    %142 = tpu.matmul %24, %141, %cst_131 {dimension_numbers = #tpu.dot_dimension_numbers<[1], [0], [0], [1], [0, 0, 1, 1], [], []>} : vector<8x144xbf16>, vector<144x256xbf16>, vector<8x256xf32> -> vector<8x256xf32>
    %cst_132 = arith.constant 0.000000e+00 : f32
    %143 = vector.broadcast %cst_132 : f32 to vector<8x256xf32>
    %144 = arith.maximumf %142, %143 : vector<8x256xf32>
    %c16_133 = arith.constant 16 : index
    %c128_134 = arith.constant 128 : index
    %145 = vector.load %arg27[%c16_133, %c128_134] : memref<24x512xf32, #tpu.memory_space<vmem>>, vector<8x256xf32>
    tpu.vector_store %arg27[%c16_133, %c128_134], %144 {strides = array<i32>} : memref<24x512xf32, #tpu.memory_space<vmem>>, vector<8x256xf32>,
    %c0_135 = arith.constant 0 : index
    %c128_136 = arith.constant 128 : index
    %146 = vector.load %arg27[%c0_135, %c128_136] : memref<24x512xf32, #tpu.memory_space<vmem>>, vector<24x256xf32>
    %147 = arith.truncf %146 : vector<24x256xf32> to vector<24x256xbf16>
    %cst_137 = arith.constant dense<0.000000e+00> : vector<8x256xf32>
    %148 = tpu.matmul %25, %147, %cst_137 {dimension_numbers = #tpu.dot_dimension_numbers<[1], [0], [0], [1], [0, 0, 1, 1], [], []>} : vector<8x24xbf16>, vector<24x256xbf16>, vector<8x256xf32> -> vector<8x256xf32>
    %149 = vector.broadcast %26 : vector<8x1xf32> to vector<8x256xf32>
    %150 = arith.addf %148, %149 : vector<8x256xf32>
    %c0_138 = arith.constant 0 : index
    %c128_139 = arith.constant 128 : index
    %151 = vector.load %arg27[%c0_138, %c128_139] : memref<24x512xf32, #tpu.memory_space<vmem>>, vector<8x256xf32>
    tpu.vector_store %arg27[%c0_138, %c128_139], %150 {strides = array<i32>} : memref<24x512xf32, #tpu.memory_space<vmem>>, vector<8x256xf32>,
    %c0_140 = arith.constant 0 : index
    %c111_141 = arith.constant 111 : index
    %152 = vector.load %arg27[%c0_140, %c111_141] : memref<24x512xf32, #tpu.memory_space<vmem>>, vector<8x256xf32>
    %cst_142 = arith.constant 0.000000e+00 : f32
    %153 = vector.shape_cast %18 : vector<1x256xi1> to vector<1x256xi1>
    %154 = vector.broadcast %153 : vector<1x256xi1> to vector<8x256xi1>
    %155 = vector.broadcast %cst_142 : f32 to vector<8x256xf32>
    %156 = arith.select %154, %152, %155 : vector<8x256xi1>, vector<8x256xf32>
    %c0_143 = arith.constant 0 : index
    %c0_144 = arith.constant 0 : index
    %157 = vector.load %arg28[%c0_143, %c0_144] : memref<144x256xf32, #tpu.memory_space<vmem>>, vector<8x256xf32>
    tpu.vector_store %arg28[%c0_143, %c0_144], %156 {strides = array<i32>} : memref<144x256xf32, #tpu.memory_space<vmem>>, vector<8x256xf32>,
    %c0_145 = arith.constant 0 : index
    %c112_146 = arith.constant 112 : index
    %158 = vector.load %arg27[%c0_145, %c112_146] : memref<24x512xf32, #tpu.memory_space<vmem>>, vector<8x256xf32>
    %c8_147 = arith.constant 8 : index
    %c0_148 = arith.constant 0 : index
    %159 = vector.load %arg28[%c8_147, %c0_148] : memref<144x256xf32, #tpu.memory_space<vmem>>, vector<8x256xf32>
    tpu.vector_store %arg28[%c8_147, %c0_148], %158 {strides = array<i32>} : memref<144x256xf32, #tpu.memory_space<vmem>>, vector<8x256xf32>,
    %c0_149 = arith.constant 0 : index
    %c113_150 = arith.constant 113 : index
    %160 = vector.load %arg27[%c0_149, %c113_150] : memref<24x512xf32, #tpu.memory_space<vmem>>, vector<8x256xf32>
    %cst_151 = arith.constant 0.000000e+00 : f32
    %161 = vector.shape_cast %20 : vector<1x256xi1> to vector<1x256xi1>
    %162 = vector.broadcast %161 : vector<1x256xi1> to vector<8x256xi1>
    %163 = vector.broadcast %cst_151 : f32 to vector<8x256xf32>
    %164 = arith.select %162, %160, %163 : vector<8x256xi1>, vector<8x256xf32>
    %c16_152 = arith.constant 16 : index
    %c0_153 = arith.constant 0 : index
    %165 = vector.load %arg28[%c16_152, %c0_153] : memref<144x256xf32, #tpu.memory_space<vmem>>, vector<8x256xf32>
    tpu.vector_store %arg28[%c16_152, %c0_153], %164 {strides = array<i32>} : memref<144x256xf32, #tpu.memory_space<vmem>>, vector<8x256xf32>,
    %c0_154 = arith.constant 0 : index
    %c127_155 = arith.constant 127 : index
    %166 = vector.load %arg27[%c0_154, %c127_155] : memref<24x512xf32, #tpu.memory_space<vmem>>, vector<8x256xf32>
    %cst_156 = arith.constant 0.000000e+00 : f32
    %167 = vector.shape_cast %18 : vector<1x256xi1> to vector<1x256xi1>
    %168 = vector.broadcast %167 : vector<1x256xi1> to vector<8x256xi1>
    %169 = vector.broadcast %cst_156 : f32 to vector<8x256xf32>
    %170 = arith.select %168, %166, %169 : vector<8x256xi1>, vector<8x256xf32>
    %c24_157 = arith.constant 24 : index
    %c0_158 = arith.constant 0 : index
    %171 = vector.load %arg28[%c24_157, %c0_158] : memref<144x256xf32, #tpu.memory_space<vmem>>, vector<8x256xf32>
    tpu.vector_store %arg28[%c24_157, %c0_158], %170 {strides = array<i32>} : memref<144x256xf32, #tpu.memory_space<vmem>>, vector<8x256xf32>,
    %c0_159 = arith.constant 0 : index
    %c128_160 = arith.constant 128 : index
    %172 = vector.load %arg27[%c0_159, %c128_160] : memref<24x512xf32, #tpu.memory_space<vmem>>, vector<8x256xf32>
    %c32_161 = arith.constant 32 : index
    %c0_162 = arith.constant 0 : index
    %173 = vector.load %arg28[%c32_161, %c0_162] : memref<144x256xf32, #tpu.memory_space<vmem>>, vector<8x256xf32>
    tpu.vector_store %arg28[%c32_161, %c0_162], %172 {strides = array<i32>} : memref<144x256xf32, #tpu.memory_space<vmem>>, vector<8x256xf32>,
    %c0_163 = arith.constant 0 : index
    %c129_164 = arith.constant 129 : index
    %174 = vector.load %arg27[%c0_163, %c129_164] : memref<24x512xf32, #tpu.memory_space<vmem>>, vector<8x256xf32>
    %cst_165 = arith.constant 0.000000e+00 : f32
    %175 = vector.shape_cast %20 : vector<1x256xi1> to vector<1x256xi1>
    %176 = vector.broadcast %175 : vector<1x256xi1> to vector<8x256xi1>
    %177 = vector.broadcast %cst_165 : f32 to vector<8x256xf32>
    %178 = arith.select %176, %174, %177 : vector<8x256xi1>, vector<8x256xf32>
    %c40_166 = arith.constant 40 : index
    %c0_167 = arith.constant 0 : index
    %179 = vector.load %arg28[%c40_166, %c0_167] : memref<144x256xf32, #tpu.memory_space<vmem>>, vector<8x256xf32>
    tpu.vector_store %arg28[%c40_166, %c0_167], %178 {strides = array<i32>} : memref<144x256xf32, #tpu.memory_space<vmem>>, vector<8x256xf32>,
    %c0_168 = arith.constant 0 : index
    %c143_169 = arith.constant 143 : index
    %180 = vector.load %arg27[%c0_168, %c143_169] : memref<24x512xf32, #tpu.memory_space<vmem>>, vector<8x256xf32>
    %cst_170 = arith.constant 0.000000e+00 : f32
    %181 = vector.shape_cast %18 : vector<1x256xi1> to vector<1x256xi1>
    %182 = vector.broadcast %181 : vector<1x256xi1> to vector<8x256xi1>
    %183 = vector.broadcast %cst_170 : f32 to vector<8x256xf32>
    %184 = arith.select %182, %180, %183 : vector<8x256xi1>, vector<8x256xf32>
    %c48_171 = arith.constant 48 : index
    %c0_172 = arith.constant 0 : index
    %185 = vector.load %arg28[%c48_171, %c0_172] : memref<144x256xf32, #tpu.memory_space<vmem>>, vector<8x256xf32>
    tpu.vector_store %arg28[%c48_171, %c0_172], %184 {strides = array<i32>} : memref<144x256xf32, #tpu.memory_space<vmem>>, vector<8x256xf32>,
    %c0_173 = arith.constant 0 : index
    %c144_174 = arith.constant 144 : index
    %186 = vector.load %arg27[%c0_173, %c144_174] : memref<24x512xf32, #tpu.memory_space<vmem>>, vector<8x256xf32>
    %c56_175 = arith.constant 56 : index
    %c0_176 = arith.constant 0 : index
    %187 = vector.load %arg28[%c56_175, %c0_176] : memref<144x256xf32, #tpu.memory_space<vmem>>, vector<8x256xf32>
    tpu.vector_store %arg28[%c56_175, %c0_176], %186 {strides = array<i32>} : memref<144x256xf32, #tpu.memory_space<vmem>>, vector<8x256xf32>,
    %c0_177 = arith.constant 0 : index
    %c145_178 = arith.constant 145 : index
    %188 = vector.load %arg27[%c0_177, %c145_178] : memref<24x512xf32, #tpu.memory_space<vmem>>, vector<8x256xf32>
    %cst_179 = arith.constant 0.000000e+00 : f32
    %189 = vector.shape_cast %20 : vector<1x256xi1> to vector<1x256xi1>
    %190 = vector.broadcast %189 : vector<1x256xi1> to vector<8x256xi1>
    %191 = vector.broadcast %cst_179 : f32 to vector<8x256xf32>
    %192 = arith.select %190, %188, %191 : vector<8x256xi1>, vector<8x256xf32>
    %c64_180 = arith.constant 64 : index
    %c0_181 = arith.constant 0 : index
    %193 = vector.load %arg28[%c64_180, %c0_181] : memref<144x256xf32, #tpu.memory_space<vmem>>, vector<8x256xf32>
    tpu.vector_store %arg28[%c64_180, %c0_181], %192 {strides = array<i32>} : memref<144x256xf32, #tpu.memory_space<vmem>>, vector<8x256xf32>,
    %c0_182 = arith.constant 0 : index
    %c0_183 = arith.constant 0 : index
    %194 = vector.load %arg28[%c0_182, %c0_183] : memref<144x256xf32, #tpu.memory_space<vmem>>, vector<72x256xf32>
    %195 = arith.truncf %194 : vector<72x256xf32> to vector<72x256xbf16>
    %cst_184 = arith.constant dense<0.000000e+00> : vector<8x256xf32>
    %196 = tpu.matmul %27, %195, %cst_184 {dimension_numbers = #tpu.dot_dimension_numbers<[1], [0], [0], [1], [0, 0, 1, 1], [], []>} : vector<8x72xbf16>, vector<72x256xbf16>, vector<8x256xf32> -> vector<8x256xf32>
    %cst_185 = arith.constant 0.000000e+00 : f32
    %197 = vector.broadcast %cst_185 : f32 to vector<8x256xf32>
    %198 = arith.maximumf %196, %197 : vector<8x256xf32>
    %c8_186 = arith.constant 8 : index
    %c128_187 = arith.constant 128 : index
    %199 = vector.load %arg27[%c8_186, %c128_187] : memref<24x512xf32, #tpu.memory_space<vmem>>, vector<8x256xf32>
    tpu.vector_store %arg27[%c8_186, %c128_187], %198 {strides = array<i32>} : memref<24x512xf32, #tpu.memory_space<vmem>>, vector<8x256xf32>,
    %c0_188 = arith.constant 0 : index
    %c111_189 = arith.constant 111 : index
    %200 = vector.load %arg27[%c0_188, %c111_189] : memref<24x512xf32, #tpu.memory_space<vmem>>, vector<16x256xf32>
    %cst_190 = arith.constant 0.000000e+00 : f32
    %201 = vector.shape_cast %18 : vector<1x256xi1> to vector<1x256xi1>
    %202 = vector.broadcast %201 : vector<1x256xi1> to vector<16x256xi1>
    %203 = vector.broadcast %cst_190 : f32 to vector<16x256xf32>
    %204 = arith.select %202, %200, %203 : vector<16x256xi1>, vector<16x256xf32>
    %c0_191 = arith.constant 0 : index
    %c0_192 = arith.constant 0 : index
    %205 = vector.load %arg28[%c0_191, %c0_192] : memref<144x256xf32, #tpu.memory_space<vmem>>, vector<16x256xf32>
    tpu.vector_store %arg28[%c0_191, %c0_192], %204 {strides = array<i32>} : memref<144x256xf32, #tpu.memory_space<vmem>>, vector<16x256xf32>,
    %c0_193 = arith.constant 0 : index
    %c112_194 = arith.constant 112 : index
    %206 = vector.load %arg27[%c0_193, %c112_194] : memref<24x512xf32, #tpu.memory_space<vmem>>, vector<16x256xf32>
    %c16_195 = arith.constant 16 : index
    %c0_196 = arith.constant 0 : index
    %207 = vector.load %arg28[%c16_195, %c0_196] : memref<144x256xf32, #tpu.memory_space<vmem>>, vector<16x256xf32>
    tpu.vector_store %arg28[%c16_195, %c0_196], %206 {strides = array<i32>} : memref<144x256xf32, #tpu.memory_space<vmem>>, vector<16x256xf32>,
    %c0_197 = arith.constant 0 : index
    %c113_198 = arith.constant 113 : index
    %208 = vector.load %arg27[%c0_197, %c113_198] : memref<24x512xf32, #tpu.memory_space<vmem>>, vector<16x256xf32>
    %cst_199 = arith.constant 0.000000e+00 : f32
    %209 = vector.shape_cast %20 : vector<1x256xi1> to vector<1x256xi1>
    %210 = vector.broadcast %209 : vector<1x256xi1> to vector<16x256xi1>
    %211 = vector.broadcast %cst_199 : f32 to vector<16x256xf32>
    %212 = arith.select %210, %208, %211 : vector<16x256xi1>, vector<16x256xf32>
    %c32_200 = arith.constant 32 : index
    %c0_201 = arith.constant 0 : index
    %213 = vector.load %arg28[%c32_200, %c0_201] : memref<144x256xf32, #tpu.memory_space<vmem>>, vector<16x256xf32>
    tpu.vector_store %arg28[%c32_200, %c0_201], %212 {strides = array<i32>} : memref<144x256xf32, #tpu.memory_space<vmem>>, vector<16x256xf32>,
    %c0_202 = arith.constant 0 : index
    %c127_203 = arith.constant 127 : index
    %214 = vector.load %arg27[%c0_202, %c127_203] : memref<24x512xf32, #tpu.memory_space<vmem>>, vector<16x256xf32>
    %cst_204 = arith.constant 0.000000e+00 : f32
    %215 = vector.shape_cast %18 : vector<1x256xi1> to vector<1x256xi1>
    %216 = vector.broadcast %215 : vector<1x256xi1> to vector<16x256xi1>
    %217 = vector.broadcast %cst_204 : f32 to vector<16x256xf32>
    %218 = arith.select %216, %214, %217 : vector<16x256xi1>, vector<16x256xf32>
    %c48_205 = arith.constant 48 : index
    %c0_206 = arith.constant 0 : index
    %219 = vector.load %arg28[%c48_205, %c0_206] : memref<144x256xf32, #tpu.memory_space<vmem>>, vector<16x256xf32>
    tpu.vector_store %arg28[%c48_205, %c0_206], %218 {strides = array<i32>} : memref<144x256xf32, #tpu.memory_space<vmem>>, vector<16x256xf32>,
    %c0_207 = arith.constant 0 : index
    %c128_208 = arith.constant 128 : index
    %220 = vector.load %arg27[%c0_207, %c128_208] : memref<24x512xf32, #tpu.memory_space<vmem>>, vector<16x256xf32>
    %c64_209 = arith.constant 64 : index
    %c0_210 = arith.constant 0 : index
    %221 = vector.load %arg28[%c64_209, %c0_210] : memref<144x256xf32, #tpu.memory_space<vmem>>, vector<16x256xf32>
    tpu.vector_store %arg28[%c64_209, %c0_210], %220 {strides = array<i32>} : memref<144x256xf32, #tpu.memory_space<vmem>>, vector<16x256xf32>,
    %c0_211 = arith.constant 0 : index
    %c129_212 = arith.constant 129 : index
    %222 = vector.load %arg27[%c0_211, %c129_212] : memref<24x512xf32, #tpu.memory_space<vmem>>, vector<16x256xf32>
    %cst_213 = arith.constant 0.000000e+00 : f32
    %223 = vector.shape_cast %20 : vector<1x256xi1> to vector<1x256xi1>
    %224 = vector.broadcast %223 : vector<1x256xi1> to vector<16x256xi1>
    %225 = vector.broadcast %cst_213 : f32 to vector<16x256xf32>
    %226 = arith.select %224, %222, %225 : vector<16x256xi1>, vector<16x256xf32>
    %c80_214 = arith.constant 80 : index
    %c0_215 = arith.constant 0 : index
    %227 = vector.load %arg28[%c80_214, %c0_215] : memref<144x256xf32, #tpu.memory_space<vmem>>, vector<16x256xf32>
    tpu.vector_store %arg28[%c80_214, %c0_215], %226 {strides = array<i32>} : memref<144x256xf32, #tpu.memory_space<vmem>>, vector<16x256xf32>,
    %c0_216 = arith.constant 0 : index
    %c143_217 = arith.constant 143 : index
    %228 = vector.load %arg27[%c0_216, %c143_217] : memref<24x512xf32, #tpu.memory_space<vmem>>, vector<16x256xf32>
    %cst_218 = arith.constant 0.000000e+00 : f32
    %229 = vector.shape_cast %18 : vector<1x256xi1> to vector<1x256xi1>
    %230 = vector.broadcast %229 : vector<1x256xi1> to vector<16x256xi1>
    %231 = vector.broadcast %cst_218 : f32 to vector<16x256xf32>
    %232 = arith.select %230, %228, %231 : vector<16x256xi1>, vector<16x256xf32>
    %c96_219 = arith.constant 96 : index
    %c0_220 = arith.constant 0 : index
    %233 = vector.load %arg28[%c96_219, %c0_220] : memref<144x256xf32, #tpu.memory_space<vmem>>, vector<16x256xf32>
    tpu.vector_store %arg28[%c96_219, %c0_220], %232 {strides = array<i32>} : memref<144x256xf32, #tpu.memory_space<vmem>>, vector<16x256xf32>,
    %c0_221 = arith.constant 0 : index
    %c144_222 = arith.constant 144 : index
    %234 = vector.load %arg27[%c0_221, %c144_222] : memref<24x512xf32, #tpu.memory_space<vmem>>, vector<16x256xf32>
    %c112_223 = arith.constant 112 : index
    %c0_224 = arith.constant 0 : index
    %235 = vector.load %arg28[%c112_223, %c0_224] : memref<144x256xf32, #tpu.memory_space<vmem>>, vector<16x256xf32>
    tpu.vector_store %arg28[%c112_223, %c0_224], %234 {strides = array<i32>} : memref<144x256xf32, #tpu.memory_space<vmem>>, vector<16x256xf32>,
    %c0_225 = arith.constant 0 : index
    %c145_226 = arith.constant 145 : index
    %236 = vector.load %arg27[%c0_225, %c145_226] : memref<24x512xf32, #tpu.memory_space<vmem>>, vector<16x256xf32>
    %cst_227 = arith.constant 0.000000e+00 : f32
    %237 = vector.shape_cast %20 : vector<1x256xi1> to vector<1x256xi1>
    %238 = vector.broadcast %237 : vector<1x256xi1> to vector<16x256xi1>
    %239 = vector.broadcast %cst_227 : f32 to vector<16x256xf32>
    %240 = arith.select %238, %236, %239 : vector<16x256xi1>, vector<16x256xf32>
    %c128_228 = arith.constant 128 : index
    %c0_229 = arith.constant 0 : index
    %241 = vector.load %arg28[%c128_228, %c0_229] : memref<144x256xf32, #tpu.memory_space<vmem>>, vector<16x256xf32>
    tpu.vector_store %arg28[%c128_228, %c0_229], %240 {strides = array<i32>} : memref<144x256xf32, #tpu.memory_space<vmem>>, vector<16x256xf32>,
    %c0_230 = arith.constant 0 : index
    %c0_231 = arith.constant 0 : index
    %242 = vector.load %arg28[%c0_230, %c0_231] : memref<144x256xf32, #tpu.memory_space<vmem>>, vector<144x256xf32>
    %243 = arith.truncf %242 : vector<144x256xf32> to vector<144x256xbf16>
    %cst_232 = arith.constant dense<0.000000e+00> : vector<8x256xf32>
    %244 = tpu.matmul %28, %243, %cst_232 {dimension_numbers = #tpu.dot_dimension_numbers<[1], [0], [0], [1], [0, 0, 1, 1], [], []>} : vector<8x144xbf16>, vector<144x256xbf16>, vector<8x256xf32> -> vector<8x256xf32>
    %cst_233 = arith.constant 0.000000e+00 : f32
    %245 = vector.broadcast %cst_233 : f32 to vector<8x256xf32>
    %246 = arith.maximumf %244, %245 : vector<8x256xf32>
    %c16_234 = arith.constant 16 : index
    %c128_235 = arith.constant 128 : index
    %247 = vector.load %arg27[%c16_234, %c128_235] : memref<24x512xf32, #tpu.memory_space<vmem>>, vector<8x256xf32>
    tpu.vector_store %arg27[%c16_234, %c128_235], %246 {strides = array<i32>} : memref<24x512xf32, #tpu.memory_space<vmem>>, vector<8x256xf32>,
    %c0_236 = arith.constant 0 : index
    %c128_237 = arith.constant 128 : index
    %248 = vector.load %arg27[%c0_236, %c128_237] : memref<24x512xf32, #tpu.memory_space<vmem>>, vector<24x256xf32>
    %249 = arith.truncf %248 : vector<24x256xf32> to vector<24x256xbf16>
    %cst_238 = arith.constant dense<0.000000e+00> : vector<8x256xf32>
    %250 = tpu.matmul %29, %249, %cst_238 {dimension_numbers = #tpu.dot_dimension_numbers<[1], [0], [0], [1], [0, 0, 1, 1], [], []>} : vector<8x24xbf16>, vector<24x256xbf16>, vector<8x256xf32> -> vector<8x256xf32>
    %251 = vector.broadcast %30 : vector<8x1xf32> to vector<8x256xf32>
    %252 = arith.addf %250, %251 : vector<8x256xf32>
    %c0_239 = arith.constant 0 : index
    %c128_240 = arith.constant 128 : index
    %253 = vector.load %arg27[%c0_239, %c128_240] : memref<24x512xf32, #tpu.memory_space<vmem>>, vector<8x256xf32>
    tpu.vector_store %arg27[%c0_239, %c128_240], %252 {strides = array<i32>} : memref<24x512xf32, #tpu.memory_space<vmem>>, vector<8x256xf32>,
    %c0_241 = arith.constant 0 : index
    %c111_242 = arith.constant 111 : index
    %254 = vector.load %arg27[%c0_241, %c111_242] : memref<24x512xf32, #tpu.memory_space<vmem>>, vector<8x256xf32>
    %cst_243 = arith.constant 0.000000e+00 : f32
    %255 = vector.shape_cast %18 : vector<1x256xi1> to vector<1x256xi1>
    %256 = vector.broadcast %255 : vector<1x256xi1> to vector<8x256xi1>
    %257 = vector.broadcast %cst_243 : f32 to vector<8x256xf32>
    %258 = arith.select %256, %254, %257 : vector<8x256xi1>, vector<8x256xf32>
    %c0_244 = arith.constant 0 : index
    %c0_245 = arith.constant 0 : index
    %259 = vector.load %arg28[%c0_244, %c0_245] : memref<144x256xf32, #tpu.memory_space<vmem>>, vector<8x256xf32>
    tpu.vector_store %arg28[%c0_244, %c0_245], %258 {strides = array<i32>} : memref<144x256xf32, #tpu.memory_space<vmem>>, vector<8x256xf32>,
    %c0_246 = arith.constant 0 : index
    %c112_247 = arith.constant 112 : index
    %260 = vector.load %arg27[%c0_246, %c112_247] : memref<24x512xf32, #tpu.memory_space<vmem>>, vector<8x256xf32>
    %c8_248 = arith.constant 8 : index
    %c0_249 = arith.constant 0 : index
    %261 = vector.load %arg28[%c8_248, %c0_249] : memref<144x256xf32, #tpu.memory_space<vmem>>, vector<8x256xf32>
    tpu.vector_store %arg28[%c8_248, %c0_249], %260 {strides = array<i32>} : memref<144x256xf32, #tpu.memory_space<vmem>>, vector<8x256xf32>,
    %c0_250 = arith.constant 0 : index
    %c113_251 = arith.constant 113 : index
    %262 = vector.load %arg27[%c0_250, %c113_251] : memref<24x512xf32, #tpu.memory_space<vmem>>, vector<8x256xf32>
    %cst_252 = arith.constant 0.000000e+00 : f32
    %263 = vector.shape_cast %20 : vector<1x256xi1> to vector<1x256xi1>
    %264 = vector.broadcast %263 : vector<1x256xi1> to vector<8x256xi1>
    %265 = vector.broadcast %cst_252 : f32 to vector<8x256xf32>
    %266 = arith.select %264, %262, %265 : vector<8x256xi1>, vector<8x256xf32>
    %c16_253 = arith.constant 16 : index
    %c0_254 = arith.constant 0 : index
    %267 = vector.load %arg28[%c16_253, %c0_254] : memref<144x256xf32, #tpu.memory_space<vmem>>, vector<8x256xf32>
    tpu.vector_store %arg28[%c16_253, %c0_254], %266 {strides = array<i32>} : memref<144x256xf32, #tpu.memory_space<vmem>>, vector<8x256xf32>,
    %c0_255 = arith.constant 0 : index
    %c127_256 = arith.constant 127 : index
    %268 = vector.load %arg27[%c0_255, %c127_256] : memref<24x512xf32, #tpu.memory_space<vmem>>, vector<8x256xf32>
    %cst_257 = arith.constant 0.000000e+00 : f32
    %269 = vector.shape_cast %18 : vector<1x256xi1> to vector<1x256xi1>
    %270 = vector.broadcast %269 : vector<1x256xi1> to vector<8x256xi1>
    %271 = vector.broadcast %cst_257 : f32 to vector<8x256xf32>
    %272 = arith.select %270, %268, %271 : vector<8x256xi1>, vector<8x256xf32>
    %c24_258 = arith.constant 24 : index
    %c0_259 = arith.constant 0 : index
    %273 = vector.load %arg28[%c24_258, %c0_259] : memref<144x256xf32, #tpu.memory_space<vmem>>, vector<8x256xf32>
    tpu.vector_store %arg28[%c24_258, %c0_259], %272 {strides = array<i32>} : memref<144x256xf32, #tpu.memory_space<vmem>>, vector<8x256xf32>,
    %c0_260 = arith.constant 0 : index
    %c128_261 = arith.constant 128 : index
    %274 = vector.load %arg27[%c0_260, %c128_261] : memref<24x512xf32, #tpu.memory_space<vmem>>, vector<8x256xf32>
    %c32_262 = arith.constant 32 : index
    %c0_263 = arith.constant 0 : index
    %275 = vector.load %arg28[%c32_262, %c0_263] : memref<144x256xf32, #tpu.memory_space<vmem>>, vector<8x256xf32>
    tpu.vector_store %arg28[%c32_262, %c0_263], %274 {strides = array<i32>} : memref<144x256xf32, #tpu.memory_space<vmem>>, vector<8x256xf32>,
    %c0_264 = arith.constant 0 : index
    %c129_265 = arith.constant 129 : index
    %276 = vector.load %arg27[%c0_264, %c129_265] : memref<24x512xf32, #tpu.memory_space<vmem>>, vector<8x256xf32>
    %cst_266 = arith.constant 0.000000e+00 : f32
    %277 = vector.shape_cast %20 : vector<1x256xi1> to vector<1x256xi1>
    %278 = vector.broadcast %277 : vector<1x256xi1> to vector<8x256xi1>
    %279 = vector.broadcast %cst_266 : f32 to vector<8x256xf32>
    %280 = arith.select %278, %276, %279 : vector<8x256xi1>, vector<8x256xf32>
    %c40_267 = arith.constant 40 : index
    %c0_268 = arith.constant 0 : index
    %281 = vector.load %arg28[%c40_267, %c0_268] : memref<144x256xf32, #tpu.memory_space<vmem>>, vector<8x256xf32>
    tpu.vector_store %arg28[%c40_267, %c0_268], %280 {strides = array<i32>} : memref<144x256xf32, #tpu.memory_space<vmem>>, vector<8x256xf32>,
    %c0_269 = arith.constant 0 : index
    %c143_270 = arith.constant 143 : index
    %282 = vector.load %arg27[%c0_269, %c143_270] : memref<24x512xf32, #tpu.memory_space<vmem>>, vector<8x256xf32>
    %cst_271 = arith.constant 0.000000e+00 : f32
    %283 = vector.shape_cast %18 : vector<1x256xi1> to vector<1x256xi1>
    %284 = vector.broadcast %283 : vector<1x256xi1> to vector<8x256xi1>
    %285 = vector.broadcast %cst_271 : f32 to vector<8x256xf32>
    %286 = arith.select %284, %282, %285 : vector<8x256xi1>, vector<8x256xf32>
    %c48_272 = arith.constant 48 : index
    %c0_273 = arith.constant 0 : index
    %287 = vector.load %arg28[%c48_272, %c0_273] : memref<144x256xf32, #tpu.memory_space<vmem>>, vector<8x256xf32>
    tpu.vector_store %arg28[%c48_272, %c0_273], %286 {strides = array<i32>} : memref<144x256xf32, #tpu.memory_space<vmem>>, vector<8x256xf32>,
    %c0_274 = arith.constant 0 : index
    %c144_275 = arith.constant 144 : index
    %288 = vector.load %arg27[%c0_274, %c144_275] : memref<24x512xf32, #tpu.memory_space<vmem>>, vector<8x256xf32>
    %c56_276 = arith.constant 56 : index
    %c0_277 = arith.constant 0 : index
    %289 = vector.load %arg28[%c56_276, %c0_277] : memref<144x256xf32, #tpu.memory_space<vmem>>, vector<8x256xf32>
    tpu.vector_store %arg28[%c56_276, %c0_277], %288 {strides = array<i32>} : memref<144x256xf32, #tpu.memory_space<vmem>>, vector<8x256xf32>,
    %c0_278 = arith.constant 0 : index
    %c145_279 = arith.constant 145 : index
    %290 = vector.load %arg27[%c0_278, %c145_279] : memref<24x512xf32, #tpu.memory_space<vmem>>, vector<8x256xf32>
    %cst_280 = arith.constant 0.000000e+00 : f32
    %291 = vector.shape_cast %20 : vector<1x256xi1> to vector<1x256xi1>
    %292 = vector.broadcast %291 : vector<1x256xi1> to vector<8x256xi1>
    %293 = vector.broadcast %cst_280 : f32 to vector<8x256xf32>
    %294 = arith.select %292, %290, %293 : vector<8x256xi1>, vector<8x256xf32>
    %c64_281 = arith.constant 64 : index
    %c0_282 = arith.constant 0 : index
    %295 = vector.load %arg28[%c64_281, %c0_282] : memref<144x256xf32, #tpu.memory_space<vmem>>, vector<8x256xf32>
    tpu.vector_store %arg28[%c64_281, %c0_282], %294 {strides = array<i32>} : memref<144x256xf32, #tpu.memory_space<vmem>>, vector<8x256xf32>,
    %c0_283 = arith.constant 0 : index
    %c0_284 = arith.constant 0 : index
    %296 = vector.load %arg28[%c0_283, %c0_284] : memref<144x256xf32, #tpu.memory_space<vmem>>, vector<72x256xf32>
    %297 = arith.truncf %296 : vector<72x256xf32> to vector<72x256xbf16>
    %cst_285 = arith.constant dense<0.000000e+00> : vector<8x256xf32>
    %298 = tpu.matmul %31, %297, %cst_285 {dimension_numbers = #tpu.dot_dimension_numbers<[1], [0], [0], [1], [0, 0, 1, 1], [], []>} : vector<8x72xbf16>, vector<72x256xbf16>, vector<8x256xf32> -> vector<8x256xf32>
    %cst_286 = arith.constant 0.000000e+00 : f32
    %299 = vector.broadcast %cst_286 : f32 to vector<8x256xf32>
    %300 = arith.maximumf %298, %299 : vector<8x256xf32>
    %c8_287 = arith.constant 8 : index
    %c128_288 = arith.constant 128 : index
    %301 = vector.load %arg27[%c8_287, %c128_288] : memref<24x512xf32, #tpu.memory_space<vmem>>, vector<8x256xf32>
    tpu.vector_store %arg27[%c8_287, %c128_288], %300 {strides = array<i32>} : memref<24x512xf32, #tpu.memory_space<vmem>>, vector<8x256xf32>,
    %c0_289 = arith.constant 0 : index
    %c111_290 = arith.constant 111 : index
    %302 = vector.load %arg27[%c0_289, %c111_290] : memref<24x512xf32, #tpu.memory_space<vmem>>, vector<16x256xf32>
    %cst_291 = arith.constant 0.000000e+00 : f32
    %303 = vector.shape_cast %18 : vector<1x256xi1> to vector<1x256xi1>
    %304 = vector.broadcast %303 : vector<1x256xi1> to vector<16x256xi1>
    %305 = vector.broadcast %cst_291 : f32 to vector<16x256xf32>
    %306 = arith.select %304, %302, %305 : vector<16x256xi1>, vector<16x256xf32>
    %c0_292 = arith.constant 0 : index
    %c0_293 = arith.constant 0 : index
    %307 = vector.load %arg28[%c0_292, %c0_293] : memref<144x256xf32, #tpu.memory_space<vmem>>, vector<16x256xf32>
    tpu.vector_store %arg28[%c0_292, %c0_293], %306 {strides = array<i32>} : memref<144x256xf32, #tpu.memory_space<vmem>>, vector<16x256xf32>,
    %c0_294 = arith.constant 0 : index
    %c112_295 = arith.constant 112 : index
    %308 = vector.load %arg27[%c0_294, %c112_295] : memref<24x512xf32, #tpu.memory_space<vmem>>, vector<16x256xf32>
    %c16_296 = arith.constant 16 : index
    %c0_297 = arith.constant 0 : index
    %309 = vector.load %arg28[%c16_296, %c0_297] : memref<144x256xf32, #tpu.memory_space<vmem>>, vector<16x256xf32>
    tpu.vector_store %arg28[%c16_296, %c0_297], %308 {strides = array<i32>} : memref<144x256xf32, #tpu.memory_space<vmem>>, vector<16x256xf32>,
    %c0_298 = arith.constant 0 : index
    %c113_299 = arith.constant 113 : index
    %310 = vector.load %arg27[%c0_298, %c113_299] : memref<24x512xf32, #tpu.memory_space<vmem>>, vector<16x256xf32>
    %cst_300 = arith.constant 0.000000e+00 : f32
    %311 = vector.shape_cast %20 : vector<1x256xi1> to vector<1x256xi1>
    %312 = vector.broadcast %311 : vector<1x256xi1> to vector<16x256xi1>
    %313 = vector.broadcast %cst_300 : f32 to vector<16x256xf32>
    %314 = arith.select %312, %310, %313 : vector<16x256xi1>, vector<16x256xf32>
    %c32_301 = arith.constant 32 : index
    %c0_302 = arith.constant 0 : index
    %315 = vector.load %arg28[%c32_301, %c0_302] : memref<144x256xf32, #tpu.memory_space<vmem>>, vector<16x256xf32>
    tpu.vector_store %arg28[%c32_301, %c0_302], %314 {strides = array<i32>} : memref<144x256xf32, #tpu.memory_space<vmem>>, vector<16x256xf32>,
    %c0_303 = arith.constant 0 : index
    %c127_304 = arith.constant 127 : index
    %316 = vector.load %arg27[%c0_303, %c127_304] : memref<24x512xf32, #tpu.memory_space<vmem>>, vector<16x256xf32>
    %cst_305 = arith.constant 0.000000e+00 : f32
    %317 = vector.shape_cast %18 : vector<1x256xi1> to vector<1x256xi1>
    %318 = vector.broadcast %317 : vector<1x256xi1> to vector<16x256xi1>
    %319 = vector.broadcast %cst_305 : f32 to vector<16x256xf32>
    %320 = arith.select %318, %316, %319 : vector<16x256xi1>, vector<16x256xf32>
    %c48_306 = arith.constant 48 : index
    %c0_307 = arith.constant 0 : index
    %321 = vector.load %arg28[%c48_306, %c0_307] : memref<144x256xf32, #tpu.memory_space<vmem>>, vector<16x256xf32>
    tpu.vector_store %arg28[%c48_306, %c0_307], %320 {strides = array<i32>} : memref<144x256xf32, #tpu.memory_space<vmem>>, vector<16x256xf32>,
    %c0_308 = arith.constant 0 : index
    %c128_309 = arith.constant 128 : index
    %322 = vector.load %arg27[%c0_308, %c128_309] : memref<24x512xf32, #tpu.memory_space<vmem>>, vector<16x256xf32>
    %c64_310 = arith.constant 64 : index
    %c0_311 = arith.constant 0 : index
    %323 = vector.load %arg28[%c64_310, %c0_311] : memref<144x256xf32, #tpu.memory_space<vmem>>, vector<16x256xf32>
    tpu.vector_store %arg28[%c64_310, %c0_311], %322 {strides = array<i32>} : memref<144x256xf32, #tpu.memory_space<vmem>>, vector<16x256xf32>,
    %c0_312 = arith.constant 0 : index
    %c129_313 = arith.constant 129 : index
    %324 = vector.load %arg27[%c0_312, %c129_313] : memref<24x512xf32, #tpu.memory_space<vmem>>, vector<16x256xf32>
    %cst_314 = arith.constant 0.000000e+00 : f32
    %325 = vector.shape_cast %20 : vector<1x256xi1> to vector<1x256xi1>
    %326 = vector.broadcast %325 : vector<1x256xi1> to vector<16x256xi1>
    %327 = vector.broadcast %cst_314 : f32 to vector<16x256xf32>
    %328 = arith.select %326, %324, %327 : vector<16x256xi1>, vector<16x256xf32>
    %c80_315 = arith.constant 80 : index
    %c0_316 = arith.constant 0 : index
    %329 = vector.load %arg28[%c80_315, %c0_316] : memref<144x256xf32, #tpu.memory_space<vmem>>, vector<16x256xf32>
    tpu.vector_store %arg28[%c80_315, %c0_316], %328 {strides = array<i32>} : memref<144x256xf32, #tpu.memory_space<vmem>>, vector<16x256xf32>,
    %c0_317 = arith.constant 0 : index
    %c143_318 = arith.constant 143 : index
    %330 = vector.load %arg27[%c0_317, %c143_318] : memref<24x512xf32, #tpu.memory_space<vmem>>, vector<16x256xf32>
    %cst_319 = arith.constant 0.000000e+00 : f32
    %331 = vector.shape_cast %18 : vector<1x256xi1> to vector<1x256xi1>
    %332 = vector.broadcast %331 : vector<1x256xi1> to vector<16x256xi1>
    %333 = vector.broadcast %cst_319 : f32 to vector<16x256xf32>
    %334 = arith.select %332, %330, %333 : vector<16x256xi1>, vector<16x256xf32>
    %c96_320 = arith.constant 96 : index
    %c0_321 = arith.constant 0 : index
    %335 = vector.load %arg28[%c96_320, %c0_321] : memref<144x256xf32, #tpu.memory_space<vmem>>, vector<16x256xf32>
    tpu.vector_store %arg28[%c96_320, %c0_321], %334 {strides = array<i32>} : memref<144x256xf32, #tpu.memory_space<vmem>>, vector<16x256xf32>,
    %c0_322 = arith.constant 0 : index
    %c144_323 = arith.constant 144 : index
    %336 = vector.load %arg27[%c0_322, %c144_323] : memref<24x512xf32, #tpu.memory_space<vmem>>, vector<16x256xf32>
    %c112_324 = arith.constant 112 : index
    %c0_325 = arith.constant 0 : index
    %337 = vector.load %arg28[%c112_324, %c0_325] : memref<144x256xf32, #tpu.memory_space<vmem>>, vector<16x256xf32>
    tpu.vector_store %arg28[%c112_324, %c0_325], %336 {strides = array<i32>} : memref<144x256xf32, #tpu.memory_space<vmem>>, vector<16x256xf32>,
    %c0_326 = arith.constant 0 : index
    %c145_327 = arith.constant 145 : index
    %338 = vector.load %arg27[%c0_326, %c145_327] : memref<24x512xf32, #tpu.memory_space<vmem>>, vector<16x256xf32>
    %cst_328 = arith.constant 0.000000e+00 : f32
    %339 = vector.shape_cast %20 : vector<1x256xi1> to vector<1x256xi1>
    %340 = vector.broadcast %339 : vector<1x256xi1> to vector<16x256xi1>
    %341 = vector.broadcast %cst_328 : f32 to vector<16x256xf32>
    %342 = arith.select %340, %338, %341 : vector<16x256xi1>, vector<16x256xf32>
    %c128_329 = arith.constant 128 : index
    %c0_330 = arith.constant 0 : index
    %343 = vector.load %arg28[%c128_329, %c0_330] : memref<144x256xf32, #tpu.memory_space<vmem>>, vector<16x256xf32>
    tpu.vector_store %arg28[%c128_329, %c0_330], %342 {strides = array<i32>} : memref<144x256xf32, #tpu.memory_space<vmem>>, vector<16x256xf32>,
    %c0_331 = arith.constant 0 : index
    %c0_332 = arith.constant 0 : index
    %344 = vector.load %arg28[%c0_331, %c0_332] : memref<144x256xf32, #tpu.memory_space<vmem>>, vector<144x256xf32>
    %345 = arith.truncf %344 : vector<144x256xf32> to vector<144x256xbf16>
    %cst_333 = arith.constant dense<0.000000e+00> : vector<8x256xf32>
    %346 = tpu.matmul %32, %345, %cst_333 {dimension_numbers = #tpu.dot_dimension_numbers<[1], [0], [0], [1], [0, 0, 1, 1], [], []>} : vector<8x144xbf16>, vector<144x256xbf16>, vector<8x256xf32> -> vector<8x256xf32>
    %cst_334 = arith.constant 0.000000e+00 : f32
    %347 = vector.broadcast %cst_334 : f32 to vector<8x256xf32>
    %348 = arith.maximumf %346, %347 : vector<8x256xf32>
    %c16_335 = arith.constant 16 : index
    %c128_336 = arith.constant 128 : index
    %349 = vector.load %arg27[%c16_335, %c128_336] : memref<24x512xf32, #tpu.memory_space<vmem>>, vector<8x256xf32>
    tpu.vector_store %arg27[%c16_335, %c128_336], %348 {strides = array<i32>} : memref<24x512xf32, #tpu.memory_space<vmem>>, vector<8x256xf32>,
    %c0_337 = arith.constant 0 : index
    %c128_338 = arith.constant 128 : index
    %350 = vector.load %arg27[%c0_337, %c128_338] : memref<24x512xf32, #tpu.memory_space<vmem>>, vector<24x256xf32>
    %351 = arith.truncf %350 : vector<24x256xf32> to vector<24x256xbf16>
    %cst_339 = arith.constant dense<0.000000e+00> : vector<8x256xf32>
    %352 = tpu.matmul %33, %351, %cst_339 {dimension_numbers = #tpu.dot_dimension_numbers<[1], [0], [0], [1], [0, 0, 1, 1], [], []>} : vector<8x24xbf16>, vector<24x256xbf16>, vector<8x256xf32> -> vector<8x256xf32>
    %353 = vector.broadcast %34 : vector<8x1xf32> to vector<8x256xf32>
    %354 = arith.addf %352, %353 : vector<8x256xf32>
    %c0_340 = arith.constant 0 : index
    %c128_341 = arith.constant 128 : index
    %355 = vector.load %arg27[%c0_340, %c128_341] : memref<24x512xf32, #tpu.memory_space<vmem>>, vector<8x256xf32>
    tpu.vector_store %arg27[%c0_340, %c128_341], %354 {strides = array<i32>} : memref<24x512xf32, #tpu.memory_space<vmem>>, vector<8x256xf32>,
    %c0_342 = arith.constant 0 : index
    %c111_343 = arith.constant 111 : index
    %356 = vector.load %arg27[%c0_342, %c111_343] : memref<24x512xf32, #tpu.memory_space<vmem>>, vector<8x256xf32>
    %cst_344 = arith.constant 0.000000e+00 : f32
    %357 = vector.shape_cast %18 : vector<1x256xi1> to vector<1x256xi1>
    %358 = vector.broadcast %357 : vector<1x256xi1> to vector<8x256xi1>
    %359 = vector.broadcast %cst_344 : f32 to vector<8x256xf32>
    %360 = arith.select %358, %356, %359 : vector<8x256xi1>, vector<8x256xf32>
    %c0_345 = arith.constant 0 : index
    %c0_346 = arith.constant 0 : index
    %361 = vector.load %arg28[%c0_345, %c0_346] : memref<144x256xf32, #tpu.memory_space<vmem>>, vector<8x256xf32>
    tpu.vector_store %arg28[%c0_345, %c0_346], %360 {strides = array<i32>} : memref<144x256xf32, #tpu.memory_space<vmem>>, vector<8x256xf32>,
    %c0_347 = arith.constant 0 : index
    %c112_348 = arith.constant 112 : index
    %362 = vector.load %arg27[%c0_347, %c112_348] : memref<24x512xf32, #tpu.memory_space<vmem>>, vector<8x256xf32>
    %c8_349 = arith.constant 8 : index
    %c0_350 = arith.constant 0 : index
    %363 = vector.load %arg28[%c8_349, %c0_350] : memref<144x256xf32, #tpu.memory_space<vmem>>, vector<8x256xf32>
    tpu.vector_store %arg28[%c8_349, %c0_350], %362 {strides = array<i32>} : memref<144x256xf32, #tpu.memory_space<vmem>>, vector<8x256xf32>,
    %c0_351 = arith.constant 0 : index
    %c113_352 = arith.constant 113 : index
    %364 = vector.load %arg27[%c0_351, %c113_352] : memref<24x512xf32, #tpu.memory_space<vmem>>, vector<8x256xf32>
    %cst_353 = arith.constant 0.000000e+00 : f32
    %365 = vector.shape_cast %20 : vector<1x256xi1> to vector<1x256xi1>
    %366 = vector.broadcast %365 : vector<1x256xi1> to vector<8x256xi1>
    %367 = vector.broadcast %cst_353 : f32 to vector<8x256xf32>
    %368 = arith.select %366, %364, %367 : vector<8x256xi1>, vector<8x256xf32>
    %c16_354 = arith.constant 16 : index
    %c0_355 = arith.constant 0 : index
    %369 = vector.load %arg28[%c16_354, %c0_355] : memref<144x256xf32, #tpu.memory_space<vmem>>, vector<8x256xf32>
    tpu.vector_store %arg28[%c16_354, %c0_355], %368 {strides = array<i32>} : memref<144x256xf32, #tpu.memory_space<vmem>>, vector<8x256xf32>,
    %c0_356 = arith.constant 0 : index
    %c127_357 = arith.constant 127 : index
    %370 = vector.load %arg27[%c0_356, %c127_357] : memref<24x512xf32, #tpu.memory_space<vmem>>, vector<8x256xf32>
    %cst_358 = arith.constant 0.000000e+00 : f32
    %371 = vector.shape_cast %18 : vector<1x256xi1> to vector<1x256xi1>
    %372 = vector.broadcast %371 : vector<1x256xi1> to vector<8x256xi1>
    %373 = vector.broadcast %cst_358 : f32 to vector<8x256xf32>
    %374 = arith.select %372, %370, %373 : vector<8x256xi1>, vector<8x256xf32>
    %c24_359 = arith.constant 24 : index
    %c0_360 = arith.constant 0 : index
    %375 = vector.load %arg28[%c24_359, %c0_360] : memref<144x256xf32, #tpu.memory_space<vmem>>, vector<8x256xf32>
    tpu.vector_store %arg28[%c24_359, %c0_360], %374 {strides = array<i32>} : memref<144x256xf32, #tpu.memory_space<vmem>>, vector<8x256xf32>,
    %c0_361 = arith.constant 0 : index
    %c128_362 = arith.constant 128 : index
    %376 = vector.load %arg27[%c0_361, %c128_362] : memref<24x512xf32, #tpu.memory_space<vmem>>, vector<8x256xf32>
    %c32_363 = arith.constant 32 : index
    %c0_364 = arith.constant 0 : index
    %377 = vector.load %arg28[%c32_363, %c0_364] : memref<144x256xf32, #tpu.memory_space<vmem>>, vector<8x256xf32>
    tpu.vector_store %arg28[%c32_363, %c0_364], %376 {strides = array<i32>} : memref<144x256xf32, #tpu.memory_space<vmem>>, vector<8x256xf32>,
    %c0_365 = arith.constant 0 : index
    %c129_366 = arith.constant 129 : index
    %378 = vector.load %arg27[%c0_365, %c129_366] : memref<24x512xf32, #tpu.memory_space<vmem>>, vector<8x256xf32>
    %cst_367 = arith.constant 0.000000e+00 : f32
    %379 = vector.shape_cast %20 : vector<1x256xi1> to vector<1x256xi1>
    %380 = vector.broadcast %379 : vector<1x256xi1> to vector<8x256xi1>
    %381 = vector.broadcast %cst_367 : f32 to vector<8x256xf32>
    %382 = arith.select %380, %378, %381 : vector<8x256xi1>, vector<8x256xf32>
    %c40_368 = arith.constant 40 : index
    %c0_369 = arith.constant 0 : index
    %383 = vector.load %arg28[%c40_368, %c0_369] : memref<144x256xf32, #tpu.memory_space<vmem>>, vector<8x256xf32>
    tpu.vector_store %arg28[%c40_368, %c0_369], %382 {strides = array<i32>} : memref<144x256xf32, #tpu.memory_space<vmem>>, vector<8x256xf32>,
    %c0_370 = arith.constant 0 : index
    %c143_371 = arith.constant 143 : index
    %384 = vector.load %arg27[%c0_370, %c143_371] : memref<24x512xf32, #tpu.memory_space<vmem>>, vector<8x256xf32>
    %cst_372 = arith.constant 0.000000e+00 : f32
    %385 = vector.shape_cast %18 : vector<1x256xi1> to vector<1x256xi1>
    %386 = vector.broadcast %385 : vector<1x256xi1> to vector<8x256xi1>
    %387 = vector.broadcast %cst_372 : f32 to vector<8x256xf32>
    %388 = arith.select %386, %384, %387 : vector<8x256xi1>, vector<8x256xf32>
    %c48_373 = arith.constant 48 : index
    %c0_374 = arith.constant 0 : index
    %389 = vector.load %arg28[%c48_373, %c0_374] : memref<144x256xf32, #tpu.memory_space<vmem>>, vector<8x256xf32>
    tpu.vector_store %arg28[%c48_373, %c0_374], %388 {strides = array<i32>} : memref<144x256xf32, #tpu.memory_space<vmem>>, vector<8x256xf32>,
    %c0_375 = arith.constant 0 : index
    %c144_376 = arith.constant 144 : index
    %390 = vector.load %arg27[%c0_375, %c144_376] : memref<24x512xf32, #tpu.memory_space<vmem>>, vector<8x256xf32>
    %c56_377 = arith.constant 56 : index
    %c0_378 = arith.constant 0 : index
    %391 = vector.load %arg28[%c56_377, %c0_378] : memref<144x256xf32, #tpu.memory_space<vmem>>, vector<8x256xf32>
    tpu.vector_store %arg28[%c56_377, %c0_378], %390 {strides = array<i32>} : memref<144x256xf32, #tpu.memory_space<vmem>>, vector<8x256xf32>,
    %c0_379 = arith.constant 0 : index
    %c145_380 = arith.constant 145 : index
    %392 = vector.load %arg27[%c0_379, %c145_380] : memref<24x512xf32, #tpu.memory_space<vmem>>, vector<8x256xf32>
    %cst_381 = arith.constant 0.000000e+00 : f32
    %393 = vector.shape_cast %20 : vector<1x256xi1> to vector<1x256xi1>
    %394 = vector.broadcast %393 : vector<1x256xi1> to vector<8x256xi1>
    %395 = vector.broadcast %cst_381 : f32 to vector<8x256xf32>
    %396 = arith.select %394, %392, %395 : vector<8x256xi1>, vector<8x256xf32>
    %c64_382 = arith.constant 64 : index
    %c0_383 = arith.constant 0 : index
    %397 = vector.load %arg28[%c64_382, %c0_383] : memref<144x256xf32, #tpu.memory_space<vmem>>, vector<8x256xf32>
    tpu.vector_store %arg28[%c64_382, %c0_383], %396 {strides = array<i32>} : memref<144x256xf32, #tpu.memory_space<vmem>>, vector<8x256xf32>,
    %c0_384 = arith.constant 0 : index
    %c0_385 = arith.constant 0 : index
    %398 = vector.load %arg28[%c0_384, %c0_385] : memref<144x256xf32, #tpu.memory_space<vmem>>, vector<72x256xf32>
    %399 = arith.truncf %398 : vector<72x256xf32> to vector<72x256xbf16>
    %cst_386 = arith.constant dense<0.000000e+00> : vector<8x256xf32>
    %400 = tpu.matmul %35, %399, %cst_386 {dimension_numbers = #tpu.dot_dimension_numbers<[1], [0], [0], [1], [0, 0, 1, 1], [], []>} : vector<8x72xbf16>, vector<72x256xbf16>, vector<8x256xf32> -> vector<8x256xf32>
    %cst_387 = arith.constant 0.000000e+00 : f32
    %401 = vector.broadcast %cst_387 : f32 to vector<8x256xf32>
    %402 = arith.maximumf %400, %401 : vector<8x256xf32>
    %c8_388 = arith.constant 8 : index
    %c128_389 = arith.constant 128 : index
    %403 = vector.load %arg27[%c8_388, %c128_389] : memref<24x512xf32, #tpu.memory_space<vmem>>, vector<8x256xf32>
    tpu.vector_store %arg27[%c8_388, %c128_389], %402 {strides = array<i32>} : memref<24x512xf32, #tpu.memory_space<vmem>>, vector<8x256xf32>,
    %c0_390 = arith.constant 0 : index
    %c111_391 = arith.constant 111 : index
    %404 = vector.load %arg27[%c0_390, %c111_391] : memref<24x512xf32, #tpu.memory_space<vmem>>, vector<16x256xf32>
    %cst_392 = arith.constant 0.000000e+00 : f32
    %405 = vector.shape_cast %18 : vector<1x256xi1> to vector<1x256xi1>
    %406 = vector.broadcast %405 : vector<1x256xi1> to vector<16x256xi1>
    %407 = vector.broadcast %cst_392 : f32 to vector<16x256xf32>
    %408 = arith.select %406, %404, %407 : vector<16x256xi1>, vector<16x256xf32>
    %c0_393 = arith.constant 0 : index
    %c0_394 = arith.constant 0 : index
    %409 = vector.load %arg28[%c0_393, %c0_394] : memref<144x256xf32, #tpu.memory_space<vmem>>, vector<16x256xf32>
    tpu.vector_store %arg28[%c0_393, %c0_394], %408 {strides = array<i32>} : memref<144x256xf32, #tpu.memory_space<vmem>>, vector<16x256xf32>,
    %c0_395 = arith.constant 0 : index
    %c112_396 = arith.constant 112 : index
    %410 = vector.load %arg27[%c0_395, %c112_396] : memref<24x512xf32, #tpu.memory_space<vmem>>, vector<16x256xf32>
    %c16_397 = arith.constant 16 : index
    %c0_398 = arith.constant 0 : index
    %411 = vector.load %arg28[%c16_397, %c0_398] : memref<144x256xf32, #tpu.memory_space<vmem>>, vector<16x256xf32>
    tpu.vector_store %arg28[%c16_397, %c0_398], %410 {strides = array<i32>} : memref<144x256xf32, #tpu.memory_space<vmem>>, vector<16x256xf32>,
    %c0_399 = arith.constant 0 : index
    %c113_400 = arith.constant 113 : index
    %412 = vector.load %arg27[%c0_399, %c113_400] : memref<24x512xf32, #tpu.memory_space<vmem>>, vector<16x256xf32>
    %cst_401 = arith.constant 0.000000e+00 : f32
    %413 = vector.shape_cast %20 : vector<1x256xi1> to vector<1x256xi1>
    %414 = vector.broadcast %413 : vector<1x256xi1> to vector<16x256xi1>
    %415 = vector.broadcast %cst_401 : f32 to vector<16x256xf32>
    %416 = arith.select %414, %412, %415 : vector<16x256xi1>, vector<16x256xf32>
    %c32_402 = arith.constant 32 : index
    %c0_403 = arith.constant 0 : index
    %417 = vector.load %arg28[%c32_402, %c0_403] : memref<144x256xf32, #tpu.memory_space<vmem>>, vector<16x256xf32>
    tpu.vector_store %arg28[%c32_402, %c0_403], %416 {strides = array<i32>} : memref<144x256xf32, #tpu.memory_space<vmem>>, vector<16x256xf32>,
    %c0_404 = arith.constant 0 : index
    %c127_405 = arith.constant 127 : index
    %418 = vector.load %arg27[%c0_404, %c127_405] : memref<24x512xf32, #tpu.memory_space<vmem>>, vector<16x256xf32>
    %cst_406 = arith.constant 0.000000e+00 : f32
    %419 = vector.shape_cast %18 : vector<1x256xi1> to vector<1x256xi1>
    %420 = vector.broadcast %419 : vector<1x256xi1> to vector<16x256xi1>
    %421 = vector.broadcast %cst_406 : f32 to vector<16x256xf32>
    %422 = arith.select %420, %418, %421 : vector<16x256xi1>, vector<16x256xf32>
    %c48_407 = arith.constant 48 : index
    %c0_408 = arith.constant 0 : index
    %423 = vector.load %arg28[%c48_407, %c0_408] : memref<144x256xf32, #tpu.memory_space<vmem>>, vector<16x256xf32>
    tpu.vector_store %arg28[%c48_407, %c0_408], %422 {strides = array<i32>} : memref<144x256xf32, #tpu.memory_space<vmem>>, vector<16x256xf32>,
    %c0_409 = arith.constant 0 : index
    %c128_410 = arith.constant 128 : index
    %424 = vector.load %arg27[%c0_409, %c128_410] : memref<24x512xf32, #tpu.memory_space<vmem>>, vector<16x256xf32>
    %c64_411 = arith.constant 64 : index
    %c0_412 = arith.constant 0 : index
    %425 = vector.load %arg28[%c64_411, %c0_412] : memref<144x256xf32, #tpu.memory_space<vmem>>, vector<16x256xf32>
    tpu.vector_store %arg28[%c64_411, %c0_412], %424 {strides = array<i32>} : memref<144x256xf32, #tpu.memory_space<vmem>>, vector<16x256xf32>,
    %c0_413 = arith.constant 0 : index
    %c129_414 = arith.constant 129 : index
    %426 = vector.load %arg27[%c0_413, %c129_414] : memref<24x512xf32, #tpu.memory_space<vmem>>, vector<16x256xf32>
    %cst_415 = arith.constant 0.000000e+00 : f32
    %427 = vector.shape_cast %20 : vector<1x256xi1> to vector<1x256xi1>
    %428 = vector.broadcast %427 : vector<1x256xi1> to vector<16x256xi1>
    %429 = vector.broadcast %cst_415 : f32 to vector<16x256xf32>
    %430 = arith.select %428, %426, %429 : vector<16x256xi1>, vector<16x256xf32>
    %c80_416 = arith.constant 80 : index
    %c0_417 = arith.constant 0 : index
    %431 = vector.load %arg28[%c80_416, %c0_417] : memref<144x256xf32, #tpu.memory_space<vmem>>, vector<16x256xf32>
    tpu.vector_store %arg28[%c80_416, %c0_417], %430 {strides = array<i32>} : memref<144x256xf32, #tpu.memory_space<vmem>>, vector<16x256xf32>,
    %c0_418 = arith.constant 0 : index
    %c143_419 = arith.constant 143 : index
    %432 = vector.load %arg27[%c0_418, %c143_419] : memref<24x512xf32, #tpu.memory_space<vmem>>, vector<16x256xf32>
    %cst_420 = arith.constant 0.000000e+00 : f32
    %433 = vector.shape_cast %18 : vector<1x256xi1> to vector<1x256xi1>
    %434 = vector.broadcast %433 : vector<1x256xi1> to vector<16x256xi1>
    %435 = vector.broadcast %cst_420 : f32 to vector<16x256xf32>
    %436 = arith.select %434, %432, %435 : vector<16x256xi1>, vector<16x256xf32>
    %c96_421 = arith.constant 96 : index
    %c0_422 = arith.constant 0 : index
    %437 = vector.load %arg28[%c96_421, %c0_422] : memref<144x256xf32, #tpu.memory_space<vmem>>, vector<16x256xf32>
    tpu.vector_store %arg28[%c96_421, %c0_422], %436 {strides = array<i32>} : memref<144x256xf32, #tpu.memory_space<vmem>>, vector<16x256xf32>,
    %c0_423 = arith.constant 0 : index
    %c144_424 = arith.constant 144 : index
    %438 = vector.load %arg27[%c0_423, %c144_424] : memref<24x512xf32, #tpu.memory_space<vmem>>, vector<16x256xf32>
    %c112_425 = arith.constant 112 : index
    %c0_426 = arith.constant 0 : index
    %439 = vector.load %arg28[%c112_425, %c0_426] : memref<144x256xf32, #tpu.memory_space<vmem>>, vector<16x256xf32>
    tpu.vector_store %arg28[%c112_425, %c0_426], %438 {strides = array<i32>} : memref<144x256xf32, #tpu.memory_space<vmem>>, vector<16x256xf32>,
    %c0_427 = arith.constant 0 : index
    %c145_428 = arith.constant 145 : index
    %440 = vector.load %arg27[%c0_427, %c145_428] : memref<24x512xf32, #tpu.memory_space<vmem>>, vector<16x256xf32>
    %cst_429 = arith.constant 0.000000e+00 : f32
    %441 = vector.shape_cast %20 : vector<1x256xi1> to vector<1x256xi1>
    %442 = vector.broadcast %441 : vector<1x256xi1> to vector<16x256xi1>
    %443 = vector.broadcast %cst_429 : f32 to vector<16x256xf32>
    %444 = arith.select %442, %440, %443 : vector<16x256xi1>, vector<16x256xf32>
    %c128_430 = arith.constant 128 : index
    %c0_431 = arith.constant 0 : index
    %445 = vector.load %arg28[%c128_430, %c0_431] : memref<144x256xf32, #tpu.memory_space<vmem>>, vector<16x256xf32>
    tpu.vector_store %arg28[%c128_430, %c0_431], %444 {strides = array<i32>} : memref<144x256xf32, #tpu.memory_space<vmem>>, vector<16x256xf32>,
    %c0_432 = arith.constant 0 : index
    %c0_433 = arith.constant 0 : index
    %446 = vector.load %arg28[%c0_432, %c0_433] : memref<144x256xf32, #tpu.memory_space<vmem>>, vector<144x256xf32>
    %447 = arith.truncf %446 : vector<144x256xf32> to vector<144x256xbf16>
    %cst_434 = arith.constant dense<0.000000e+00> : vector<8x256xf32>
    %448 = tpu.matmul %36, %447, %cst_434 {dimension_numbers = #tpu.dot_dimension_numbers<[1], [0], [0], [1], [0, 0, 1, 1], [], []>} : vector<8x144xbf16>, vector<144x256xbf16>, vector<8x256xf32> -> vector<8x256xf32>
    %cst_435 = arith.constant 0.000000e+00 : f32
    %449 = vector.broadcast %cst_435 : f32 to vector<8x256xf32>
    %450 = arith.maximumf %448, %449 : vector<8x256xf32>
    %c16_436 = arith.constant 16 : index
    %c128_437 = arith.constant 128 : index
    %451 = vector.load %arg27[%c16_436, %c128_437] : memref<24x512xf32, #tpu.memory_space<vmem>>, vector<8x256xf32>
    tpu.vector_store %arg27[%c16_436, %c128_437], %450 {strides = array<i32>} : memref<24x512xf32, #tpu.memory_space<vmem>>, vector<8x256xf32>,
    %c0_438 = arith.constant 0 : index
    %c128_439 = arith.constant 128 : index
    %452 = vector.load %arg27[%c0_438, %c128_439] : memref<24x512xf32, #tpu.memory_space<vmem>>, vector<24x256xf32>
    %453 = arith.truncf %452 : vector<24x256xf32> to vector<24x256xbf16>
    %cst_440 = arith.constant dense<0.000000e+00> : vector<8x256xf32>
    %454 = tpu.matmul %37, %453, %cst_440 {dimension_numbers = #tpu.dot_dimension_numbers<[1], [0], [0], [1], [0, 0, 1, 1], [], []>} : vector<8x24xbf16>, vector<24x256xbf16>, vector<8x256xf32> -> vector<8x256xf32>
    %455 = vector.broadcast %38 : vector<8x1xf32> to vector<8x256xf32>
    %456 = arith.addf %454, %455 : vector<8x256xf32>
    %457 = arith.addf %456, %252 : vector<8x256xf32>
    %c0_441 = arith.constant 0 : index
    %c128_442 = arith.constant 128 : index
    %458 = vector.load %arg27[%c0_441, %c128_442] : memref<24x512xf32, #tpu.memory_space<vmem>>, vector<8x256xf32>
    tpu.vector_store %arg27[%c0_441, %c128_442], %457 {strides = array<i32>} : memref<24x512xf32, #tpu.memory_space<vmem>>, vector<8x256xf32>,
    %c0_443 = arith.constant 0 : index
    %c111_444 = arith.constant 111 : index
    %459 = vector.load %arg27[%c0_443, %c111_444] : memref<24x512xf32, #tpu.memory_space<vmem>>, vector<8x256xf32>
    %cst_445 = arith.constant 0.000000e+00 : f32
    %460 = vector.shape_cast %18 : vector<1x256xi1> to vector<1x256xi1>
    %461 = vector.broadcast %460 : vector<1x256xi1> to vector<8x256xi1>
    %462 = vector.broadcast %cst_445 : f32 to vector<8x256xf32>
    %463 = arith.select %461, %459, %462 : vector<8x256xi1>, vector<8x256xf32>
    %c0_446 = arith.constant 0 : index
    %c0_447 = arith.constant 0 : index
    %464 = vector.load %arg28[%c0_446, %c0_447] : memref<144x256xf32, #tpu.memory_space<vmem>>, vector<8x256xf32>
    tpu.vector_store %arg28[%c0_446, %c0_447], %463 {strides = array<i32>} : memref<144x256xf32, #tpu.memory_space<vmem>>, vector<8x256xf32>,
    %c0_448 = arith.constant 0 : index
    %c112_449 = arith.constant 112 : index
    %465 = vector.load %arg27[%c0_448, %c112_449] : memref<24x512xf32, #tpu.memory_space<vmem>>, vector<8x256xf32>
    %c8_450 = arith.constant 8 : index
    %c0_451 = arith.constant 0 : index
    %466 = vector.load %arg28[%c8_450, %c0_451] : memref<144x256xf32, #tpu.memory_space<vmem>>, vector<8x256xf32>
    tpu.vector_store %arg28[%c8_450, %c0_451], %465 {strides = array<i32>} : memref<144x256xf32, #tpu.memory_space<vmem>>, vector<8x256xf32>,
    %c0_452 = arith.constant 0 : index
    %c113_453 = arith.constant 113 : index
    %467 = vector.load %arg27[%c0_452, %c113_453] : memref<24x512xf32, #tpu.memory_space<vmem>>, vector<8x256xf32>
    %cst_454 = arith.constant 0.000000e+00 : f32
    %468 = vector.shape_cast %20 : vector<1x256xi1> to vector<1x256xi1>
    %469 = vector.broadcast %468 : vector<1x256xi1> to vector<8x256xi1>
    %470 = vector.broadcast %cst_454 : f32 to vector<8x256xf32>
    %471 = arith.select %469, %467, %470 : vector<8x256xi1>, vector<8x256xf32>
    %c16_455 = arith.constant 16 : index
    %c0_456 = arith.constant 0 : index
    %472 = vector.load %arg28[%c16_455, %c0_456] : memref<144x256xf32, #tpu.memory_space<vmem>>, vector<8x256xf32>
    tpu.vector_store %arg28[%c16_455, %c0_456], %471 {strides = array<i32>} : memref<144x256xf32, #tpu.memory_space<vmem>>, vector<8x256xf32>,
    %c0_457 = arith.constant 0 : index
    %c127_458 = arith.constant 127 : index
    %473 = vector.load %arg27[%c0_457, %c127_458] : memref<24x512xf32, #tpu.memory_space<vmem>>, vector<8x256xf32>
    %cst_459 = arith.constant 0.000000e+00 : f32
    %474 = vector.shape_cast %18 : vector<1x256xi1> to vector<1x256xi1>
    %475 = vector.broadcast %474 : vector<1x256xi1> to vector<8x256xi1>
    %476 = vector.broadcast %cst_459 : f32 to vector<8x256xf32>
    %477 = arith.select %475, %473, %476 : vector<8x256xi1>, vector<8x256xf32>
    %c24_460 = arith.constant 24 : index
    %c0_461 = arith.constant 0 : index
    %478 = vector.load %arg28[%c24_460, %c0_461] : memref<144x256xf32, #tpu.memory_space<vmem>>, vector<8x256xf32>
    tpu.vector_store %arg28[%c24_460, %c0_461], %477 {strides = array<i32>} : memref<144x256xf32, #tpu.memory_space<vmem>>, vector<8x256xf32>,
    %c0_462 = arith.constant 0 : index
    %c128_463 = arith.constant 128 : index
    %479 = vector.load %arg27[%c0_462, %c128_463] : memref<24x512xf32, #tpu.memory_space<vmem>>, vector<8x256xf32>
    %c32_464 = arith.constant 32 : index
    %c0_465 = arith.constant 0 : index
    %480 = vector.load %arg28[%c32_464, %c0_465] : memref<144x256xf32, #tpu.memory_space<vmem>>, vector<8x256xf32>
    tpu.vector_store %arg28[%c32_464, %c0_465], %479 {strides = array<i32>} : memref<144x256xf32, #tpu.memory_space<vmem>>, vector<8x256xf32>,
    %c0_466 = arith.constant 0 : index
    %c129_467 = arith.constant 129 : index
    %481 = vector.load %arg27[%c0_466, %c129_467] : memref<24x512xf32, #tpu.memory_space<vmem>>, vector<8x256xf32>
    %cst_468 = arith.constant 0.000000e+00 : f32
    %482 = vector.shape_cast %20 : vector<1x256xi1> to vector<1x256xi1>
    %483 = vector.broadcast %482 : vector<1x256xi1> to vector<8x256xi1>
    %484 = vector.broadcast %cst_468 : f32 to vector<8x256xf32>
    %485 = arith.select %483, %481, %484 : vector<8x256xi1>, vector<8x256xf32>
    %c40_469 = arith.constant 40 : index
    %c0_470 = arith.constant 0 : index
    %486 = vector.load %arg28[%c40_469, %c0_470] : memref<144x256xf32, #tpu.memory_space<vmem>>, vector<8x256xf32>
    tpu.vector_store %arg28[%c40_469, %c0_470], %485 {strides = array<i32>} : memref<144x256xf32, #tpu.memory_space<vmem>>, vector<8x256xf32>,
    %c0_471 = arith.constant 0 : index
    %c143_472 = arith.constant 143 : index
    %487 = vector.load %arg27[%c0_471, %c143_472] : memref<24x512xf32, #tpu.memory_space<vmem>>, vector<8x256xf32>
    %cst_473 = arith.constant 0.000000e+00 : f32
    %488 = vector.shape_cast %18 : vector<1x256xi1> to vector<1x256xi1>
    %489 = vector.broadcast %488 : vector<1x256xi1> to vector<8x256xi1>
    %490 = vector.broadcast %cst_473 : f32 to vector<8x256xf32>
    %491 = arith.select %489, %487, %490 : vector<8x256xi1>, vector<8x256xf32>
    %c48_474 = arith.constant 48 : index
    %c0_475 = arith.constant 0 : index
    %492 = vector.load %arg28[%c48_474, %c0_475] : memref<144x256xf32, #tpu.memory_space<vmem>>, vector<8x256xf32>
    tpu.vector_store %arg28[%c48_474, %c0_475], %491 {strides = array<i32>} : memref<144x256xf32, #tpu.memory_space<vmem>>, vector<8x256xf32>,
    %c0_476 = arith.constant 0 : index
    %c144_477 = arith.constant 144 : index
    %493 = vector.load %arg27[%c0_476, %c144_477] : memref<24x512xf32, #tpu.memory_space<vmem>>, vector<8x256xf32>
    %c56_478 = arith.constant 56 : index
    %c0_479 = arith.constant 0 : index
    %494 = vector.load %arg28[%c56_478, %c0_479] : memref<144x256xf32, #tpu.memory_space<vmem>>, vector<8x256xf32>
    tpu.vector_store %arg28[%c56_478, %c0_479], %493 {strides = array<i32>} : memref<144x256xf32, #tpu.memory_space<vmem>>, vector<8x256xf32>,
    %c0_480 = arith.constant 0 : index
    %c145_481 = arith.constant 145 : index
    %495 = vector.load %arg27[%c0_480, %c145_481] : memref<24x512xf32, #tpu.memory_space<vmem>>, vector<8x256xf32>
    %cst_482 = arith.constant 0.000000e+00 : f32
    %496 = vector.shape_cast %20 : vector<1x256xi1> to vector<1x256xi1>
    %497 = vector.broadcast %496 : vector<1x256xi1> to vector<8x256xi1>
    %498 = vector.broadcast %cst_482 : f32 to vector<8x256xf32>
    %499 = arith.select %497, %495, %498 : vector<8x256xi1>, vector<8x256xf32>
    %c64_483 = arith.constant 64 : index
    %c0_484 = arith.constant 0 : index
    %500 = vector.load %arg28[%c64_483, %c0_484] : memref<144x256xf32, #tpu.memory_space<vmem>>, vector<8x256xf32>
    tpu.vector_store %arg28[%c64_483, %c0_484], %499 {strides = array<i32>} : memref<144x256xf32, #tpu.memory_space<vmem>>, vector<8x256xf32>,
    %c0_485 = arith.constant 0 : index
    %c0_486 = arith.constant 0 : index
    %501 = vector.load %arg28[%c0_485, %c0_486] : memref<144x256xf32, #tpu.memory_space<vmem>>, vector<72x256xf32>
    %502 = arith.truncf %501 : vector<72x256xf32> to vector<72x256xbf16>
    %cst_487 = arith.constant dense<0.000000e+00> : vector<8x256xf32>
    %503 = tpu.matmul %39, %502, %cst_487 {dimension_numbers = #tpu.dot_dimension_numbers<[1], [0], [0], [1], [0, 0, 1, 1], [], []>} : vector<8x72xbf16>, vector<72x256xbf16>, vector<8x256xf32> -> vector<8x256xf32>
    %cst_488 = arith.constant 0.000000e+00 : f32
    %504 = vector.broadcast %cst_488 : f32 to vector<8x256xf32>
    %505 = arith.maximumf %503, %504 : vector<8x256xf32>
    %c8_489 = arith.constant 8 : index
    %c128_490 = arith.constant 128 : index
    %506 = vector.load %arg27[%c8_489, %c128_490] : memref<24x512xf32, #tpu.memory_space<vmem>>, vector<8x256xf32>
    tpu.vector_store %arg27[%c8_489, %c128_490], %505 {strides = array<i32>} : memref<24x512xf32, #tpu.memory_space<vmem>>, vector<8x256xf32>,
    %c0_491 = arith.constant 0 : index
    %c111_492 = arith.constant 111 : index
    %507 = vector.load %arg27[%c0_491, %c111_492] : memref<24x512xf32, #tpu.memory_space<vmem>>, vector<16x256xf32>
    %cst_493 = arith.constant 0.000000e+00 : f32
    %508 = vector.shape_cast %18 : vector<1x256xi1> to vector<1x256xi1>
    %509 = vector.broadcast %508 : vector<1x256xi1> to vector<16x256xi1>
    %510 = vector.broadcast %cst_493 : f32 to vector<16x256xf32>
    %511 = arith.select %509, %507, %510 : vector<16x256xi1>, vector<16x256xf32>
    %c0_494 = arith.constant 0 : index
    %c0_495 = arith.constant 0 : index
    %512 = vector.load %arg28[%c0_494, %c0_495] : memref<144x256xf32, #tpu.memory_space<vmem>>, vector<16x256xf32>
    tpu.vector_store %arg28[%c0_494, %c0_495], %511 {strides = array<i32>} : memref<144x256xf32, #tpu.memory_space<vmem>>, vector<16x256xf32>,
    %c0_496 = arith.constant 0 : index
    %c112_497 = arith.constant 112 : index
    %513 = vector.load %arg27[%c0_496, %c112_497] : memref<24x512xf32, #tpu.memory_space<vmem>>, vector<16x256xf32>
    %c16_498 = arith.constant 16 : index
    %c0_499 = arith.constant 0 : index
    %514 = vector.load %arg28[%c16_498, %c0_499] : memref<144x256xf32, #tpu.memory_space<vmem>>, vector<16x256xf32>
    tpu.vector_store %arg28[%c16_498, %c0_499], %513 {strides = array<i32>} : memref<144x256xf32, #tpu.memory_space<vmem>>, vector<16x256xf32>,
    %c0_500 = arith.constant 0 : index
    %c113_501 = arith.constant 113 : index
    %515 = vector.load %arg27[%c0_500, %c113_501] : memref<24x512xf32, #tpu.memory_space<vmem>>, vector<16x256xf32>
    %cst_502 = arith.constant 0.000000e+00 : f32
    %516 = vector.shape_cast %20 : vector<1x256xi1> to vector<1x256xi1>
    %517 = vector.broadcast %516 : vector<1x256xi1> to vector<16x256xi1>
    %518 = vector.broadcast %cst_502 : f32 to vector<16x256xf32>
    %519 = arith.select %517, %515, %518 : vector<16x256xi1>, vector<16x256xf32>
    %c32_503 = arith.constant 32 : index
    %c0_504 = arith.constant 0 : index
    %520 = vector.load %arg28[%c32_503, %c0_504] : memref<144x256xf32, #tpu.memory_space<vmem>>, vector<16x256xf32>
    tpu.vector_store %arg28[%c32_503, %c0_504], %519 {strides = array<i32>} : memref<144x256xf32, #tpu.memory_space<vmem>>, vector<16x256xf32>,
    %c0_505 = arith.constant 0 : index
    %c127_506 = arith.constant 127 : index
    %521 = vector.load %arg27[%c0_505, %c127_506] : memref<24x512xf32, #tpu.memory_space<vmem>>, vector<16x256xf32>
    %cst_507 = arith.constant 0.000000e+00 : f32
    %522 = vector.shape_cast %18 : vector<1x256xi1> to vector<1x256xi1>
    %523 = vector.broadcast %522 : vector<1x256xi1> to vector<16x256xi1>
    %524 = vector.broadcast %cst_507 : f32 to vector<16x256xf32>
    %525 = arith.select %523, %521, %524 : vector<16x256xi1>, vector<16x256xf32>
    %c48_508 = arith.constant 48 : index
    %c0_509 = arith.constant 0 : index
    %526 = vector.load %arg28[%c48_508, %c0_509] : memref<144x256xf32, #tpu.memory_space<vmem>>, vector<16x256xf32>
    tpu.vector_store %arg28[%c48_508, %c0_509], %525 {strides = array<i32>} : memref<144x256xf32, #tpu.memory_space<vmem>>, vector<16x256xf32>,
    %c0_510 = arith.constant 0 : index
    %c128_511 = arith.constant 128 : index
    %527 = vector.load %arg27[%c0_510, %c128_511] : memref<24x512xf32, #tpu.memory_space<vmem>>, vector<16x256xf32>
    %c64_512 = arith.constant 64 : index
    %c0_513 = arith.constant 0 : index
    %528 = vector.load %arg28[%c64_512, %c0_513] : memref<144x256xf32, #tpu.memory_space<vmem>>, vector<16x256xf32>
    tpu.vector_store %arg28[%c64_512, %c0_513], %527 {strides = array<i32>} : memref<144x256xf32, #tpu.memory_space<vmem>>, vector<16x256xf32>,
    %c0_514 = arith.constant 0 : index
    %c129_515 = arith.constant 129 : index
    %529 = vector.load %arg27[%c0_514, %c129_515] : memref<24x512xf32, #tpu.memory_space<vmem>>, vector<16x256xf32>
    %cst_516 = arith.constant 0.000000e+00 : f32
    %530 = vector.shape_cast %20 : vector<1x256xi1> to vector<1x256xi1>
    %531 = vector.broadcast %530 : vector<1x256xi1> to vector<16x256xi1>
    %532 = vector.broadcast %cst_516 : f32 to vector<16x256xf32>
    %533 = arith.select %531, %529, %532 : vector<16x256xi1>, vector<16x256xf32>
    %c80_517 = arith.constant 80 : index
    %c0_518 = arith.constant 0 : index
    %534 = vector.load %arg28[%c80_517, %c0_518] : memref<144x256xf32, #tpu.memory_space<vmem>>, vector<16x256xf32>
    tpu.vector_store %arg28[%c80_517, %c0_518], %533 {strides = array<i32>} : memref<144x256xf32, #tpu.memory_space<vmem>>, vector<16x256xf32>,
    %c0_519 = arith.constant 0 : index
    %c143_520 = arith.constant 143 : index
    %535 = vector.load %arg27[%c0_519, %c143_520] : memref<24x512xf32, #tpu.memory_space<vmem>>, vector<16x256xf32>
    %cst_521 = arith.constant 0.000000e+00 : f32
    %536 = vector.shape_cast %18 : vector<1x256xi1> to vector<1x256xi1>
    %537 = vector.broadcast %536 : vector<1x256xi1> to vector<16x256xi1>
    %538 = vector.broadcast %cst_521 : f32 to vector<16x256xf32>
    %539 = arith.select %537, %535, %538 : vector<16x256xi1>, vector<16x256xf32>
    %c96_522 = arith.constant 96 : index
    %c0_523 = arith.constant 0 : index
    %540 = vector.load %arg28[%c96_522, %c0_523] : memref<144x256xf32, #tpu.memory_space<vmem>>, vector<16x256xf32>
    tpu.vector_store %arg28[%c96_522, %c0_523], %539 {strides = array<i32>} : memref<144x256xf32, #tpu.memory_space<vmem>>, vector<16x256xf32>,
    %c0_524 = arith.constant 0 : index
    %c144_525 = arith.constant 144 : index
    %541 = vector.load %arg27[%c0_524, %c144_525] : memref<24x512xf32, #tpu.memory_space<vmem>>, vector<16x256xf32>
    %c112_526 = arith.constant 112 : index
    %c0_527 = arith.constant 0 : index
    %542 = vector.load %arg28[%c112_526, %c0_527] : memref<144x256xf32, #tpu.memory_space<vmem>>, vector<16x256xf32>
    tpu.vector_store %arg28[%c112_526, %c0_527], %541 {strides = array<i32>} : memref<144x256xf32, #tpu.memory_space<vmem>>, vector<16x256xf32>,
    %c0_528 = arith.constant 0 : index
    %c145_529 = arith.constant 145 : index
    %543 = vector.load %arg27[%c0_528, %c145_529] : memref<24x512xf32, #tpu.memory_space<vmem>>, vector<16x256xf32>
    %cst_530 = arith.constant 0.000000e+00 : f32
    %544 = vector.shape_cast %20 : vector<1x256xi1> to vector<1x256xi1>
    %545 = vector.broadcast %544 : vector<1x256xi1> to vector<16x256xi1>
    %546 = vector.broadcast %cst_530 : f32 to vector<16x256xf32>
    %547 = arith.select %545, %543, %546 : vector<16x256xi1>, vector<16x256xf32>
    %c128_531 = arith.constant 128 : index
    %c0_532 = arith.constant 0 : index
    %548 = vector.load %arg28[%c128_531, %c0_532] : memref<144x256xf32, #tpu.memory_space<vmem>>, vector<16x256xf32>
    tpu.vector_store %arg28[%c128_531, %c0_532], %547 {strides = array<i32>} : memref<144x256xf32, #tpu.memory_space<vmem>>, vector<16x256xf32>,
    %c0_533 = arith.constant 0 : index
    %c0_534 = arith.constant 0 : index
    %549 = vector.load %arg28[%c0_533, %c0_534] : memref<144x256xf32, #tpu.memory_space<vmem>>, vector<144x256xf32>
    %550 = arith.truncf %549 : vector<144x256xf32> to vector<144x256xbf16>
    %cst_535 = arith.constant dense<0.000000e+00> : vector<8x256xf32>
    %551 = tpu.matmul %40, %550, %cst_535 {dimension_numbers = #tpu.dot_dimension_numbers<[1], [0], [0], [1], [0, 0, 1, 1], [], []>} : vector<8x144xbf16>, vector<144x256xbf16>, vector<8x256xf32> -> vector<8x256xf32>
    %cst_536 = arith.constant 0.000000e+00 : f32
    %552 = vector.broadcast %cst_536 : f32 to vector<8x256xf32>
    %553 = arith.maximumf %551, %552 : vector<8x256xf32>
    %c16_537 = arith.constant 16 : index
    %c128_538 = arith.constant 128 : index
    %554 = vector.load %arg27[%c16_537, %c128_538] : memref<24x512xf32, #tpu.memory_space<vmem>>, vector<8x256xf32>
    tpu.vector_store %arg27[%c16_537, %c128_538], %553 {strides = array<i32>} : memref<24x512xf32, #tpu.memory_space<vmem>>, vector<8x256xf32>,
    %c0_539 = arith.constant 0 : index
    %c128_540 = arith.constant 128 : index
    %555 = vector.load %arg27[%c0_539, %c128_540] : memref<24x512xf32, #tpu.memory_space<vmem>>, vector<24x256xf32>
    %556 = arith.truncf %555 : vector<24x256xf32> to vector<24x256xbf16>
    %cst_541 = arith.constant dense<0.000000e+00> : vector<8x256xf32>
    %557 = tpu.matmul %41, %556, %cst_541 {dimension_numbers = #tpu.dot_dimension_numbers<[1], [0], [0], [1], [0, 0, 1, 1], [], []>} : vector<8x24xbf16>, vector<24x256xbf16>, vector<8x256xf32> -> vector<8x256xf32>
    %558 = vector.broadcast %42 : vector<8x1xf32> to vector<8x256xf32>
    %559 = arith.addf %557, %558 : vector<8x256xf32>
    %560 = arith.addf %559, %150 : vector<8x256xf32>
    %c0_542 = arith.constant 0 : index
    %c128_543 = arith.constant 128 : index
    %561 = vector.load %arg27[%c0_542, %c128_543] : memref<24x512xf32, #tpu.memory_space<vmem>>, vector<8x256xf32>
    tpu.vector_store %arg27[%c0_542, %c128_543], %560 {strides = array<i32>} : memref<24x512xf32, #tpu.memory_space<vmem>>, vector<8x256xf32>,
    %c0_544 = arith.constant 0 : index
    %c111_545 = arith.constant 111 : index
    %562 = vector.load %arg27[%c0_544, %c111_545] : memref<24x512xf32, #tpu.memory_space<vmem>>, vector<8x256xf32>
    %cst_546 = arith.constant 0.000000e+00 : f32
    %563 = vector.shape_cast %18 : vector<1x256xi1> to vector<1x256xi1>
    %564 = vector.broadcast %563 : vector<1x256xi1> to vector<8x256xi1>
    %565 = vector.broadcast %cst_546 : f32 to vector<8x256xf32>
    %566 = arith.select %564, %562, %565 : vector<8x256xi1>, vector<8x256xf32>
    %c0_547 = arith.constant 0 : index
    %c0_548 = arith.constant 0 : index
    %567 = vector.load %arg28[%c0_547, %c0_548] : memref<144x256xf32, #tpu.memory_space<vmem>>, vector<8x256xf32>
    tpu.vector_store %arg28[%c0_547, %c0_548], %566 {strides = array<i32>} : memref<144x256xf32, #tpu.memory_space<vmem>>, vector<8x256xf32>,
    %c0_549 = arith.constant 0 : index
    %c112_550 = arith.constant 112 : index
    %568 = vector.load %arg27[%c0_549, %c112_550] : memref<24x512xf32, #tpu.memory_space<vmem>>, vector<8x256xf32>
    %c8_551 = arith.constant 8 : index
    %c0_552 = arith.constant 0 : index
    %569 = vector.load %arg28[%c8_551, %c0_552] : memref<144x256xf32, #tpu.memory_space<vmem>>, vector<8x256xf32>
    tpu.vector_store %arg28[%c8_551, %c0_552], %568 {strides = array<i32>} : memref<144x256xf32, #tpu.memory_space<vmem>>, vector<8x256xf32>,
    %c0_553 = arith.constant 0 : index
    %c113_554 = arith.constant 113 : index
    %570 = vector.load %arg27[%c0_553, %c113_554] : memref<24x512xf32, #tpu.memory_space<vmem>>, vector<8x256xf32>
    %cst_555 = arith.constant 0.000000e+00 : f32
    %571 = vector.shape_cast %20 : vector<1x256xi1> to vector<1x256xi1>
    %572 = vector.broadcast %571 : vector<1x256xi1> to vector<8x256xi1>
    %573 = vector.broadcast %cst_555 : f32 to vector<8x256xf32>
    %574 = arith.select %572, %570, %573 : vector<8x256xi1>, vector<8x256xf32>
    %c16_556 = arith.constant 16 : index
    %c0_557 = arith.constant 0 : index
    %575 = vector.load %arg28[%c16_556, %c0_557] : memref<144x256xf32, #tpu.memory_space<vmem>>, vector<8x256xf32>
    tpu.vector_store %arg28[%c16_556, %c0_557], %574 {strides = array<i32>} : memref<144x256xf32, #tpu.memory_space<vmem>>, vector<8x256xf32>,
    %c0_558 = arith.constant 0 : index
    %c127_559 = arith.constant 127 : index
    %576 = vector.load %arg27[%c0_558, %c127_559] : memref<24x512xf32, #tpu.memory_space<vmem>>, vector<8x256xf32>
    %cst_560 = arith.constant 0.000000e+00 : f32
    %577 = vector.shape_cast %18 : vector<1x256xi1> to vector<1x256xi1>
    %578 = vector.broadcast %577 : vector<1x256xi1> to vector<8x256xi1>
    %579 = vector.broadcast %cst_560 : f32 to vector<8x256xf32>
    %580 = arith.select %578, %576, %579 : vector<8x256xi1>, vector<8x256xf32>
    %c24_561 = arith.constant 24 : index
    %c0_562 = arith.constant 0 : index
    %581 = vector.load %arg28[%c24_561, %c0_562] : memref<144x256xf32, #tpu.memory_space<vmem>>, vector<8x256xf32>
    tpu.vector_store %arg28[%c24_561, %c0_562], %580 {strides = array<i32>} : memref<144x256xf32, #tpu.memory_space<vmem>>, vector<8x256xf32>,
    %c0_563 = arith.constant 0 : index
    %c128_564 = arith.constant 128 : index
    %582 = vector.load %arg27[%c0_563, %c128_564] : memref<24x512xf32, #tpu.memory_space<vmem>>, vector<8x256xf32>
    %c32_565 = arith.constant 32 : index
    %c0_566 = arith.constant 0 : index
    %583 = vector.load %arg28[%c32_565, %c0_566] : memref<144x256xf32, #tpu.memory_space<vmem>>, vector<8x256xf32>
    tpu.vector_store %arg28[%c32_565, %c0_566], %582 {strides = array<i32>} : memref<144x256xf32, #tpu.memory_space<vmem>>, vector<8x256xf32>,
    %c0_567 = arith.constant 0 : index
    %c129_568 = arith.constant 129 : index
    %584 = vector.load %arg27[%c0_567, %c129_568] : memref<24x512xf32, #tpu.memory_space<vmem>>, vector<8x256xf32>
    %cst_569 = arith.constant 0.000000e+00 : f32
    %585 = vector.shape_cast %20 : vector<1x256xi1> to vector<1x256xi1>
    %586 = vector.broadcast %585 : vector<1x256xi1> to vector<8x256xi1>
    %587 = vector.broadcast %cst_569 : f32 to vector<8x256xf32>
    %588 = arith.select %586, %584, %587 : vector<8x256xi1>, vector<8x256xf32>
    %c40_570 = arith.constant 40 : index
    %c0_571 = arith.constant 0 : index
    %589 = vector.load %arg28[%c40_570, %c0_571] : memref<144x256xf32, #tpu.memory_space<vmem>>, vector<8x256xf32>
    tpu.vector_store %arg28[%c40_570, %c0_571], %588 {strides = array<i32>} : memref<144x256xf32, #tpu.memory_space<vmem>>, vector<8x256xf32>,
    %c0_572 = arith.constant 0 : index
    %c143_573 = arith.constant 143 : index
    %590 = vector.load %arg27[%c0_572, %c143_573] : memref<24x512xf32, #tpu.memory_space<vmem>>, vector<8x256xf32>
    %cst_574 = arith.constant 0.000000e+00 : f32
    %591 = vector.shape_cast %18 : vector<1x256xi1> to vector<1x256xi1>
    %592 = vector.broadcast %591 : vector<1x256xi1> to vector<8x256xi1>
    %593 = vector.broadcast %cst_574 : f32 to vector<8x256xf32>
    %594 = arith.select %592, %590, %593 : vector<8x256xi1>, vector<8x256xf32>
    %c48_575 = arith.constant 48 : index
    %c0_576 = arith.constant 0 : index
    %595 = vector.load %arg28[%c48_575, %c0_576] : memref<144x256xf32, #tpu.memory_space<vmem>>, vector<8x256xf32>
    tpu.vector_store %arg28[%c48_575, %c0_576], %594 {strides = array<i32>} : memref<144x256xf32, #tpu.memory_space<vmem>>, vector<8x256xf32>,
    %c0_577 = arith.constant 0 : index
    %c144_578 = arith.constant 144 : index
    %596 = vector.load %arg27[%c0_577, %c144_578] : memref<24x512xf32, #tpu.memory_space<vmem>>, vector<8x256xf32>
    %c56_579 = arith.constant 56 : index
    %c0_580 = arith.constant 0 : index
    %597 = vector.load %arg28[%c56_579, %c0_580] : memref<144x256xf32, #tpu.memory_space<vmem>>, vector<8x256xf32>
    tpu.vector_store %arg28[%c56_579, %c0_580], %596 {strides = array<i32>} : memref<144x256xf32, #tpu.memory_space<vmem>>, vector<8x256xf32>,
    %c0_581 = arith.constant 0 : index
    %c145_582 = arith.constant 145 : index
    %598 = vector.load %arg27[%c0_581, %c145_582] : memref<24x512xf32, #tpu.memory_space<vmem>>, vector<8x256xf32>
    %cst_583 = arith.constant 0.000000e+00 : f32
    %599 = vector.shape_cast %20 : vector<1x256xi1> to vector<1x256xi1>
    %600 = vector.broadcast %599 : vector<1x256xi1> to vector<8x256xi1>
    %601 = vector.broadcast %cst_583 : f32 to vector<8x256xf32>
    %602 = arith.select %600, %598, %601 : vector<8x256xi1>, vector<8x256xf32>
    %c64_584 = arith.constant 64 : index
    %c0_585 = arith.constant 0 : index
    %603 = vector.load %arg28[%c64_584, %c0_585] : memref<144x256xf32, #tpu.memory_space<vmem>>, vector<8x256xf32>
    tpu.vector_store %arg28[%c64_584, %c0_585], %602 {strides = array<i32>} : memref<144x256xf32, #tpu.memory_space<vmem>>, vector<8x256xf32>,
    %c0_586 = arith.constant 0 : index
    %c0_587 = arith.constant 0 : index
    %604 = vector.load %arg28[%c0_586, %c0_587] : memref<144x256xf32, #tpu.memory_space<vmem>>, vector<72x256xf32>
    %605 = arith.truncf %604 : vector<72x256xf32> to vector<72x256xbf16>
    %cst_588 = arith.constant dense<0.000000e+00> : vector<8x256xf32>
    %606 = tpu.matmul %43, %605, %cst_588 {dimension_numbers = #tpu.dot_dimension_numbers<[1], [0], [0], [1], [0, 0, 1, 1], [], []>} : vector<8x72xbf16>, vector<72x256xbf16>, vector<8x256xf32> -> vector<8x256xf32>
    %cst_589 = arith.constant 0.000000e+00 : f32
    %607 = vector.broadcast %cst_589 : f32 to vector<8x256xf32>
    %608 = arith.maximumf %606, %607 : vector<8x256xf32>
    %c8_590 = arith.constant 8 : index
    %c128_591 = arith.constant 128 : index
    %609 = vector.load %arg27[%c8_590, %c128_591] : memref<24x512xf32, #tpu.memory_space<vmem>>, vector<8x256xf32>
    tpu.vector_store %arg27[%c8_590, %c128_591], %608 {strides = array<i32>} : memref<24x512xf32, #tpu.memory_space<vmem>>, vector<8x256xf32>,
    %c0_592 = arith.constant 0 : index
    %c111_593 = arith.constant 111 : index
    %610 = vector.load %arg27[%c0_592, %c111_593] : memref<24x512xf32, #tpu.memory_space<vmem>>, vector<16x256xf32>
    %cst_594 = arith.constant 0.000000e+00 : f32
    %611 = vector.shape_cast %18 : vector<1x256xi1> to vector<1x256xi1>
    %612 = vector.broadcast %611 : vector<1x256xi1> to vector<16x256xi1>
    %613 = vector.broadcast %cst_594 : f32 to vector<16x256xf32>
    %614 = arith.select %612, %610, %613 : vector<16x256xi1>, vector<16x256xf32>
    %c0_595 = arith.constant 0 : index
    %c0_596 = arith.constant 0 : index
    %615 = vector.load %arg28[%c0_595, %c0_596] : memref<144x256xf32, #tpu.memory_space<vmem>>, vector<16x256xf32>
    tpu.vector_store %arg28[%c0_595, %c0_596], %614 {strides = array<i32>} : memref<144x256xf32, #tpu.memory_space<vmem>>, vector<16x256xf32>,
    %c0_597 = arith.constant 0 : index
    %c112_598 = arith.constant 112 : index
    %616 = vector.load %arg27[%c0_597, %c112_598] : memref<24x512xf32, #tpu.memory_space<vmem>>, vector<16x256xf32>
    %c16_599 = arith.constant 16 : index
    %c0_600 = arith.constant 0 : index
    %617 = vector.load %arg28[%c16_599, %c0_600] : memref<144x256xf32, #tpu.memory_space<vmem>>, vector<16x256xf32>
    tpu.vector_store %arg28[%c16_599, %c0_600], %616 {strides = array<i32>} : memref<144x256xf32, #tpu.memory_space<vmem>>, vector<16x256xf32>,
    %c0_601 = arith.constant 0 : index
    %c113_602 = arith.constant 113 : index
    %618 = vector.load %arg27[%c0_601, %c113_602] : memref<24x512xf32, #tpu.memory_space<vmem>>, vector<16x256xf32>
    %cst_603 = arith.constant 0.000000e+00 : f32
    %619 = vector.shape_cast %20 : vector<1x256xi1> to vector<1x256xi1>
    %620 = vector.broadcast %619 : vector<1x256xi1> to vector<16x256xi1>
    %621 = vector.broadcast %cst_603 : f32 to vector<16x256xf32>
    %622 = arith.select %620, %618, %621 : vector<16x256xi1>, vector<16x256xf32>
    %c32_604 = arith.constant 32 : index
    %c0_605 = arith.constant 0 : index
    %623 = vector.load %arg28[%c32_604, %c0_605] : memref<144x256xf32, #tpu.memory_space<vmem>>, vector<16x256xf32>
    tpu.vector_store %arg28[%c32_604, %c0_605], %622 {strides = array<i32>} : memref<144x256xf32, #tpu.memory_space<vmem>>, vector<16x256xf32>,
    %c0_606 = arith.constant 0 : index
    %c127_607 = arith.constant 127 : index
    %624 = vector.load %arg27[%c0_606, %c127_607] : memref<24x512xf32, #tpu.memory_space<vmem>>, vector<16x256xf32>
    %cst_608 = arith.constant 0.000000e+00 : f32
    %625 = vector.shape_cast %18 : vector<1x256xi1> to vector<1x256xi1>
    %626 = vector.broadcast %625 : vector<1x256xi1> to vector<16x256xi1>
    %627 = vector.broadcast %cst_608 : f32 to vector<16x256xf32>
    %628 = arith.select %626, %624, %627 : vector<16x256xi1>, vector<16x256xf32>
    %c48_609 = arith.constant 48 : index
    %c0_610 = arith.constant 0 : index
    %629 = vector.load %arg28[%c48_609, %c0_610] : memref<144x256xf32, #tpu.memory_space<vmem>>, vector<16x256xf32>
    tpu.vector_store %arg28[%c48_609, %c0_610], %628 {strides = array<i32>} : memref<144x256xf32, #tpu.memory_space<vmem>>, vector<16x256xf32>,
    %c0_611 = arith.constant 0 : index
    %c128_612 = arith.constant 128 : index
    %630 = vector.load %arg27[%c0_611, %c128_612] : memref<24x512xf32, #tpu.memory_space<vmem>>, vector<16x256xf32>
    %c64_613 = arith.constant 64 : index
    %c0_614 = arith.constant 0 : index
    %631 = vector.load %arg28[%c64_613, %c0_614] : memref<144x256xf32, #tpu.memory_space<vmem>>, vector<16x256xf32>
    tpu.vector_store %arg28[%c64_613, %c0_614], %630 {strides = array<i32>} : memref<144x256xf32, #tpu.memory_space<vmem>>, vector<16x256xf32>,
    %c0_615 = arith.constant 0 : index
    %c129_616 = arith.constant 129 : index
    %632 = vector.load %arg27[%c0_615, %c129_616] : memref<24x512xf32, #tpu.memory_space<vmem>>, vector<16x256xf32>
    %cst_617 = arith.constant 0.000000e+00 : f32
    %633 = vector.shape_cast %20 : vector<1x256xi1> to vector<1x256xi1>
    %634 = vector.broadcast %633 : vector<1x256xi1> to vector<16x256xi1>
    %635 = vector.broadcast %cst_617 : f32 to vector<16x256xf32>
    %636 = arith.select %634, %632, %635 : vector<16x256xi1>, vector<16x256xf32>
    %c80_618 = arith.constant 80 : index
    %c0_619 = arith.constant 0 : index
    %637 = vector.load %arg28[%c80_618, %c0_619] : memref<144x256xf32, #tpu.memory_space<vmem>>, vector<16x256xf32>
    tpu.vector_store %arg28[%c80_618, %c0_619], %636 {strides = array<i32>} : memref<144x256xf32, #tpu.memory_space<vmem>>, vector<16x256xf32>,
    %c0_620 = arith.constant 0 : index
    %c143_621 = arith.constant 143 : index
    %638 = vector.load %arg27[%c0_620, %c143_621] : memref<24x512xf32, #tpu.memory_space<vmem>>, vector<16x256xf32>
    %cst_622 = arith.constant 0.000000e+00 : f32
    %639 = vector.shape_cast %18 : vector<1x256xi1> to vector<1x256xi1>
    %640 = vector.broadcast %639 : vector<1x256xi1> to vector<16x256xi1>
    %641 = vector.broadcast %cst_622 : f32 to vector<16x256xf32>
    %642 = arith.select %640, %638, %641 : vector<16x256xi1>, vector<16x256xf32>
    %c96_623 = arith.constant 96 : index
    %c0_624 = arith.constant 0 : index
    %643 = vector.load %arg28[%c96_623, %c0_624] : memref<144x256xf32, #tpu.memory_space<vmem>>, vector<16x256xf32>
    tpu.vector_store %arg28[%c96_623, %c0_624], %642 {strides = array<i32>} : memref<144x256xf32, #tpu.memory_space<vmem>>, vector<16x256xf32>,
    %c0_625 = arith.constant 0 : index
    %c144_626 = arith.constant 144 : index
    %644 = vector.load %arg27[%c0_625, %c144_626] : memref<24x512xf32, #tpu.memory_space<vmem>>, vector<16x256xf32>
    %c112_627 = arith.constant 112 : index
    %c0_628 = arith.constant 0 : index
    %645 = vector.load %arg28[%c112_627, %c0_628] : memref<144x256xf32, #tpu.memory_space<vmem>>, vector<16x256xf32>
    tpu.vector_store %arg28[%c112_627, %c0_628], %644 {strides = array<i32>} : memref<144x256xf32, #tpu.memory_space<vmem>>, vector<16x256xf32>,
    %c0_629 = arith.constant 0 : index
    %c145_630 = arith.constant 145 : index
    %646 = vector.load %arg27[%c0_629, %c145_630] : memref<24x512xf32, #tpu.memory_space<vmem>>, vector<16x256xf32>
    %cst_631 = arith.constant 0.000000e+00 : f32
    %647 = vector.shape_cast %20 : vector<1x256xi1> to vector<1x256xi1>
    %648 = vector.broadcast %647 : vector<1x256xi1> to vector<16x256xi1>
    %649 = vector.broadcast %cst_631 : f32 to vector<16x256xf32>
    %650 = arith.select %648, %646, %649 : vector<16x256xi1>, vector<16x256xf32>
    %c128_632 = arith.constant 128 : index
    %c0_633 = arith.constant 0 : index
    %651 = vector.load %arg28[%c128_632, %c0_633] : memref<144x256xf32, #tpu.memory_space<vmem>>, vector<16x256xf32>
    tpu.vector_store %arg28[%c128_632, %c0_633], %650 {strides = array<i32>} : memref<144x256xf32, #tpu.memory_space<vmem>>, vector<16x256xf32>,
    %c0_634 = arith.constant 0 : index
    %c0_635 = arith.constant 0 : index
    %652 = vector.load %arg28[%c0_634, %c0_635] : memref<144x256xf32, #tpu.memory_space<vmem>>, vector<144x256xf32>
    %653 = arith.truncf %652 : vector<144x256xf32> to vector<144x256xbf16>
    %cst_636 = arith.constant dense<0.000000e+00> : vector<8x256xf32>
    %654 = tpu.matmul %44, %653, %cst_636 {dimension_numbers = #tpu.dot_dimension_numbers<[1], [0], [0], [1], [0, 0, 1, 1], [], []>} : vector<8x144xbf16>, vector<144x256xbf16>, vector<8x256xf32> -> vector<8x256xf32>
    %cst_637 = arith.constant 0.000000e+00 : f32
    %655 = vector.broadcast %cst_637 : f32 to vector<8x256xf32>
    %656 = arith.maximumf %654, %655 : vector<8x256xf32>
    %c16_638 = arith.constant 16 : index
    %c128_639 = arith.constant 128 : index
    %657 = vector.load %arg27[%c16_638, %c128_639] : memref<24x512xf32, #tpu.memory_space<vmem>>, vector<8x256xf32>
    tpu.vector_store %arg27[%c16_638, %c128_639], %656 {strides = array<i32>} : memref<24x512xf32, #tpu.memory_space<vmem>>, vector<8x256xf32>,
    %c0_640 = arith.constant 0 : index
    %c128_641 = arith.constant 128 : index
    %658 = vector.load %arg27[%c0_640, %c128_641] : memref<24x512xf32, #tpu.memory_space<vmem>>, vector<24x256xf32>
    %659 = arith.truncf %658 : vector<24x256xf32> to vector<24x256xbf16>
    %cst_642 = arith.constant dense<0.000000e+00> : vector<8x256xf32>
    %660 = tpu.matmul %45, %659, %cst_642 {dimension_numbers = #tpu.dot_dimension_numbers<[1], [0], [0], [1], [0, 0, 1, 1], [], []>} : vector<8x24xbf16>, vector<24x256xbf16>, vector<8x256xf32> -> vector<8x256xf32>
    %661 = vector.broadcast %46 : vector<8x1xf32> to vector<8x256xf32>
    %662 = arith.addf %660, %661 : vector<8x256xf32>
    %663 = arith.addf %662, %48 : vector<8x256xf32>
    %c0_643 = arith.constant 0 : index
    %c0_644 = arith.constant 0 : index
    %c0_645 = arith.constant 0 : index
    %664 = vector.load %arg26[%c0_643, %c0_644, %c0_645] : memref<1x8x256xf32, #tpu.memory_space<vmem>>, vector<1x8x256xf32>
    %665 = vector.shape_cast %664 : vector<1x8x256xf32> to vector<8x256xf32>
    %666 = vector.shape_cast %663 : vector<8x256xf32> to vector<1x8x256xf32>
    tpu.vector_store %arg26[%c0_643, %c0_644, %c0_645], %666 {strides = array<i32>} : memref<1x8x256xf32, #tpu.memory_space<vmem>>, vector<1x8x256xf32>,
    return
  }
  func.func @transform_0(%arg0: i32) -> (i32, i32, i32) {
    %c0_i32 = arith.constant 0 : i32
    %c0_i32_0 = arith.constant 0 : i32
    %c0_i32_1 = arith.constant 0 : i32
    return %arg0, %c0_i32, %c0_i32_0 : i32, i32, i32
  }
  func.func @transform_1(%arg0: i32) -> (i32, i32) {
    %c0_i32 = arith.constant 0 : i32
    %c0_i32_0 = arith.constant 0 : i32
    %c0_i32_1 = arith.constant 0 : i32
    return %c0_i32, %c0_i32_0 : i32, i32
  }
  func.func @transform_2(%arg0: i32) -> (i32, i32) {
    %c0_i32 = arith.constant 0 : i32
    %c0_i32_0 = arith.constant 0 : i32
    %c0_i32_1 = arith.constant 0 : i32
    return %c0_i32, %c0_i32_0 : i32, i32
  }
  func.func @transform_3(%arg0: i32) -> (i32, i32) {
    %c0_i32 = arith.constant 0 : i32
    %c0_i32_0 = arith.constant 0 : i32
    %c0_i32_1 = arith.constant 0 : i32
    return %c0_i32, %c0_i32_0 : i32, i32
  }
  func.func @transform_4(%arg0: i32) -> (i32, i32) {
    %c0_i32 = arith.constant 0 : i32
    %c0_i32_0 = arith.constant 0 : i32
    %c0_i32_1 = arith.constant 0 : i32
    return %c0_i32, %c0_i32_0 : i32, i32
  }
  func.func @transform_5(%arg0: i32) -> (i32, i32) {
    %c0_i32 = arith.constant 0 : i32
    %c0_i32_0 = arith.constant 0 : i32
    %c0_i32_1 = arith.constant 0 : i32
    return %c0_i32, %c0_i32_0 : i32, i32
  }
  func.func @transform_6(%arg0: i32) -> (i32, i32) {
    %c0_i32 = arith.constant 0 : i32
    %c0_i32_0 = arith.constant 0 : i32
    %c0_i32_1 = arith.constant 0 : i32
    return %c0_i32, %c0_i32_0 : i32, i32
  }
  func.func @transform_7(%arg0: i32) -> (i32, i32) {
    %c0_i32 = arith.constant 0 : i32
    %c0_i32_0 = arith.constant 0 : i32
    %c0_i32_1 = arith.constant 0 : i32
    return %c0_i32, %c0_i32_0 : i32, i32
  }
  func.func @transform_8(%arg0: i32) -> (i32, i32) {
    %c0_i32 = arith.constant 0 : i32
    %c0_i32_0 = arith.constant 0 : i32
    %c0_i32_1 = arith.constant 0 : i32
    return %c0_i32, %c0_i32_0 : i32, i32
  }
  func.func @transform_9(%arg0: i32) -> (i32, i32) {
    %c0_i32 = arith.constant 0 : i32
    %c0_i32_0 = arith.constant 0 : i32
    %c0_i32_1 = arith.constant 0 : i32
    return %c0_i32, %c0_i32_0 : i32, i32
  }
  func.func @transform_10(%arg0: i32) -> (i32, i32) {
    %c0_i32 = arith.constant 0 : i32
    %c0_i32_0 = arith.constant 0 : i32
    %c0_i32_1 = arith.constant 0 : i32
    return %c0_i32, %c0_i32_0 : i32, i32
  }
  func.func @transform_11(%arg0: i32) -> (i32, i32) {
    %c0_i32 = arith.constant 0 : i32
    %c0_i32_0 = arith.constant 0 : i32
    %c0_i32_1 = arith.constant 0 : i32
    return %c0_i32, %c0_i32_0 : i32, i32
  }
  func.func @transform_12(%arg0: i32) -> (i32, i32) {
    %c0_i32 = arith.constant 0 : i32
    %c0_i32_0 = arith.constant 0 : i32
    %c0_i32_1 = arith.constant 0 : i32
    return %c0_i32, %c0_i32_0 : i32, i32
  }
  func.func @transform_13(%arg0: i32) -> (i32, i32) {
    %c0_i32 = arith.constant 0 : i32
    %c0_i32_0 = arith.constant 0 : i32
    %c0_i32_1 = arith.constant 0 : i32
    return %c0_i32, %c0_i32_0 : i32, i32
  }
  func.func @transform_14(%arg0: i32) -> (i32, i32) {
    %c0_i32 = arith.constant 0 : i32
    %c0_i32_0 = arith.constant 0 : i32
    %c0_i32_1 = arith.constant 0 : i32
    return %c0_i32, %c0_i32_0 : i32, i32
  }
  func.func @transform_15(%arg0: i32) -> (i32, i32) {
    %c0_i32 = arith.constant 0 : i32
    %c0_i32_0 = arith.constant 0 : i32
    %c0_i32_1 = arith.constant 0 : i32
    return %c0_i32, %c0_i32_0 : i32, i32
  }
  func.func @transform_16(%arg0: i32) -> (i32, i32) {
    %c0_i32 = arith.constant 0 : i32
    %c0_i32_0 = arith.constant 0 : i32
    %c0_i32_1 = arith.constant 0 : i32
    return %c0_i32, %c0_i32_0 : i32, i32
  }
  func.func @transform_17(%arg0: i32) -> (i32, i32) {
    %c0_i32 = arith.constant 0 : i32
    %c0_i32_0 = arith.constant 0 : i32
    %c0_i32_1 = arith.constant 0 : i32
    return %c0_i32, %c0_i32_0 : i32, i32
  }
  func.func @transform_18(%arg0: i32) -> (i32, i32) {
    %c0_i32 = arith.constant 0 : i32
    %c0_i32_0 = arith.constant 0 : i32
    %c0_i32_1 = arith.constant 0 : i32
    return %c0_i32, %c0_i32_0 : i32, i32
  }
  func.func @transform_19(%arg0: i32) -> (i32, i32) {
    %c0_i32 = arith.constant 0 : i32
    %c0_i32_0 = arith.constant 0 : i32
    %c0_i32_1 = arith.constant 0 : i32
    return %c0_i32, %c0_i32_0 : i32, i32
  }
  func.func @transform_20(%arg0: i32) -> (i32, i32) {
    %c0_i32 = arith.constant 0 : i32
    %c0_i32_0 = arith.constant 0 : i32
    %c0_i32_1 = arith.constant 0 : i32
    return %c0_i32, %c0_i32_0 : i32, i32
  }
  func.func @transform_21(%arg0: i32) -> (i32, i32) {
    %c0_i32 = arith.constant 0 : i32
    %c0_i32_0 = arith.constant 0 : i32
    %c0_i32_1 = arith.constant 0 : i32
    return %c0_i32, %c0_i32_0 : i32, i32
  }
  func.func @transform_22(%arg0: i32) -> (i32, i32) {
    %c0_i32 = arith.constant 0 : i32
    %c0_i32_0 = arith.constant 0 : i32
    %c0_i32_1 = arith.constant 0 : i32
    return %c0_i32, %c0_i32_0 : i32, i32
  }
  func.func @transform_23(%arg0: i32) -> (i32, i32) {
    %c0_i32 = arith.constant 0 : i32
    %c0_i32_0 = arith.constant 0 : i32
    %c0_i32_1 = arith.constant 0 : i32
    return %c0_i32, %c0_i32_0 : i32, i32
  }
  func.func @transform_24(%arg0: i32) -> (i32, i32) {
    %c0_i32 = arith.constant 0 : i32
    %c0_i32_0 = arith.constant 0 : i32
    %c0_i32_1 = arith.constant 0 : i32
    return %c0_i32, %c0_i32_0 : i32, i32
  }
  func.func @transform_25(%arg0: i32) -> (i32, i32, i32) {
    %c0_i32 = arith.constant 0 : i32
    %c0_i32_0 = arith.constant 0 : i32
    %c0_i32_1 = arith.constant 0 : i32
    return %arg0, %c0_i32, %c0_i32_0 : i32, i32, i32
  }
}

</mosaic_0001>

<llo_original>
// kernel: uhdb_forward.1
$region0: #{uhdb_forward.1}
  #allocation0 [shape = 'u32[]', space=smem, size = 0x4, offset = 0x4, fixed_abs, tag = 'smem constant byte address 0x4 - core index']
  #allocation1 [shape = 'u32[144,128]{1,0:T(1,128)}', space=vmem, size = 0x12000, scoped, tag = 'internal scratch']
  #allocation2 [shape = 'f32[24,512]{1,0:T(8,128)}', space=vmem, size = 0xc000, scoped, tag = 'scratch operand']
  #allocation3 [shape = 'f32[144,256]{1,0:T(8,128)}', space=vmem, size = 0x24000, scoped, tag = 'scratch operand']
  %s0 = inlined_call_operand.vmem [shape: f32[2,8,256], index: 0, kind: input, shape index: {}]
  %s1 = inlined_call_operand.vmem [shape: bf16[8,72], index: 1, kind: input, shape index: {}]
  %s2 = inlined_call_operand.vmem [shape: bf16[8,144], index: 2, kind: input, shape index: {}]
  %s3 = inlined_call_operand.vmem [shape: bf16[8,24], index: 3, kind: input, shape index: {}]
  %s4 = inlined_call_operand.vmem [shape: f32[8,1], index: 4, kind: input, shape index: {}]
  %s5 = inlined_call_operand.vmem [shape: bf16[8,72], index: 5, kind: input, shape index: {}]
  %s6 = inlined_call_operand.vmem [shape: bf16[8,144], index: 6, kind: input, shape index: {}]
  %s7 = inlined_call_operand.vmem [shape: bf16[8,24], index: 7, kind: input, shape index: {}]
  %s8 = inlined_call_operand.vmem [shape: f32[8,1], index: 8, kind: input, shape index: {}]
  %s9 = inlined_call_operand.vmem [shape: bf16[8,72], index: 9, kind: input, shape index: {}]
  %s10 = inlined_call_operand.vmem [shape: bf16[8,144], index: 10, kind: input, shape index: {}]
  %s11 = inlined_call_operand.vmem [shape: bf16[8,24], index: 11, kind: input, shape index: {}]
  %s12 = inlined_call_operand.vmem [shape: f32[8,1], index: 12, kind: input, shape index: {}]
  %s13 = inlined_call_operand.vmem [shape: bf16[8,72], index: 13, kind: input, shape index: {}]
  %s14 = inlined_call_operand.vmem [shape: bf16[8,144], index: 14, kind: input, shape index: {}]
  %s15 = inlined_call_operand.vmem [shape: bf16[8,24], index: 15, kind: input, shape index: {}]
  %s16 = inlined_call_operand.vmem [shape: f32[8,1], index: 16, kind: input, shape index: {}]
  %s17 = inlined_call_operand.vmem [shape: bf16[8,72], index: 17, kind: input, shape index: {}]
  %s18 = inlined_call_operand.vmem [shape: bf16[8,144], index: 18, kind: input, shape index: {}]
  %s19 = inlined_call_operand.vmem [shape: bf16[8,24], index: 19, kind: input, shape index: {}]
  %s20 = inlined_call_operand.vmem [shape: f32[8,1], index: 20, kind: input, shape index: {}]
  %s21 = inlined_call_operand.vmem [shape: bf16[8,72], index: 21, kind: input, shape index: {}]
  %s22 = inlined_call_operand.vmem [shape: bf16[8,144], index: 22, kind: input, shape index: {}]
  %s23 = inlined_call_operand.vmem [shape: bf16[8,24], index: 23, kind: input, shape index: {}]
  %s24 = inlined_call_operand.vmem [shape: f32[8,1], index: 24, kind: input, shape index: {}]
  %s25 = inlined_call_operand.vmem [shape: f32[2,8,256], index: 25, kind: output, shape index: {}]
  %s26 = sld [smem:[#allocation0]]
  $region133: #{uhdb_forward.1} parent=0
    _
  %s28 = ssub.s32 1, %s26
  %s29 = scalar_select 0, %s28, %s26
  loop: start=0, step=1, limit=4
  $region2: #{uhdb_forward.1} parent=0 // loop_pre_header
    _
  $region3: #{uhdb_forward.1} parent=0 // loop_header
    %s31 = sphi 0, %s35
    %p32 = scmp.ge.s32.totalorder %s31, 4
    %s41 = sphi 0, %s43
    %s44 = sphi 0, %s41
    %s45 = sphi 0, %s44
    %s61 = sphi 0, %s45
    %s65 = sphi 0, %s65
    %s67 = sphi 0, %s65
    %s68 = sphi 0, %s67
    %s82 = sphi 0, %s68
    %s86 = sphi 0, %s86
    %s88 = sphi 0, %s86
    %s89 = sphi 0, %s88
    %s103 = sphi 0, %s89
    %s107 = sphi 0, %s107
    %s109 = sphi 0, %s107
    %s110 = sphi 0, %s109
    %s124 = sphi 0, %s110
    %s128 = sphi 0, %s128
    %s130 = sphi 0, %s128
    %s131 = sphi 0, %s130
    %s145 = sphi 0, %s131
    %s149 = sphi 0, %s149
    %s151 = sphi 0, %s149
    %s152 = sphi 0, %s151
    %s166 = sphi 0, %s152
    %s170 = sphi 0, %s170
    %s172 = sphi 0, %s170
    %s173 = sphi 0, %s172
    %s187 = sphi 0, %s173
    %s191 = sphi 0, %s191
    %s193 = sphi 0, %s191
    %s194 = sphi 0, %s193
    %s208 = sphi 0, %s194
    %s212 = sphi 0, %s212
    %s214 = sphi 0, %s212
    %s215 = sphi 0, %s214
    %s229 = sphi 0, %s215
    %s233 = sphi 0, %s233
    %s235 = sphi 0, %s233
    %s236 = sphi 0, %s235
    %s250 = sphi 0, %s236
    %s254 = sphi 0, %s254
    %s256 = sphi 0, %s254
    %s257 = sphi 0, %s256
    %s271 = sphi 0, %s257
    %s275 = sphi 0, %s275
    %s277 = sphi 0, %s275
    %s278 = sphi 0, %s277
    %s292 = sphi 0, %s278
    %s296 = sphi 0, %s296
    %s298 = sphi 0, %s296
    %s299 = sphi 0, %s298
    %s313 = sphi 0, %s299
    %s317 = sphi 0, %s317
    %s319 = sphi 0, %s317
    %s320 = sphi 0, %s319
    %s334 = sphi 0, %s320
    %s338 = sphi 0, %s338
    %s340 = sphi 0, %s338
    %s341 = sphi 0, %s340
    %s355 = sphi 0, %s341
    %s359 = sphi 0, %s359
    %s361 = sphi 0, %s359
    %s362 = sphi 0, %s361
    %s376 = sphi 0, %s362
    %s380 = sphi 0, %s380
    %s382 = sphi 0, %s380
    %s383 = sphi 0, %s382
    %s397 = sphi 0, %s383
    %s401 = sphi 0, %s401
    %s403 = sphi 0, %s401
    %s404 = sphi 0, %s403
    %s418 = sphi 0, %s404
    %s422 = sphi 0, %s422
    %s424 = sphi 0, %s422
    %s425 = sphi 0, %s424
    %s439 = sphi 0, %s425
    %s443 = sphi 0, %s443
    %s445 = sphi 0, %s443
    %s446 = sphi 0, %s445
    %s460 = sphi 0, %s446
    %s464 = sphi 0, %s464
    %s466 = sphi 0, %s464
    %s467 = sphi 0, %s466
    %s481 = sphi 0, %s467
    %s485 = sphi 0, %s485
    %s487 = sphi 0, %s485
    %s488 = sphi 0, %s487
    %s502 = sphi 0, %s488
    %s506 = sphi 0, %s506
    %s508 = sphi 0, %s506
    %s509 = sphi 0, %s508
    %s523 = sphi 0, %s509
    %s527 = sphi 0, %s527
    %s529 = sphi 0, %s527
    %s530 = sphi 0, %s529
    %s544 = sphi 0, %s530
    %s548 = sphi 0, %s548
    %s550 = sphi 0, %s548
    %s551 = sphi 0, %s550
    %s565 = sphi 0, %s551
    %s571 = sphi 0, %s573
    %s574 = sphi 0, %s571
    %s575 = sphi 0, %s574
    %s591 = sphi 0, %s575
  $region4: #{uhdb_forward.1} parent=0 // loop_header_branch
    %34 = sbr.rel (%p32) target = $region8
  $region5: #{uhdb_forward.1} parent=0 // loop_body
    %s36 = ssub.s32 %s31, 1
    %s37 = ssub.s32 %s31, 2
    %s38 = sadd.s32 %s31, 1
    %s39 = ssub.s32 %s31, %s38
    %p40 = scmp.eq.s32.totalorder %s39, 0
    %s42 = sadd.s32 %s41, 1
    %s43 = scalar_select %p40, %s41, %s42
    %p46 = pneg %p40
    %p47 = scmp.eq.s32.totalorder %s31, 1
    %p48 = por %p46, %p47
    %p49 = scmp.ne.s32.totalorder %s41, %s44
    %p50 = scmp.eq.s32.totalorder %s31, 0
    %p51 = por %p49, %p50
    %p52 = scmp.ne.s32.totalorder %s41, %s44
    %p53 = scmp.eq.s32.totalorder %s36, 1
    %p54 = por %p52, %p53
    %p55 = scmp.ne.s32.totalorder %s44, %s45
    %p56 = scmp.eq.s32.totalorder %s36, 0
    %p57 = por %p55, %p56
    %p58 = scmp.ne.s32.totalorder %s44, %s45
    %p59 = scmp.eq.s32.totalorder %s37, 1
    %p60 = por %p58, %p59
    %p62 = scmp.ne.s32.totalorder %s45, %s61
    %p63 = scmp.eq.s32.totalorder %s37, 0
    %p64 = por %p62, %p63
    %s66 = sadd.s32 %s65, 1
    %p69 = scmp.eq.s32.totalorder %s31, 1
    %p70 = scmp.ne.s32.totalorder %s65, %s67
    %p71 = scmp.eq.s32.totalorder %s31, 0
    %p72 = por %p70, %p71
    %p73 = scmp.ne.s32.totalorder %s65, %s67
    %p74 = scmp.eq.s32.totalorder %s36, 1
    %p75 = por %p73, %p74
    %p76 = scmp.ne.s32.totalorder %s67, %s68
    %p77 = scmp.eq.s32.totalorder %s36, 0
    %p78 = por %p76, %p77
    %p79 = scmp.ne.s32.totalorder %s67, %s68
    %p80 = scmp.eq.s32.totalorder %s37, 1
    %p81 = por %p79, %p80
    %p83 = scmp.ne.s32.totalorder %s68, %s82
    %p84 = scmp.eq.s32.totalorder %s37, 0
    %p85 = por %p83, %p84
    %s87 = sadd.s32 %s86, 1
    %p90 = scmp.eq.s32.totalorder %s31, 1
    %p91 = scmp.ne.s32.totalorder %s86, %s88
    %p92 = scmp.eq.s32.totalorder %s31, 0
    %p93 = por %p91, %p92
    %p94 = scmp.ne.s32.totalorder %s86, %s88
    %p95 = scmp.eq.s32.totalorder %s36, 1
    %p96 = por %p94, %p95
    %p97 = scmp.ne.s32.totalorder %s88, %s89
    %p98 = scmp.eq.s32.totalorder %s36, 0
    %p99 = por %p97, %p98
    %p100 = scmp.ne.s32.totalorder %s88, %s89
    %p101 = scmp.eq.s32.totalorder %s37, 1
    %p102 = por %p100, %p101
    %p104 = scmp.ne.s32.totalorder %s89, %s103
    %p105 = scmp.eq.s32.totalorder %s37, 0
    %p106 = por %p104, %p105
    %s108 = sadd.s32 %s107, 1
    %p111 = scmp.eq.s32.totalorder %s31, 1
    %p112 = scmp.ne.s32.totalorder %s107, %s109
    %p113 = scmp.eq.s32.totalorder %s31, 0
    %p114 = por %p112, %p113
    %p115 = scmp.ne.s32.totalorder %s107, %s109
    %p116 = scmp.eq.s32.totalorder %s36, 1
    %p117 = por %p115, %p116
    %p118 = scmp.ne.s32.totalorder %s109, %s110
    %p119 = scmp.eq.s32.totalorder %s36, 0
    %p120 = por %p118, %p119
    %p121 = scmp.ne.s32.totalorder %s109, %s110
    %p122 = scmp.eq.s32.totalorder %s37, 1
    %p123 = por %p121, %p122
    %p125 = scmp.ne.s32.totalorder %s110, %s124
    %p126 = scmp.eq.s32.totalorder %s37, 0
    %p127 = por %p125, %p126
    %s129 = sadd.s32 %s128, 1
    %p132 = scmp.eq.s32.totalorder %s31, 1
    %p133 = scmp.ne.s32.totalorder %s128, %s130
    %p134 = scmp.eq.s32.totalorder %s31, 0
    %p135 = por %p133, %p134
    %p136 = scmp.ne.s32.totalorder %s128, %s130
    %p137 = scmp.eq.s32.totalorder %s36, 1
    %p138 = por %p136, %p137
    %p139 = scmp.ne.s32.totalorder %s130, %s131
    %p140 = scmp.eq.s32.totalorder %s36, 0
    %p141 = por %p139, %p140
    %p142 = scmp.ne.s32.totalorder %s130, %s131
    %p143 = scmp.eq.s32.totalorder %s37, 1
    %p144 = por %p142, %p143
    %p146 = scmp.ne.s32.totalorder %s131, %s145
    %p147 = scmp.eq.s32.totalorder %s37, 0
    %p148 = por %p146, %p147
    %s150 = sadd.s32 %s149, 1
    %p153 = scmp.eq.s32.totalorder %s31, 1
    %p154 = scmp.ne.s32.totalorder %s149, %s151
    %p155 = scmp.eq.s32.totalorder %s31, 0
    %p156 = por %p154, %p155
    %p157 = scmp.ne.s32.totalorder %s149, %s151
    %p158 = scmp.eq.s32.totalorder %s36, 1
    %p159 = por %p157, %p158
    %p160 = scmp.ne.s32.totalorder %s151, %s152
    %p161 = scmp.eq.s32.totalorder %s36, 0
    %p162 = por %p160, %p161
    %p163 = scmp.ne.s32.totalorder %s151, %s152
    %p164 = scmp.eq.s32.totalorder %s37, 1
    %p165 = por %p163, %p164
    %p167 = scmp.ne.s32.totalorder %s152, %s166
    %p168 = scmp.eq.s32.totalorder %s37, 0
    %p169 = por %p167, %p168
    %s171 = sadd.s32 %s170, 1
    %p174 = scmp.eq.s32.totalorder %s31, 1
    %p175 = scmp.ne.s32.totalorder %s170, %s172
    %p176 = scmp.eq.s32.totalorder %s31, 0
    %p177 = por %p175, %p176
    %p178 = scmp.ne.s32.totalorder %s170, %s172
    %p179 = scmp.eq.s32.totalorder %s36, 1
    %p180 = por %p178, %p179
    %p181 = scmp.ne.s32.totalorder %s172, %s173
    %p182 = scmp.eq.s32.totalorder %s36, 0
    %p183 = por %p181, %p182
    %p184 = scmp.ne.s32.totalorder %s172, %s173
    %p185 = scmp.eq.s32.totalorder %s37, 1
    %p186 = por %p184, %p185
    %p188 = scmp.ne.s32.totalorder %s173, %s187
    %p189 = scmp.eq.s32.totalorder %s37, 0
    %p190 = por %p188, %p189
    %s192 = sadd.s32 %s191, 1
    %p195 = scmp.eq.s32.totalorder %s31, 1
    %p196 = scmp.ne.s32.totalorder %s191, %s193
    %p197 = scmp.eq.s32.totalorder %s31, 0
    %p198 = por %p196, %p197
    %p199 = scmp.ne.s32.totalorder %s191, %s193
    %p200 = scmp.eq.s32.totalorder %s36, 1
    %p201 = por %p199, %p200
    %p202 = scmp.ne.s32.totalorder %s193, %s194
    %p203 = scmp.eq.s32.totalorder %s36, 0
    %p204 = por %p202, %p203
    %p205 = scmp.ne.s32.totalorder %s193, %s194
    %p206 = scmp.eq.s32.totalorder %s37, 1
    %p207 = por %p205, %p206
    %p209 = scmp.ne.s32.totalorder %s194, %s208
    %p210 = scmp.eq.s32.totalorder %s37, 0
    %p211 = por %p209, %p210
    %s213 = sadd.s32 %s212, 1
    %p216 = scmp.eq.s32.totalorder %s31, 1
    %p217 = scmp.ne.s32.totalorder %s212, %s214
    %p218 = scmp.eq.s32.totalorder %s31, 0
    %p219 = por %p217, %p218
    %p220 = scmp.ne.s32.totalorder %s212, %s214
    %p221 = scmp.eq.s32.totalorder %s36, 1
    %p222 = por %p220, %p221
    %p223 = scmp.ne.s32.totalorder %s214, %s215
    %p224 = scmp.eq.s32.totalorder %s36, 0
    %p225 = por %p223, %p224
    %p226 = scmp.ne.s32.totalorder %s214, %s215
    %p227 = scmp.eq.s32.totalorder %s37, 1
    %p228 = por %p226, %p227
    %p230 = scmp.ne.s32.totalorder %s215, %s229
    %p231 = scmp.eq.s32.totalorder %s37, 0
    %p232 = por %p230, %p231
    %s234 = sadd.s32 %s233, 1
    %p237 = scmp.eq.s32.totalorder %s31, 1
    %p238 = scmp.ne.s32.totalorder %s233, %s235
    %p239 = scmp.eq.s32.totalorder %s31, 0
    %p240 = por %p238, %p239
    %p241 = scmp.ne.s32.totalorder %s233, %s235
    %p242 = scmp.eq.s32.totalorder %s36, 1
    %p243 = por %p241, %p242
    %p244 = scmp.ne.s32.totalorder %s235, %s236
    %p245 = scmp.eq.s32.totalorder %s36, 0
    %p246 = por %p244, %p245
    %p247 = scmp.ne.s32.totalorder %s235, %s236
    %p248 = scmp.eq.s32.totalorder %s37, 1
    %p249 = por %p247, %p248
    %p251 = scmp.ne.s32.totalorder %s236, %s250
    %p252 = scmp.eq.s32.totalorder %s37, 0
    %p253 = por %p251, %p252
    %s255 = sadd.s32 %s254, 1
    %p258 = scmp.eq.s32.totalorder %s31, 1
    %p259 = scmp.ne.s32.totalorder %s254, %s256
    %p260 = scmp.eq.s32.totalorder %s31, 0
    %p261 = por %p259, %p260
    %p262 = scmp.ne.s32.totalorder %s254, %s256
    %p263 = scmp.eq.s32.totalorder %s36, 1
    %p264 = por %p262, %p263
    %p265 = scmp.ne.s32.totalorder %s256, %s257
    %p266 = scmp.eq.s32.totalorder %s36, 0
    %p267 = por %p265, %p266
    %p268 = scmp.ne.s32.totalorder %s256, %s257
    %p269 = scmp.eq.s32.totalorder %s37, 1
    %p270 = por %p268, %p269
    %p272 = scmp.ne.s32.totalorder %s257, %s271
    %p273 = scmp.eq.s32.totalorder %s37, 0
    %p274 = por %p272, %p273
    %s276 = sadd.s32 %s275, 1
    %p279 = scmp.eq.s32.totalorder %s31, 1
    %p280 = scmp.ne.s32.totalorder %s275, %s277
    %p281 = scmp.eq.s32.totalorder %s31, 0
    %p282 = por %p280, %p281
    %p283 = scmp.ne.s32.totalorder %s275, %s277
    %p284 = scmp.eq.s32.totalorder %s36, 1
    %p285 = por %p283, %p284
    %p286 = scmp.ne.s32.totalorder %s277, %s278
    %p287 = scmp.eq.s32.totalorder %s36, 0
    %p288 = por %p286, %p287
    %p289 = scmp.ne.s32.totalorder %s277, %s278
    %p290 = scmp.eq.s32.totalorder %s37, 1
    %p291 = por %p289, %p290
    %p293 = scmp.ne.s32.totalorder %s278, %s292
    %p294 = scmp.eq.s32.totalorder %s37, 0
    %p295 = por %p293, %p294
    %s297 = sadd.s32 %s296, 1
    %p300 = scmp.eq.s32.totalorder %s31, 1
    %p301 = scmp.ne.s32.totalorder %s296, %s298
    %p302 = scmp.eq.s32.totalorder %s31, 0
    %p303 = por %p301, %p302
    %p304 = scmp.ne.s32.totalorder %s296, %s298
    %p305 = scmp.eq.s32.totalorder %s36, 1
    %p306 = por %p304, %p305
    %p307 = scmp.ne.s32.totalorder %s298, %s299
    %p308 = scmp.eq.s32.totalorder %s36, 0
    %p309 = por %p307, %p308
    %p310 = scmp.ne.s32.totalorder %s298, %s299
    %p311 = scmp.eq.s32.totalorder %s37, 1
    %p312 = por %p310, %p311
    %p314 = scmp.ne.s32.totalorder %s299, %s313
    %p315 = scmp.eq.s32.totalorder %s37, 0
    %p316 = por %p314, %p315
    %s318 = sadd.s32 %s317, 1
    %p321 = scmp.eq.s32.totalorder %s31, 1
    %p322 = scmp.ne.s32.totalorder %s317, %s319
    %p323 = scmp.eq.s32.totalorder %s31, 0
    %p324 = por %p322, %p323
    %p325 = scmp.ne.s32.totalorder %s317, %s319
    %p326 = scmp.eq.s32.totalorder %s36, 1
    %p327 = por %p325, %p326
    %p328 = scmp.ne.s32.totalorder %s319, %s320
    %p329 = scmp.eq.s32.totalorder %s36, 0
    %p330 = por %p328, %p329
    %p331 = scmp.ne.s32.totalorder %s319, %s320
    %p332 = scmp.eq.s32.totalorder %s37, 1
    %p333 = por %p331, %p332
    %p335 = scmp.ne.s32.totalorder %s320, %s334
    %p336 = scmp.eq.s32.totalorder %s37, 0
    %p337 = por %p335, %p336
    %s339 = sadd.s32 %s338, 1
    %p342 = scmp.eq.s32.totalorder %s31, 1
    %p343 = scmp.ne.s32.totalorder %s338, %s340
    %p344 = scmp.eq.s32.totalorder %s31, 0
    %p345 = por %p343, %p344
    %p346 = scmp.ne.s32.totalorder %s338, %s340
    %p347 = scmp.eq.s32.totalorder %s36, 1
    %p348 = por %p346, %p347
    %p349 = scmp.ne.s32.totalorder %s340, %s341
    %p350 = scmp.eq.s32.totalorder %s36, 0
    %p351 = por %p349, %p350
    %p352 = scmp.ne.s32.totalorder %s340, %s341
    %p353 = scmp.eq.s32.totalorder %s37, 1
    %p354 = por %p352, %p353
    %p356 = scmp.ne.s32.totalorder %s341, %s355
    %p357 = scmp.eq.s32.totalorder %s37, 0
    %p358 = por %p356, %p357
    %s360 = sadd.s32 %s359, 1
    %p363 = scmp.eq.s32.totalorder %s31, 1
    %p364 = scmp.ne.s32.totalorder %s359, %s361
    %p365 = scmp.eq.s32.totalorder %s31, 0
    %p366 = por %p364, %p365
    %p367 = scmp.ne.s32.totalorder %s359, %s361
    %p368 = scmp.eq.s32.totalorder %s36, 1
    %p369 = por %p367, %p368
    %p370 = scmp.ne.s32.totalorder %s361, %s362
    %p371 = scmp.eq.s32.totalorder %s36, 0
    %p372 = por %p370, %p371
    %p373 = scmp.ne.s32.totalorder %s361, %s362
    %p374 = scmp.eq.s32.totalorder %s37, 1
    %p375 = por %p373, %p374
    %p377 = scmp.ne.s32.totalorder %s362, %s376
    %p378 = scmp.eq.s32.totalorder %s37, 0
    %p379 = por %p377, %p378
    %s381 = sadd.s32 %s380, 1
    %p384 = scmp.eq.s32.totalorder %s31, 1
    %p385 = scmp.ne.s32.totalorder %s380, %s382
    %p386 = scmp.eq.s32.totalorder %s31, 0
    %p387 = por %p385, %p386
    %p388 = scmp.ne.s32.totalorder %s380, %s382
    %p389 = scmp.eq.s32.totalorder %s36, 1
    %p390 = por %p388, %p389
    %p391 = scmp.ne.s32.totalorder %s382, %s383
    %p392 = scmp.eq.s32.totalorder %s36, 0
    %p393 = por %p391, %p392
    %p394 = scmp.ne.s32.totalorder %s382, %s383
    %p395 = scmp.eq.s32.totalorder %s37, 1
    %p396 = por %p394, %p395
    %p398 = scmp.ne.s32.totalorder %s383, %s397
    %p399 = scmp.eq.s32.totalorder %s37, 0
    %p400 = por %p398, %p399
    %s402 = sadd.s32 %s401, 1
    %p405 = scmp.eq.s32.totalorder %s31, 1
    %p406 = scmp.ne.s32.totalorder %s401, %s403
    %p407 = scmp.eq.s32.totalorder %s31, 0
    %p408 = por %p406, %p407
    %p409 = scmp.ne.s32.totalorder %s401, %s403
    %p410 = scmp.eq.s32.totalorder %s36, 1
    %p411 = por %p409, %p410
    %p412 = scmp.ne.s32.totalorder %s403, %s404
    %p413 = scmp.eq.s32.totalorder %s36, 0
    %p414 = por %p412, %p413
    %p415 = scmp.ne.s32.totalorder %s403, %s404
    %p416 = scmp.eq.s32.totalorder %s37, 1
    %p417 = por %p415, %p416
    %p419 = scmp.ne.s32.totalorder %s404, %s418
    %p420 = scmp.eq.s32.totalorder %s37, 0
    %p421 = por %p419, %p420
    %s423 = sadd.s32 %s422, 1
    %p426 = scmp.eq.s32.totalorder %s31, 1
    %p427 = scmp.ne.s32.totalorder %s422, %s424
    %p428 = scmp.eq.s32.totalorder %s31, 0
    %p429 = por %p427, %p428
    %p430 = scmp.ne.s32.totalorder %s422, %s424
    %p431 = scmp.eq.s32.totalorder %s36, 1
    %p432 = por %p430, %p431
    %p433 = scmp.ne.s32.totalorder %s424, %s425
    %p434 = scmp.eq.s32.totalorder %s36, 0
    %p435 = por %p433, %p434
    %p436 = scmp.ne.s32.totalorder %s424, %s425
    %p437 = scmp.eq.s32.totalorder %s37, 1
    %p438 = por %p436, %p437
    %p440 = scmp.ne.s32.totalorder %s425, %s439
    %p441 = scmp.eq.s32.totalorder %s37, 0
    %p442 = por %p440, %p441
    %s444 = sadd.s32 %s443, 1
    %p447 = scmp.eq.s32.totalorder %s31, 1
    %p448 = scmp.ne.s32.totalorder %s443, %s445
    %p449 = scmp.eq.s32.totalorder %s31, 0
    %p450 = por %p448, %p449
    %p451 = scmp.ne.s32.totalorder %s443, %s445
    %p452 = scmp.eq.s32.totalorder %s36, 1
    %p453 = por %p451, %p452
    %p454 = scmp.ne.s32.totalorder %s445, %s446
    %p455 = scmp.eq.s32.totalorder %s36, 0
    %p456 = por %p454, %p455
    %p457 = scmp.ne.s32.totalorder %s445, %s446
    %p458 = scmp.eq.s32.totalorder %s37, 1
    %p459 = por %p457, %p458
    %p461 = scmp.ne.s32.totalorder %s446, %s460
    %p462 = scmp.eq.s32.totalorder %s37, 0
    %p463 = por %p461, %p462
    %s465 = sadd.s32 %s464, 1
    %p468 = scmp.eq.s32.totalorder %s31, 1
    %p469 = scmp.ne.s32.totalorder %s464, %s466
    %p470 = scmp.eq.s32.totalorder %s31, 0
    %p471 = por %p469, %p470
    %p472 = scmp.ne.s32.totalorder %s464, %s466
    %p473 = scmp.eq.s32.totalorder %s36, 1
    %p474 = por %p472, %p473
    %p475 = scmp.ne.s32.totalorder %s466, %s467
    %p476 = scmp.eq.s32.totalorder %s36, 0
    %p477 = por %p475, %p476
    %p478 = scmp.ne.s32.totalorder %s466, %s467
    %p479 = scmp.eq.s32.totalorder %s37, 1
    %p480 = por %p478, %p479
    %p482 = scmp.ne.s32.totalorder %s467, %s481
    %p483 = scmp.eq.s32.totalorder %s37, 0
    %p484 = por %p482, %p483
    %s486 = sadd.s32 %s485, 1
    %p489 = scmp.eq.s32.totalorder %s31, 1
    %p490 = scmp.ne.s32.totalorder %s485, %s487
    %p491 = scmp.eq.s32.totalorder %s31, 0
    %p492 = por %p490, %p491
    %p493 = scmp.ne.s32.totalorder %s485, %s487
    %p494 = scmp.eq.s32.totalorder %s36, 1
    %p495 = por %p493, %p494
    %p496 = scmp.ne.s32.totalorder %s487, %s488
    %p497 = scmp.eq.s32.totalorder %s36, 0
    %p498 = por %p496, %p497
    %p499 = scmp.ne.s32.totalorder %s487, %s488
    %p500 = scmp.eq.s32.totalorder %s37, 1
    %p501 = por %p499, %p500
    %p503 = scmp.ne.s32.totalorder %s488, %s502
    %p504 = scmp.eq.s32.totalorder %s37, 0
    %p505 = por %p503, %p504
    %s507 = sadd.s32 %s506, 1
    %p510 = scmp.eq.s32.totalorder %s31, 1
    %p511 = scmp.ne.s32.totalorder %s506, %s508
    %p512 = scmp.eq.s32.totalorder %s31, 0
    %p513 = por %p511, %p512
    %p514 = scmp.ne.s32.totalorder %s506, %s508
    %p515 = scmp.eq.s32.totalorder %s36, 1
    %p516 = por %p514, %p515
    %p517 = scmp.ne.s32.totalorder %s508, %s509
    %p518 = scmp.eq.s32.totalorder %s36, 0
    %p519 = por %p517, %p518
    %p520 = scmp.ne.s32.totalorder %s508, %s509
    %p521 = scmp.eq.s32.totalorder %s37, 1
    %p522 = por %p520, %p521
    %p524 = scmp.ne.s32.totalorder %s509, %s523
    %p525 = scmp.eq.s32.totalorder %s37, 0
    %p526 = por %p524, %p525
    %s528 = sadd.s32 %s527, 1
    %p531 = scmp.eq.s32.totalorder %s31, 1
    %p532 = scmp.ne.s32.totalorder %s527, %s529
    %p533 = scmp.eq.s32.totalorder %s31, 0
    %p534 = por %p532, %p533
    %p535 = scmp.ne.s32.totalorder %s527, %s529
    %p536 = scmp.eq.s32.totalorder %s36, 1
    %p537 = por %p535, %p536
    %p538 = scmp.ne.s32.totalorder %s529, %s530
    %p539 = scmp.eq.s32.totalorder %s36, 0
    %p540 = por %p538, %p539
    %p541 = scmp.ne.s32.totalorder %s529, %s530
    %p542 = scmp.eq.s32.totalorder %s37, 1
    %p543 = por %p541, %p542
    %p545 = scmp.ne.s32.totalorder %s530, %s544
    %p546 = scmp.eq.s32.totalorder %s37, 0
    %p547 = por %p545, %p546
    %s549 = sadd.s32 %s548, 1
    %p552 = scmp.eq.s32.totalorder %s31, 1
    %p553 = scmp.ne.s32.totalorder %s548, %s550
    %p554 = scmp.eq.s32.totalorder %s31, 0
    %p555 = por %p553, %p554
    %p556 = scmp.ne.s32.totalorder %s548, %s550
    %p557 = scmp.eq.s32.totalorder %s36, 1
    %p558 = por %p556, %p557
    %p559 = scmp.ne.s32.totalorder %s550, %s551
    %p560 = scmp.eq.s32.totalorder %s36, 0
    %p561 = por %p559, %p560
    %p562 = scmp.ne.s32.totalorder %s550, %s551
    %p563 = scmp.eq.s32.totalorder %s37, 1
    %p564 = por %p562, %p563
    %p566 = scmp.ne.s32.totalorder %s551, %s565
    %p567 = scmp.eq.s32.totalorder %s37, 0
    %p568 = por %p566, %p567
    %s569 = ssub.s32 %s31, %s38
    %p570 = scmp.eq.s32.totalorder %s569, 0
    %s572 = sadd.s32 %s571, 1
    %s573 = scalar_select %p570, %s571, %s572
    %p576 = pneg %p570
    %p577 = scmp.eq.s32.totalorder %s31, 1
    %p578 = por %p576, %p577
    %p579 = scmp.ne.s32.totalorder %s571, %s574
    %p580 = scmp.eq.s32.totalorder %s31, 0
    %p581 = por %p579, %p580
    %p582 = scmp.ne.s32.totalorder %s571, %s574
    %p583 = scmp.eq.s32.totalorder %s36, 1
    %p584 = por %p582, %p583
    %p585 = scmp.ne.s32.totalorder %s574, %s575
    %p586 = scmp.eq.s32.totalorder %s36, 0
    %p587 = por %p585, %p586
    %p588 = scmp.ne.s32.totalorder %s574, %s575
    %p589 = scmp.eq.s32.totalorder %s37, 1
    %p590 = por %p588, %p589
    %p592 = scmp.ne.s32.totalorder %s575, %s591
    %p593 = scmp.eq.s32.totalorder %s37, 0
    %p594 = por %p592, %p593
    %p595 = scmp.le.s32.totalorder 1, %s31
    %p596 = scmp.lt.s32.totalorder %s31, 3
    %p597 = pnand %p595, %p596
    %p598 = pneg %p597
    // Predicated region
    $region9: #{uhdb_forward.1} parent=5 // pred_check
      _
    $region10: #{uhdb_forward.1} parent=5 // pred_check_branch
      %600 = sbr.rel (%p597) target = $region12
    $region11: #{uhdb_forward.1} parent=5 // pred_region
      %s601 = ssub.s32 %s31, 1
      // Predicated region
      $region13: #{uhdb_forward.1} parent=11 // pred_check
        %p602 = pneg %p78
      $region14: #{uhdb_forward.1} parent=11 // pred_check_branch
        %604 = sbr.rel (%p602) target = $region16
      $region15: #{uhdb_forward.1} parent=11 // pred_region
        _
      $region16: #{uhdb_forward.1} parent=11 // pred_fallthru
        _
      // Predicated region
      $region17: #{uhdb_forward.1} parent=11 // pred_check
        %p605 = pneg %p99
      $region18: #{uhdb_forward.1} parent=11 // pred_check_branch
        %607 = sbr.rel (%p605) target = $region20
      $region19: #{uhdb_forward.1} parent=11 // pred_region
        _
      $region20: #{uhdb_forward.1} parent=11 // pred_fallthru
        _
      // Predicated region
      $region21: #{uhdb_forward.1} parent=11 // pred_check
        %p608 = pneg %p120
      $region22: #{uhdb_forward.1} parent=11 // pred_check_branch
        %610 = sbr.rel (%p608) target = $region24
      $region23: #{uhdb_forward.1} parent=11 // pred_region
        _
      $region24: #{uhdb_forward.1} parent=11 // pred_fallthru
        _
      // Predicated region
      $region25: #{uhdb_forward.1} parent=11 // pred_check
        %p611 = pneg %p141
      $region26: #{uhdb_forward.1} parent=11 // pred_check_branch
        %613 = sbr.rel (%p611) target = $region28
      $region27: #{uhdb_forward.1} parent=11 // pred_region
        _
      $region28: #{uhdb_forward.1} parent=11 // pred_fallthru
        _
      // Predicated region
      $region29: #{uhdb_forward.1} parent=11 // pred_check
        %p614 = pneg %p162
      $region30: #{uhdb_forward.1} parent=11 // pred_check_branch
        %616 = sbr.rel (%p614) target = $region32
      $region31: #{uhdb_forward.1} parent=11 // pred_region
        _
      $region32: #{uhdb_forward.1} parent=11 // pred_fallthru
        _
      // Predicated region
      $region33: #{uhdb_forward.1} parent=11 // pred_check
        %p617 = pneg %p183
      $region34: #{uhdb_forward.1} parent=11 // pred_check_branch
        %619 = sbr.rel (%p617) target = $region36
      $region35: #{uhdb_forward.1} parent=11 // pred_region
        _
      $region36: #{uhdb_forward.1} parent=11 // pred_fallthru
        _
      // Predicated region
      $region37: #{uhdb_forward.1} parent=11 // pred_check
        %p620 = pneg %p204
      $region38: #{uhdb_forward.1} parent=11 // pred_check_branch
        %622 = sbr.rel (%p620) target = $region40
      $region39: #{uhdb_forward.1} parent=11 // pred_region
        _
      $region40: #{uhdb_forward.1} parent=11 // pred_fallthru
        _
      // Predicated region
      $region41: #{uhdb_forward.1} parent=11 // pred_check
        %p623 = pneg %p225
      $region42: #{uhdb_forward.1} parent=11 // pred_check_branch
        %625 = sbr.rel (%p623) target = $region44
      $region43: #{uhdb_forward.1} parent=11 // pred_region
        _
      $region44: #{uhdb_forward.1} parent=11 // pred_fallthru
        _
      // Predicated region
      $region45: #{uhdb_forward.1} parent=11 // pred_check
        %p626 = pneg %p246
      $region46: #{uhdb_forward.1} parent=11 // pred_check_branch
        %628 = sbr.rel (%p626) target = $region48
      $region47: #{uhdb_forward.1} parent=11 // pred_region
        _
      $region48: #{uhdb_forward.1} parent=11 // pred_fallthru
        _
      // Predicated region
      $region49: #{uhdb_forward.1} parent=11 // pred_check
        %p629 = pneg %p267
      $region50: #{uhdb_forward.1} parent=11 // pred_check_branch
        %631 = sbr.rel (%p629) target = $region52
      $region51: #{uhdb_forward.1} parent=11 // pred_region
        _
      $region52: #{uhdb_forward.1} parent=11 // pred_fallthru
        _
      // Predicated region
      $region53: #{uhdb_forward.1} parent=11 // pred_check
        %p632 = pneg %p288
      $region54: #{uhdb_forward.1} parent=11 // pred_check_branch
        %634 = sbr.rel (%p632) target = $region56
      $region55: #{uhdb_forward.1} parent=11 // pred_region
        _
      $region56: #{uhdb_forward.1} parent=11 // pred_fallthru
        _
      // Predicated region
      $region57: #{uhdb_forward.1} parent=11 // pred_check
        %p635 = pneg %p309
      $region58: #{uhdb_forward.1} parent=11 // pred_check_branch
        %637 = sbr.rel (%p635) target = $region60
      $region59: #{uhdb_forward.1} parent=11 // pred_region
        _
      $region60: #{uhdb_forward.1} parent=11 // pred_fallthru
        _
      // Predicated region
      $region61: #{uhdb_forward.1} parent=11 // pred_check
        %p638 = pneg %p330
      $region62: #{uhdb_forward.1} parent=11 // pred_check_branch
        %640 = sbr.rel (%p638) target = $region64
      $region63: #{uhdb_forward.1} parent=11 // pred_region
        _
      $region64: #{uhdb_forward.1} parent=11 // pred_fallthru
        _
      // Predicated region
      $region65: #{uhdb_forward.1} parent=11 // pred_check
        %p641 = pneg %p351
      $region66: #{uhdb_forward.1} parent=11 // pred_check_branch
        %643 = sbr.rel (%p641) target = $region68
      $region67: #{uhdb_forward.1} parent=11 // pred_region
        _
      $region68: #{uhdb_forward.1} parent=11 // pred_fallthru
        _
      // Predicated region
      $region69: #{uhdb_forward.1} parent=11 // pred_check
        %p644 = pneg %p372
      $region70: #{uhdb_forward.1} parent=11 // pred_check_branch
        %646 = sbr.rel (%p644) target = $region72
      $region71: #{uhdb_forward.1} parent=11 // pred_region
        _
      $region72: #{uhdb_forward.1} parent=11 // pred_fallthru
        _
      // Predicated region
      $region73: #{uhdb_forward.1} parent=11 // pred_check
        %p647 = pneg %p393
      $region74: #{uhdb_forward.1} parent=11 // pred_check_branch
        %649 = sbr.rel (%p647) target = $region76
      $region75: #{uhdb_forward.1} parent=11 // pred_region
        _
      $region76: #{uhdb_forward.1} parent=11 // pred_fallthru
        _
      // Predicated region
      $region77: #{uhdb_forward.1} parent=11 // pred_check
        %p650 = pneg %p414
      $region78: #{uhdb_forward.1} parent=11 // pred_check_branch
        %652 = sbr.rel (%p650) target = $region80
      $region79: #{uhdb_forward.1} parent=11 // pred_region
        _
      $region80: #{uhdb_forward.1} parent=11 // pred_fallthru
        _
      // Predicated region
      $region81: #{uhdb_forward.1} parent=11 // pred_check
        %p653 = pneg %p435
      $region82: #{uhdb_forward.1} parent=11 // pred_check_branch
        %655 = sbr.rel (%p653) target = $region84
      $region83: #{uhdb_forward.1} parent=11 // pred_region
        _
      $region84: #{uhdb_forward.1} parent=11 // pred_fallthru
        _
      // Predicated region
      $region85: #{uhdb_forward.1} parent=11 // pred_check
        %p656 = pneg %p456
      $region86: #{uhdb_forward.1} parent=11 // pred_check_branch
        %658 = sbr.rel (%p656) target = $region88
      $region87: #{uhdb_forward.1} parent=11 // pred_region
        _
      $region88: #{uhdb_forward.1} parent=11 // pred_fallthru
        _
      // Predicated region
      $region89: #{uhdb_forward.1} parent=11 // pred_check
        %p659 = pneg %p477
      $region90: #{uhdb_forward.1} parent=11 // pred_check_branch
        %661 = sbr.rel (%p659) target = $region92
      $region91: #{uhdb_forward.1} parent=11 // pred_region
        _
      $region92: #{uhdb_forward.1} parent=11 // pred_fallthru
        _
      // Predicated region
      $region93: #{uhdb_forward.1} parent=11 // pred_check
        %p662 = pneg %p498
      $region94: #{uhdb_forward.1} parent=11 // pred_check_branch
        %664 = sbr.rel (%p662) target = $region96
      $region95: #{uhdb_forward.1} parent=11 // pred_region
        _
      $region96: #{uhdb_forward.1} parent=11 // pred_fallthru
        _
      // Predicated region
      $region97: #{uhdb_forward.1} parent=11 // pred_check
        %p665 = pneg %p519
      $region98: #{uhdb_forward.1} parent=11 // pred_check_branch
        %667 = sbr.rel (%p665) target = $region100
      $region99: #{uhdb_forward.1} parent=11 // pred_region
        _
      $region100: #{uhdb_forward.1} parent=11 // pred_fallthru
        _
      // Predicated region
      $region101: #{uhdb_forward.1} parent=11 // pred_check
        %p668 = pneg %p540
      $region102: #{uhdb_forward.1} parent=11 // pred_check_branch
        %670 = sbr.rel (%p668) target = $region104
      $region103: #{uhdb_forward.1} parent=11 // pred_region
        _
      $region104: #{uhdb_forward.1} parent=11 // pred_fallthru
        _
      // Predicated region
      $region105: #{uhdb_forward.1} parent=11 // pred_check
        %p671 = pneg %p561
      $region106: #{uhdb_forward.1} parent=11 // pred_check_branch
        %673 = sbr.rel (%p671) target = $region108
      $region107: #{uhdb_forward.1} parent=11 // pred_region
        _
      $region108: #{uhdb_forward.1} parent=11 // pred_fallthru
        _
    $region12: #{uhdb_forward.1} parent=5 // pred_fallthru
      _
    %p674 = scmp.lt.s32.totalorder %s31, 2
    // Predicated region
    $region109: #{uhdb_forward.1} parent=5 // pred_check
      %p675 = pneg %p674
    $region110: #{uhdb_forward.1} parent=5 // pred_check_branch
      %677 = sbr.rel (%p675) target = $region112
    $region111: #{uhdb_forward.1} parent=5 // pred_region
      // Predicated region
      $region113: #{uhdb_forward.1} parent=111 // pred_check
        %p678 = pneg %p51
      $region114: #{uhdb_forward.1} parent=111 // pred_check_branch
        %680 = sbr.rel (%p678) target = $region116
      $region115: #{uhdb_forward.1} parent=111 // pred_region
        %p681 = scmp.lt.s32.totalorder %s31, 1
        %s682 = scalar_select %p681, %s31, 1
        %s683 = smul.addr %s682, 2
        %s684 = smul.addr %s683, 8
        %s685 = scalar_lea.vmem %s0, %s684
      $region116: #{uhdb_forward.1} parent=111 // pred_fallthru
        _
    $region112: #{uhdb_forward.1} parent=5 // pred_fallthru
      _
    %p686 = scmp.le.s32.totalorder 1, %s31
    %p687 = scmp.lt.s32.totalorder %s31, 3
    %p688 = pnand %p686, %p687
    %p689 = pneg %p688
    // Predicated region
    $region117: #{uhdb_forward.1} parent=5 // pred_check
      _
    $region118: #{uhdb_forward.1} parent=5 // pred_check_branch
      %691 = sbr.rel (%p688) target = $region120
    $region119: #{uhdb_forward.1} parent=5 // pred_region
      %s692 = ssub.s32 %s31, 1
      %p693 = scmp.lt.s32.totalorder %s36, 1
      %s694 = scalar_select %p693, %s36, 1
      %s695 = smul.addr %s694, 2
      %s696 = smul.addr %s695, 8
      %s697 = scalar_lea.vmem %s0, %s696
      %p698 = pneg %p57
      %p699 = pneg %p54
      %p700 = pneg %p78
      %p701 = pneg %p75
      %p702 = pneg %p99
      %p703 = pneg %p96
      %p704 = pneg %p120
      %p705 = pneg %p117
      %p706 = pneg %p141
      %p707 = pneg %p138
      %p708 = pneg %p162
      %p709 = pneg %p159
      %p710 = pneg %p183
      %p711 = pneg %p180
      %p712 = pneg %p204
      %p713 = pneg %p201
      %p714 = pneg %p225
      %p715 = pneg %p222
      %p716 = pneg %p246
      %p717 = pneg %p243
      %p718 = pneg %p267
      %p719 = pneg %p264
      %p720 = pneg %p288
      %p721 = pneg %p285
      %p722 = pneg %p309
      %p723 = pneg %p306
      %p724 = pneg %p330
      %p725 = pneg %p327
      %p726 = pneg %p351
      %p727 = pneg %p348
      %p728 = pneg %p372
      %p729 = pneg %p369
      %p730 = pneg %p393
      %p731 = pneg %p390
      %p732 = pneg %p414
      %p733 = pneg %p411
      %p734 = pneg %p435
      %p735 = pneg %p432
      %p736 = pneg %p456
      %p737 = pneg %p453
      %p738 = pneg %p477
      %p739 = pneg %p474
      %p740 = pneg %p498
      %p741 = pneg %p495
      %p742 = pneg %p519
      %p743 = pneg %p516
      %p744 = pneg %p540
      %p745 = pneg %p537
      %p746 = pneg %p561
      %p747 = pneg %p558
      %p748 = pneg %p587
      %p749 = pneg %p584
      %p750 = scmp.lt.s32.totalorder %s36, 1
      %s751 = scalar_select %p750, %s36, 1
      %s752 = smul.addr %s751, 2
      %s753 = smul.addr %s752, 8
      %s754 = scalar_lea.vmem %s25, %s753
      %p755 = scmp.lt.s32.totalorder %s36, 1
      %s756 = scalar_select %p755, %s36, 1
      %s757 = smul.addr %s756, 2
      %s758 = smul.addr %s757, 8
      %s759 = scalar_lea.vmem %s0, %s758
      %p760 = scmp.lt.s32.totalorder %s36, 1
      %s761 = scalar_select %p760, %s36, 1
      %s762 = smul.addr %s761, 2
      %s763 = smul.addr %s762, 8
      %s764 = scalar_lea.vmem %s25, %s763
      %v766 = vlaneseq
      %v767 = vand.u32 %v766, 127
      %v768 = vadd.s32 %v767, 128
      %vm769 = vcmp.lt.s32.totalorder %v767, 0
      %v770 = vsub.s32 0, %v767
      %v771 = vsel %vm769, %v770, %v767
      %v772 = vshrl.u32 %v771, 4
      %v773 = vand.u32 %v771, 15
      %v774 = vsub.s32 0, %v773
      %v775 = vsel %vm769, %v774, %v773
      %vm776 = vcmp.lt.s32.totalorder %v768, 0
      %v777 = vsub.s32 0, %v768
      %v778 = vsel %vm776, %v777, %v768
      %v779 = vshrl.u32 %v778, 4
      %v780 = vand.u32 %v778, 15
      %v781 = vsub.s32 0, %v780
      %v782 = vsel %vm776, %v781, %v780
      %vm783 = vcmp.ne.s32.totalorder %v775, 0
      %vm784 = vcmp.ne.s32.totalorder %v782, 0
      %vm785 = vcmp.lt.s32.totalorder %v775, 0
      %vm786 = vcmp.lt.s32.totalorder %v782, 0
      %vm787 = vmand %vm785, %vm783
      %vm788 = vmand %vm786, %vm784
      %v789 = vadd.s32 %v775, 16
      %v790 = vadd.s32 %v782, 16
      %v791 = vsel %vm787, %v789, %v775
      %v792 = vsel %vm788, %v790, %v782
      %vm793 = vcmp.ge.s32.totalorder %v791, 1
      %vm794 = vcmp.ge.s32.totalorder %v792, 1
      %vm795 = vcmp.lt.s32.totalorder %v791, 15
      %vm796 = vcmp.lt.s32.totalorder %v792, 15
      %797 = vst [vmem:[#allocation2] sm:$0xff] 0.0
      %798 = vst [vmem:[#allocation2 + $0x8] sm:$0xff] 0.0
      %799 = vst [vmem:[#allocation2 + $0x10] sm:$0xff] 0.0
      %800 = vst [vmem:[#allocation2 + $0x18] sm:$0xff] 0.0
      %801 = vst [vmem:[#allocation2 + $0x20] sm:$0xff] 0.0
      %802 = vst [vmem:[#allocation2 + $0x28] sm:$0xff] 0.0
      %803 = vst [vmem:[#allocation2 + $0x30] sm:$0xff] 0.0
      %804 = vst [vmem:[#allocation2 + $0x38] sm:$0xff] 0.0
      %805 = vst [vmem:[#allocation2 + $0x40] sm:$0xff] 0.0
      %806 = vst [vmem:[#allocation2 + $0x48] sm:$0xff] 0.0
      %807 = vst [vmem:[#allocation2 + $0x50] sm:$0xff] 0.0
      %808 = vst [vmem:[#allocation2 + $0x58] sm:$0xff] 0.0
      %v809 = vld [vmem:[%s1] sm:$0xf]
      %v810 = vld [vmem:[%s2] sm:$0xff]
      %v811 = vld [vmem:[%s3] sm:$0xf]
      %v812 = vld [vmem:[%s4] sm:$0xff]
      %v813 = vld [vmem:[%s5] sm:$0xf]
      %v814 = vld [vmem:[%s6] sm:$0xff]
      %v815 = vld [vmem:[%s7] sm:$0xf]
      %v816 = vld [vmem:[%s8] sm:$0xff]
      %v817 = vld [vmem:[%s9] sm:$0xf]
      %v818 = vld [vmem:[%s10] sm:$0xff]
      %v819 = vld [vmem:[%s11] sm:$0xf]
      %v820 = vld [vmem:[%s12] sm:$0xff]
      %v821 = vld [vmem:[%s13] sm:$0xf]
      %v822 = vld [vmem:[%s14] sm:$0xff]
      %v823 = vld [vmem:[%s15] sm:$0xf]
      %v824 = vld [vmem:[%s16] sm:$0xff]
      %v825 = vld [vmem:[%s17] sm:$0xf]
      %v826 = vld [vmem:[%s18] sm:$0xff]
      %v827 = vld [vmem:[%s19] sm:$0xf]
      %v828 = vld [vmem:[%s20] sm:$0xff]
      %v829 = vld [vmem:[%s21] sm:$0xf]
      %v830 = vld [vmem:[%s22] sm:$0xff]
      %v831 = vld [vmem:[%s23] sm:$0xf]
      %v832 = vld [vmem:[%s24] sm:$0xff]
      %v833 = vld [vmem:[%s759] sm:$0xff]
      %v834 = vld [vmem:[%s759 + $0x8] sm:$0xff]
      %835 = vst [vmem:[#allocation2 + $0x8] sm:$0xff] %v833
      %836 = vst [vmem:[#allocation2 + $0x10] sm:$0xff] %v834
      %v837 = vld [vmem:[#allocation2] sm:$0xff]
      %v838 = vld [vmem:[#allocation2 + $0x8] sm:$0xff]
      %v839 = vld [vmem:[#allocation2 + $0x10] sm:$0xff]
      %v840 = vsel %vm793, 1, 0
      %v841 = vsel %vm794, 1, 0
      %vm842 = vcmp.eq.s32.totalorder %v840, 1
      %vm843 = vcmp.eq.s32.totalorder %v841, 1
      %847 = vrot.lane.b32.xlu0 %v837, 17
      %v848 = vpop.permute.xlu0 %847
      %849 = vrot.lane.b32.xlu0 %v838, 17
      %v850 = vpop.permute.xlu0 %849
      %851 = vrot.lane.b32.xlu0 %v839, 17
      %v852 = vpop.permute.xlu0 %851
      %vm853 = vcmask 138240
      %v854 = vsel %vm853, %v848, %v850
      %v855 = vsel %vm853, %v850, %v852
      %v858 = vsel %vm842, %v854, 0.0
      %v859 = vsel %vm843, %v855, 0.0
      %860 = vst [vmem:[#allocation3] sm:$0xff] %v858
      %861 = vst [vmem:[#allocation3 + $0x8] sm:$0xff] %v859
      %v862 = vld [vmem:[#allocation2] sm:$0xff]
      %v863 = vld [vmem:[#allocation2 + $0x8] sm:$0xff]
      %v864 = vld [vmem:[#allocation2 + $0x10] sm:$0xff]
      %868 = vrot.lane.b32.xlu0 %v862, 16
      %v869 = vpop.permute.xlu0 %868
      %870 = vrot.lane.b32.xlu0 %v863, 16
      %v871 = vpop.permute.xlu0 %870
      %872 = vrot.lane.b32.xlu0 %v864, 16
      %v873 = vpop.permute.xlu0 %872
      %vm874 = vcmask 130048
      %v875 = vsel %vm874, %v869, %v871
      %v876 = vsel %vm874, %v871, %v873
      %879 = vst [vmem:[#allocation3 + $0x10] sm:$0xff] %v875
      %880 = vst [vmem:[#allocation3 + $0x18] sm:$0xff] %v876
      %v881 = vld [vmem:[#allocation2] sm:$0xff]
      %v882 = vld [vmem:[#allocation2 + $0x8] sm:$0xff]
      %v883 = vld [vmem:[#allocation2 + $0x10] sm:$0xff]
      %v884 = vsel %vm795, 1, 0
      %v885 = vsel %vm796, 1, 0
      %vm886 = vcmp.eq.s32.totalorder %v884, 1
      %vm887 = vcmp.eq.s32.totalorder %v885, 1
      %891 = vrot.lane.b32.xlu0 %v881, 15
      %v892 = vpop.permute.xlu0 %891
      %893 = vrot.lane.b32.xlu0 %v882, 15
      %v894 = vpop.permute.xlu0 %893
      %895 = vrot.lane.b32.xlu0 %v883, 15
      %v896 = vpop.permute.xlu0 %895
      %vm897 = vcmask 121856
      %v898 = vsel %vm897, %v892, %v894
      %v899 = vsel %vm897, %v894, %v896
      %v902 = vsel %vm886, %v898, 0.0
      %v903 = vsel %vm887, %v899, 0.0
      %904 = vst [vmem:[#allocation3 + $0x20] sm:$0xff] %v902
      %905 = vst [vmem:[#allocation3 + $0x28] sm:$0xff] %v903
      %v906 = vld [vmem:[#allocation2] sm:$0xff]
      %v907 = vld [vmem:[#allocation2 + $0x8] sm:$0xff]
      %v908 = vld [vmem:[#allocation2 + $0x10] sm:$0xff]
      %912 = vrot.lane.b32.xlu0 %v906, 1
      %v913 = vpop.permute.xlu0 %912
      %914 = vrot.lane.b32.xlu0 %v907, 1
      %v915 = vpop.permute.xlu0 %914
      %916 = vrot.lane.b32.xlu0 %v908, 1
      %v917 = vpop.permute.xlu0 %916
      %vm918 = vcmask 7168
      %v919 = vsel %vm918, %v913, %v915
      %v920 = vsel %vm918, %v915, %v917
      %v923 = vsel %vm842, %v919, 0.0
      %v924 = vsel %vm843, %v920, 0.0
      %925 = vst [vmem:[#allocation3 + $0x30] sm:$0xff] %v923
      %926 = vst [vmem:[#allocation3 + $0x38] sm:$0xff] %v924
      %v927 = vld [vmem:[#allocation2 + $0x8] sm:$0xff]
      %v928 = vld [vmem:[#allocation2 + $0x10] sm:$0xff]
      %929 = vst [vmem:[#allocation3 + $0x40] sm:$0xff] %v927
      %930 = vst [vmem:[#allocation3 + $0x48] sm:$0xff] %v928
      %v931 = vld [vmem:[#allocation2 + $0x8] sm:$0xff]
      %v932 = vld [vmem:[#allocation2 + $0x10] sm:$0xff]
      %v933 = vld [vmem:[#allocation2 + $0x18] sm:$0xff]
      %937 = vrot.lane.b32.xlu0 %v931, 127
      %v938 = vpop.permute.xlu0 %937
      %939 = vrot.lane.b32.xlu0 %v932, 127
      %v940 = vpop.permute.xlu0 %939
      %941 = vrot.lane.b32.xlu0 %v933, 127
      %v942 = vpop.permute.xlu0 %941
      %vm943 = vcmask 1039360
      %v944 = vsel %vm943, %v938, %v940
      %v945 = vsel %vm943, %v940, %v942
      %v948 = vsel %vm886, %v944, 0.0
      %v949 = vsel %vm887, %v945, 0.0
      %950 = vst [vmem:[#allocation3 + $0x50] sm:$0xff] %v948
      %951 = vst [vmem:[#allocation3 + $0x58] sm:$0xff] %v949
      %v952 = vld [vmem:[#allocation2 + $0x8] sm:$0xff]
      %v953 = vld [vmem:[#allocation2 + $0x10] sm:$0xff]
      %v954 = vld [vmem:[#allocation2 + $0x18] sm:$0xff]
      %958 = vrot.lane.b32.xlu0 %v952, 113
      %v959 = vpop.permute.xlu0 %958
      %960 = vrot.lane.b32.xlu0 %v953, 113
      %v961 = vpop.permute.xlu0 %960
      %962 = vrot.lane.b32.xlu0 %v954, 113
      %v963 = vpop.permute.xlu0 %962
      %vm964 = vcmask 924672
      %v965 = vsel %vm964, %v959, %v961
      %v966 = vsel %vm964, %v961, %v963
      %v969 = vsel %vm842, %v965, 0.0
      %v970 = vsel %vm843, %v966, 0.0
      %971 = vst [vmem:[#allocation3 + $0x60] sm:$0xff] %v969
      %972 = vst [vmem:[#allocation3 + $0x68] sm:$0xff] %v970
      %v973 = vld [vmem:[#allocation2 + $0x8] sm:$0xff]
      %v974 = vld [vmem:[#allocation2 + $0x10] sm:$0xff]
      %v975 = vld [vmem:[#allocation2 + $0x18] sm:$0xff]
      %979 = vrot.lane.b32.xlu0 %v973, 112
      %v980 = vpop.permute.xlu0 %979
      %981 = vrot.lane.b32.xlu0 %v974, 112
      %v982 = vpop.permute.xlu0 %981
      %983 = vrot.lane.b32.xlu0 %v975, 112
      %v984 = vpop.permute.xlu0 %983
      %vm985 = vcmask 916480
      %v986 = vsel %vm985, %v980, %v982
      %v987 = vsel %vm985, %v982, %v984
      %990 = vst [vmem:[#allocation3 + $0x70] sm:$0xff] %v986
      %991 = vst [vmem:[#allocation3 + $0x78] sm:$0xff] %v987
      %v992 = vld [vmem:[#allocation2 + $0x8] sm:$0xff]
      %v993 = vld [vmem:[#allocation2 + $0x10] sm:$0xff]
      %v994 = vld [vmem:[#allocation2 + $0x18] sm:$0xff]
      %998 = vrot.lane.b32.xlu0 %v992, 111
      %v999 = vpop.permute.xlu0 %998
      %1000 = vrot.lane.b32.xlu0 %v993, 111
      %v1001 = vpop.permute.xlu0 %1000
      %1002 = vrot.lane.b32.xlu0 %v994, 111
      %v1003 = vpop.permute.xlu0 %1002
      %vm1004 = vcmask 908288
      %v1005 = vsel %vm1004, %v999, %v1001
      %v1006 = vsel %vm1004, %v1001, %v1003
      %v1009 = vsel %vm886, %v1005, 0.0
      %v1010 = vsel %vm887, %v1006, 0.0
      %1011 = vst [vmem:[#allocation3 + $0x80] sm:$0xff] %v1009
      %1012 = vst [vmem:[#allocation3 + $0x88] sm:$0xff] %v1010
      %v1013 = vld [vmem:[#allocation3] sm:$0xff]
      %v1014 = vld [vmem:[#allocation3 + $0x8] sm:$0xff]
      %v1015 = vld [vmem:[#allocation3 + $0x10] sm:$0xff]
      %v1016 = vld [vmem:[#allocation3 + $0x18] sm:$0xff]
      %v1017 = vld [vmem:[#allocation3 + $0x20] sm:$0xff]
      %v1018 = vld [vmem:[#allocation3 + $0x28] sm:$0xff]
      %v1019 = vld [vmem:[#allocation3 + $0x30] sm:$0xff]
      %v1020 = vld [vmem:[#allocation3 + $0x38] sm:$0xff]
      %v1021 = vld [vmem:[#allocation3 + $0x40] sm:$0xff]
      %v1022 = vld [vmem:[#allocation3 + $0x48] sm:$0xff]
      %v1023 = vld [vmem:[#allocation3 + $0x50] sm:$0xff]
      %v1024 = vld [vmem:[#allocation3 + $0x58] sm:$0xff]
      %v1025 = vld [vmem:[#allocation3 + $0x60] sm:$0xff]
      %v1026 = vld [vmem:[#allocation3 + $0x68] sm:$0xff]
      %v1027 = vld [vmem:[#allocation3 + $0x70] sm:$0xff]
      %v1028 = vld [vmem:[#allocation3 + $0x78] sm:$0xff]
      %v1029 = vld [vmem:[#allocation3 + $0x80] sm:$0xff]
      %v1030 = vld [vmem:[#allocation3 + $0x88] sm:$0xff]
      %v1031 = vpack.c.bf16 %v1015, %v1013
      %v1032 = vpack.c.bf16 %v1016, %v1014
      %v1033 = vpack.c.bf16 %v1019, %v1017
      %v1034 = vpack.c.bf16 %v1020, %v1018
      %v1035 = vpack.c.bf16 %v1023, %v1021
      %v1036 = vpack.c.bf16 %v1024, %v1022
      %v1037 = vpack.c.bf16 %v1027, %v1025
      %v1038 = vpack.c.bf16 %v1028, %v1026
      %v1039 = vpack.c.bf16 %v1029, %v1029
      %v1040 = vpack.c.bf16 %v1030, %v1030
      %vm1041 = vcmask 588800
      %v1043 = vsel %vm1041, %v809, 0
      %vm1045 = vcmask 1043456
      %v1047 = vsel %vm1045, %v1039, 0
      %v1050 = vsel %vm1045, %v1040, 0
      %1052 = vmatprep.subr.bf16.mxu0 %v1032
      %1053 = vmatpush1.bf16.msra.mxu0 %v1031
      %1054 = vmatprep.subr.bf16.mxu0 %v1034
      %1055 = vmatpush1.bf16.msra.mxu0 %v1033
      %1056 = vmatprep.subr.bf16.mxu0 %v1036
      %1057 = vmatpush1.bf16.msra.mxu0 %v1035
      %1058 = vmatprep.subr.bf16.mxu0 %v1038
      %1059 = vmatpush1.bf16.msra.mxu0 %v1037
      %1060 = vmatprep.subr.bf16.mxu0 %v1050
      %1061 = vmatpush1.bf16.msra.mxu0 %v1047
      %1062 = vmatprep.subr.bf16.mxu0 0
      %1063 = vmatpush1.bf16.msra.mxu0 0
      %1064 = vmatprep.subr.bf16.mxu0 0
      %1065 = vmatpush1.bf16.msra.mxu0 0
      %1066 = vmatprep.subr.bf16.mxu0 0
      %1067 = vmatpush1.bf16.msra.mxu0 0
      %1068 = vmatprep.subr.bf16.mxu0 0
      %1069 = vmatpush1.bf16.msra.mxu0 0
      %1070 = vmatprep.subr.bf16.mxu0 0
      %1071 = vmatpush1.bf16.msra.mxu0 0
      %1072 = vmatprep.subr.bf16.mxu0 0
      %1073 = vmatpush1.bf16.msra.mxu0 0
      %1074 = vmatprep.subr.bf16.mxu0 0
      %1075 = vmatpush1.bf16.msra.mxu0 0
      %1076 = vmatprep.subr.bf16.mxu0 0
      %1077 = vmatpush1.bf16.msra.mxu0 0
      %1078 = vmatprep.subr.bf16.mxu0 0
      %1079 = vmatpush1.bf16.msra.mxu0 0
      %1080 = vmatprep.subr.bf16.mxu0 0
      %1081 = vmatpush1.bf16.msra.mxu0 0
      %1082 = vmatprep.subr.bf16.mxu0 0
      %1083 = vmatpush1.bf16.msra.mxu0 0
      %1084 = vmatprep.mubr.bf16.mxu0 0
      %1085 = vmatmul.mubr.bf16.gmra.mrb[0].mxu0 %v1043
      %v1086 = vpop.f32.mrb[0].mxu0
      %v1087 = vadd.f32 0.0, %v1086
      %v1088 = vpop.f32.mrb[0].mxu0
      %v1089 = vadd.f32 0.0, %v1088
      %v1090 = vpop.f32.mrb[0].mxu0
      %v1091 = vpop.f32.mrb[0].mxu0
      %1092 = vdwg.mxu0
      %v1093 = vmax.f32 %v1087, 0.0
      %v1094 = vmax.f32 %v1089, 0.0
      %1095 = vst [vmem:[#allocation2 + $0x28] sm:$0xff] %v1093
      %1096 = vst [vmem:[#allocation2 + $0x30] sm:$0xff] %v1094
      %v1097 = vld [vmem:[#allocation2] sm:$0xff]
      %v1098 = vld [vmem:[#allocation2 + $0x8] sm:$0xff]
      %v1099 = vld [vmem:[#allocation2 + $0x10] sm:$0xff]
      %v1100 = vld [vmem:[#allocation2 + $0x20] sm:$0xff]
      %v1101 = vld [vmem:[#allocation2 + $0x28] sm:$0xff]
      %v1102 = vld [vmem:[#allocation2 + $0x30] sm:$0xff]
      %1109 = vrot.lane.b32.xlu0 %v1097, 17
      %v1110 = vpop.permute.xlu0 %1109
      %1111 = vrot.lane.b32.xlu0 %v1098, 17
      %v1112 = vpop.permute.xlu0 %1111
      %1113 = vrot.lane.b32.xlu0 %v1099, 17
      %v1114 = vpop.permute.xlu0 %1113
      %1115 = vrot.lane.b32.xlu0 %v1100, 17
      %v1116 = vpop.permute.xlu0 %1115
      %1117 = vrot.lane.b32.xlu0 %v1101, 17
      %v1118 = vpop.permute.xlu0 %1117
      %1119 = vrot.lane.b32.xlu0 %v1102, 17
      %v1120 = vpop.permute.xlu0 %1119
      %v1121 = vsel %vm853, %v1110, %v1112
      %v1122 = vsel %vm853, %v1112, %v1114
      %v1123 = vsel %vm853, %v1116, %v1118
      %v1124 = vsel %vm853, %v1118, %v1120
      %v1129 = vsel %vm842, %v1121, 0.0
      %v1130 = vsel %vm843, %v1122, 0.0
      %v1131 = vsel %vm842, %v1123, 0.0
      %v1132 = vsel %vm843, %v1124, 0.0
      %1133 = vst [vmem:[#allocation3] sm:$0xff] %v1129
      %1134 = vst [vmem:[#allocation3 + $0x8] sm:$0xff] %v1130
      %1135 = vst [vmem:[#allocation3 + $0x10] sm:$0xff] %v1131
      %1136 = vst [vmem:[#allocation3 + $0x18] sm:$0xff] %v1132
      %v1137 = vld [vmem:[#allocation2] sm:$0xff]
      %v1138 = vld [vmem:[#allocation2 + $0x8] sm:$0xff]
      %v1139 = vld [vmem:[#allocation2 + $0x10] sm:$0xff]
      %v1140 = vld [vmem:[#allocation2 + $0x20] sm:$0xff]
      %v1141 = vld [vmem:[#allocation2 + $0x28] sm:$0xff]
      %v1142 = vld [vmem:[#allocation2 + $0x30] sm:$0xff]
      %1149 = vrot.lane.b32.xlu0 %v1137, 16
      %v1150 = vpop.permute.xlu0 %1149
      %1151 = vrot.lane.b32.xlu0 %v1138, 16
      %v1152 = vpop.permute.xlu0 %1151
      %1153 = vrot.lane.b32.xlu0 %v1139, 16
      %v1154 = vpop.permute.xlu0 %1153
      %1155 = vrot.lane.b32.xlu0 %v1140, 16
      %v1156 = vpop.permute.xlu0 %1155
      %1157 = vrot.lane.b32.xlu0 %v1141, 16
      %v1158 = vpop.permute.xlu0 %1157
      %1159 = vrot.lane.b32.xlu0 %v1142, 16
      %v1160 = vpop.permute.xlu0 %1159
      %v1161 = vsel %vm874, %v1150, %v1152
      %v1162 = vsel %vm874, %v1152, %v1154
      %v1163 = vsel %vm874, %v1156, %v1158
      %v1164 = vsel %vm874, %v1158, %v1160
      %1169 = vst [vmem:[#allocation3 + $0x20] sm:$0xff] %v1161
      %1170 = vst [vmem:[#allocation3 + $0x28] sm:$0xff] %v1162
      %1171 = vst [vmem:[#allocation3 + $0x30] sm:$0xff] %v1163
      %1172 = vst [vmem:[#allocation3 + $0x38] sm:$0xff] %v1164
      %v1173 = vld [vmem:[#allocation2] sm:$0xff]
      %v1174 = vld [vmem:[#allocation2 + $0x8] sm:$0xff]
      %v1175 = vld [vmem:[#allocation2 + $0x10] sm:$0xff]
      %v1176 = vld [vmem:[#allocation2 + $0x20] sm:$0xff]
      %v1177 = vld [vmem:[#allocation2 + $0x28] sm:$0xff]
      %v1178 = vld [vmem:[#allocation2 + $0x30] sm:$0xff]
      %1185 = vrot.lane.b32.xlu0 %v1173, 15
      %v1186 = vpop.permute.xlu0 %1185
      %1187 = vrot.lane.b32.xlu0 %v1174, 15
      %v1188 = vpop.permute.xlu0 %1187
      %1189 = vrot.lane.b32.xlu0 %v1175, 15
      %v1190 = vpop.permute.xlu0 %1189
      %1191 = vrot.lane.b32.xlu0 %v1176, 15
      %v1192 = vpop.permute.xlu0 %1191
      %1193 = vrot.lane.b32.xlu0 %v1177, 15
      %v1194 = vpop.permute.xlu0 %1193
      %1195 = vrot.lane.b32.xlu0 %v1178, 15
      %v1196 = vpop.permute.xlu0 %1195
      %v1197 = vsel %vm897, %v1186, %v1188
      %v1198 = vsel %vm897, %v1188, %v1190
      %v1199 = vsel %vm897, %v1192, %v1194
      %v1200 = vsel %vm897, %v1194, %v1196
      %v1205 = vsel %vm886, %v1197, 0.0
      %v1206 = vsel %vm887, %v1198, 0.0
      %v1207 = vsel %vm886, %v1199, 0.0
      %v1208 = vsel %vm887, %v1200, 0.0
      %1209 = vst [vmem:[#allocation3 + $0x40] sm:$0xff] %v1205
      %1210 = vst [vmem:[#allocation3 + $0x48] sm:$0xff] %v1206
      %1211 = vst [vmem:[#allocation3 + $0x50] sm:$0xff] %v1207
      %1212 = vst [vmem:[#allocation3 + $0x58] sm:$0xff] %v1208
      %v1213 = vld [vmem:[#allocation2] sm:$0xff]
      %v1214 = vld [vmem:[#allocation2 + $0x8] sm:$0xff]
      %v1215 = vld [vmem:[#allocation2 + $0x10] sm:$0xff]
      %v1216 = vld [vmem:[#allocation2 + $0x20] sm:$0xff]
      %v1217 = vld [vmem:[#allocation2 + $0x28] sm:$0xff]
      %v1218 = vld [vmem:[#allocation2 + $0x30] sm:$0xff]
      %1225 = vrot.lane.b32.xlu0 %v1213, 1
      %v1226 = vpop.permute.xlu0 %1225
      %1227 = vrot.lane.b32.xlu0 %v1214, 1
      %v1228 = vpop.permute.xlu0 %1227
      %1229 = vrot.lane.b32.xlu0 %v1215, 1
      %v1230 = vpop.permute.xlu0 %1229
      %1231 = vrot.lane.b32.xlu0 %v1216, 1
      %v1232 = vpop.permute.xlu0 %1231
      %1233 = vrot.lane.b32.xlu0 %v1217, 1
      %v1234 = vpop.permute.xlu0 %1233
      %1235 = vrot.lane.b32.xlu0 %v1218, 1
      %v1236 = vpop.permute.xlu0 %1235
      %v1237 = vsel %vm918, %v1226, %v1228
      %v1238 = vsel %vm918, %v1228, %v1230
      %v1239 = vsel %vm918, %v1232, %v1234
      %v1240 = vsel %vm918, %v1234, %v1236
      %v1245 = vsel %vm842, %v1237, 0.0
      %v1246 = vsel %vm843, %v1238, 0.0
      %v1247 = vsel %vm842, %v1239, 0.0
      %v1248 = vsel %vm843, %v1240, 0.0
      %1249 = vst [vmem:[#allocation3 + $0x60] sm:$0xff] %v1245
      %1250 = vst [vmem:[#allocation3 + $0x68] sm:$0xff] %v1246
      %1251 = vst [vmem:[#allocation3 + $0x70] sm:$0xff] %v1247
      %1252 = vst [vmem:[#allocation3 + $0x78] sm:$0xff] %v1248
      %v1253 = vld [vmem:[#allocation2 + $0x8] sm:$0xff]
      %v1254 = vld [vmem:[#allocation2 + $0x10] sm:$0xff]
      %v1255 = vld [vmem:[#allocation2 + $0x28] sm:$0xff]
      %v1256 = vld [vmem:[#allocation2 + $0x30] sm:$0xff]
      %1257 = vst [vmem:[#allocation3 + $0x80] sm:$0xff] %v1253
      %1258 = vst [vmem:[#allocation3 + $0x88] sm:$0xff] %v1254
      %1259 = vst [vmem:[#allocation3 + $0x90] sm:$0xff] %v1255
      %1260 = vst [vmem:[#allocation3 + $0x98] sm:$0xff] %v1256
      %v1261 = vld [vmem:[#allocation2 + $0x8] sm:$0xff]
      %v1262 = vld [vmem:[#allocation2 + $0x10] sm:$0xff]
      %v1263 = vld [vmem:[#allocation2 + $0x18] sm:$0xff]
      %v1264 = vld [vmem:[#allocation2 + $0x28] sm:$0xff]
      %v1265 = vld [vmem:[#allocation2 + $0x30] sm:$0xff]
      %v1266 = vld [vmem:[#allocation2 + $0x38] sm:$0xff]
      %1273 = vrot.lane.b32.xlu0 %v1261, 127
      %v1274 = vpop.permute.xlu0 %1273
      %1275 = vrot.lane.b32.xlu0 %v1262, 127
      %v1276 = vpop.permute.xlu0 %1275
      %1277 = vrot.lane.b32.xlu0 %v1263, 127
      %v1278 = vpop.permute.xlu0 %1277
      %1279 = vrot.lane.b32.xlu0 %v1264, 127
      %v1280 = vpop.permute.xlu0 %1279
      %1281 = vrot.lane.b32.xlu0 %v1265, 127
      %v1282 = vpop.permute.xlu0 %1281
      %1283 = vrot.lane.b32.xlu0 %v1266, 127
      %v1284 = vpop.permute.xlu0 %1283
      %v1285 = vsel %vm943, %v1274, %v1276
      %v1286 = vsel %vm943, %v1276, %v1278
      %v1287 = vsel %vm943, %v1280, %v1282
      %v1288 = vsel %vm943, %v1282, %v1284
      %v1293 = vsel %vm886, %v1285, 0.0
      %v1294 = vsel %vm887, %v1286, 0.0
      %v1295 = vsel %vm886, %v1287, 0.0
      %v1296 = vsel %vm887, %v1288, 0.0
      %1297 = vst [vmem:[#allocation3 + $0xa0] sm:$0xff] %v1293
      %1298 = vst [vmem:[#allocation3 + $0xa8] sm:$0xff] %v1294
      %1299 = vst [vmem:[#allocation3 + $0xb0] sm:$0xff] %v1295
      %1300 = vst [vmem:[#allocation3 + $0xb8] sm:$0xff] %v1296
      %v1301 = vld [vmem:[#allocation2 + $0x8] sm:$0xff]
      %v1302 = vld [vmem:[#allocation2 + $0x10] sm:$0xff]
      %v1303 = vld [vmem:[#allocation2 + $0x18] sm:$0xff]
      %v1304 = vld [vmem:[#allocation2 + $0x28] sm:$0xff]
      %v1305 = vld [vmem:[#allocation2 + $0x30] sm:$0xff]
      %v1306 = vld [vmem:[#allocation2 + $0x38] sm:$0xff]
      %1313 = vrot.lane.b32.xlu0 %v1301, 113
      %v1314 = vpop.permute.xlu0 %1313
      %1315 = vrot.lane.b32.xlu0 %v1302, 113
      %v1316 = vpop.permute.xlu0 %1315
      %1317 = vrot.lane.b32.xlu0 %v1303, 113
      %v1318 = vpop.permute.xlu0 %1317
      %1319 = vrot.lane.b32.xlu0 %v1304, 113
      %v1320 = vpop.permute.xlu0 %1319
      %1321 = vrot.lane.b32.xlu0 %v1305, 113
      %v1322 = vpop.permute.xlu0 %1321
      %1323 = vrot.lane.b32.xlu0 %v1306, 113
      %v1324 = vpop.permute.xlu0 %1323
      %v1325 = vsel %vm964, %v1314, %v1316
      %v1326 = vsel %vm964, %v1316, %v1318
      %v1327 = vsel %vm964, %v1320, %v1322
      %v1328 = vsel %vm964, %v1322, %v1324
      %v1333 = vsel %vm842, %v1325, 0.0
      %v1334 = vsel %vm843, %v1326, 0.0
      %v1335 = vsel %vm842, %v1327, 0.0
      %v1336 = vsel %vm843, %v1328, 0.0
      %1337 = vst [vmem:[#allocation3 + $0xc0] sm:$0xff] %v1333
      %1338 = vst [vmem:[#allocation3 + $0xc8] sm:$0xff] %v1334
      %1339 = vst [vmem:[#allocation3 + $0xd0] sm:$0xff] %v1335
      %1340 = vst [vmem:[#allocation3 + $0xd8] sm:$0xff] %v1336
      %v1341 = vld [vmem:[#allocation2 + $0x8] sm:$0xff]
      %v1342 = vld [vmem:[#allocation2 + $0x10] sm:$0xff]
      %v1343 = vld [vmem:[#allocation2 + $0x18] sm:$0xff]
      %v1344 = vld [vmem:[#allocation2 + $0x28] sm:$0xff]
      %v1345 = vld [vmem:[#allocation2 + $0x30] sm:$0xff]
      %v1346 = vld [vmem:[#allocation2 + $0x38] sm:$0xff]
      %1353 = vrot.lane.b32.xlu0 %v1341, 112
      %v1354 = vpop.permute.xlu0 %1353
      %1355 = vrot.lane.b32.xlu0 %v1342, 112
      %v1356 = vpop.permute.xlu0 %1355
      %1357 = vrot.lane.b32.xlu0 %v1343, 112
      %v1358 = vpop.permute.xlu0 %1357
      %1359 = vrot.lane.b32.xlu0 %v1344, 112
      %v1360 = vpop.permute.xlu0 %1359
      %1361 = vrot.lane.b32.xlu0 %v1345, 112
      %v1362 = vpop.permute.xlu0 %1361
      %1363 = vrot.lane.b32.xlu0 %v1346, 112
      %v1364 = vpop.permute.xlu0 %1363
      %v1365 = vsel %vm985, %v1354, %v1356
      %v1366 = vsel %vm985, %v1356, %v1358
      %v1367 = vsel %vm985, %v1360, %v1362
      %v1368 = vsel %vm985, %v1362, %v1364
      %1373 = vst [vmem:[#allocation3 + $0xe0] sm:$0xff] %v1365
      %1374 = vst [vmem:[#allocation3 + $0xe8] sm:$0xff] %v1366
      %1375 = vst [vmem:[#allocation3 + $0xf0] sm:$0xff] %v1367
      %1376 = vst [vmem:[#allocation3 + $0xf8] sm:$0xff] %v1368
      %v1377 = vld [vmem:[#allocation2 + $0x8] sm:$0xff]
      %v1378 = vld [vmem:[#allocation2 + $0x10] sm:$0xff]
      %v1379 = vld [vmem:[#allocation2 + $0x18] sm:$0xff]
      %v1380 = vld [vmem:[#allocation2 + $0x28] sm:$0xff]
      %v1381 = vld [vmem:[#allocation2 + $0x30] sm:$0xff]
      %v1382 = vld [vmem:[#allocation2 + $0x38] sm:$0xff]
      %1389 = vrot.lane.b32.xlu0 %v1377, 111
      %v1390 = vpop.permute.xlu0 %1389
      %1391 = vrot.lane.b32.xlu0 %v1378, 111
      %v1392 = vpop.permute.xlu0 %1391
      %1393 = vrot.lane.b32.xlu0 %v1379, 111
      %v1394 = vpop.permute.xlu0 %1393
      %1395 = vrot.lane.b32.xlu0 %v1380, 111
      %v1396 = vpop.permute.xlu0 %1395
      %1397 = vrot.lane.b32.xlu0 %v1381, 111
      %v1398 = vpop.permute.xlu0 %1397
      %1399 = vrot.lane.b32.xlu0 %v1382, 111
      %v1400 = vpop.permute.xlu0 %1399
      %v1401 = vsel %vm1004, %v1390, %v1392
      %v1402 = vsel %vm1004, %v1392, %v1394
      %v1403 = vsel %vm1004, %v1396, %v1398
      %v1404 = vsel %vm1004, %v1398, %v1400
      %v1409 = vsel %vm886, %v1401, 0.0
      %v1410 = vsel %vm887, %v1402, 0.0
      %v1411 = vsel %vm886, %v1403, 0.0
      %v1412 = vsel %vm887, %v1404, 0.0
      %1413 = vst [vmem:[#allocation3 + $0x100] sm:$0xff] %v1409
      %1414 = vst [vmem:[#allocation3 + $0x108] sm:$0xff] %v1410
      %1415 = vst [vmem:[#allocation3 + $0x110] sm:$0xff] %v1411
      %1416 = vst [vmem:[#allocation3 + $0x118] sm:$0xff] %v1412
      %v1417 = vld [vmem:[#allocation3] sm:$0xff]
      %v1418 = vld [vmem:[#allocation3 + $0x8] sm:$0xff]
      %v1419 = vld [vmem:[#allocation3 + $0x10] sm:$0xff]
      %v1420 = vld [vmem:[#allocation3 + $0x18] sm:$0xff]
      %v1421 = vld [vmem:[#allocation3 + $0x20] sm:$0xff]
      %v1422 = vld [vmem:[#allocation3 + $0x28] sm:$0xff]
      %v1423 = vld [vmem:[#allocation3 + $0x30] sm:$0xff]
      %v1424 = vld [vmem:[#allocation3 + $0x38] sm:$0xff]
      %v1425 = vld [vmem:[#allocation3 + $0x40] sm:$0xff]
      %v1426 = vld [vmem:[#allocation3 + $0x48] sm:$0xff]
      %v1427 = vld [vmem:[#allocation3 + $0x50] sm:$0xff]
      %v1428 = vld [vmem:[#allocation3 + $0x58] sm:$0xff]
      %v1429 = vld [vmem:[#allocation3 + $0x60] sm:$0xff]
      %v1430 = vld [vmem:[#allocation3 + $0x68] sm:$0xff]
      %v1431 = vld [vmem:[#allocation3 + $0x70] sm:$0xff]
      %v1432 = vld [vmem:[#allocation3 + $0x78] sm:$0xff]
      %v1433 = vld [vmem:[#allocation3 + $0x80] sm:$0xff]
      %v1434 = vld [vmem:[#allocation3 + $0x88] sm:$0xff]
      %v1435 = vld [vmem:[#allocation3 + $0x90] sm:$0xff]
      %v1436 = vld [vmem:[#allocation3 + $0x98] sm:$0xff]
      %v1437 = vld [vmem:[#allocation3 + $0xa0] sm:$0xff]
      %v1438 = vld [vmem:[#allocation3 + $0xa8] sm:$0xff]
      %v1439 = vld [vmem:[#allocation3 + $0xb0] sm:$0xff]
      %v1440 = vld [vmem:[#allocation3 + $0xb8] sm:$0xff]
      %v1441 = vld [vmem:[#allocation3 + $0xc0] sm:$0xff]
      %v1442 = vld [vmem:[#allocation3 + $0xc8] sm:$0xff]
      %v1443 = vld [vmem:[#allocation3 + $0xd0] sm:$0xff]
      %v1444 = vld [vmem:[#allocation3 + $0xd8] sm:$0xff]
      %v1445 = vld [vmem:[#allocation3 + $0xe0] sm:$0xff]
      %v1446 = vld [vmem:[#allocation3 + $0xe8] sm:$0xff]
      %v1447 = vld [vmem:[#allocation3 + $0xf0] sm:$0xff]
      %v1448 = vld [vmem:[#allocation3 + $0xf8] sm:$0xff]
      %v1449 = vld [vmem:[#allocation3 + $0x100] sm:$0xff]
      %v1450 = vld [vmem:[#allocation3 + $0x108] sm:$0xff]
      %v1451 = vld [vmem:[#allocation3 + $0x110] sm:$0xff]
      %v1452 = vld [vmem:[#allocation3 + $0x118] sm:$0xff]
      %v1453 = vpack.c.bf16 %v1419, %v1417
      %v1454 = vpack.c.bf16 %v1420, %v1418
      %v1455 = vpack.c.bf16 %v1423, %v1421
      %v1456 = vpack.c.bf16 %v1424, %v1422
      %v1457 = vpack.c.bf16 %v1427, %v1425
      %v1458 = vpack.c.bf16 %v1428, %v1426
      %v1459 = vpack.c.bf16 %v1431, %v1429
      %v1460 = vpack.c.bf16 %v1432, %v1430
      %v1461 = vpack.c.bf16 %v1435, %v1433
      %v1462 = vpack.c.bf16 %v1436, %v1434
      %v1463 = vpack.c.bf16 %v1439, %v1437
      %v1464 = vpack.c.bf16 %v1440, %v1438
      %v1465 = vpack.c.bf16 %v1443, %v1441
      %v1466 = vpack.c.bf16 %v1444, %v1442
      %v1467 = vpack.c.bf16 %v1447, %v1445
      %v1468 = vpack.c.bf16 %v1448, %v1446
      %v1469 = vpack.c.bf16 %v1451, %v1449
      %v1470 = vpack.c.bf16 %v1452, %v1450
      %v1472 = vunpack.c.l.b16 %v810
      %v1473 = vunpack.c.h.b16 %v810
      %v1474 = vpack.c.b16 %v1472, %v1472
      %v1475 = vpack.c.b16 %v1473, %v1473
      %v1478 = vsel %vm874, %v1475, 0
      %1480 = vmatprep.subr.bf16.mxu0 %v1454
      %1481 = vmatpush1.bf16.msra.mxu0 %v1453
      %1482 = vmatprep.subr.bf16.mxu0 %v1456
      %1483 = vmatpush1.bf16.msra.mxu0 %v1455
      %1484 = vmatprep.subr.bf16.mxu0 %v1458
      %1485 = vmatpush1.bf16.msra.mxu0 %v1457
      %1486 = vmatprep.subr.bf16.mxu0 %v1460
      %1487 = vmatpush1.bf16.msra.mxu0 %v1459
      %1488 = vmatprep.subr.bf16.mxu0 %v1462
      %1489 = vmatpush1.bf16.msra.mxu0 %v1461
      %1490 = vmatprep.subr.bf16.mxu0 %v1464
      %1491 = vmatpush1.bf16.msra.mxu0 %v1463
      %1492 = vmatprep.subr.bf16.mxu0 %v1466
      %1493 = vmatpush1.bf16.msra.mxu0 %v1465
      %1494 = vmatprep.subr.bf16.mxu0 %v1468
      %1495 = vmatpush1.bf16.msra.mxu0 %v1467
      %1496 = vmatprep.subr.bf16.mxu0 %v1470
      %1497 = vmatpush1.bf16.msra.mxu0 %v1469
      %1498 = vmatprep.subr.bf16.mxu0 0
      %1499 = vmatpush1.bf16.msra.mxu0 0
      %1500 = vmatprep.subr.bf16.mxu0 0
      %1501 = vmatpush1.bf16.msra.mxu0 0
      %1502 = vmatprep.subr.bf16.mxu0 0
      %1503 = vmatpush1.bf16.msra.mxu0 0
      %1504 = vmatprep.subr.bf16.mxu0 0
      %1505 = vmatpush1.bf16.msra.mxu0 0
      %1506 = vmatprep.subr.bf16.mxu0 0
      %1507 = vmatpush1.bf16.msra.mxu0 0
      %1508 = vmatprep.subr.bf16.mxu0 0
      %1509 = vmatpush1.bf16.msra.mxu0 0
      %1510 = vmatprep.subr.bf16.mxu0 0
      %1511 = vmatpush1.bf16.msra.mxu0 0
      %1512 = vmatprep.mubr.bf16.mxu0 %v1478
      %1513 = vmatmul.mubr.bf16.gmra.mrb[0].mxu0 %v1474
      %v1514 = vpop.f32.mrb[0].mxu0
      %v1515 = vadd.f32 0.0, %v1514
      %v1516 = vpop.f32.mrb[0].mxu0
      %v1517 = vadd.f32 0.0, %v1516
      %v1518 = vpop.f32.mrb[0].mxu0
      %v1519 = vpop.f32.mrb[0].mxu0
      %1520 = vdwg.mxu0
      %v1521 = vmax.f32 %v1515, 0.0
      %v1522 = vmax.f32 %v1517, 0.0
      %1523 = vst [vmem:[#allocation2 + $0x48] sm:$0xff] %v1521
      %1524 = vst [vmem:[#allocation2 + $0x50] sm:$0xff] %v1522
      %v1525 = vld [vmem:[#allocation2 + $0x8] sm:$0xff]
      %v1526 = vld [vmem:[#allocation2 + $0x10] sm:$0xff]
      %v1527 = vld [vmem:[#allocation2 + $0x28] sm:$0xff]
      %v1528 = vld [vmem:[#allocation2 + $0x30] sm:$0xff]
      %v1529 = vld [vmem:[#allocation2 + $0x48] sm:$0xff]
      %v1530 = vld [vmem:[#allocation2 + $0x50] sm:$0xff]
      %v1531 = vpack.c.bf16 %v1527, %v1525
      %v1532 = vpack.c.bf16 %v1528, %v1526
      %v1533 = vpack.c.bf16 %v1529, %v1529
      %v1534 = vpack.c.bf16 %v1530, %v1530
      %1536 = vset.pattern.permute.xlu0 0
      %1537 = vperm.xlu0 %1536, %v812
      %v1538 = vpop.permute.xlu0 %1537
      %vm1540 = vcmask 195584
      %v1542 = vsel %vm1540, %v811, 0
      %v1545 = vsel %vm1045, %v1533, 0
      %v1548 = vsel %vm1045, %v1534, 0
      %1550 = vmatprep.subr.bf16.mxu0 %v1532
      %1551 = vmatpush1.bf16.msra.mxu0 %v1531
      %1552 = vmatprep.subr.bf16.mxu0 %v1548
      %1553 = vmatpush1.bf16.msra.mxu0 %v1545
      %1554 = vmatprep.subr.bf16.mxu0 0
      %1555 = vmatpush1.bf16.msra.mxu0 0
      %1556 = vmatprep.subr.bf16.mxu0 0
      %1557 = vmatpush1.bf16.msra.mxu0 0
      %1558 = vmatprep.subr.bf16.mxu0 0
      %1559 = vmatpush1.bf16.msra.mxu0 0
      %1560 = vmatprep.subr.bf16.mxu0 0
      %1561 = vmatpush1.bf16.msra.mxu0 0
      %1562 = vmatprep.subr.bf16.mxu0 0
      %1563 = vmatpush1.bf16.msra.mxu0 0
      %1564 = vmatprep.subr.bf16.mxu0 0
      %1565 = vmatpush1.bf16.msra.mxu0 0
      %1566 = vmatprep.subr.bf16.mxu0 0
      %1567 = vmatpush1.bf16.msra.mxu0 0
      %1568 = vmatprep.subr.bf16.mxu0 0
      %1569 = vmatpush1.bf16.msra.mxu0 0
      %1570 = vmatprep.subr.bf16.mxu0 0
      %1571 = vmatpush1.bf16.msra.mxu0 0
      %1572 = vmatprep.subr.bf16.mxu0 0
      %1573 = vmatpush1.bf16.msra.mxu0 0
      %1574 = vmatprep.subr.bf16.mxu0 0
      %1575 = vmatpush1.bf16.msra.mxu0 0
      %1576 = vmatprep.subr.bf16.mxu0 0
      %1577 = vmatpush1.bf16.msra.mxu0 0
      %1578 = vmatprep.subr.bf16.mxu0 0
      %1579 = vmatpush1.bf16.msra.mxu0 0
      %1580 = vmatprep.subr.bf16.mxu0 0
      %1581 = vmatpush1.bf16.msra.mxu0 0
      %1582 = vmatprep.mubr.bf16.mxu0 0
      %1583 = vmatmul.mubr.bf16.gmra.mrb[0].mxu0 %v1542
      %v1584 = vpop.f32.mrb[0].mxu0
      %v1585 = vadd.f32 %v1538, %v1584
      %v1586 = vpop.f32.mrb[0].mxu0
      %v1587 = vadd.f32 %v1538, %v1586
      %v1588 = vpop.f32.mrb[0].mxu0
      %v1589 = vpop.f32.mrb[0].mxu0
      %1590 = vdwg.mxu0
      %1591 = vst [vmem:[#allocation2 + $0x8] sm:$0xff] %v1585
      %1592 = vst [vmem:[#allocation2 + $0x10] sm:$0xff] %v1587
      %v1593 = vld [vmem:[#allocation2] sm:$0xff]
      %v1594 = vld [vmem:[#allocation2 + $0x8] sm:$0xff]
      %v1595 = vld [vmem:[#allocation2 + $0x10] sm:$0xff]
      %1599 = vrot.lane.b32.xlu0 %v1593, 17
      %v1600 = vpop.permute.xlu0 %1599
      %1601 = vrot.lane.b32.xlu0 %v1594, 17
      %v1602 = vpop.permute.xlu0 %1601
      %1603 = vrot.lane.b32.xlu0 %v1595, 17
      %v1604 = vpop.permute.xlu0 %1603
      %v1605 = vsel %vm853, %v1600, %v1602
      %v1606 = vsel %vm853, %v1602, %v1604
      %v1609 = vsel %vm842, %v1605, 0.0
      %v1610 = vsel %vm843, %v1606, 0.0
      %1611 = vst [vmem:[#allocation3] sm:$0xff] %v1609
      %1612 = vst [vmem:[#allocation3 + $0x8] sm:$0xff] %v1610
      %v1613 = vld [vmem:[#allocation2] sm:$0xff]
      %v1614 = vld [vmem:[#allocation2 + $0x8] sm:$0xff]
      %v1615 = vld [vmem:[#allocation2 + $0x10] sm:$0xff]
      %1619 = vrot.lane.b32.xlu0 %v1613, 16
      %v1620 = vpop.permute.xlu0 %1619
      %1621 = vrot.lane.b32.xlu0 %v1614, 16
      %v1622 = vpop.permute.xlu0 %1621
      %1623 = vrot.lane.b32.xlu0 %v1615, 16
      %v1624 = vpop.permute.xlu0 %1623
      %v1625 = vsel %vm874, %v1620, %v1622
      %v1626 = vsel %vm874, %v1622, %v1624
      %1629 = vst [vmem:[#allocation3 + $0x10] sm:$0xff] %v1625
      %1630 = vst [vmem:[#allocation3 + $0x18] sm:$0xff] %v1626
      %v1631 = vld [vmem:[#allocation2] sm:$0xff]
      %v1632 = vld [vmem:[#allocation2 + $0x8] sm:$0xff]
      %v1633 = vld [vmem:[#allocation2 + $0x10] sm:$0xff]
      %1637 = vrot.lane.b32.xlu0 %v1631, 15
      %v1638 = vpop.permute.xlu0 %1637
      %1639 = vrot.lane.b32.xlu0 %v1632, 15
      %v1640 = vpop.permute.xlu0 %1639
      %1641 = vrot.lane.b32.xlu0 %v1633, 15
      %v1642 = vpop.permute.xlu0 %1641
      %v1643 = vsel %vm897, %v1638, %v1640
      %v1644 = vsel %vm897, %v1640, %v1642
      %v1647 = vsel %vm886, %v1643, 0.0
      %v1648 = vsel %vm887, %v1644, 0.0
      %1649 = vst [vmem:[#allocation3 + $0x20] sm:$0xff] %v1647
      %1650 = vst [vmem:[#allocation3 + $0x28] sm:$0xff] %v1648
      %v1651 = vld [vmem:[#allocation2] sm:$0xff]
      %v1652 = vld [vmem:[#allocation2 + $0x8] sm:$0xff]
      %v1653 = vld [vmem:[#allocation2 + $0x10] sm:$0xff]
      %1657 = vrot.lane.b32.xlu0 %v1651, 1
      %v1658 = vpop.permute.xlu0 %1657
      %1659 = vrot.lane.b32.xlu0 %v1652, 1
      %v1660 = vpop.permute.xlu0 %1659
      %1661 = vrot.lane.b32.xlu0 %v1653, 1
      %v1662 = vpop.permute.xlu0 %1661
      %v1663 = vsel %vm918, %v1658, %v1660
      %v1664 = vsel %vm918, %v1660, %v1662
      %v1667 = vsel %vm842, %v1663, 0.0
      %v1668 = vsel %vm843, %v1664, 0.0
      %1669 = vst [vmem:[#allocation3 + $0x30] sm:$0xff] %v1667
      %1670 = vst [vmem:[#allocation3 + $0x38] sm:$0xff] %v1668
      %v1671 = vld [vmem:[#allocation2 + $0x8] sm:$0xff]
      %v1672 = vld [vmem:[#allocation2 + $0x10] sm:$0xff]
      %1673 = vst [vmem:[#allocation3 + $0x40] sm:$0xff] %v1671
      %1674 = vst [vmem:[#allocation3 + $0x48] sm:$0xff] %v1672
      %v1675 = vld [vmem:[#allocation2 + $0x8] sm:$0xff]
      %v1676 = vld [vmem:[#allocation2 + $0x10] sm:$0xff]
      %v1677 = vld [vmem:[#allocation2 + $0x18] sm:$0xff]
      %1681 = vrot.lane.b32.xlu0 %v1675, 127
      %v1682 = vpop.permute.xlu0 %1681
      %1683 = vrot.lane.b32.xlu0 %v1676, 127
      %v1684 = vpop.permute.xlu0 %1683
      %1685 = vrot.lane.b32.xlu0 %v1677, 127
      %v1686 = vpop.permute.xlu0 %1685
      %v1687 = vsel %vm943, %v1682, %v1684
      %v1688 = vsel %vm943, %v1684, %v1686
      %v1691 = vsel %vm886, %v1687, 0.0
      %v1692 = vsel %vm887, %v1688, 0.0
      %1693 = vst [vmem:[#allocation3 + $0x50] sm:$0xff] %v1691
      %1694 = vst [vmem:[#allocation3 + $0x58] sm:$0xff] %v1692
      %v1695 = vld [vmem:[#allocation2 + $0x8] sm:$0xff]
      %v1696 = vld [vmem:[#allocation2 + $0x10] sm:$0xff]
      %v1697 = vld [vmem:[#allocation2 + $0x18] sm:$0xff]
      %1701 = vrot.lane.b32.xlu0 %v1695, 113
      %v1702 = vpop.permute.xlu0 %1701
      %1703 = vrot.lane.b32.xlu0 %v1696, 113
      %v1704 = vpop.permute.xlu0 %1703
      %1705 = vrot.lane.b32.xlu0 %v1697, 113
      %v1706 = vpop.permute.xlu0 %1705
      %v1707 = vsel %vm964, %v1702, %v1704
      %v1708 = vsel %vm964, %v1704, %v1706
      %v1711 = vsel %vm842, %v1707, 0.0
      %v1712 = vsel %vm843, %v1708, 0.0
      %1713 = vst [vmem:[#allocation3 + $0x60] sm:$0xff] %v1711
      %1714 = vst [vmem:[#allocation3 + $0x68] sm:$0xff] %v1712
      %v1715 = vld [vmem:[#allocation2 + $0x8] sm:$0xff]
      %v1716 = vld [vmem:[#allocation2 + $0x10] sm:$0xff]
      %v1717 = vld [vmem:[#allocation2 + $0x18] sm:$0xff]
      %1721 = vrot.lane.b32.xlu0 %v1715, 112
      %v1722 = vpop.permute.xlu0 %1721
      %1723 = vrot.lane.b32.xlu0 %v1716, 112
      %v1724 = vpop.permute.xlu0 %1723
      %1725 = vrot.lane.b32.xlu0 %v1717, 112
      %v1726 = vpop.permute.xlu0 %1725
      %v1727 = vsel %vm985, %v1722, %v1724
      %v1728 = vsel %vm985, %v1724, %v1726
      %1731 = vst [vmem:[#allocation3 + $0x70] sm:$0xff] %v1727
      %1732 = vst [vmem:[#allocation3 + $0x78] sm:$0xff] %v1728
      %v1733 = vld [vmem:[#allocation2 + $0x8] sm:$0xff]
      %v1734 = vld [vmem:[#allocation2 + $0x10] sm:$0xff]
      %v1735 = vld [vmem:[#allocation2 + $0x18] sm:$0xff]
      %1739 = vrot.lane.b32.xlu0 %v1733, 111
      %v1740 = vpop.permute.xlu0 %1739
      %1741 = vrot.lane.b32.xlu0 %v1734, 111
      %v1742 = vpop.permute.xlu0 %1741
      %1743 = vrot.lane.b32.xlu0 %v1735, 111
      %v1744 = vpop.permute.xlu0 %1743
      %v1745 = vsel %vm1004, %v1740, %v1742
      %v1746 = vsel %vm1004, %v1742, %v1744
      %v1749 = vsel %vm886, %v1745, 0.0
      %v1750 = vsel %vm887, %v1746, 0.0
      %1751 = vst [vmem:[#allocation3 + $0x80] sm:$0xff] %v1749
      %1752 = vst [vmem:[#allocation3 + $0x88] sm:$0xff] %v1750
      %v1753 = vld [vmem:[#allocation3] sm:$0xff]
      %v1754 = vld [vmem:[#allocation3 + $0x8] sm:$0xff]
      %v1755 = vld [vmem:[#allocation3 + $0x10] sm:$0xff]
      %v1756 = vld [vmem:[#allocation3 + $0x18] sm:$0xff]
      %v1757 = vld [vmem:[#allocation3 + $0x20] sm:$0xff]
      %v1758 = vld [vmem:[#allocation3 + $0x28] sm:$0xff]
      %v1759 = vld [vmem:[#allocation3 + $0x30] sm:$0xff]
      %v1760 = vld [vmem:[#allocation3 + $0x38] sm:$0xff]
      %v1761 = vld [vmem:[#allocation3 + $0x40] sm:$0xff]
      %v1762 = vld [vmem:[#allocation3 + $0x48] sm:$0xff]
      %v1763 = vld [vmem:[#allocation3 + $0x50] sm:$0xff]
      %v1764 = vld [vmem:[#allocation3 + $0x58] sm:$0xff]
      %v1765 = vld [vmem:[#allocation3 + $0x60] sm:$0xff]
      %v1766 = vld [vmem:[#allocation3 + $0x68] sm:$0xff]
      %v1767 = vld [vmem:[#allocation3 + $0x70] sm:$0xff]
      %v1768 = vld [vmem:[#allocation3 + $0x78] sm:$0xff]
      %v1769 = vld [vmem:[#allocation3 + $0x80] sm:$0xff]
      %v1770 = vld [vmem:[#allocation3 + $0x88] sm:$0xff]
      %v1771 = vpack.c.bf16 %v1755, %v1753
      %v1772 = vpack.c.bf16 %v1756, %v1754
      %v1773 = vpack.c.bf16 %v1759, %v1757
      %v1774 = vpack.c.bf16 %v1760, %v1758
      %v1775 = vpack.c.bf16 %v1763, %v1761
      %v1776 = vpack.c.bf16 %v1764, %v1762
      %v1777 = vpack.c.bf16 %v1767, %v1765
      %v1778 = vpack.c.bf16 %v1768, %v1766
      %v1779 = vpack.c.bf16 %v1769, %v1769
      %v1780 = vpack.c.bf16 %v1770, %v1770
      %v1782 = vsel %vm1041, %v813, 0
      %v1785 = vsel %vm1045, %v1779, 0
      %v1788 = vsel %vm1045, %v1780, 0
      %1790 = vmatprep.subr.bf16.mxu0 %v1772
      %1791 = vmatpush1.bf16.msra.mxu0 %v1771
      %1792 = vmatprep.subr.bf16.mxu0 %v1774
      %1793 = vmatpush1.bf16.msra.mxu0 %v1773
      %1794 = vmatprep.subr.bf16.mxu0 %v1776
      %1795 = vmatpush1.bf16.msra.mxu0 %v1775
      %1796 = vmatprep.subr.bf16.mxu0 %v1778
      %1797 = vmatpush1.bf16.msra.mxu0 %v1777
      %1798 = vmatprep.subr.bf16.mxu0 %v1788
      %1799 = vmatpush1.bf16.msra.mxu0 %v1785
      %1800 = vmatprep.subr.bf16.mxu0 0
      %1801 = vmatpush1.bf16.msra.mxu0 0
      %1802 = vmatprep.subr.bf16.mxu0 0
      %1803 = vmatpush1.bf16.msra.mxu0 0
      %1804 = vmatprep.subr.bf16.mxu0 0
      %1805 = vmatpush1.bf16.msra.mxu0 0
      %1806 = vmatprep.subr.bf16.mxu0 0
      %1807 = vmatpush1.bf16.msra.mxu0 0
      %1808 = vmatprep.subr.bf16.mxu0 0
      %1809 = vmatpush1.bf16.msra.mxu0 0
      %1810 = vmatprep.subr.bf16.mxu0 0
      %1811 = vmatpush1.bf16.msra.mxu0 0
      %1812 = vmatprep.subr.bf16.mxu0 0
      %1813 = vmatpush1.bf16.msra.mxu0 0
      %1814 = vmatprep.subr.bf16.mxu0 0
      %1815 = vmatpush1.bf16.msra.mxu0 0
      %1816 = vmatprep.subr.bf16.mxu0 0
      %1817 = vmatpush1.bf16.msra.mxu0 0
      %1818 = vmatprep.subr.bf16.mxu0 0
      %1819 = vmatpush1.bf16.msra.mxu0 0
      %1820 = vmatprep.subr.bf16.mxu0 0
      %1821 = vmatpush1.bf16.msra.mxu0 0
      %1822 = vmatprep.mubr.bf16.mxu0 0
      %1823 = vmatmul.mubr.bf16.gmra.mrb[0].mxu0 %v1782
      %v1824 = vpop.f32.mrb[0].mxu0
      %v1825 = vadd.f32 0.0, %v1824
      %v1826 = vpop.f32.mrb[0].mxu0
      %v1827 = vadd.f32 0.0, %v1826
      %v1828 = vpop.f32.mrb[0].mxu0
      %v1829 = vpop.f32.mrb[0].mxu0
      %1830 = vdwg.mxu0
      %v1831 = vmax.f32 %v1825, 0.0
      %v1832 = vmax.f32 %v1827, 0.0
      %1833 = vst [vmem:[#allocation2 + $0x28] sm:$0xff] %v1831
      %1834 = vst [vmem:[#allocation2 + $0x30] sm:$0xff] %v1832
      %v1835 = vld [vmem:[#allocation2] sm:$0xff]
      %v1836 = vld [vmem:[#allocation2 + $0x8] sm:$0xff]
      %v1837 = vld [vmem:[#allocation2 + $0x10] sm:$0xff]
      %v1838 = vld [vmem:[#allocation2 + $0x20] sm:$0xff]
      %v1839 = vld [vmem:[#allocation2 + $0x28] sm:$0xff]
      %v1840 = vld [vmem:[#allocation2 + $0x30] sm:$0xff]
      %1847 = vrot.lane.b32.xlu0 %v1835, 17
      %v1848 = vpop.permute.xlu0 %1847
      %1849 = vrot.lane.b32.xlu0 %v1836, 17
      %v1850 = vpop.permute.xlu0 %1849
      %1851 = vrot.lane.b32.xlu0 %v1837, 17
      %v1852 = vpop.permute.xlu0 %1851
      %1853 = vrot.lane.b32.xlu0 %v1838, 17
      %v1854 = vpop.permute.xlu0 %1853
      %1855 = vrot.lane.b32.xlu0 %v1839, 17
      %v1856 = vpop.permute.xlu0 %1855
      %1857 = vrot.lane.b32.xlu0 %v1840, 17
      %v1858 = vpop.permute.xlu0 %1857
      %v1859 = vsel %vm853, %v1848, %v1850
      %v1860 = vsel %vm853, %v1850, %v1852
      %v1861 = vsel %vm853, %v1854, %v1856
      %v1862 = vsel %vm853, %v1856, %v1858
      %v1867 = vsel %vm842, %v1859, 0.0
      %v1868 = vsel %vm843, %v1860, 0.0
      %v1869 = vsel %vm842, %v1861, 0.0
      %v1870 = vsel %vm843, %v1862, 0.0
      %1871 = vst [vmem:[#allocation3] sm:$0xff] %v1867
      %1872 = vst [vmem:[#allocation3 + $0x8] sm:$0xff] %v1868
      %1873 = vst [vmem:[#allocation3 + $0x10] sm:$0xff] %v1869
      %1874 = vst [vmem:[#allocation3 + $0x18] sm:$0xff] %v1870
      %v1875 = vld [vmem:[#allocation2] sm:$0xff]
      %v1876 = vld [vmem:[#allocation2 + $0x8] sm:$0xff]
      %v1877 = vld [vmem:[#allocation2 + $0x10] sm:$0xff]
      %v1878 = vld [vmem:[#allocation2 + $0x20] sm:$0xff]
      %v1879 = vld [vmem:[#allocation2 + $0x28] sm:$0xff]
      %v1880 = vld [vmem:[#allocation2 + $0x30] sm:$0xff]
      %1887 = vrot.lane.b32.xlu0 %v1875, 16
      %v1888 = vpop.permute.xlu0 %1887
      %1889 = vrot.lane.b32.xlu0 %v1876, 16
      %v1890 = vpop.permute.xlu0 %1889
      %1891 = vrot.lane.b32.xlu0 %v1877, 16
      %v1892 = vpop.permute.xlu0 %1891
      %1893 = vrot.lane.b32.xlu0 %v1878, 16
      %v1894 = vpop.permute.xlu0 %1893
      %1895 = vrot.lane.b32.xlu0 %v1879, 16
      %v1896 = vpop.permute.xlu0 %1895
      %1897 = vrot.lane.b32.xlu0 %v1880, 16
      %v1898 = vpop.permute.xlu0 %1897
      %v1899 = vsel %vm874, %v1888, %v1890
      %v1900 = vsel %vm874, %v1890, %v1892
      %v1901 = vsel %vm874, %v1894, %v1896
      %v1902 = vsel %vm874, %v1896, %v1898
      %1907 = vst [vmem:[#allocation3 + $0x20] sm:$0xff] %v1899
      %1908 = vst [vmem:[#allocation3 + $0x28] sm:$0xff] %v1900
      %1909 = vst [vmem:[#allocation3 + $0x30] sm:$0xff] %v1901
      %1910 = vst [vmem:[#allocation3 + $0x38] sm:$0xff] %v1902
      %v1911 = vld [vmem:[#allocation2] sm:$0xff]
      %v1912 = vld [vmem:[#allocation2 + $0x8] sm:$0xff]
      %v1913 = vld [vmem:[#allocation2 + $0x10] sm:$0xff]
      %v1914 = vld [vmem:[#allocation2 + $0x20] sm:$0xff]
      %v1915 = vld [vmem:[#allocation2 + $0x28] sm:$0xff]
      %v1916 = vld [vmem:[#allocation2 + $0x30] sm:$0xff]
      %1923 = vrot.lane.b32.xlu0 %v1911, 15
      %v1924 = vpop.permute.xlu0 %1923
      %1925 = vrot.lane.b32.xlu0 %v1912, 15
      %v1926 = vpop.permute.xlu0 %1925
      %1927 = vrot.lane.b32.xlu0 %v1913, 15
      %v1928 = vpop.permute.xlu0 %1927
      %1929 = vrot.lane.b32.xlu0 %v1914, 15
      %v1930 = vpop.permute.xlu0 %1929
      %1931 = vrot.lane.b32.xlu0 %v1915, 15
      %v1932 = vpop.permute.xlu0 %1931
      %1933 = vrot.lane.b32.xlu0 %v1916, 15
      %v1934 = vpop.permute.xlu0 %1933
      %v1935 = vsel %vm897, %v1924, %v1926
      %v1936 = vsel %vm897, %v1926, %v1928
      %v1937 = vsel %vm897, %v1930, %v1932
      %v1938 = vsel %vm897, %v1932, %v1934
      %v1943 = vsel %vm886, %v1935, 0.0
      %v1944 = vsel %vm887, %v1936, 0.0
      %v1945 = vsel %vm886, %v1937, 0.0
      %v1946 = vsel %vm887, %v1938, 0.0
      %1947 = vst [vmem:[#allocation3 + $0x40] sm:$0xff] %v1943
      %1948 = vst [vmem:[#allocation3 + $0x48] sm:$0xff] %v1944
      %1949 = vst [vmem:[#allocation3 + $0x50] sm:$0xff] %v1945
      %1950 = vst [vmem:[#allocation3 + $0x58] sm:$0xff] %v1946
      %v1951 = vld [vmem:[#allocation2] sm:$0xff]
      %v1952 = vld [vmem:[#allocation2 + $0x8] sm:$0xff]
      %v1953 = vld [vmem:[#allocation2 + $0x10] sm:$0xff]
      %v1954 = vld [vmem:[#allocation2 + $0x20] sm:$0xff]
      %v1955 = vld [vmem:[#allocation2 + $0x28] sm:$0xff]
      %v1956 = vld [vmem:[#allocation2 + $0x30] sm:$0xff]
      %1963 = vrot.lane.b32.xlu0 %v1951, 1
      %v1964 = vpop.permute.xlu0 %1963
      %1965 = vrot.lane.b32.xlu0 %v1952, 1
      %v1966 = vpop.permute.xlu0 %1965
      %1967 = vrot.lane.b32.xlu0 %v1953, 1
      %v1968 = vpop.permute.xlu0 %1967
      %1969 = vrot.lane.b32.xlu0 %v1954, 1
      %v1970 = vpop.permute.xlu0 %1969
      %1971 = vrot.lane.b32.xlu0 %v1955, 1
      %v1972 = vpop.permute.xlu0 %1971
      %1973 = vrot.lane.b32.xlu0 %v1956, 1
      %v1974 = vpop.permute.xlu0 %1973
      %v1975 = vsel %vm918, %v1964, %v1966
      %v1976 = vsel %vm918, %v1966, %v1968
      %v1977 = vsel %vm918, %v1970, %v1972
      %v1978 = vsel %vm918, %v1972, %v1974
      %v1983 = vsel %vm842, %v1975, 0.0
      %v1984 = vsel %vm843, %v1976, 0.0
      %v1985 = vsel %vm842, %v1977, 0.0
      %v1986 = vsel %vm843, %v1978, 0.0
      %1987 = vst [vmem:[#allocation3 + $0x60] sm:$0xff] %v1983
      %1988 = vst [vmem:[#allocation3 + $0x68] sm:$0xff] %v1984
      %1989 = vst [vmem:[#allocation3 + $0x70] sm:$0xff] %v1985
      %1990 = vst [vmem:[#allocation3 + $0x78] sm:$0xff] %v1986
      %v1991 = vld [vmem:[#allocation2 + $0x8] sm:$0xff]
      %v1992 = vld [vmem:[#allocation2 + $0x10] sm:$0xff]
      %v1993 = vld [vmem:[#allocation2 + $0x28] sm:$0xff]
      %v1994 = vld [vmem:[#allocation2 + $0x30] sm:$0xff]
      %1995 = vst [vmem:[#allocation3 + $0x80] sm:$0xff] %v1991
      %1996 = vst [vmem:[#allocation3 + $0x88] sm:$0xff] %v1992
      %1997 = vst [vmem:[#allocation3 + $0x90] sm:$0xff] %v1993
      %1998 = vst [vmem:[#allocation3 + $0x98] sm:$0xff] %v1994
      %v1999 = vld [vmem:[#allocation2 + $0x8] sm:$0xff]
      %v2000 = vld [vmem:[#allocation2 + $0x10] sm:$0xff]
      %v2001 = vld [vmem:[#allocation2 + $0x18] sm:$0xff]
      %v2002 = vld [vmem:[#allocation2 + $0x28] sm:$0xff]
      %v2003 = vld [vmem:[#allocation2 + $0x30] sm:$0xff]
      %v2004 = vld [vmem:[#allocation2 + $0x38] sm:$0xff]
      %2011 = vrot.lane.b32.xlu0 %v1999, 127
      %v2012 = vpop.permute.xlu0 %2011
      %2013 = vrot.lane.b32.xlu0 %v2000, 127
      %v2014 = vpop.permute.xlu0 %2013
      %2015 = vrot.lane.b32.xlu0 %v2001, 127
      %v2016 = vpop.permute.xlu0 %2015
      %2017 = vrot.lane.b32.xlu0 %v2002, 127
      %v2018 = vpop.permute.xlu0 %2017
      %2019 = vrot.lane.b32.xlu0 %v2003, 127
      %v2020 = vpop.permute.xlu0 %2019
      %2021 = vrot.lane.b32.xlu0 %v2004, 127
      %v2022 = vpop.permute.xlu0 %2021
      %v2023 = vsel %vm943, %v2012, %v2014
      %v2024 = vsel %vm943, %v2014, %v2016
      %v2025 = vsel %vm943, %v2018, %v2020
      %v2026 = vsel %vm943, %v2020, %v2022
      %v2031 = vsel %vm886, %v2023, 0.0
      %v2032 = vsel %vm887, %v2024, 0.0
      %v2033 = vsel %vm886, %v2025, 0.0
      %v2034 = vsel %vm887, %v2026, 0.0
      %2035 = vst [vmem:[#allocation3 + $0xa0] sm:$0xff] %v2031
      %2036 = vst [vmem:[#allocation3 + $0xa8] sm:$0xff] %v2032
      %2037 = vst [vmem:[#allocation3 + $0xb0] sm:$0xff] %v2033
      %2038 = vst [vmem:[#allocation3 + $0xb8] sm:$0xff] %v2034
      %v2039 = vld [vmem:[#allocation2 + $0x8] sm:$0xff]
      %v2040 = vld [vmem:[#allocation2 + $0x10] sm:$0xff]
      %v2041 = vld [vmem:[#allocation2 + $0x18] sm:$0xff]
      %v2042 = vld [vmem:[#allocation2 + $0x28] sm:$0xff]
      %v2043 = vld [vmem:[#allocation2 + $0x30] sm:$0xff]
      %v2044 = vld [vmem:[#allocation2 + $0x38] sm:$0xff]
      %2051 = vrot.lane.b32.xlu0 %v2039, 113
      %v2052 = vpop.permute.xlu0 %2051
      %2053 = vrot.lane.b32.xlu0 %v2040, 113
      %v2054 = vpop.permute.xlu0 %2053
      %2055 = vrot.lane.b32.xlu0 %v2041, 113
      %v2056 = vpop.permute.xlu0 %2055
      %2057 = vrot.lane.b32.xlu0 %v2042, 113
      %v2058 = vpop.permute.xlu0 %2057
      %2059 = vrot.lane.b32.xlu0 %v2043, 113
      %v2060 = vpop.permute.xlu0 %2059
      %2061 = vrot.lane.b32.xlu0 %v2044, 113
      %v2062 = vpop.permute.xlu0 %2061
      %v2063 = vsel %vm964, %v2052, %v2054
      %v2064 = vsel %vm964, %v2054, %v2056
      %v2065 = vsel %vm964, %v2058, %v2060
      %v2066 = vsel %vm964, %v2060, %v2062
      %v2071 = vsel %vm842, %v2063, 0.0
      %v2072 = vsel %vm843, %v2064, 0.0
      %v2073 = vsel %vm842, %v2065, 0.0
      %v2074 = vsel %vm843, %v2066, 0.0
      %2075 = vst [vmem:[#allocation3 + $0xc0] sm:$0xff] %v2071
      %2076 = vst [vmem:[#allocation3 + $0xc8] sm:$0xff] %v2072
      %2077 = vst [vmem:[#allocation3 + $0xd0] sm:$0xff] %v2073
      %2078 = vst [vmem:[#allocation3 + $0xd8] sm:$0xff] %v2074
      %v2079 = vld [vmem:[#allocation2 + $0x8] sm:$0xff]
      %v2080 = vld [vmem:[#allocation2 + $0x10] sm:$0xff]
      %v2081 = vld [vmem:[#allocation2 + $0x18] sm:$0xff]
      %v2082 = vld [vmem:[#allocation2 + $0x28] sm:$0xff]
      %v2083 = vld [vmem:[#allocation2 + $0x30] sm:$0xff]
      %v2084 = vld [vmem:[#allocation2 + $0x38] sm:$0xff]
      %2091 = vrot.lane.b32.xlu0 %v2079, 112
      %v2092 = vpop.permute.xlu0 %2091
      %2093 = vrot.lane.b32.xlu0 %v2080, 112
      %v2094 = vpop.permute.xlu0 %2093
      %2095 = vrot.lane.b32.xlu0 %v2081, 112
      %v2096 = vpop.permute.xlu0 %2095
      %2097 = vrot.lane.b32.xlu0 %v2082, 112
      %v2098 = vpop.permute.xlu0 %2097
      %2099 = vrot.lane.b32.xlu0 %v2083, 112
      %v2100 = vpop.permute.xlu0 %2099
      %2101 = vrot.lane.b32.xlu0 %v2084, 112
      %v2102 = vpop.permute.xlu0 %2101
      %v2103 = vsel %vm985, %v2092, %v2094
      %v2104 = vsel %vm985, %v2094, %v2096
      %v2105 = vsel %vm985, %v2098, %v2100
      %v2106 = vsel %vm985, %v2100, %v2102
      %2111 = vst [vmem:[#allocation3 + $0xe0] sm:$0xff] %v2103
      %2112 = vst [vmem:[#allocation3 + $0xe8] sm:$0xff] %v2104
      %2113 = vst [vmem:[#allocation3 + $0xf0] sm:$0xff] %v2105
      %2114 = vst [vmem:[#allocation3 + $0xf8] sm:$0xff] %v2106
      %v2115 = vld [vmem:[#allocation2 + $0x8] sm:$0xff]
      %v2116 = vld [vmem:[#allocation2 + $0x10] sm:$0xff]
      %v2117 = vld [vmem:[#allocation2 + $0x18] sm:$0xff]
      %v2118 = vld [vmem:[#allocation2 + $0x28] sm:$0xff]
      %v2119 = vld [vmem:[#allocation2 + $0x30] sm:$0xff]
      %v2120 = vld [vmem:[#allocation2 + $0x38] sm:$0xff]
      %2127 = vrot.lane.b32.xlu0 %v2115, 111
      %v2128 = vpop.permute.xlu0 %2127
      %2129 = vrot.lane.b32.xlu0 %v2116, 111
      %v2130 = vpop.permute.xlu0 %2129
      %2131 = vrot.lane.b32.xlu0 %v2117, 111
      %v2132 = vpop.permute.xlu0 %2131
      %2133 = vrot.lane.b32.xlu0 %v2118, 111
      %v2134 = vpop.permute.xlu0 %2133
      %2135 = vrot.lane.b32.xlu0 %v2119, 111
      %v2136 = vpop.permute.xlu0 %2135
      %2137 = vrot.lane.b32.xlu0 %v2120, 111
      %v2138 = vpop.permute.xlu0 %2137
      %v2139 = vsel %vm1004, %v2128, %v2130
      %v2140 = vsel %vm1004, %v2130, %v2132
      %v2141 = vsel %vm1004, %v2134, %v2136
      %v2142 = vsel %vm1004, %v2136, %v2138
      %v2147 = vsel %vm886, %v2139, 0.0
      %v2148 = vsel %vm887, %v2140, 0.0
      %v2149 = vsel %vm886, %v2141, 0.0
      %v2150 = vsel %vm887, %v2142, 0.0
      %2151 = vst [vmem:[#allocation3 + $0x100] sm:$0xff] %v2147
      %2152 = vst [vmem:[#allocation3 + $0x108] sm:$0xff] %v2148
      %2153 = vst [vmem:[#allocation3 + $0x110] sm:$0xff] %v2149
      %2154 = vst [vmem:[#allocation3 + $0x118] sm:$0xff] %v2150
      %v2155 = vld [vmem:[#allocation3] sm:$0xff]
      %v2156 = vld [vmem:[#allocation3 + $0x8] sm:$0xff]
      %v2157 = vld [vmem:[#allocation3 + $0x10] sm:$0xff]
      %v2158 = vld [vmem:[#allocation3 + $0x18] sm:$0xff]
      %v2159 = vld [vmem:[#allocation3 + $0x20] sm:$0xff]
      %v2160 = vld [vmem:[#allocation3 + $0x28] sm:$0xff]
      %v2161 = vld [vmem:[#allocation3 + $0x30] sm:$0xff]
      %v2162 = vld [vmem:[#allocation3 + $0x38] sm:$0xff]
      %v2163 = vld [vmem:[#allocation3 + $0x40] sm:$0xff]
      %v2164 = vld [vmem:[#allocation3 + $0x48] sm:$0xff]
      %v2165 = vld [vmem:[#allocation3 + $0x50] sm:$0xff]
      %v2166 = vld [vmem:[#allocation3 + $0x58] sm:$0xff]
      %v2167 = vld [vmem:[#allocation3 + $0x60] sm:$0xff]
      %v2168 = vld [vmem:[#allocation3 + $0x68] sm:$0xff]
      %v2169 = vld [vmem:[#allocation3 + $0x70] sm:$0xff]
      %v2170 = vld [vmem:[#allocation3 + $0x78] sm:$0xff]
      %v2171 = vld [vmem:[#allocation3 + $0x80] sm:$0xff]
      %v2172 = vld [vmem:[#allocation3 + $0x88] sm:$0xff]
      %v2173 = vld [vmem:[#allocation3 + $0x90] sm:$0xff]
      %v2174 = vld [vmem:[#allocation3 + $0x98] sm:$0xff]
      %v2175 = vld [vmem:[#allocation3 + $0xa0] sm:$0xff]
      %v2176 = vld [vmem:[#allocation3 + $0xa8] sm:$0xff]
      %v2177 = vld [vmem:[#allocation3 + $0xb0] sm:$0xff]
      %v2178 = vld [vmem:[#allocation3 + $0xb8] sm:$0xff]
      %v2179 = vld [vmem:[#allocation3 + $0xc0] sm:$0xff]
      %v2180 = vld [vmem:[#allocation3 + $0xc8] sm:$0xff]
      %v2181 = vld [vmem:[#allocation3 + $0xd0] sm:$0xff]
      %v2182 = vld [vmem:[#allocation3 + $0xd8] sm:$0xff]
      %v2183 = vld [vmem:[#allocation3 + $0xe0] sm:$0xff]
      %v2184 = vld [vmem:[#allocation3 + $0xe8] sm:$0xff]
      %v2185 = vld [vmem:[#allocation3 + $0xf0] sm:$0xff]
      %v2186 = vld [vmem:[#allocation3 + $0xf8] sm:$0xff]
      %v2187 = vld [vmem:[#allocation3 + $0x100] sm:$0xff]
      %v2188 = vld [vmem:[#allocation3 + $0x108] sm:$0xff]
      %v2189 = vld [vmem:[#allocation3 + $0x110] sm:$0xff]
      %v2190 = vld [vmem:[#allocation3 + $0x118] sm:$0xff]
      %v2191 = vpack.c.bf16 %v2157, %v2155
      %v2192 = vpack.c.bf16 %v2158, %v2156
      %v2193 = vpack.c.bf16 %v2161, %v2159
      %v2194 = vpack.c.bf16 %v2162, %v2160
      %v2195 = vpack.c.bf16 %v2165, %v2163
      %v2196 = vpack.c.bf16 %v2166, %v2164
      %v2197 = vpack.c.bf16 %v2169, %v2167
      %v2198 = vpack.c.bf16 %v2170, %v2168
      %v2199 = vpack.c.bf16 %v2173, %v2171
      %v2200 = vpack.c.bf16 %v2174, %v2172
      %v2201 = vpack.c.bf16 %v2177, %v2175
      %v2202 = vpack.c.bf16 %v2178, %v2176
      %v2203 = vpack.c.bf16 %v2181, %v2179
      %v2204 = vpack.c.bf16 %v2182, %v2180
      %v2205 = vpack.c.bf16 %v2185, %v2183
      %v2206 = vpack.c.bf16 %v2186, %v2184
      %v2207 = vpack.c.bf16 %v2189, %v2187
      %v2208 = vpack.c.bf16 %v2190, %v2188
      %v2210 = vunpack.c.l.b16 %v814
      %v2211 = vunpack.c.h.b16 %v814
      %v2212 = vpack.c.b16 %v2210, %v2210
      %v2213 = vpack.c.b16 %v2211, %v2211
      %v2216 = vsel %vm874, %v2213, 0
      %2218 = vmatprep.subr.bf16.mxu0 %v2192
      %2219 = vmatpush1.bf16.msra.mxu0 %v2191
      %2220 = vmatprep.subr.bf16.mxu0 %v2194
      %2221 = vmatpush1.bf16.msra.mxu0 %v2193
      %2222 = vmatprep.subr.bf16.mxu0 %v2196
      %2223 = vmatpush1.bf16.msra.mxu0 %v2195
      %2224 = vmatprep.subr.bf16.mxu0 %v2198
      %2225 = vmatpush1.bf16.msra.mxu0 %v2197
      %2226 = vmatprep.subr.bf16.mxu0 %v2200
      %2227 = vmatpush1.bf16.msra.mxu0 %v2199
      %2228 = vmatprep.subr.bf16.mxu0 %v2202
      %2229 = vmatpush1.bf16.msra.mxu0 %v2201
      %2230 = vmatprep.subr.bf16.mxu0 %v2204
      %2231 = vmatpush1.bf16.msra.mxu0 %v2203
      %2232 = vmatprep.subr.bf16.mxu0 %v2206
      %2233 = vmatpush1.bf16.msra.mxu0 %v2205
      %2234 = vmatprep.subr.bf16.mxu0 %v2208
      %2235 = vmatpush1.bf16.msra.mxu0 %v2207
      %2236 = vmatprep.subr.bf16.mxu0 0
      %2237 = vmatpush1.bf16.msra.mxu0 0
      %2238 = vmatprep.subr.bf16.mxu0 0
      %2239 = vmatpush1.bf16.msra.mxu0 0
      %2240 = vmatprep.subr.bf16.mxu0 0
      %2241 = vmatpush1.bf16.msra.mxu0 0
      %2242 = vmatprep.subr.bf16.mxu0 0
      %2243 = vmatpush1.bf16.msra.mxu0 0
      %2244 = vmatprep.subr.bf16.mxu0 0
      %2245 = vmatpush1.bf16.msra.mxu0 0
      %2246 = vmatprep.subr.bf16.mxu0 0
      %2247 = vmatpush1.bf16.msra.mxu0 0
      %2248 = vmatprep.subr.bf16.mxu0 0
      %2249 = vmatpush1.bf16.msra.mxu0 0
      %2250 = vmatprep.mubr.bf16.mxu0 %v2216
      %2251 = vmatmul.mubr.bf16.gmra.mrb[0].mxu0 %v2212
      %v2252 = vpop.f32.mrb[0].mxu0
      %v2253 = vadd.f32 0.0, %v2252
      %v2254 = vpop.f32.mrb[0].mxu0
      %v2255 = vadd.f32 0.0, %v2254
      %v2256 = vpop.f32.mrb[0].mxu0
      %v2257 = vpop.f32.mrb[0].mxu0
      %2258 = vdwg.mxu0
      %v2259 = vmax.f32 %v2253, 0.0
      %v2260 = vmax.f32 %v2255, 0.0
      %2261 = vst [vmem:[#allocation2 + $0x48] sm:$0xff] %v2259
      %2262 = vst [vmem:[#allocation2 + $0x50] sm:$0xff] %v2260
      %v2263 = vld [vmem:[#allocation2 + $0x8] sm:$0xff]
      %v2264 = vld [vmem:[#allocation2 + $0x10] sm:$0xff]
      %v2265 = vld [vmem:[#allocation2 + $0x28] sm:$0xff]
      %v2266 = vld [vmem:[#allocation2 + $0x30] sm:$0xff]
      %v2267 = vld [vmem:[#allocation2 + $0x48] sm:$0xff]
      %v2268 = vld [vmem:[#allocation2 + $0x50] sm:$0xff]
      %v2269 = vpack.c.bf16 %v2265, %v2263
      %v2270 = vpack.c.bf16 %v2266, %v2264
      %v2271 = vpack.c.bf16 %v2267, %v2267
      %v2272 = vpack.c.bf16 %v2268, %v2268
      %2274 = vset.pattern.permute.xlu0 0
      %2275 = vperm.xlu0 %2274, %v816
      %v2276 = vpop.permute.xlu0 %2275
      %v2279 = vsel %vm1540, %v815, 0
      %v2282 = vsel %vm1045, %v2271, 0
      %v2285 = vsel %vm1045, %v2272, 0
      %2287 = vmatprep.subr.bf16.mxu0 %v2270
      %2288 = vmatpush1.bf16.msra.mxu0 %v2269
      %2289 = vmatprep.subr.bf16.mxu0 %v2285
      %2290 = vmatpush1.bf16.msra.mxu0 %v2282
      %2291 = vmatprep.subr.bf16.mxu0 0
      %2292 = vmatpush1.bf16.msra.mxu0 0
      %2293 = vmatprep.subr.bf16.mxu0 0
      %2294 = vmatpush1.bf16.msra.mxu0 0
      %2295 = vmatprep.subr.bf16.mxu0 0
      %2296 = vmatpush1.bf16.msra.mxu0 0
      %2297 = vmatprep.subr.bf16.mxu0 0
      %2298 = vmatpush1.bf16.msra.mxu0 0
      %2299 = vmatprep.subr.bf16.mxu0 0
      %2300 = vmatpush1.bf16.msra.mxu0 0
      %2301 = vmatprep.subr.bf16.mxu0 0
      %2302 = vmatpush1.bf16.msra.mxu0 0
      %2303 = vmatprep.subr.bf16.mxu0 0
      %2304 = vmatpush1.bf16.msra.mxu0 0
      %2305 = vmatprep.subr.bf16.mxu0 0
      %2306 = vmatpush1.bf16.msra.mxu0 0
      %2307 = vmatprep.subr.bf16.mxu0 0
      %2308 = vmatpush1.bf16.msra.mxu0 0
      %2309 = vmatprep.subr.bf16.mxu0 0
      %2310 = vmatpush1.bf16.msra.mxu0 0
      %2311 = vmatprep.subr.bf16.mxu0 0
      %2312 = vmatpush1.bf16.msra.mxu0 0
      %2313 = vmatprep.subr.bf16.mxu0 0
      %2314 = vmatpush1.bf16.msra.mxu0 0
      %2315 = vmatprep.subr.bf16.mxu0 0
      %2316 = vmatpush1.bf16.msra.mxu0 0
      %2317 = vmatprep.subr.bf16.mxu0 0
      %2318 = vmatpush1.bf16.msra.mxu0 0
      %2319 = vmatprep.mubr.bf16.mxu0 0
      %2320 = vmatmul.mubr.bf16.gmra.mrb[0].mxu0 %v2279
      %v2321 = vpop.f32.mrb[0].mxu0
      %v2322 = vadd.f32 %v2276, %v2321
      %v2323 = vpop.f32.mrb[0].mxu0
      %v2324 = vadd.f32 %v2276, %v2323
      %v2325 = vpop.f32.mrb[0].mxu0
      %v2326 = vpop.f32.mrb[0].mxu0
      %2327 = vdwg.mxu0
      %2328 = vst [vmem:[#allocation2 + $0x8] sm:$0xff] %v2322
      %2329 = vst [vmem:[#allocation2 + $0x10] sm:$0xff] %v2324
      %v2330 = vld [vmem:[#allocation2] sm:$0xff]
      %v2331 = vld [vmem:[#allocation2 + $0x8] sm:$0xff]
      %v2332 = vld [vmem:[#allocation2 + $0x10] sm:$0xff]
      %2336 = vrot.lane.b32.xlu0 %v2330, 17
      %v2337 = vpop.permute.xlu0 %2336
      %2338 = vrot.lane.b32.xlu0 %v2331, 17
      %v2339 = vpop.permute.xlu0 %2338
      %2340 = vrot.lane.b32.xlu0 %v2332, 17
      %v2341 = vpop.permute.xlu0 %2340
      %v2342 = vsel %vm853, %v2337, %v2339
      %v2343 = vsel %vm853, %v2339, %v2341
      %v2346 = vsel %vm842, %v2342, 0.0
      %v2347 = vsel %vm843, %v2343, 0.0
      %2348 = vst [vmem:[#allocation3] sm:$0xff] %v2346
      %2349 = vst [vmem:[#allocation3 + $0x8] sm:$0xff] %v2347
      %v2350 = vld [vmem:[#allocation2] sm:$0xff]
      %v2351 = vld [vmem:[#allocation2 + $0x8] sm:$0xff]
      %v2352 = vld [vmem:[#allocation2 + $0x10] sm:$0xff]
      %2356 = vrot.lane.b32.xlu0 %v2350, 16
      %v2357 = vpop.permute.xlu0 %2356
      %2358 = vrot.lane.b32.xlu0 %v2351, 16
      %v2359 = vpop.permute.xlu0 %2358
      %2360 = vrot.lane.b32.xlu0 %v2352, 16
      %v2361 = vpop.permute.xlu0 %2360
      %v2362 = vsel %vm874, %v2357, %v2359
      %v2363 = vsel %vm874, %v2359, %v2361
      %2366 = vst [vmem:[#allocation3 + $0x10] sm:$0xff] %v2362
      %2367 = vst [vmem:[#allocation3 + $0x18] sm:$0xff] %v2363
      %v2368 = vld [vmem:[#allocation2] sm:$0xff]
      %v2369 = vld [vmem:[#allocation2 + $0x8] sm:$0xff]
      %v2370 = vld [vmem:[#allocation2 + $0x10] sm:$0xff]
      %2374 = vrot.lane.b32.xlu0 %v2368, 15
      %v2375 = vpop.permute.xlu0 %2374
      %2376 = vrot.lane.b32.xlu0 %v2369, 15
      %v2377 = vpop.permute.xlu0 %2376
      %2378 = vrot.lane.b32.xlu0 %v2370, 15
      %v2379 = vpop.permute.xlu0 %2378
      %v2380 = vsel %vm897, %v2375, %v2377
      %v2381 = vsel %vm897, %v2377, %v2379
      %v2384 = vsel %vm886, %v2380, 0.0
      %v2385 = vsel %vm887, %v2381, 0.0
      %2386 = vst [vmem:[#allocation3 + $0x20] sm:$0xff] %v2384
      %2387 = vst [vmem:[#allocation3 + $0x28] sm:$0xff] %v2385
      %v2388 = vld [vmem:[#allocation2] sm:$0xff]
      %v2389 = vld [vmem:[#allocation2 + $0x8] sm:$0xff]
      %v2390 = vld [vmem:[#allocation2 + $0x10] sm:$0xff]
      %2394 = vrot.lane.b32.xlu0 %v2388, 1
      %v2395 = vpop.permute.xlu0 %2394
      %2396 = vrot.lane.b32.xlu0 %v2389, 1
      %v2397 = vpop.permute.xlu0 %2396
      %2398 = vrot.lane.b32.xlu0 %v2390, 1
      %v2399 = vpop.permute.xlu0 %2398
      %v2400 = vsel %vm918, %v2395, %v2397
      %v2401 = vsel %vm918, %v2397, %v2399
      %v2404 = vsel %vm842, %v2400, 0.0
      %v2405 = vsel %vm843, %v2401, 0.0
      %2406 = vst [vmem:[#allocation3 + $0x30] sm:$0xff] %v2404
      %2407 = vst [vmem:[#allocation3 + $0x38] sm:$0xff] %v2405
      %v2408 = vld [vmem:[#allocation2 + $0x8] sm:$0xff]
      %v2409 = vld [vmem:[#allocation2 + $0x10] sm:$0xff]
      %2410 = vst [vmem:[#allocation3 + $0x40] sm:$0xff] %v2408
      %2411 = vst [vmem:[#allocation3 + $0x48] sm:$0xff] %v2409
      %v2412 = vld [vmem:[#allocation2 + $0x8] sm:$0xff]
      %v2413 = vld [vmem:[#allocation2 + $0x10] sm:$0xff]
      %v2414 = vld [vmem:[#allocation2 + $0x18] sm:$0xff]
      %2418 = vrot.lane.b32.xlu0 %v2412, 127
      %v2419 = vpop.permute.xlu0 %2418
      %2420 = vrot.lane.b32.xlu0 %v2413, 127
      %v2421 = vpop.permute.xlu0 %2420
      %2422 = vrot.lane.b32.xlu0 %v2414, 127
      %v2423 = vpop.permute.xlu0 %2422
      %v2424 = vsel %vm943, %v2419, %v2421
      %v2425 = vsel %vm943, %v2421, %v2423
      %v2428 = vsel %vm886, %v2424, 0.0
      %v2429 = vsel %vm887, %v2425, 0.0
      %2430 = vst [vmem:[#allocation3 + $0x50] sm:$0xff] %v2428
      %2431 = vst [vmem:[#allocation3 + $0x58] sm:$0xff] %v2429
      %v2432 = vld [vmem:[#allocation2 + $0x8] sm:$0xff]
      %v2433 = vld [vmem:[#allocation2 + $0x10] sm:$0xff]
      %v2434 = vld [vmem:[#allocation2 + $0x18] sm:$0xff]
      %2438 = vrot.lane.b32.xlu0 %v2432, 113
      %v2439 = vpop.permute.xlu0 %2438
      %2440 = vrot.lane.b32.xlu0 %v2433, 113
      %v2441 = vpop.permute.xlu0 %2440
      %2442 = vrot.lane.b32.xlu0 %v2434, 113
      %v2443 = vpop.permute.xlu0 %2442
      %v2444 = vsel %vm964, %v2439, %v2441
      %v2445 = vsel %vm964, %v2441, %v2443
      %v2448 = vsel %vm842, %v2444, 0.0
      %v2449 = vsel %vm843, %v2445, 0.0
      %2450 = vst [vmem:[#allocation3 + $0x60] sm:$0xff] %v2448
      %2451 = vst [vmem:[#allocation3 + $0x68] sm:$0xff] %v2449
      %v2452 = vld [vmem:[#allocation2 + $0x8] sm:$0xff]
      %v2453 = vld [vmem:[#allocation2 + $0x10] sm:$0xff]
      %v2454 = vld [vmem:[#allocation2 + $0x18] sm:$0xff]
      %2458 = vrot.lane.b32.xlu0 %v2452, 112
      %v2459 = vpop.permute.xlu0 %2458
      %2460 = vrot.lane.b32.xlu0 %v2453, 112
      %v2461 = vpop.permute.xlu0 %2460
      %2462 = vrot.lane.b32.xlu0 %v2454, 112
      %v2463 = vpop.permute.xlu0 %2462
      %v2464 = vsel %vm985, %v2459, %v2461
      %v2465 = vsel %vm985, %v2461, %v2463
      %2468 = vst [vmem:[#allocation3 + $0x70] sm:$0xff] %v2464
      %2469 = vst [vmem:[#allocation3 + $0x78] sm:$0xff] %v2465
      %v2470 = vld [vmem:[#allocation2 + $0x8] sm:$0xff]
      %v2471 = vld [vmem:[#allocation2 + $0x10] sm:$0xff]
      %v2472 = vld [vmem:[#allocation2 + $0x18] sm:$0xff]
      %2476 = vrot.lane.b32.xlu0 %v2470, 111
      %v2477 = vpop.permute.xlu0 %2476
      %2478 = vrot.lane.b32.xlu0 %v2471, 111
      %v2479 = vpop.permute.xlu0 %2478
      %2480 = vrot.lane.b32.xlu0 %v2472, 111
      %v2481 = vpop.permute.xlu0 %2480
      %v2482 = vsel %vm1004, %v2477, %v2479
      %v2483 = vsel %vm1004, %v2479, %v2481
      %v2486 = vsel %vm886, %v2482, 0.0
      %v2487 = vsel %vm887, %v2483, 0.0
      %2488 = vst [vmem:[#allocation3 + $0x80] sm:$0xff] %v2486
      %2489 = vst [vmem:[#allocation3 + $0x88] sm:$0xff] %v2487
      %v2490 = vld [vmem:[#allocation3] sm:$0xff]
      %v2491 = vld [vmem:[#allocation3 + $0x8] sm:$0xff]
      %v2492 = vld [vmem:[#allocation3 + $0x10] sm:$0xff]
      %v2493 = vld [vmem:[#allocation3 + $0x18] sm:$0xff]
      %v2494 = vld [vmem:[#allocation3 + $0x20] sm:$0xff]
      %v2495 = vld [vmem:[#allocation3 + $0x28] sm:$0xff]
      %v2496 = vld [vmem:[#allocation3 + $0x30] sm:$0xff]
      %v2497 = vld [vmem:[#allocation3 + $0x38] sm:$0xff]
      %v2498 = vld [vmem:[#allocation3 + $0x40] sm:$0xff]
      %v2499 = vld [vmem:[#allocation3 + $0x48] sm:$0xff]
      %v2500 = vld [vmem:[#allocation3 + $0x50] sm:$0xff]
      %v2501 = vld [vmem:[#allocation3 + $0x58] sm:$0xff]
      %v2502 = vld [vmem:[#allocation3 + $0x60] sm:$0xff]
      %v2503 = vld [vmem:[#allocation3 + $0x68] sm:$0xff]
      %v2504 = vld [vmem:[#allocation3 + $0x70] sm:$0xff]
      %v2505 = vld [vmem:[#allocation3 + $0x78] sm:$0xff]
      %v2506 = vld [vmem:[#allocation3 + $0x80] sm:$0xff]
      %v2507 = vld [vmem:[#allocation3 + $0x88] sm:$0xff]
      %v2508 = vpack.c.bf16 %v2492, %v2490
      %v2509 = vpack.c.bf16 %v2493, %v2491
      %v2510 = vpack.c.bf16 %v2496, %v2494
      %v2511 = vpack.c.bf16 %v2497, %v2495
      %v2512 = vpack.c.bf16 %v2500, %v2498
      %v2513 = vpack.c.bf16 %v2501, %v2499
      %v2514 = vpack.c.bf16 %v2504, %v2502
      %v2515 = vpack.c.bf16 %v2505, %v2503
      %v2516 = vpack.c.bf16 %v2506, %v2506
      %v2517 = vpack.c.bf16 %v2507, %v2507
      %v2519 = vsel %vm1041, %v817, 0
      %v2522 = vsel %vm1045, %v2516, 0
      %v2525 = vsel %vm1045, %v2517, 0
      %2527 = vmatprep.subr.bf16.mxu0 %v2509
      %2528 = vmatpush1.bf16.msra.mxu0 %v2508
      %2529 = vmatprep.subr.bf16.mxu0 %v2511
      %2530 = vmatpush1.bf16.msra.mxu0 %v2510
      %2531 = vmatprep.subr.bf16.mxu0 %v2513
      %2532 = vmatpush1.bf16.msra.mxu0 %v2512
      %2533 = vmatprep.subr.bf16.mxu0 %v2515
      %2534 = vmatpush1.bf16.msra.mxu0 %v2514
      %2535 = vmatprep.subr.bf16.mxu0 %v2525
      %2536 = vmatpush1.bf16.msra.mxu0 %v2522
      %2537 = vmatprep.subr.bf16.mxu0 0
      %2538 = vmatpush1.bf16.msra.mxu0 0
      %2539 = vmatprep.subr.bf16.mxu0 0
      %2540 = vmatpush1.bf16.msra.mxu0 0
      %2541 = vmatprep.subr.bf16.mxu0 0
      %2542 = vmatpush1.bf16.msra.mxu0 0
      %2543 = vmatprep.subr.bf16.mxu0 0
      %2544 = vmatpush1.bf16.msra.mxu0 0
      %2545 = vmatprep.subr.bf16.mxu0 0
      %2546 = vmatpush1.bf16.msra.mxu0 0
      %2547 = vmatprep.subr.bf16.mxu0 0
      %2548 = vmatpush1.bf16.msra.mxu0 0
      %2549 = vmatprep.subr.bf16.mxu0 0
      %2550 = vmatpush1.bf16.msra.mxu0 0
      %2551 = vmatprep.subr.bf16.mxu0 0
      %2552 = vmatpush1.bf16.msra.mxu0 0
      %2553 = vmatprep.subr.bf16.mxu0 0
      %2554 = vmatpush1.bf16.msra.mxu0 0
      %2555 = vmatprep.subr.bf16.mxu0 0
      %2556 = vmatpush1.bf16.msra.mxu0 0
      %2557 = vmatprep.subr.bf16.mxu0 0
      %2558 = vmatpush1.bf16.msra.mxu0 0
      %2559 = vmatprep.mubr.bf16.mxu0 0
      %2560 = vmatmul.mubr.bf16.gmra.mrb[0].mxu0 %v2519
      %v2561 = vpop.f32.mrb[0].mxu0
      %v2562 = vadd.f32 0.0, %v2561
      %v2563 = vpop.f32.mrb[0].mxu0
      %v2564 = vadd.f32 0.0, %v2563
      %v2565 = vpop.f32.mrb[0].mxu0
      %v2566 = vpop.f32.mrb[0].mxu0
      %2567 = vdwg.mxu0
      %v2568 = vmax.f32 %v2562, 0.0
      %v2569 = vmax.f32 %v2564, 0.0
      %2570 = vst [vmem:[#allocation2 + $0x28] sm:$0xff] %v2568
      %2571 = vst [vmem:[#allocation2 + $0x30] sm:$0xff] %v2569
      %v2572 = vld [vmem:[#allocation2] sm:$0xff]
      %v2573 = vld [vmem:[#allocation2 + $0x8] sm:$0xff]
      %v2574 = vld [vmem:[#allocation2 + $0x10] sm:$0xff]
      %v2575 = vld [vmem:[#allocation2 + $0x20] sm:$0xff]
      %v2576 = vld [vmem:[#allocation2 + $0x28] sm:$0xff]
      %v2577 = vld [vmem:[#allocation2 + $0x30] sm:$0xff]
      %2584 = vrot.lane.b32.xlu0 %v2572, 17
      %v2585 = vpop.permute.xlu0 %2584
      %2586 = vrot.lane.b32.xlu0 %v2573, 17
      %v2587 = vpop.permute.xlu0 %2586
      %2588 = vrot.lane.b32.xlu0 %v2574, 17
      %v2589 = vpop.permute.xlu0 %2588
      %2590 = vrot.lane.b32.xlu0 %v2575, 17
      %v2591 = vpop.permute.xlu0 %2590
      %2592 = vrot.lane.b32.xlu0 %v2576, 17
      %v2593 = vpop.permute.xlu0 %2592
      %2594 = vrot.lane.b32.xlu0 %v2577, 17
      %v2595 = vpop.permute.xlu0 %2594
      %v2596 = vsel %vm853, %v2585, %v2587
      %v2597 = vsel %vm853, %v2587, %v2589
      %v2598 = vsel %vm853, %v2591, %v2593
      %v2599 = vsel %vm853, %v2593, %v2595
      %v2604 = vsel %vm842, %v2596, 0.0
      %v2605 = vsel %vm843, %v2597, 0.0
      %v2606 = vsel %vm842, %v2598, 0.0
      %v2607 = vsel %vm843, %v2599, 0.0
      %2608 = vst [vmem:[#allocation3] sm:$0xff] %v2604
      %2609 = vst [vmem:[#allocation3 + $0x8] sm:$0xff] %v2605
      %2610 = vst [vmem:[#allocation3 + $0x10] sm:$0xff] %v2606
      %2611 = vst [vmem:[#allocation3 + $0x18] sm:$0xff] %v2607
      %v2612 = vld [vmem:[#allocation2] sm:$0xff]
      %v2613 = vld [vmem:[#allocation2 + $0x8] sm:$0xff]
      %v2614 = vld [vmem:[#allocation2 + $0x10] sm:$0xff]
      %v2615 = vld [vmem:[#allocation2 + $0x20] sm:$0xff]
      %v2616 = vld [vmem:[#allocation2 + $0x28] sm:$0xff]
      %v2617 = vld [vmem:[#allocation2 + $0x30] sm:$0xff]
      %2624 = vrot.lane.b32.xlu0 %v2612, 16
      %v2625 = vpop.permute.xlu0 %2624
      %2626 = vrot.lane.b32.xlu0 %v2613, 16
      %v2627 = vpop.permute.xlu0 %2626
      %2628 = vrot.lane.b32.xlu0 %v2614, 16
      %v2629 = vpop.permute.xlu0 %2628
      %2630 = vrot.lane.b32.xlu0 %v2615, 16
      %v2631 = vpop.permute.xlu0 %2630
      %2632 = vrot.lane.b32.xlu0 %v2616, 16
      %v2633 = vpop.permute.xlu0 %2632
      %2634 = vrot.lane.b32.xlu0 %v2617, 16
      %v2635 = vpop.permute.xlu0 %2634
      %v2636 = vsel %vm874, %v2625, %v2627
      %v2637 = vsel %vm874, %v2627, %v2629
      %v2638 = vsel %vm874, %v2631, %v2633
      %v2639 = vsel %vm874, %v2633, %v2635
      %2644 = vst [vmem:[#allocation3 + $0x20] sm:$0xff] %v2636
      %2645 = vst [vmem:[#allocation3 + $0x28] sm:$0xff] %v2637
      %2646 = vst [vmem:[#allocation3 + $0x30] sm:$0xff] %v2638
      %2647 = vst [vmem:[#allocation3 + $0x38] sm:$0xff] %v2639
      %v2648 = vld [vmem:[#allocation2] sm:$0xff]
      %v2649 = vld [vmem:[#allocation2 + $0x8] sm:$0xff]
      %v2650 = vld [vmem:[#allocation2 + $0x10] sm:$0xff]
      %v2651 = vld [vmem:[#allocation2 + $0x20] sm:$0xff]
      %v2652 = vld [vmem:[#allocation2 + $0x28] sm:$0xff]
      %v2653 = vld [vmem:[#allocation2 + $0x30] sm:$0xff]
      %2660 = vrot.lane.b32.xlu0 %v2648, 15
      %v2661 = vpop.permute.xlu0 %2660
      %2662 = vrot.lane.b32.xlu0 %v2649, 15
      %v2663 = vpop.permute.xlu0 %2662
      %2664 = vrot.lane.b32.xlu0 %v2650, 15
      %v2665 = vpop.permute.xlu0 %2664
      %2666 = vrot.lane.b32.xlu0 %v2651, 15
      %v2667 = vpop.permute.xlu0 %2666
      %2668 = vrot.lane.b32.xlu0 %v2652, 15
      %v2669 = vpop.permute.xlu0 %2668
      %2670 = vrot.lane.b32.xlu0 %v2653, 15
      %v2671 = vpop.permute.xlu0 %2670
      %v2672 = vsel %vm897, %v2661, %v2663
      %v2673 = vsel %vm897, %v2663, %v2665
      %v2674 = vsel %vm897, %v2667, %v2669
      %v2675 = vsel %vm897, %v2669, %v2671
      %v2680 = vsel %vm886, %v2672, 0.0
      %v2681 = vsel %vm887, %v2673, 0.0
      %v2682 = vsel %vm886, %v2674, 0.0
      %v2683 = vsel %vm887, %v2675, 0.0
      %2684 = vst [vmem:[#allocation3 + $0x40] sm:$0xff] %v2680
      %2685 = vst [vmem:[#allocation3 + $0x48] sm:$0xff] %v2681
      %2686 = vst [vmem:[#allocation3 + $0x50] sm:$0xff] %v2682
      %2687 = vst [vmem:[#allocation3 + $0x58] sm:$0xff] %v2683
      %v2688 = vld [vmem:[#allocation2] sm:$0xff]
      %v2689 = vld [vmem:[#allocation2 + $0x8] sm:$0xff]
      %v2690 = vld [vmem:[#allocation2 + $0x10] sm:$0xff]
      %v2691 = vld [vmem:[#allocation2 + $0x20] sm:$0xff]
      %v2692 = vld [vmem:[#allocation2 + $0x28] sm:$0xff]
      %v2693 = vld [vmem:[#allocation2 + $0x30] sm:$0xff]
      %2700 = vrot.lane.b32.xlu0 %v2688, 1
      %v2701 = vpop.permute.xlu0 %2700
      %2702 = vrot.lane.b32.xlu0 %v2689, 1
      %v2703 = vpop.permute.xlu0 %2702
      %2704 = vrot.lane.b32.xlu0 %v2690, 1
      %v2705 = vpop.permute.xlu0 %2704
      %2706 = vrot.lane.b32.xlu0 %v2691, 1
      %v2707 = vpop.permute.xlu0 %2706
      %2708 = vrot.lane.b32.xlu0 %v2692, 1
      %v2709 = vpop.permute.xlu0 %2708
      %2710 = vrot.lane.b32.xlu0 %v2693, 1
      %v2711 = vpop.permute.xlu0 %2710
      %v2712 = vsel %vm918, %v2701, %v2703
      %v2713 = vsel %vm918, %v2703, %v2705
      %v2714 = vsel %vm918, %v2707, %v2709
      %v2715 = vsel %vm918, %v2709, %v2711
      %v2720 = vsel %vm842, %v2712, 0.0
      %v2721 = vsel %vm843, %v2713, 0.0
      %v2722 = vsel %vm842, %v2714, 0.0
      %v2723 = vsel %vm843, %v2715, 0.0
      %2724 = vst [vmem:[#allocation3 + $0x60] sm:$0xff] %v2720
      %2725 = vst [vmem:[#allocation3 + $0x68] sm:$0xff] %v2721
      %2726 = vst [vmem:[#allocation3 + $0x70] sm:$0xff] %v2722
      %2727 = vst [vmem:[#allocation3 + $0x78] sm:$0xff] %v2723
      %v2728 = vld [vmem:[#allocation2 + $0x8] sm:$0xff]
      %v2729 = vld [vmem:[#allocation2 + $0x10] sm:$0xff]
      %v2730 = vld [vmem:[#allocation2 + $0x28] sm:$0xff]
      %v2731 = vld [vmem:[#allocation2 + $0x30] sm:$0xff]
      %2732 = vst [vmem:[#allocation3 + $0x80] sm:$0xff] %v2728
      %2733 = vst [vmem:[#allocation3 + $0x88] sm:$0xff] %v2729
      %2734 = vst [vmem:[#allocation3 + $0x90] sm:$0xff] %v2730
      %2735 = vst [vmem:[#allocation3 + $0x98] sm:$0xff] %v2731
      %v2736 = vld [vmem:[#allocation2 + $0x8] sm:$0xff]
      %v2737 = vld [vmem:[#allocation2 + $0x10] sm:$0xff]
      %v2738 = vld [vmem:[#allocation2 + $0x18] sm:$0xff]
      %v2739 = vld [vmem:[#allocation2 + $0x28] sm:$0xff]
      %v2740 = vld [vmem:[#allocation2 + $0x30] sm:$0xff]
      %v2741 = vld [vmem:[#allocation2 + $0x38] sm:$0xff]
      %2748 = vrot.lane.b32.xlu0 %v2736, 127
      %v2749 = vpop.permute.xlu0 %2748
      %2750 = vrot.lane.b32.xlu0 %v2737, 127
      %v2751 = vpop.permute.xlu0 %2750
      %2752 = vrot.lane.b32.xlu0 %v2738, 127
      %v2753 = vpop.permute.xlu0 %2752
      %2754 = vrot.lane.b32.xlu0 %v2739, 127
      %v2755 = vpop.permute.xlu0 %2754
      %2756 = vrot.lane.b32.xlu0 %v2740, 127
      %v2757 = vpop.permute.xlu0 %2756
      %2758 = vrot.lane.b32.xlu0 %v2741, 127
      %v2759 = vpop.permute.xlu0 %2758
      %v2760 = vsel %vm943, %v2749, %v2751
      %v2761 = vsel %vm943, %v2751, %v2753
      %v2762 = vsel %vm943, %v2755, %v2757
      %v2763 = vsel %vm943, %v2757, %v2759
      %v2768 = vsel %vm886, %v2760, 0.0
      %v2769 = vsel %vm887, %v2761, 0.0
      %v2770 = vsel %vm886, %v2762, 0.0
      %v2771 = vsel %vm887, %v2763, 0.0
      %2772 = vst [vmem:[#allocation3 + $0xa0] sm:$0xff] %v2768
      %2773 = vst [vmem:[#allocation3 + $0xa8] sm:$0xff] %v2769
      %2774 = vst [vmem:[#allocation3 + $0xb0] sm:$0xff] %v2770
      %2775 = vst [vmem:[#allocation3 + $0xb8] sm:$0xff] %v2771
      %v2776 = vld [vmem:[#allocation2 + $0x8] sm:$0xff]
      %v2777 = vld [vmem:[#allocation2 + $0x10] sm:$0xff]
      %v2778 = vld [vmem:[#allocation2 + $0x18] sm:$0xff]
      %v2779 = vld [vmem:[#allocation2 + $0x28] sm:$0xff]
      %v2780 = vld [vmem:[#allocation2 + $0x30] sm:$0xff]
      %v2781 = vld [vmem:[#allocation2 + $0x38] sm:$0xff]
      %2788 = vrot.lane.b32.xlu0 %v2776, 113
      %v2789 = vpop.permute.xlu0 %2788
      %2790 = vrot.lane.b32.xlu0 %v2777, 113
      %v2791 = vpop.permute.xlu0 %2790
      %2792 = vrot.lane.b32.xlu0 %v2778, 113
      %v2793 = vpop.permute.xlu0 %2792
      %2794 = vrot.lane.b32.xlu0 %v2779, 113
      %v2795 = vpop.permute.xlu0 %2794
      %2796 = vrot.lane.b32.xlu0 %v2780, 113
      %v2797 = vpop.permute.xlu0 %2796
      %2798 = vrot.lane.b32.xlu0 %v2781, 113
      %v2799 = vpop.permute.xlu0 %2798
      %v2800 = vsel %vm964, %v2789, %v2791
      %v2801 = vsel %vm964, %v2791, %v2793
      %v2802 = vsel %vm964, %v2795, %v2797
      %v2803 = vsel %vm964, %v2797, %v2799
      %v2808 = vsel %vm842, %v2800, 0.0
      %v2809 = vsel %vm843, %v2801, 0.0
      %v2810 = vsel %vm842, %v2802, 0.0
      %v2811 = vsel %vm843, %v2803, 0.0
      %2812 = vst [vmem:[#allocation3 + $0xc0] sm:$0xff] %v2808
      %2813 = vst [vmem:[#allocation3 + $0xc8] sm:$0xff] %v2809
      %2814 = vst [vmem:[#allocation3 + $0xd0] sm:$0xff] %v2810
      %2815 = vst [vmem:[#allocation3 + $0xd8] sm:$0xff] %v2811
      %v2816 = vld [vmem:[#allocation2 + $0x8] sm:$0xff]
      %v2817 = vld [vmem:[#allocation2 + $0x10] sm:$0xff]
      %v2818 = vld [vmem:[#allocation2 + $0x18] sm:$0xff]
      %v2819 = vld [vmem:[#allocation2 + $0x28] sm:$0xff]
      %v2820 = vld [vmem:[#allocation2 + $0x30] sm:$0xff]
      %v2821 = vld [vmem:[#allocation2 + $0x38] sm:$0xff]
      %2828 = vrot.lane.b32.xlu0 %v2816, 112
      %v2829 = vpop.permute.xlu0 %2828
      %2830 = vrot.lane.b32.xlu0 %v2817, 112
      %v2831 = vpop.permute.xlu0 %2830
      %2832 = vrot.lane.b32.xlu0 %v2818, 112
      %v2833 = vpop.permute.xlu0 %2832
      %2834 = vrot.lane.b32.xlu0 %v2819, 112
      %v2835 = vpop.permute.xlu0 %2834
      %2836 = vrot.lane.b32.xlu0 %v2820, 112
      %v2837 = vpop.permute.xlu0 %2836
      %2838 = vrot.lane.b32.xlu0 %v2821, 112
      %v2839 = vpop.permute.xlu0 %2838
      %v2840 = vsel %vm985, %v2829, %v2831
      %v2841 = vsel %vm985, %v2831, %v2833
      %v2842 = vsel %vm985, %v2835, %v2837
      %v2843 = vsel %vm985, %v2837, %v2839
      %2848 = vst [vmem:[#allocation3 + $0xe0] sm:$0xff] %v2840
      %2849 = vst [vmem:[#allocation3 + $0xe8] sm:$0xff] %v2841
      %2850 = vst [vmem:[#allocation3 + $0xf0] sm:$0xff] %v2842
      %2851 = vst [vmem:[#allocation3 + $0xf8] sm:$0xff] %v2843
      %v2852 = vld [vmem:[#allocation2 + $0x8] sm:$0xff]
      %v2853 = vld [vmem:[#allocation2 + $0x10] sm:$0xff]
      %v2854 = vld [vmem:[#allocation2 + $0x18] sm:$0xff]
      %v2855 = vld [vmem:[#allocation2 + $0x28] sm:$0xff]
      %v2856 = vld [vmem:[#allocation2 + $0x30] sm:$0xff]
      %v2857 = vld [vmem:[#allocation2 + $0x38] sm:$0xff]
      %2864 = vrot.lane.b32.xlu0 %v2852, 111
      %v2865 = vpop.permute.xlu0 %2864
      %2866 = vrot.lane.b32.xlu0 %v2853, 111
      %v2867 = vpop.permute.xlu0 %2866
      %2868 = vrot.lane.b32.xlu0 %v2854, 111
      %v2869 = vpop.permute.xlu0 %2868
      %2870 = vrot.lane.b32.xlu0 %v2855, 111
      %v2871 = vpop.permute.xlu0 %2870
      %2872 = vrot.lane.b32.xlu0 %v2856, 111
      %v2873 = vpop.permute.xlu0 %2872
      %2874 = vrot.lane.b32.xlu0 %v2857, 111
      %v2875 = vpop.permute.xlu0 %2874
      %v2876 = vsel %vm1004, %v2865, %v2867
      %v2877 = vsel %vm1004, %v2867, %v2869
      %v2878 = vsel %vm1004, %v2871, %v2873
      %v2879 = vsel %vm1004, %v2873, %v2875
      %v2884 = vsel %vm886, %v2876, 0.0
      %v2885 = vsel %vm887, %v2877, 0.0
      %v2886 = vsel %vm886, %v2878, 0.0
      %v2887 = vsel %vm887, %v2879, 0.0
      %2888 = vst [vmem:[#allocation3 + $0x100] sm:$0xff] %v2884
      %2889 = vst [vmem:[#allocation3 + $0x108] sm:$0xff] %v2885
      %2890 = vst [vmem:[#allocation3 + $0x110] sm:$0xff] %v2886
      %2891 = vst [vmem:[#allocation3 + $0x118] sm:$0xff] %v2887
      %v2892 = vld [vmem:[#allocation3] sm:$0xff]
      %v2893 = vld [vmem:[#allocation3 + $0x8] sm:$0xff]
      %v2894 = vld [vmem:[#allocation3 + $0x10] sm:$0xff]
      %v2895 = vld [vmem:[#allocation3 + $0x18] sm:$0xff]
      %v2896 = vld [vmem:[#allocation3 + $0x20] sm:$0xff]
      %v2897 = vld [vmem:[#allocation3 + $0x28] sm:$0xff]
      %v2898 = vld [vmem:[#allocation3 + $0x30] sm:$0xff]
      %v2899 = vld [vmem:[#allocation3 + $0x38] sm:$0xff]
      %v2900 = vld [vmem:[#allocation3 + $0x40] sm:$0xff]
      %v2901 = vld [vmem:[#allocation3 + $0x48] sm:$0xff]
      %v2902 = vld [vmem:[#allocation3 + $0x50] sm:$0xff]
      %v2903 = vld [vmem:[#allocation3 + $0x58] sm:$0xff]
      %v2904 = vld [vmem:[#allocation3 + $0x60] sm:$0xff]
      %v2905 = vld [vmem:[#allocation3 + $0x68] sm:$0xff]
      %v2906 = vld [vmem:[#allocation3 + $0x70] sm:$0xff]
      %v2907 = vld [vmem:[#allocation3 + $0x78] sm:$0xff]
      %v2908 = vld [vmem:[#allocation3 + $0x80] sm:$0xff]
      %v2909 = vld [vmem:[#allocation3 + $0x88] sm:$0xff]
      %v2910 = vld [vmem:[#allocation3 + $0x90] sm:$0xff]
      %v2911 = vld [vmem:[#allocation3 + $0x98] sm:$0xff]
      %v2912 = vld [vmem:[#allocation3 + $0xa0] sm:$0xff]
      %v2913 = vld [vmem:[#allocation3 + $0xa8] sm:$0xff]
      %v2914 = vld [vmem:[#allocation3 + $0xb0] sm:$0xff]
      %v2915 = vld [vmem:[#allocation3 + $0xb8] sm:$0xff]
      %v2916 = vld [vmem:[#allocation3 + $0xc0] sm:$0xff]
      %v2917 = vld [vmem:[#allocation3 + $0xc8] sm:$0xff]
      %v2918 = vld [vmem:[#allocation3 + $0xd0] sm:$0xff]
      %v2919 = vld [vmem:[#allocation3 + $0xd8] sm:$0xff]
      %v2920 = vld [vmem:[#allocation3 + $0xe0] sm:$0xff]
      %v2921 = vld [vmem:[#allocation3 + $0xe8] sm:$0xff]
      %v2922 = vld [vmem:[#allocation3 + $0xf0] sm:$0xff]
      %v2923 = vld [vmem:[#allocation3 + $0xf8] sm:$0xff]
      %v2924 = vld [vmem:[#allocation3 + $0x100] sm:$0xff]
      %v2925 = vld [vmem:[#allocation3 + $0x108] sm:$0xff]
      %v2926 = vld [vmem:[#allocation3 + $0x110] sm:$0xff]
      %v2927 = vld [vmem:[#allocation3 + $0x118] sm:$0xff]
      %v2928 = vpack.c.bf16 %v2894, %v2892
      %v2929 = vpack.c.bf16 %v2895, %v2893
      %v2930 = vpack.c.bf16 %v2898, %v2896
      %v2931 = vpack.c.bf16 %v2899, %v2897
      %v2932 = vpack.c.bf16 %v2902, %v2900
      %v2933 = vpack.c.bf16 %v2903, %v2901
      %v2934 = vpack.c.bf16 %v2906, %v2904
      %v2935 = vpack.c.bf16 %v2907, %v2905
      %v2936 = vpack.c.bf16 %v2910, %v2908
      %v2937 = vpack.c.bf16 %v2911, %v2909
      %v2938 = vpack.c.bf16 %v2914, %v2912
      %v2939 = vpack.c.bf16 %v2915, %v2913
      %v2940 = vpack.c.bf16 %v2918, %v2916
      %v2941 = vpack.c.bf16 %v2919, %v2917
      %v2942 = vpack.c.bf16 %v2922, %v2920
      %v2943 = vpack.c.bf16 %v2923, %v2921
      %v2944 = vpack.c.bf16 %v2926, %v2924
      %v2945 = vpack.c.bf16 %v2927, %v2925
      %v2947 = vunpack.c.l.b16 %v818
      %v2948 = vunpack.c.h.b16 %v818
      %v2949 = vpack.c.b16 %v2947, %v2947
      %v2950 = vpack.c.b16 %v2948, %v2948
      %v2953 = vsel %vm874, %v2950, 0
      %2955 = vmatprep.subr.bf16.mxu0 %v2929
      %2956 = vmatpush1.bf16.msra.mxu0 %v2928
      %2957 = vmatprep.subr.bf16.mxu0 %v2931
      %2958 = vmatpush1.bf16.msra.mxu0 %v2930
      %2959 = vmatprep.subr.bf16.mxu0 %v2933
      %2960 = vmatpush1.bf16.msra.mxu0 %v2932
      %2961 = vmatprep.subr.bf16.mxu0 %v2935
      %2962 = vmatpush1.bf16.msra.mxu0 %v2934
      %2963 = vmatprep.subr.bf16.mxu0 %v2937
      %2964 = vmatpush1.bf16.msra.mxu0 %v2936
      %2965 = vmatprep.subr.bf16.mxu0 %v2939
      %2966 = vmatpush1.bf16.msra.mxu0 %v2938
      %2967 = vmatprep.subr.bf16.mxu0 %v2941
      %2968 = vmatpush1.bf16.msra.mxu0 %v2940
      %2969 = vmatprep.subr.bf16.mxu0 %v2943
      %2970 = vmatpush1.bf16.msra.mxu0 %v2942
      %2971 = vmatprep.subr.bf16.mxu0 %v2945
      %2972 = vmatpush1.bf16.msra.mxu0 %v2944
      %2973 = vmatprep.subr.bf16.mxu0 0
      %2974 = vmatpush1.bf16.msra.mxu0 0
      %2975 = vmatprep.subr.bf16.mxu0 0
      %2976 = vmatpush1.bf16.msra.mxu0 0
      %2977 = vmatprep.subr.bf16.mxu0 0
      %2978 = vmatpush1.bf16.msra.mxu0 0
      %2979 = vmatprep.subr.bf16.mxu0 0
      %2980 = vmatpush1.bf16.msra.mxu0 0
      %2981 = vmatprep.subr.bf16.mxu0 0
      %2982 = vmatpush1.bf16.msra.mxu0 0
      %2983 = vmatprep.subr.bf16.mxu0 0
      %2984 = vmatpush1.bf16.msra.mxu0 0
      %2985 = vmatprep.subr.bf16.mxu0 0
      %2986 = vmatpush1.bf16.msra.mxu0 0
      %2987 = vmatprep.mubr.bf16.mxu0 %v2953
      %2988 = vmatmul.mubr.bf16.gmra.mrb[0].mxu0 %v2949
      %v2989 = vpop.f32.mrb[0].mxu0
      %v2990 = vadd.f32 0.0, %v2989
      %v2991 = vpop.f32.mrb[0].mxu0
      %v2992 = vadd.f32 0.0, %v2991
      %v2993 = vpop.f32.mrb[0].mxu0
      %v2994 = vpop.f32.mrb[0].mxu0
      %2995 = vdwg.mxu0
      %v2996 = vmax.f32 %v2990, 0.0
      %v2997 = vmax.f32 %v2992, 0.0
      %2998 = vst [vmem:[#allocation2 + $0x48] sm:$0xff] %v2996
      %2999 = vst [vmem:[#allocation2 + $0x50] sm:$0xff] %v2997
      %v3000 = vld [vmem:[#allocation2 + $0x8] sm:$0xff]
      %v3001 = vld [vmem:[#allocation2 + $0x10] sm:$0xff]
      %v3002 = vld [vmem:[#allocation2 + $0x28] sm:$0xff]
      %v3003 = vld [vmem:[#allocation2 + $0x30] sm:$0xff]
      %v3004 = vld [vmem:[#allocation2 + $0x48] sm:$0xff]
      %v3005 = vld [vmem:[#allocation2 + $0x50] sm:$0xff]
      %v3006 = vpack.c.bf16 %v3002, %v3000
      %v3007 = vpack.c.bf16 %v3003, %v3001
      %v3008 = vpack.c.bf16 %v3004, %v3004
      %v3009 = vpack.c.bf16 %v3005, %v3005
      %3011 = vset.pattern.permute.xlu0 0
      %3012 = vperm.xlu0 %3011, %v820
      %v3013 = vpop.permute.xlu0 %3012
      %v3016 = vsel %vm1540, %v819, 0
      %v3019 = vsel %vm1045, %v3008, 0
      %v3022 = vsel %vm1045, %v3009, 0
      %3024 = vmatprep.subr.bf16.mxu0 %v3007
      %3025 = vmatpush1.bf16.msra.mxu0 %v3006
      %3026 = vmatprep.subr.bf16.mxu0 %v3022
      %3027 = vmatpush1.bf16.msra.mxu0 %v3019
      %3028 = vmatprep.subr.bf16.mxu0 0
      %3029 = vmatpush1.bf16.msra.mxu0 0
      %3030 = vmatprep.subr.bf16.mxu0 0
      %3031 = vmatpush1.bf16.msra.mxu0 0
      %3032 = vmatprep.subr.bf16.mxu0 0
      %3033 = vmatpush1.bf16.msra.mxu0 0
      %3034 = vmatprep.subr.bf16.mxu0 0
      %3035 = vmatpush1.bf16.msra.mxu0 0
      %3036 = vmatprep.subr.bf16.mxu0 0
      %3037 = vmatpush1.bf16.msra.mxu0 0
      %3038 = vmatprep.subr.bf16.mxu0 0
      %3039 = vmatpush1.bf16.msra.mxu0 0
      %3040 = vmatprep.subr.bf16.mxu0 0
      %3041 = vmatpush1.bf16.msra.mxu0 0
      %3042 = vmatprep.subr.bf16.mxu0 0
      %3043 = vmatpush1.bf16.msra.mxu0 0
      %3044 = vmatprep.subr.bf16.mxu0 0
      %3045 = vmatpush1.bf16.msra.mxu0 0
      %3046 = vmatprep.subr.bf16.mxu0 0
      %3047 = vmatpush1.bf16.msra.mxu0 0
      %3048 = vmatprep.subr.bf16.mxu0 0
      %3049 = vmatpush1.bf16.msra.mxu0 0
      %3050 = vmatprep.subr.bf16.mxu0 0
      %3051 = vmatpush1.bf16.msra.mxu0 0
      %3052 = vmatprep.subr.bf16.mxu0 0
      %3053 = vmatpush1.bf16.msra.mxu0 0
      %3054 = vmatprep.subr.bf16.mxu0 0
      %3055 = vmatpush1.bf16.msra.mxu0 0
      %3056 = vmatprep.mubr.bf16.mxu0 0
      %3057 = vmatmul.mubr.bf16.gmra.mrb[0].mxu0 %v3016
      %v3058 = vpop.f32.mrb[0].mxu0
      %v3059 = vadd.f32 %v3013, %v3058
      %v3060 = vpop.f32.mrb[0].mxu0
      %v3061 = vadd.f32 %v3013, %v3060
      %v3062 = vpop.f32.mrb[0].mxu0
      %v3063 = vpop.f32.mrb[0].mxu0
      %3064 = vdwg.mxu0
      %3065 = vst [vmem:[#allocation2 + $0x8] sm:$0xff] %v3059
      %3066 = vst [vmem:[#allocation2 + $0x10] sm:$0xff] %v3061
      %v3067 = vld [vmem:[#allocation2] sm:$0xff]
      %v3068 = vld [vmem:[#allocation2 + $0x8] sm:$0xff]
      %v3069 = vld [vmem:[#allocation2 + $0x10] sm:$0xff]
      %3073 = vrot.lane.b32.xlu0 %v3067, 17
      %v3074 = vpop.permute.xlu0 %3073
      %3075 = vrot.lane.b32.xlu0 %v3068, 17
      %v3076 = vpop.permute.xlu0 %3075
      %3077 = vrot.lane.b32.xlu0 %v3069, 17
      %v3078 = vpop.permute.xlu0 %3077
      %v3079 = vsel %vm853, %v3074, %v3076
      %v3080 = vsel %vm853, %v3076, %v3078
      %v3083 = vsel %vm842, %v3079, 0.0
      %v3084 = vsel %vm843, %v3080, 0.0
      %3085 = vst [vmem:[#allocation3] sm:$0xff] %v3083
      %3086 = vst [vmem:[#allocation3 + $0x8] sm:$0xff] %v3084
      %v3087 = vld [vmem:[#allocation2] sm:$0xff]
      %v3088 = vld [vmem:[#allocation2 + $0x8] sm:$0xff]
      %v3089 = vld [vmem:[#allocation2 + $0x10] sm:$0xff]
      %3093 = vrot.lane.b32.xlu0 %v3087, 16
      %v3094 = vpop.permute.xlu0 %3093
      %3095 = vrot.lane.b32.xlu0 %v3088, 16
      %v3096 = vpop.permute.xlu0 %3095
      %3097 = vrot.lane.b32.xlu0 %v3089, 16
      %v3098 = vpop.permute.xlu0 %3097
      %v3099 = vsel %vm874, %v3094, %v3096
      %v3100 = vsel %vm874, %v3096, %v3098
      %3103 = vst [vmem:[#allocation3 + $0x10] sm:$0xff] %v3099
      %3104 = vst [vmem:[#allocation3 + $0x18] sm:$0xff] %v3100
      %v3105 = vld [vmem:[#allocation2] sm:$0xff]
      %v3106 = vld [vmem:[#allocation2 + $0x8] sm:$0xff]
      %v3107 = vld [vmem:[#allocation2 + $0x10] sm:$0xff]
      %3111 = vrot.lane.b32.xlu0 %v3105, 15
      %v3112 = vpop.permute.xlu0 %3111
      %3113 = vrot.lane.b32.xlu0 %v3106, 15
      %v3114 = vpop.permute.xlu0 %3113
      %3115 = vrot.lane.b32.xlu0 %v3107, 15
      %v3116 = vpop.permute.xlu0 %3115
      %v3117 = vsel %vm897, %v3112, %v3114
      %v3118 = vsel %vm897, %v3114, %v3116
      %v3121 = vsel %vm886, %v3117, 0.0
      %v3122 = vsel %vm887, %v3118, 0.0
      %3123 = vst [vmem:[#allocation3 + $0x20] sm:$0xff] %v3121
      %3124 = vst [vmem:[#allocation3 + $0x28] sm:$0xff] %v3122
      %v3125 = vld [vmem:[#allocation2] sm:$0xff]
      %v3126 = vld [vmem:[#allocation2 + $0x8] sm:$0xff]
      %v3127 = vld [vmem:[#allocation2 + $0x10] sm:$0xff]
      %3131 = vrot.lane.b32.xlu0 %v3125, 1
      %v3132 = vpop.permute.xlu0 %3131
      %3133 = vrot.lane.b32.xlu0 %v3126, 1
      %v3134 = vpop.permute.xlu0 %3133
      %3135 = vrot.lane.b32.xlu0 %v3127, 1
      %v3136 = vpop.permute.xlu0 %3135
      %v3137 = vsel %vm918, %v3132, %v3134
      %v3138 = vsel %vm918, %v3134, %v3136
      %v3141 = vsel %vm842, %v3137, 0.0
      %v3142 = vsel %vm843, %v3138, 0.0
      %3143 = vst [vmem:[#allocation3 + $0x30] sm:$0xff] %v3141
      %3144 = vst [vmem:[#allocation3 + $0x38] sm:$0xff] %v3142
      %v3145 = vld [vmem:[#allocation2 + $0x8] sm:$0xff]
      %v3146 = vld [vmem:[#allocation2 + $0x10] sm:$0xff]
      %3147 = vst [vmem:[#allocation3 + $0x40] sm:$0xff] %v3145
      %3148 = vst [vmem:[#allocation3 + $0x48] sm:$0xff] %v3146
      %v3149 = vld [vmem:[#allocation2 + $0x8] sm:$0xff]
      %v3150 = vld [vmem:[#allocation2 + $0x10] sm:$0xff]
      %v3151 = vld [vmem:[#allocation2 + $0x18] sm:$0xff]
      %3155 = vrot.lane.b32.xlu0 %v3149, 127
      %v3156 = vpop.permute.xlu0 %3155
      %3157 = vrot.lane.b32.xlu0 %v3150, 127
      %v3158 = vpop.permute.xlu0 %3157
      %3159 = vrot.lane.b32.xlu0 %v3151, 127
      %v3160 = vpop.permute.xlu0 %3159
      %v3161 = vsel %vm943, %v3156, %v3158
      %v3162 = vsel %vm943, %v3158, %v3160
      %v3165 = vsel %vm886, %v3161, 0.0
      %v3166 = vsel %vm887, %v3162, 0.0
      %3167 = vst [vmem:[#allocation3 + $0x50] sm:$0xff] %v3165
      %3168 = vst [vmem:[#allocation3 + $0x58] sm:$0xff] %v3166
      %v3169 = vld [vmem:[#allocation2 + $0x8] sm:$0xff]
      %v3170 = vld [vmem:[#allocation2 + $0x10] sm:$0xff]
      %v3171 = vld [vmem:[#allocation2 + $0x18] sm:$0xff]
      %3175 = vrot.lane.b32.xlu0 %v3169, 113
      %v3176 = vpop.permute.xlu0 %3175
      %3177 = vrot.lane.b32.xlu0 %v3170, 113
      %v3178 = vpop.permute.xlu0 %3177
      %3179 = vrot.lane.b32.xlu0 %v3171, 113
      %v3180 = vpop.permute.xlu0 %3179
      %v3181 = vsel %vm964, %v3176, %v3178
      %v3182 = vsel %vm964, %v3178, %v3180
      %v3185 = vsel %vm842, %v3181, 0.0
      %v3186 = vsel %vm843, %v3182, 0.0
      %3187 = vst [vmem:[#allocation3 + $0x60] sm:$0xff] %v3185
      %3188 = vst [vmem:[#allocation3 + $0x68] sm:$0xff] %v3186
      %v3189 = vld [vmem:[#allocation2 + $0x8] sm:$0xff]
      %v3190 = vld [vmem:[#allocation2 + $0x10] sm:$0xff]
      %v3191 = vld [vmem:[#allocation2 + $0x18] sm:$0xff]
      %3195 = vrot.lane.b32.xlu0 %v3189, 112
      %v3196 = vpop.permute.xlu0 %3195
      %3197 = vrot.lane.b32.xlu0 %v3190, 112
      %v3198 = vpop.permute.xlu0 %3197
      %3199 = vrot.lane.b32.xlu0 %v3191, 112
      %v3200 = vpop.permute.xlu0 %3199
      %v3201 = vsel %vm985, %v3196, %v3198
      %v3202 = vsel %vm985, %v3198, %v3200
      %3205 = vst [vmem:[#allocation3 + $0x70] sm:$0xff] %v3201
      %3206 = vst [vmem:[#allocation3 + $0x78] sm:$0xff] %v3202
      %v3207 = vld [vmem:[#allocation2 + $0x8] sm:$0xff]
      %v3208 = vld [vmem:[#allocation2 + $0x10] sm:$0xff]
      %v3209 = vld [vmem:[#allocation2 + $0x18] sm:$0xff]
      %3213 = vrot.lane.b32.xlu0 %v3207, 111
      %v3214 = vpop.permute.xlu0 %3213
      %3215 = vrot.lane.b32.xlu0 %v3208, 111
      %v3216 = vpop.permute.xlu0 %3215
      %3217 = vrot.lane.b32.xlu0 %v3209, 111
      %v3218 = vpop.permute.xlu0 %3217
      %v3219 = vsel %vm1004, %v3214, %v3216
      %v3220 = vsel %vm1004, %v3216, %v3218
      %v3223 = vsel %vm886, %v3219, 0.0
      %v3224 = vsel %vm887, %v3220, 0.0
      %3225 = vst [vmem:[#allocation3 + $0x80] sm:$0xff] %v3223
      %3226 = vst [vmem:[#allocation3 + $0x88] sm:$0xff] %v3224
      %v3227 = vld [vmem:[#allocation3] sm:$0xff]
      %v3228 = vld [vmem:[#allocation3 + $0x8] sm:$0xff]
      %v3229 = vld [vmem:[#allocation3 + $0x10] sm:$0xff]
      %v3230 = vld [vmem:[#allocation3 + $0x18] sm:$0xff]
      %v3231 = vld [vmem:[#allocation3 + $0x20] sm:$0xff]
      %v3232 = vld [vmem:[#allocation3 + $0x28] sm:$0xff]
      %v3233 = vld [vmem:[#allocation3 + $0x30] sm:$0xff]
      %v3234 = vld [vmem:[#allocation3 + $0x38] sm:$0xff]
      %v3235 = vld [vmem:[#allocation3 + $0x40] sm:$0xff]
      %v3236 = vld [vmem:[#allocation3 + $0x48] sm:$0xff]
      %v3237 = vld [vmem:[#allocation3 + $0x50] sm:$0xff]
      %v3238 = vld [vmem:[#allocation3 + $0x58] sm:$0xff]
      %v3239 = vld [vmem:[#allocation3 + $0x60] sm:$0xff]
      %v3240 = vld [vmem:[#allocation3 + $0x68] sm:$0xff]
      %v3241 = vld [vmem:[#allocation3 + $0x70] sm:$0xff]
      %v3242 = vld [vmem:[#allocation3 + $0x78] sm:$0xff]
      %v3243 = vld [vmem:[#allocation3 + $0x80] sm:$0xff]
      %v3244 = vld [vmem:[#allocation3 + $0x88] sm:$0xff]
      %v3245 = vpack.c.bf16 %v3229, %v3227
      %v3246 = vpack.c.bf16 %v3230, %v3228
      %v3247 = vpack.c.bf16 %v3233, %v3231
      %v3248 = vpack.c.bf16 %v3234, %v3232
      %v3249 = vpack.c.bf16 %v3237, %v3235
      %v3250 = vpack.c.bf16 %v3238, %v3236
      %v3251 = vpack.c.bf16 %v3241, %v3239
      %v3252 = vpack.c.bf16 %v3242, %v3240
      %v3253 = vpack.c.bf16 %v3243, %v3243
      %v3254 = vpack.c.bf16 %v3244, %v3244
      %v3256 = vsel %vm1041, %v821, 0
      %v3259 = vsel %vm1045, %v3253, 0
      %v3262 = vsel %vm1045, %v3254, 0
      %3264 = vmatprep.subr.bf16.mxu0 %v3246
      %3265 = vmatpush1.bf16.msra.mxu0 %v3245
      %3266 = vmatprep.subr.bf16.mxu0 %v3248
      %3267 = vmatpush1.bf16.msra.mxu0 %v3247
      %3268 = vmatprep.subr.bf16.mxu0 %v3250
      %3269 = vmatpush1.bf16.msra.mxu0 %v3249
      %3270 = vmatprep.subr.bf16.mxu0 %v3252
      %3271 = vmatpush1.bf16.msra.mxu0 %v3251
      %3272 = vmatprep.subr.bf16.mxu0 %v3262
      %3273 = vmatpush1.bf16.msra.mxu0 %v3259
      %3274 = vmatprep.subr.bf16.mxu0 0
      %3275 = vmatpush1.bf16.msra.mxu0 0
      %3276 = vmatprep.subr.bf16.mxu0 0
      %3277 = vmatpush1.bf16.msra.mxu0 0
      %3278 = vmatprep.subr.bf16.mxu0 0
      %3279 = vmatpush1.bf16.msra.mxu0 0
      %3280 = vmatprep.subr.bf16.mxu0 0
      %3281 = vmatpush1.bf16.msra.mxu0 0
      %3282 = vmatprep.subr.bf16.mxu0 0
      %3283 = vmatpush1.bf16.msra.mxu0 0
      %3284 = vmatprep.subr.bf16.mxu0 0
      %3285 = vmatpush1.bf16.msra.mxu0 0
      %3286 = vmatprep.subr.bf16.mxu0 0
      %3287 = vmatpush1.bf16.msra.mxu0 0
      %3288 = vmatprep.subr.bf16.mxu0 0
      %3289 = vmatpush1.bf16.msra.mxu0 0
      %3290 = vmatprep.subr.bf16.mxu0 0
      %3291 = vmatpush1.bf16.msra.mxu0 0
      %3292 = vmatprep.subr.bf16.mxu0 0
      %3293 = vmatpush1.bf16.msra.mxu0 0
      %3294 = vmatprep.subr.bf16.mxu0 0
      %3295 = vmatpush1.bf16.msra.mxu0 0
      %3296 = vmatprep.mubr.bf16.mxu0 0
      %3297 = vmatmul.mubr.bf16.gmra.mrb[0].mxu0 %v3256
      %v3298 = vpop.f32.mrb[0].mxu0
      %v3299 = vadd.f32 0.0, %v3298
      %v3300 = vpop.f32.mrb[0].mxu0
      %v3301 = vadd.f32 0.0, %v3300
      %v3302 = vpop.f32.mrb[0].mxu0
      %v3303 = vpop.f32.mrb[0].mxu0
      %3304 = vdwg.mxu0
      %v3305 = vmax.f32 %v3299, 0.0
      %v3306 = vmax.f32 %v3301, 0.0
      %3307 = vst [vmem:[#allocation2 + $0x28] sm:$0xff] %v3305
      %3308 = vst [vmem:[#allocation2 + $0x30] sm:$0xff] %v3306
      %v3309 = vld [vmem:[#allocation2] sm:$0xff]
      %v3310 = vld [vmem:[#allocation2 + $0x8] sm:$0xff]
      %v3311 = vld [vmem:[#allocation2 + $0x10] sm:$0xff]
      %v3312 = vld [vmem:[#allocation2 + $0x20] sm:$0xff]
      %v3313 = vld [vmem:[#allocation2 + $0x28] sm:$0xff]
      %v3314 = vld [vmem:[#allocation2 + $0x30] sm:$0xff]
      %3321 = vrot.lane.b32.xlu0 %v3309, 17
      %v3322 = vpop.permute.xlu0 %3321
      %3323 = vrot.lane.b32.xlu0 %v3310, 17
      %v3324 = vpop.permute.xlu0 %3323
      %3325 = vrot.lane.b32.xlu0 %v3311, 17
      %v3326 = vpop.permute.xlu0 %3325
      %3327 = vrot.lane.b32.xlu0 %v3312, 17
      %v3328 = vpop.permute.xlu0 %3327
      %3329 = vrot.lane.b32.xlu0 %v3313, 17
      %v3330 = vpop.permute.xlu0 %3329
      %3331 = vrot.lane.b32.xlu0 %v3314, 17
      %v3332 = vpop.permute.xlu0 %3331
      %v3333 = vsel %vm853, %v3322, %v3324
      %v3334 = vsel %vm853, %v3324, %v3326
      %v3335 = vsel %vm853, %v3328, %v3330
      %v3336 = vsel %vm853, %v3330, %v3332
      %v3341 = vsel %vm842, %v3333, 0.0
      %v3342 = vsel %vm843, %v3334, 0.0
      %v3343 = vsel %vm842, %v3335, 0.0
      %v3344 = vsel %vm843, %v3336, 0.0
      %3345 = vst [vmem:[#allocation3] sm:$0xff] %v3341
      %3346 = vst [vmem:[#allocation3 + $0x8] sm:$0xff] %v3342
      %3347 = vst [vmem:[#allocation3 + $0x10] sm:$0xff] %v3343
      %3348 = vst [vmem:[#allocation3 + $0x18] sm:$0xff] %v3344
      %v3349 = vld [vmem:[#allocation2] sm:$0xff]
      %v3350 = vld [vmem:[#allocation2 + $0x8] sm:$0xff]
      %v3351 = vld [vmem:[#allocation2 + $0x10] sm:$0xff]
      %v3352 = vld [vmem:[#allocation2 + $0x20] sm:$0xff]
      %v3353 = vld [vmem:[#allocation2 + $0x28] sm:$0xff]
      %v3354 = vld [vmem:[#allocation2 + $0x30] sm:$0xff]
      %3361 = vrot.lane.b32.xlu0 %v3349, 16
      %v3362 = vpop.permute.xlu0 %3361
      %3363 = vrot.lane.b32.xlu0 %v3350, 16
      %v3364 = vpop.permute.xlu0 %3363
      %3365 = vrot.lane.b32.xlu0 %v3351, 16
      %v3366 = vpop.permute.xlu0 %3365
      %3367 = vrot.lane.b32.xlu0 %v3352, 16
      %v3368 = vpop.permute.xlu0 %3367
      %3369 = vrot.lane.b32.xlu0 %v3353, 16
      %v3370 = vpop.permute.xlu0 %3369
      %3371 = vrot.lane.b32.xlu0 %v3354, 16
      %v3372 = vpop.permute.xlu0 %3371
      %v3373 = vsel %vm874, %v3362, %v3364
      %v3374 = vsel %vm874, %v3364, %v3366
      %v3375 = vsel %vm874, %v3368, %v3370
      %v3376 = vsel %vm874, %v3370, %v3372
      %3381 = vst [vmem:[#allocation3 + $0x20] sm:$0xff] %v3373
      %3382 = vst [vmem:[#allocation3 + $0x28] sm:$0xff] %v3374
      %3383 = vst [vmem:[#allocation3 + $0x30] sm:$0xff] %v3375
      %3384 = vst [vmem:[#allocation3 + $0x38] sm:$0xff] %v3376
      %v3385 = vld [vmem:[#allocation2] sm:$0xff]
      %v3386 = vld [vmem:[#allocation2 + $0x8] sm:$0xff]
      %v3387 = vld [vmem:[#allocation2 + $0x10] sm:$0xff]
      %v3388 = vld [vmem:[#allocation2 + $0x20] sm:$0xff]
      %v3389 = vld [vmem:[#allocation2 + $0x28] sm:$0xff]
      %v3390 = vld [vmem:[#allocation2 + $0x30] sm:$0xff]
      %3397 = vrot.lane.b32.xlu0 %v3385, 15
      %v3398 = vpop.permute.xlu0 %3397
      %3399 = vrot.lane.b32.xlu0 %v3386, 15
      %v3400 = vpop.permute.xlu0 %3399
      %3401 = vrot.lane.b32.xlu0 %v3387, 15
      %v3402 = vpop.permute.xlu0 %3401
      %3403 = vrot.lane.b32.xlu0 %v3388, 15
      %v3404 = vpop.permute.xlu0 %3403
      %3405 = vrot.lane.b32.xlu0 %v3389, 15
      %v3406 = vpop.permute.xlu0 %3405
      %3407 = vrot.lane.b32.xlu0 %v3390, 15
      %v3408 = vpop.permute.xlu0 %3407
      %v3409 = vsel %vm897, %v3398, %v3400
      %v3410 = vsel %vm897, %v3400, %v3402
      %v3411 = vsel %vm897, %v3404, %v3406
      %v3412 = vsel %vm897, %v3406, %v3408
      %v3417 = vsel %vm886, %v3409, 0.0
      %v3418 = vsel %vm887, %v3410, 0.0
      %v3419 = vsel %vm886, %v3411, 0.0
      %v3420 = vsel %vm887, %v3412, 0.0
      %3421 = vst [vmem:[#allocation3 + $0x40] sm:$0xff] %v3417
      %3422 = vst [vmem:[#allocation3 + $0x48] sm:$0xff] %v3418
      %3423 = vst [vmem:[#allocation3 + $0x50] sm:$0xff] %v3419
      %3424 = vst [vmem:[#allocation3 + $0x58] sm:$0xff] %v3420
      %v3425 = vld [vmem:[#allocation2] sm:$0xff]
      %v3426 = vld [vmem:[#allocation2 + $0x8] sm:$0xff]
      %v3427 = vld [vmem:[#allocation2 + $0x10] sm:$0xff]
      %v3428 = vld [vmem:[#allocation2 + $0x20] sm:$0xff]
      %v3429 = vld [vmem:[#allocation2 + $0x28] sm:$0xff]
      %v3430 = vld [vmem:[#allocation2 + $0x30] sm:$0xff]
      %3437 = vrot.lane.b32.xlu0 %v3425, 1
      %v3438 = vpop.permute.xlu0 %3437
      %3439 = vrot.lane.b32.xlu0 %v3426, 1
      %v3440 = vpop.permute.xlu0 %3439
      %3441 = vrot.lane.b32.xlu0 %v3427, 1
      %v3442 = vpop.permute.xlu0 %3441
      %3443 = vrot.lane.b32.xlu0 %v3428, 1
      %v3444 = vpop.permute.xlu0 %3443
      %3445 = vrot.lane.b32.xlu0 %v3429, 1
      %v3446 = vpop.permute.xlu0 %3445
      %3447 = vrot.lane.b32.xlu0 %v3430, 1
      %v3448 = vpop.permute.xlu0 %3447
      %v3449 = vsel %vm918, %v3438, %v3440
      %v3450 = vsel %vm918, %v3440, %v3442
      %v3451 = vsel %vm918, %v3444, %v3446
      %v3452 = vsel %vm918, %v3446, %v3448
      %v3457 = vsel %vm842, %v3449, 0.0
      %v3458 = vsel %vm843, %v3450, 0.0
      %v3459 = vsel %vm842, %v3451, 0.0
      %v3460 = vsel %vm843, %v3452, 0.0
      %3461 = vst [vmem:[#allocation3 + $0x60] sm:$0xff] %v3457
      %3462 = vst [vmem:[#allocation3 + $0x68] sm:$0xff] %v3458
      %3463 = vst [vmem:[#allocation3 + $0x70] sm:$0xff] %v3459
      %3464 = vst [vmem:[#allocation3 + $0x78] sm:$0xff] %v3460
      %v3465 = vld [vmem:[#allocation2 + $0x8] sm:$0xff]
      %v3466 = vld [vmem:[#allocation2 + $0x10] sm:$0xff]
      %v3467 = vld [vmem:[#allocation2 + $0x28] sm:$0xff]
      %v3468 = vld [vmem:[#allocation2 + $0x30] sm:$0xff]
      %3469 = vst [vmem:[#allocation3 + $0x80] sm:$0xff] %v3465
      %3470 = vst [vmem:[#allocation3 + $0x88] sm:$0xff] %v3466
      %3471 = vst [vmem:[#allocation3 + $0x90] sm:$0xff] %v3467
      %3472 = vst [vmem:[#allocation3 + $0x98] sm:$0xff] %v3468
      %v3473 = vld [vmem:[#allocation2 + $0x8] sm:$0xff]
      %v3474 = vld [vmem:[#allocation2 + $0x10] sm:$0xff]
      %v3475 = vld [vmem:[#allocation2 + $0x18] sm:$0xff]
      %v3476 = vld [vmem:[#allocation2 + $0x28] sm:$0xff]
      %v3477 = vld [vmem:[#allocation2 + $0x30] sm:$0xff]
      %v3478 = vld [vmem:[#allocation2 + $0x38] sm:$0xff]
      %3485 = vrot.lane.b32.xlu0 %v3473, 127
      %v3486 = vpop.permute.xlu0 %3485
      %3487 = vrot.lane.b32.xlu0 %v3474, 127
      %v3488 = vpop.permute.xlu0 %3487
      %3489 = vrot.lane.b32.xlu0 %v3475, 127
      %v3490 = vpop.permute.xlu0 %3489
      %3491 = vrot.lane.b32.xlu0 %v3476, 127
      %v3492 = vpop.permute.xlu0 %3491
      %3493 = vrot.lane.b32.xlu0 %v3477, 127
      %v3494 = vpop.permute.xlu0 %3493
      %3495 = vrot.lane.b32.xlu0 %v3478, 127
      %v3496 = vpop.permute.xlu0 %3495
      %v3497 = vsel %vm943, %v3486, %v3488
      %v3498 = vsel %vm943, %v3488, %v3490
      %v3499 = vsel %vm943, %v3492, %v3494
      %v3500 = vsel %vm943, %v3494, %v3496
      %v3505 = vsel %vm886, %v3497, 0.0
      %v3506 = vsel %vm887, %v3498, 0.0
      %v3507 = vsel %vm886, %v3499, 0.0
      %v3508 = vsel %vm887, %v3500, 0.0
      %3509 = vst [vmem:[#allocation3 + $0xa0] sm:$0xff] %v3505
      %3510 = vst [vmem:[#allocation3 + $0xa8] sm:$0xff] %v3506
      %3511 = vst [vmem:[#allocation3 + $0xb0] sm:$0xff] %v3507
      %3512 = vst [vmem:[#allocation3 + $0xb8] sm:$0xff] %v3508
      %v3513 = vld [vmem:[#allocation2 + $0x8] sm:$0xff]
      %v3514 = vld [vmem:[#allocation2 + $0x10] sm:$0xff]
      %v3515 = vld [vmem:[#allocation2 + $0x18] sm:$0xff]
      %v3516 = vld [vmem:[#allocation2 + $0x28] sm:$0xff]
      %v3517 = vld [vmem:[#allocation2 + $0x30] sm:$0xff]
      %v3518 = vld [vmem:[#allocation2 + $0x38] sm:$0xff]
      %3525 = vrot.lane.b32.xlu0 %v3513, 113
      %v3526 = vpop.permute.xlu0 %3525
      %3527 = vrot.lane.b32.xlu0 %v3514, 113
      %v3528 = vpop.permute.xlu0 %3527
      %3529 = vrot.lane.b32.xlu0 %v3515, 113
      %v3530 = vpop.permute.xlu0 %3529
      %3531 = vrot.lane.b32.xlu0 %v3516, 113
      %v3532 = vpop.permute.xlu0 %3531
      %3533 = vrot.lane.b32.xlu0 %v3517, 113
      %v3534 = vpop.permute.xlu0 %3533
      %3535 = vrot.lane.b32.xlu0 %v3518, 113
      %v3536 = vpop.permute.xlu0 %3535
      %v3537 = vsel %vm964, %v3526, %v3528
      %v3538 = vsel %vm964, %v3528, %v3530
      %v3539 = vsel %vm964, %v3532, %v3534
      %v3540 = vsel %vm964, %v3534, %v3536
      %v3545 = vsel %vm842, %v3537, 0.0
      %v3546 = vsel %vm843, %v3538, 0.0
      %v3547 = vsel %vm842, %v3539, 0.0
      %v3548 = vsel %vm843, %v3540, 0.0
      %3549 = vst [vmem:[#allocation3 + $0xc0] sm:$0xff] %v3545
      %3550 = vst [vmem:[#allocation3 + $0xc8] sm:$0xff] %v3546
      %3551 = vst [vmem:[#allocation3 + $0xd0] sm:$0xff] %v3547
      %3552 = vst [vmem:[#allocation3 + $0xd8] sm:$0xff] %v3548
      %v3553 = vld [vmem:[#allocation2 + $0x8] sm:$0xff]
      %v3554 = vld [vmem:[#allocation2 + $0x10] sm:$0xff]
      %v3555 = vld [vmem:[#allocation2 + $0x18] sm:$0xff]
      %v3556 = vld [vmem:[#allocation2 + $0x28] sm:$0xff]
      %v3557 = vld [vmem:[#allocation2 + $0x30] sm:$0xff]
      %v3558 = vld [vmem:[#allocation2 + $0x38] sm:$0xff]
      %3565 = vrot.lane.b32.xlu0 %v3553, 112
      %v3566 = vpop.permute.xlu0 %3565
      %3567 = vrot.lane.b32.xlu0 %v3554, 112
      %v3568 = vpop.permute.xlu0 %3567
      %3569 = vrot.lane.b32.xlu0 %v3555, 112
      %v3570 = vpop.permute.xlu0 %3569
      %3571 = vrot.lane.b32.xlu0 %v3556, 112
      %v3572 = vpop.permute.xlu0 %3571
      %3573 = vrot.lane.b32.xlu0 %v3557, 112
      %v3574 = vpop.permute.xlu0 %3573
      %3575 = vrot.lane.b32.xlu0 %v3558, 112
      %v3576 = vpop.permute.xlu0 %3575
      %v3577 = vsel %vm985, %v3566, %v3568
      %v3578 = vsel %vm985, %v3568, %v3570
      %v3579 = vsel %vm985, %v3572, %v3574
      %v3580 = vsel %vm985, %v3574, %v3576
      %3585 = vst [vmem:[#allocation3 + $0xe0] sm:$0xff] %v3577
      %3586 = vst [vmem:[#allocation3 + $0xe8] sm:$0xff] %v3578
      %3587 = vst [vmem:[#allocation3 + $0xf0] sm:$0xff] %v3579
      %3588 = vst [vmem:[#allocation3 + $0xf8] sm:$0xff] %v3580
      %v3589 = vld [vmem:[#allocation2 + $0x8] sm:$0xff]
      %v3590 = vld [vmem:[#allocation2 + $0x10] sm:$0xff]
      %v3591 = vld [vmem:[#allocation2 + $0x18] sm:$0xff]
      %v3592 = vld [vmem:[#allocation2 + $0x28] sm:$0xff]
      %v3593 = vld [vmem:[#allocation2 + $0x30] sm:$0xff]
      %v3594 = vld [vmem:[#allocation2 + $0x38] sm:$0xff]
      %3601 = vrot.lane.b32.xlu0 %v3589, 111
      %v3602 = vpop.permute.xlu0 %3601
      %3603 = vrot.lane.b32.xlu0 %v3590, 111
      %v3604 = vpop.permute.xlu0 %3603
      %3605 = vrot.lane.b32.xlu0 %v3591, 111
      %v3606 = vpop.permute.xlu0 %3605
      %3607 = vrot.lane.b32.xlu0 %v3592, 111
      %v3608 = vpop.permute.xlu0 %3607
      %3609 = vrot.lane.b32.xlu0 %v3593, 111
      %v3610 = vpop.permute.xlu0 %3609
      %3611 = vrot.lane.b32.xlu0 %v3594, 111
      %v3612 = vpop.permute.xlu0 %3611
      %v3613 = vsel %vm1004, %v3602, %v3604
      %v3614 = vsel %vm1004, %v3604, %v3606
      %v3615 = vsel %vm1004, %v3608, %v3610
      %v3616 = vsel %vm1004, %v3610, %v3612
      %v3621 = vsel %vm886, %v3613, 0.0
      %v3622 = vsel %vm887, %v3614, 0.0
      %v3623 = vsel %vm886, %v3615, 0.0
      %v3624 = vsel %vm887, %v3616, 0.0
      %3625 = vst [vmem:[#allocation3 + $0x100] sm:$0xff] %v3621
      %3626 = vst [vmem:[#allocation3 + $0x108] sm:$0xff] %v3622
      %3627 = vst [vmem:[#allocation3 + $0x110] sm:$0xff] %v3623
      %3628 = vst [vmem:[#allocation3 + $0x118] sm:$0xff] %v3624
      %v3629 = vld [vmem:[#allocation3] sm:$0xff]
      %v3630 = vld [vmem:[#allocation3 + $0x8] sm:$0xff]
      %v3631 = vld [vmem:[#allocation3 + $0x10] sm:$0xff]
      %v3632 = vld [vmem:[#allocation3 + $0x18] sm:$0xff]
      %v3633 = vld [vmem:[#allocation3 + $0x20] sm:$0xff]
      %v3634 = vld [vmem:[#allocation3 + $0x28] sm:$0xff]
      %v3635 = vld [vmem:[#allocation3 + $0x30] sm:$0xff]
      %v3636 = vld [vmem:[#allocation3 + $0x38] sm:$0xff]
      %v3637 = vld [vmem:[#allocation3 + $0x40] sm:$0xff]
      %v3638 = vld [vmem:[#allocation3 + $0x48] sm:$0xff]
      %v3639 = vld [vmem:[#allocation3 + $0x50] sm:$0xff]
      %v3640 = vld [vmem:[#allocation3 + $0x58] sm:$0xff]
      %v3641 = vld [vmem:[#allocation3 + $0x60] sm:$0xff]
      %v3642 = vld [vmem:[#allocation3 + $0x68] sm:$0xff]
      %v3643 = vld [vmem:[#allocation3 + $0x70] sm:$0xff]
      %v3644 = vld [vmem:[#allocation3 + $0x78] sm:$0xff]
      %v3645 = vld [vmem:[#allocation3 + $0x80] sm:$0xff]
      %v3646 = vld [vmem:[#allocation3 + $0x88] sm:$0xff]
      %v3647 = vld [vmem:[#allocation3 + $0x90] sm:$0xff]
      %v3648 = vld [vmem:[#allocation3 + $0x98] sm:$0xff]
      %v3649 = vld [vmem:[#allocation3 + $0xa0] sm:$0xff]
      %v3650 = vld [vmem:[#allocation3 + $0xa8] sm:$0xff]
      %v3651 = vld [vmem:[#allocation3 + $0xb0] sm:$0xff]
      %v3652 = vld [vmem:[#allocation3 + $0xb8] sm:$0xff]
      %v3653 = vld [vmem:[#allocation3 + $0xc0] sm:$0xff]
      %v3654 = vld [vmem:[#allocation3 + $0xc8] sm:$0xff]
      %v3655 = vld [vmem:[#allocation3 + $0xd0] sm:$0xff]
      %v3656 = vld [vmem:[#allocation3 + $0xd8] sm:$0xff]
      %v3657 = vld [vmem:[#allocation3 + $0xe0] sm:$0xff]
      %v3658 = vld [vmem:[#allocation3 + $0xe8] sm:$0xff]
      %v3659 = vld [vmem:[#allocation3 + $0xf0] sm:$0xff]
      %v3660 = vld [vmem:[#allocation3 + $0xf8] sm:$0xff]
      %v3661 = vld [vmem:[#allocation3 + $0x100] sm:$0xff]
      %v3662 = vld [vmem:[#allocation3 + $0x108] sm:$0xff]
      %v3663 = vld [vmem:[#allocation3 + $0x110] sm:$0xff]
      %v3664 = vld [vmem:[#allocation3 + $0x118] sm:$0xff]
      %v3665 = vpack.c.bf16 %v3631, %v3629
      %v3666 = vpack.c.bf16 %v3632, %v3630
      %v3667 = vpack.c.bf16 %v3635, %v3633
      %v3668 = vpack.c.bf16 %v3636, %v3634
      %v3669 = vpack.c.bf16 %v3639, %v3637
      %v3670 = vpack.c.bf16 %v3640, %v3638
      %v3671 = vpack.c.bf16 %v3643, %v3641
      %v3672 = vpack.c.bf16 %v3644, %v3642
      %v3673 = vpack.c.bf16 %v3647, %v3645
      %v3674 = vpack.c.bf16 %v3648, %v3646
      %v3675 = vpack.c.bf16 %v3651, %v3649
      %v3676 = vpack.c.bf16 %v3652, %v3650
      %v3677 = vpack.c.bf16 %v3655, %v3653
      %v3678 = vpack.c.bf16 %v3656, %v3654
      %v3679 = vpack.c.bf16 %v3659, %v3657
      %v3680 = vpack.c.bf16 %v3660, %v3658
      %v3681 = vpack.c.bf16 %v3663, %v3661
      %v3682 = vpack.c.bf16 %v3664, %v3662
      %v3684 = vunpack.c.l.b16 %v822
      %v3685 = vunpack.c.h.b16 %v822
      %v3686 = vpack.c.b16 %v3684, %v3684
      %v3687 = vpack.c.b16 %v3685, %v3685
      %v3690 = vsel %vm874, %v3687, 0
      %3692 = vmatprep.subr.bf16.mxu0 %v3666
      %3693 = vmatpush1.bf16.msra.mxu0 %v3665
      %3694 = vmatprep.subr.bf16.mxu0 %v3668
      %3695 = vmatpush1.bf16.msra.mxu0 %v3667
      %3696 = vmatprep.subr.bf16.mxu0 %v3670
      %3697 = vmatpush1.bf16.msra.mxu0 %v3669
      %3698 = vmatprep.subr.bf16.mxu0 %v3672
      %3699 = vmatpush1.bf16.msra.mxu0 %v3671
      %3700 = vmatprep.subr.bf16.mxu0 %v3674
      %3701 = vmatpush1.bf16.msra.mxu0 %v3673
      %3702 = vmatprep.subr.bf16.mxu0 %v3676
      %3703 = vmatpush1.bf16.msra.mxu0 %v3675
      %3704 = vmatprep.subr.bf16.mxu0 %v3678
      %3705 = vmatpush1.bf16.msra.mxu0 %v3677
      %3706 = vmatprep.subr.bf16.mxu0 %v3680
      %3707 = vmatpush1.bf16.msra.mxu0 %v3679
      %3708 = vmatprep.subr.bf16.mxu0 %v3682
      %3709 = vmatpush1.bf16.msra.mxu0 %v3681
      %3710 = vmatprep.subr.bf16.mxu0 0
      %3711 = vmatpush1.bf16.msra.mxu0 0
      %3712 = vmatprep.subr.bf16.mxu0 0
      %3713 = vmatpush1.bf16.msra.mxu0 0
      %3714 = vmatprep.subr.bf16.mxu0 0
      %3715 = vmatpush1.bf16.msra.mxu0 0
      %3716 = vmatprep.subr.bf16.mxu0 0
      %3717 = vmatpush1.bf16.msra.mxu0 0
      %3718 = vmatprep.subr.bf16.mxu0 0
      %3719 = vmatpush1.bf16.msra.mxu0 0
      %3720 = vmatprep.subr.bf16.mxu0 0
      %3721 = vmatpush1.bf16.msra.mxu0 0
      %3722 = vmatprep.subr.bf16.mxu0 0
      %3723 = vmatpush1.bf16.msra.mxu0 0
      %3724 = vmatprep.mubr.bf16.mxu0 %v3690
      %3725 = vmatmul.mubr.bf16.gmra.mrb[0].mxu0 %v3686
      %v3726 = vpop.f32.mrb[0].mxu0
      %v3727 = vadd.f32 0.0, %v3726
      %v3728 = vpop.f32.mrb[0].mxu0
      %v3729 = vadd.f32 0.0, %v3728
      %v3730 = vpop.f32.mrb[0].mxu0
      %v3731 = vpop.f32.mrb[0].mxu0
      %3732 = vdwg.mxu0
      %v3733 = vmax.f32 %v3727, 0.0
      %v3734 = vmax.f32 %v3729, 0.0
      %3735 = vst [vmem:[#allocation2 + $0x48] sm:$0xff] %v3733
      %3736 = vst [vmem:[#allocation2 + $0x50] sm:$0xff] %v3734
      %v3737 = vld [vmem:[#allocation2 + $0x8] sm:$0xff]
      %v3738 = vld [vmem:[#allocation2 + $0x10] sm:$0xff]
      %v3739 = vld [vmem:[#allocation2 + $0x28] sm:$0xff]
      %v3740 = vld [vmem:[#allocation2 + $0x30] sm:$0xff]
      %v3741 = vld [vmem:[#allocation2 + $0x48] sm:$0xff]
      %v3742 = vld [vmem:[#allocation2 + $0x50] sm:$0xff]
      %v3743 = vpack.c.bf16 %v3739, %v3737
      %v3744 = vpack.c.bf16 %v3740, %v3738
      %v3745 = vpack.c.bf16 %v3741, %v3741
      %v3746 = vpack.c.bf16 %v3742, %v3742
      %3748 = vset.pattern.permute.xlu0 0
      %3749 = vperm.xlu0 %3748, %v824
      %v3750 = vpop.permute.xlu0 %3749
      %v3753 = vsel %vm1540, %v823, 0
      %v3756 = vsel %vm1045, %v3745, 0
      %v3759 = vsel %vm1045, %v3746, 0
      %3761 = vmatprep.subr.bf16.mxu0 %v3744
      %3762 = vmatpush1.bf16.msra.mxu0 %v3743
      %3763 = vmatprep.subr.bf16.mxu0 %v3759
      %3764 = vmatpush1.bf16.msra.mxu0 %v3756
      %3765 = vmatprep.subr.bf16.mxu0 0
      %3766 = vmatpush1.bf16.msra.mxu0 0
      %3767 = vmatprep.subr.bf16.mxu0 0
      %3768 = vmatpush1.bf16.msra.mxu0 0
      %3769 = vmatprep.subr.bf16.mxu0 0
      %3770 = vmatpush1.bf16.msra.mxu0 0
      %3771 = vmatprep.subr.bf16.mxu0 0
      %3772 = vmatpush1.bf16.msra.mxu0 0
      %3773 = vmatprep.subr.bf16.mxu0 0
      %3774 = vmatpush1.bf16.msra.mxu0 0
      %3775 = vmatprep.subr.bf16.mxu0 0
      %3776 = vmatpush1.bf16.msra.mxu0 0
      %3777 = vmatprep.subr.bf16.mxu0 0
      %3778 = vmatpush1.bf16.msra.mxu0 0
      %3779 = vmatprep.subr.bf16.mxu0 0
      %3780 = vmatpush1.bf16.msra.mxu0 0
      %3781 = vmatprep.subr.bf16.mxu0 0
      %3782 = vmatpush1.bf16.msra.mxu0 0
      %3783 = vmatprep.subr.bf16.mxu0 0
      %3784 = vmatpush1.bf16.msra.mxu0 0
      %3785 = vmatprep.subr.bf16.mxu0 0
      %3786 = vmatpush1.bf16.msra.mxu0 0
      %3787 = vmatprep.subr.bf16.mxu0 0
      %3788 = vmatpush1.bf16.msra.mxu0 0
      %3789 = vmatprep.subr.bf16.mxu0 0
      %3790 = vmatpush1.bf16.msra.mxu0 0
      %3791 = vmatprep.subr.bf16.mxu0 0
      %3792 = vmatpush1.bf16.msra.mxu0 0
      %3793 = vmatprep.mubr.bf16.mxu0 0
      %3794 = vmatmul.mubr.bf16.gmra.mrb[0].mxu0 %v3753
      %v3795 = vpop.f32.mrb[0].mxu0
      %v3796 = vadd.f32 %v3750, %v3795
      %v3797 = vpop.f32.mrb[0].mxu0
      %v3798 = vadd.f32 %v3750, %v3797
      %v3799 = vpop.f32.mrb[0].mxu0
      %v3800 = vpop.f32.mrb[0].mxu0
      %3801 = vdwg.mxu0
      %v3802 = vadd.f32 %v3796, %v2322
      %v3803 = vadd.f32 %v3798, %v2324
      %3804 = vst [vmem:[#allocation2 + $0x8] sm:$0xff] %v3802
      %3805 = vst [vmem:[#allocation2 + $0x10] sm:$0xff] %v3803
      %v3806 = vld [vmem:[#allocation2] sm:$0xff]
      %v3807 = vld [vmem:[#allocation2 + $0x8] sm:$0xff]
      %v3808 = vld [vmem:[#allocation2 + $0x10] sm:$0xff]
      %3812 = vrot.lane.b32.xlu0 %v3806, 17
      %v3813 = vpop.permute.xlu0 %3812
      %3814 = vrot.lane.b32.xlu0 %v3807, 17
      %v3815 = vpop.permute.xlu0 %3814
      %3816 = vrot.lane.b32.xlu0 %v3808, 17
      %v3817 = vpop.permute.xlu0 %3816
      %v3818 = vsel %vm853, %v3813, %v3815
      %v3819 = vsel %vm853, %v3815, %v3817
      %v3822 = vsel %vm842, %v3818, 0.0
      %v3823 = vsel %vm843, %v3819, 0.0
      %3824 = vst [vmem:[#allocation3] sm:$0xff] %v3822
      %3825 = vst [vmem:[#allocation3 + $0x8] sm:$0xff] %v3823
      %v3826 = vld [vmem:[#allocation2] sm:$0xff]
      %v3827 = vld [vmem:[#allocation2 + $0x8] sm:$0xff]
      %v3828 = vld [vmem:[#allocation2 + $0x10] sm:$0xff]
      %3832 = vrot.lane.b32.xlu0 %v3826, 16
      %v3833 = vpop.permute.xlu0 %3832
      %3834 = vrot.lane.b32.xlu0 %v3827, 16
      %v3835 = vpop.permute.xlu0 %3834
      %3836 = vrot.lane.b32.xlu0 %v3828, 16
      %v3837 = vpop.permute.xlu0 %3836
      %v3838 = vsel %vm874, %v3833, %v3835
      %v3839 = vsel %vm874, %v3835, %v3837
      %3842 = vst [vmem:[#allocation3 + $0x10] sm:$0xff] %v3838
      %3843 = vst [vmem:[#allocation3 + $0x18] sm:$0xff] %v3839
      %v3844 = vld [vmem:[#allocation2] sm:$0xff]
      %v3845 = vld [vmem:[#allocation2 + $0x8] sm:$0xff]
      %v3846 = vld [vmem:[#allocation2 + $0x10] sm:$0xff]
      %3850 = vrot.lane.b32.xlu0 %v3844, 15
      %v3851 = vpop.permute.xlu0 %3850
      %3852 = vrot.lane.b32.xlu0 %v3845, 15
      %v3853 = vpop.permute.xlu0 %3852
      %3854 = vrot.lane.b32.xlu0 %v3846, 15
      %v3855 = vpop.permute.xlu0 %3854
      %v3856 = vsel %vm897, %v3851, %v3853
      %v3857 = vsel %vm897, %v3853, %v3855
      %v3860 = vsel %vm886, %v3856, 0.0
      %v3861 = vsel %vm887, %v3857, 0.0
      %3862 = vst [vmem:[#allocation3 + $0x20] sm:$0xff] %v3860
      %3863 = vst [vmem:[#allocation3 + $0x28] sm:$0xff] %v3861
      %v3864 = vld [vmem:[#allocation2] sm:$0xff]
      %v3865 = vld [vmem:[#allocation2 + $0x8] sm:$0xff]
      %v3866 = vld [vmem:[#allocation2 + $0x10] sm:$0xff]
      %3870 = vrot.lane.b32.xlu0 %v3864, 1
      %v3871 = vpop.permute.xlu0 %3870
      %3872 = vrot.lane.b32.xlu0 %v3865, 1
      %v3873 = vpop.permute.xlu0 %3872
      %3874 = vrot.lane.b32.xlu0 %v3866, 1
      %v3875 = vpop.permute.xlu0 %3874
      %v3876 = vsel %vm918, %v3871, %v3873
      %v3877 = vsel %vm918, %v3873, %v3875
      %v3880 = vsel %vm842, %v3876, 0.0
      %v3881 = vsel %vm843, %v3877, 0.0
      %3882 = vst [vmem:[#allocation3 + $0x30] sm:$0xff] %v3880
      %3883 = vst [vmem:[#allocation3 + $0x38] sm:$0xff] %v3881
      %v3884 = vld [vmem:[#allocation2 + $0x8] sm:$0xff]
      %v3885 = vld [vmem:[#allocation2 + $0x10] sm:$0xff]
      %3886 = vst [vmem:[#allocation3 + $0x40] sm:$0xff] %v3884
      %3887 = vst [vmem:[#allocation3 + $0x48] sm:$0xff] %v3885
      %v3888 = vld [vmem:[#allocation2 + $0x8] sm:$0xff]
      %v3889 = vld [vmem:[#allocation2 + $0x10] sm:$0xff]
      %v3890 = vld [vmem:[#allocation2 + $0x18] sm:$0xff]
      %3894 = vrot.lane.b32.xlu0 %v3888, 127
      %v3895 = vpop.permute.xlu0 %3894
      %3896 = vrot.lane.b32.xlu0 %v3889, 127
      %v3897 = vpop.permute.xlu0 %3896
      %3898 = vrot.lane.b32.xlu0 %v3890, 127
      %v3899 = vpop.permute.xlu0 %3898
      %v3900 = vsel %vm943, %v3895, %v3897
      %v3901 = vsel %vm943, %v3897, %v3899
      %v3904 = vsel %vm886, %v3900, 0.0
      %v3905 = vsel %vm887, %v3901, 0.0
      %3906 = vst [vmem:[#allocation3 + $0x50] sm:$0xff] %v3904
      %3907 = vst [vmem:[#allocation3 + $0x58] sm:$0xff] %v3905
      %v3908 = vld [vmem:[#allocation2 + $0x8] sm:$0xff]
      %v3909 = vld [vmem:[#allocation2 + $0x10] sm:$0xff]
      %v3910 = vld [vmem:[#allocation2 + $0x18] sm:$0xff]
      %3914 = vrot.lane.b32.xlu0 %v3908, 113
      %v3915 = vpop.permute.xlu0 %3914
      %3916 = vrot.lane.b32.xlu0 %v3909, 113
      %v3917 = vpop.permute.xlu0 %3916
      %3918 = vrot.lane.b32.xlu0 %v3910, 113
      %v3919 = vpop.permute.xlu0 %3918
      %v3920 = vsel %vm964, %v3915, %v3917
      %v3921 = vsel %vm964, %v3917, %v3919
      %v3924 = vsel %vm842, %v3920, 0.0
      %v3925 = vsel %vm843, %v3921, 0.0
      %3926 = vst [vmem:[#allocation3 + $0x60] sm:$0xff] %v3924
      %3927 = vst [vmem:[#allocation3 + $0x68] sm:$0xff] %v3925
      %v3928 = vld [vmem:[#allocation2 + $0x8] sm:$0xff]
      %v3929 = vld [vmem:[#allocation2 + $0x10] sm:$0xff]
      %v3930 = vld [vmem:[#allocation2 + $0x18] sm:$0xff]
      %3934 = vrot.lane.b32.xlu0 %v3928, 112
      %v3935 = vpop.permute.xlu0 %3934
      %3936 = vrot.lane.b32.xlu0 %v3929, 112
      %v3937 = vpop.permute.xlu0 %3936
      %3938 = vrot.lane.b32.xlu0 %v3930, 112
      %v3939 = vpop.permute.xlu0 %3938
      %v3940 = vsel %vm985, %v3935, %v3937
      %v3941 = vsel %vm985, %v3937, %v3939
      %3944 = vst [vmem:[#allocation3 + $0x70] sm:$0xff] %v3940
      %3945 = vst [vmem:[#allocation3 + $0x78] sm:$0xff] %v3941
      %v3946 = vld [vmem:[#allocation2 + $0x8] sm:$0xff]
      %v3947 = vld [vmem:[#allocation2 + $0x10] sm:$0xff]
      %v3948 = vld [vmem:[#allocation2 + $0x18] sm:$0xff]
      %3952 = vrot.lane.b32.xlu0 %v3946, 111
      %v3953 = vpop.permute.xlu0 %3952
      %3954 = vrot.lane.b32.xlu0 %v3947, 111
      %v3955 = vpop.permute.xlu0 %3954
      %3956 = vrot.lane.b32.xlu0 %v3948, 111
      %v3957 = vpop.permute.xlu0 %3956
      %v3958 = vsel %vm1004, %v3953, %v3955
      %v3959 = vsel %vm1004, %v3955, %v3957
      %v3962 = vsel %vm886, %v3958, 0.0
      %v3963 = vsel %vm887, %v3959, 0.0
      %3964 = vst [vmem:[#allocation3 + $0x80] sm:$0xff] %v3962
      %3965 = vst [vmem:[#allocation3 + $0x88] sm:$0xff] %v3963
      %v3966 = vld [vmem:[#allocation3] sm:$0xff]
      %v3967 = vld [vmem:[#allocation3 + $0x8] sm:$0xff]
      %v3968 = vld [vmem:[#allocation3 + $0x10] sm:$0xff]
      %v3969 = vld [vmem:[#allocation3 + $0x18] sm:$0xff]
      %v3970 = vld [vmem:[#allocation3 + $0x20] sm:$0xff]
      %v3971 = vld [vmem:[#allocation3 + $0x28] sm:$0xff]
      %v3972 = vld [vmem:[#allocation3 + $0x30] sm:$0xff]
      %v3973 = vld [vmem:[#allocation3 + $0x38] sm:$0xff]
      %v3974 = vld [vmem:[#allocation3 + $0x40] sm:$0xff]
      %v3975 = vld [vmem:[#allocation3 + $0x48] sm:$0xff]
      %v3976 = vld [vmem:[#allocation3 + $0x50] sm:$0xff]
      %v3977 = vld [vmem:[#allocation3 + $0x58] sm:$0xff]
      %v3978 = vld [vmem:[#allocation3 + $0x60] sm:$0xff]
      %v3979 = vld [vmem:[#allocation3 + $0x68] sm:$0xff]
      %v3980 = vld [vmem:[#allocation3 + $0x70] sm:$0xff]
      %v3981 = vld [vmem:[#allocation3 + $0x78] sm:$0xff]
      %v3982 = vld [vmem:[#allocation3 + $0x80] sm:$0xff]
      %v3983 = vld [vmem:[#allocation3 + $0x88] sm:$0xff]
      %v3984 = vpack.c.bf16 %v3968, %v3966
      %v3985 = vpack.c.bf16 %v3969, %v3967
      %v3986 = vpack.c.bf16 %v3972, %v3970
      %v3987 = vpack.c.bf16 %v3973, %v3971
      %v3988 = vpack.c.bf16 %v3976, %v3974
      %v3989 = vpack.c.bf16 %v3977, %v3975
      %v3990 = vpack.c.bf16 %v3980, %v3978
      %v3991 = vpack.c.bf16 %v3981, %v3979
      %v3992 = vpack.c.bf16 %v3982, %v3982
      %v3993 = vpack.c.bf16 %v3983, %v3983
      %v3995 = vsel %vm1041, %v825, 0
      %v3998 = vsel %vm1045, %v3992, 0
      %v4001 = vsel %vm1045, %v3993, 0
      %4003 = vmatprep.subr.bf16.mxu0 %v3985
      %4004 = vmatpush1.bf16.msra.mxu0 %v3984
      %4005 = vmatprep.subr.bf16.mxu0 %v3987
      %4006 = vmatpush1.bf16.msra.mxu0 %v3986
      %4007 = vmatprep.subr.bf16.mxu0 %v3989
      %4008 = vmatpush1.bf16.msra.mxu0 %v3988
      %4009 = vmatprep.subr.bf16.mxu0 %v3991
      %4010 = vmatpush1.bf16.msra.mxu0 %v3990
      %4011 = vmatprep.subr.bf16.mxu0 %v4001
      %4012 = vmatpush1.bf16.msra.mxu0 %v3998
      %4013 = vmatprep.subr.bf16.mxu0 0
      %4014 = vmatpush1.bf16.msra.mxu0 0
      %4015 = vmatprep.subr.bf16.mxu0 0
      %4016 = vmatpush1.bf16.msra.mxu0 0
      %4017 = vmatprep.subr.bf16.mxu0 0
      %4018 = vmatpush1.bf16.msra.mxu0 0
      %4019 = vmatprep.subr.bf16.mxu0 0
      %4020 = vmatpush1.bf16.msra.mxu0 0
      %4021 = vmatprep.subr.bf16.mxu0 0
      %4022 = vmatpush1.bf16.msra.mxu0 0
      %4023 = vmatprep.subr.bf16.mxu0 0
      %4024 = vmatpush1.bf16.msra.mxu0 0
      %4025 = vmatprep.subr.bf16.mxu0 0
      %4026 = vmatpush1.bf16.msra.mxu0 0
      %4027 = vmatprep.subr.bf16.mxu0 0
      %4028 = vmatpush1.bf16.msra.mxu0 0
      %4029 = vmatprep.subr.bf16.mxu0 0
      %4030 = vmatpush1.bf16.msra.mxu0 0
      %4031 = vmatprep.subr.bf16.mxu0 0
      %4032 = vmatpush1.bf16.msra.mxu0 0
      %4033 = vmatprep.subr.bf16.mxu0 0
      %4034 = vmatpush1.bf16.msra.mxu0 0
      %4035 = vmatprep.mubr.bf16.mxu0 0
      %4036 = vmatmul.mubr.bf16.gmra.mrb[0].mxu0 %v3995
      %v4037 = vpop.f32.mrb[0].mxu0
      %v4038 = vadd.f32 0.0, %v4037
      %v4039 = vpop.f32.mrb[0].mxu0
      %v4040 = vadd.f32 0.0, %v4039
      %v4041 = vpop.f32.mrb[0].mxu0
      %v4042 = vpop.f32.mrb[0].mxu0
      %4043 = vdwg.mxu0
      %v4044 = vmax.f32 %v4038, 0.0
      %v4045 = vmax.f32 %v4040, 0.0
      %4046 = vst [vmem:[#allocation2 + $0x28] sm:$0xff] %v4044
      %4047 = vst [vmem:[#allocation2 + $0x30] sm:$0xff] %v4045
      %v4048 = vld [vmem:[#allocation2] sm:$0xff]
      %v4049 = vld [vmem:[#allocation2 + $0x8] sm:$0xff]
      %v4050 = vld [vmem:[#allocation2 + $0x10] sm:$0xff]
      %v4051 = vld [vmem:[#allocation2 + $0x20] sm:$0xff]
      %v4052 = vld [vmem:[#allocation2 + $0x28] sm:$0xff]
      %v4053 = vld [vmem:[#allocation2 + $0x30] sm:$0xff]
      %4060 = vrot.lane.b32.xlu0 %v4048, 17
      %v4061 = vpop.permute.xlu0 %4060
      %4062 = vrot.lane.b32.xlu0 %v4049, 17
      %v4063 = vpop.permute.xlu0 %4062
      %4064 = vrot.lane.b32.xlu0 %v4050, 17
      %v4065 = vpop.permute.xlu0 %4064
      %4066 = vrot.lane.b32.xlu0 %v4051, 17
      %v4067 = vpop.permute.xlu0 %4066
      %4068 = vrot.lane.b32.xlu0 %v4052, 17
      %v4069 = vpop.permute.xlu0 %4068
      %4070 = vrot.lane.b32.xlu0 %v4053, 17
      %v4071 = vpop.permute.xlu0 %4070
      %v4072 = vsel %vm853, %v4061, %v4063
      %v4073 = vsel %vm853, %v4063, %v4065
      %v4074 = vsel %vm853, %v4067, %v4069
      %v4075 = vsel %vm853, %v4069, %v4071
      %v4080 = vsel %vm842, %v4072, 0.0
      %v4081 = vsel %vm843, %v4073, 0.0
      %v4082 = vsel %vm842, %v4074, 0.0
      %v4083 = vsel %vm843, %v4075, 0.0
      %4084 = vst [vmem:[#allocation3] sm:$0xff] %v4080
      %4085 = vst [vmem:[#allocation3 + $0x8] sm:$0xff] %v4081
      %4086 = vst [vmem:[#allocation3 + $0x10] sm:$0xff] %v4082
      %4087 = vst [vmem:[#allocation3 + $0x18] sm:$0xff] %v4083
      %v4088 = vld [vmem:[#allocation2] sm:$0xff]
      %v4089 = vld [vmem:[#allocation2 + $0x8] sm:$0xff]
      %v4090 = vld [vmem:[#allocation2 + $0x10] sm:$0xff]
      %v4091 = vld [vmem:[#allocation2 + $0x20] sm:$0xff]
      %v4092 = vld [vmem:[#allocation2 + $0x28] sm:$0xff]
      %v4093 = vld [vmem:[#allocation2 + $0x30] sm:$0xff]
      %4100 = vrot.lane.b32.xlu0 %v4088, 16
      %v4101 = vpop.permute.xlu0 %4100
      %4102 = vrot.lane.b32.xlu0 %v4089, 16
      %v4103 = vpop.permute.xlu0 %4102
      %4104 = vrot.lane.b32.xlu0 %v4090, 16
      %v4105 = vpop.permute.xlu0 %4104
      %4106 = vrot.lane.b32.xlu0 %v4091, 16
      %v4107 = vpop.permute.xlu0 %4106
      %4108 = vrot.lane.b32.xlu0 %v4092, 16
      %v4109 = vpop.permute.xlu0 %4108
      %4110 = vrot.lane.b32.xlu0 %v4093, 16
      %v4111 = vpop.permute.xlu0 %4110
      %v4112 = vsel %vm874, %v4101, %v4103
      %v4113 = vsel %vm874, %v4103, %v4105
      %v4114 = vsel %vm874, %v4107, %v4109
      %v4115 = vsel %vm874, %v4109, %v4111
      %4120 = vst [vmem:[#allocation3 + $0x20] sm:$0xff] %v4112
      %4121 = vst [vmem:[#allocation3 + $0x28] sm:$0xff] %v4113
      %4122 = vst [vmem:[#allocation3 + $0x30] sm:$0xff] %v4114
      %4123 = vst [vmem:[#allocation3 + $0x38] sm:$0xff] %v4115
      %v4124 = vld [vmem:[#allocation2] sm:$0xff]
      %v4125 = vld [vmem:[#allocation2 + $0x8] sm:$0xff]
      %v4126 = vld [vmem:[#allocation2 + $0x10] sm:$0xff]
      %v4127 = vld [vmem:[#allocation2 + $0x20] sm:$0xff]
      %v4128 = vld [vmem:[#allocation2 + $0x28] sm:$0xff]
      %v4129 = vld [vmem:[#allocation2 + $0x30] sm:$0xff]
      %4136 = vrot.lane.b32.xlu0 %v4124, 15
      %v4137 = vpop.permute.xlu0 %4136
      %4138 = vrot.lane.b32.xlu0 %v4125, 15
      %v4139 = vpop.permute.xlu0 %4138
      %4140 = vrot.lane.b32.xlu0 %v4126, 15
      %v4141 = vpop.permute.xlu0 %4140
      %4142 = vrot.lane.b32.xlu0 %v4127, 15
      %v4143 = vpop.permute.xlu0 %4142
      %4144 = vrot.lane.b32.xlu0 %v4128, 15
      %v4145 = vpop.permute.xlu0 %4144
      %4146 = vrot.lane.b32.xlu0 %v4129, 15
      %v4147 = vpop.permute.xlu0 %4146
      %v4148 = vsel %vm897, %v4137, %v4139
      %v4149 = vsel %vm897, %v4139, %v4141
      %v4150 = vsel %vm897, %v4143, %v4145
      %v4151 = vsel %vm897, %v4145, %v4147
      %v4156 = vsel %vm886, %v4148, 0.0
      %v4157 = vsel %vm887, %v4149, 0.0
      %v4158 = vsel %vm886, %v4150, 0.0
      %v4159 = vsel %vm887, %v4151, 0.0
      %4160 = vst [vmem:[#allocation3 + $0x40] sm:$0xff] %v4156
      %4161 = vst [vmem:[#allocation3 + $0x48] sm:$0xff] %v4157
      %4162 = vst [vmem:[#allocation3 + $0x50] sm:$0xff] %v4158
      %4163 = vst [vmem:[#allocation3 + $0x58] sm:$0xff] %v4159
      %v4164 = vld [vmem:[#allocation2] sm:$0xff]
      %v4165 = vld [vmem:[#allocation2 + $0x8] sm:$0xff]
      %v4166 = vld [vmem:[#allocation2 + $0x10] sm:$0xff]
      %v4167 = vld [vmem:[#allocation2 + $0x20] sm:$0xff]
      %v4168 = vld [vmem:[#allocation2 + $0x28] sm:$0xff]
      %v4169 = vld [vmem:[#allocation2 + $0x30] sm:$0xff]
      %4176 = vrot.lane.b32.xlu0 %v4164, 1
      %v4177 = vpop.permute.xlu0 %4176
      %4178 = vrot.lane.b32.xlu0 %v4165, 1
      %v4179 = vpop.permute.xlu0 %4178
      %4180 = vrot.lane.b32.xlu0 %v4166, 1
      %v4181 = vpop.permute.xlu0 %4180
      %4182 = vrot.lane.b32.xlu0 %v4167, 1
      %v4183 = vpop.permute.xlu0 %4182
      %4184 = vrot.lane.b32.xlu0 %v4168, 1
      %v4185 = vpop.permute.xlu0 %4184
      %4186 = vrot.lane.b32.xlu0 %v4169, 1
      %v4187 = vpop.permute.xlu0 %4186
      %v4188 = vsel %vm918, %v4177, %v4179
      %v4189 = vsel %vm918, %v4179, %v4181
      %v4190 = vsel %vm918, %v4183, %v4185
      %v4191 = vsel %vm918, %v4185, %v4187
      %v4196 = vsel %vm842, %v4188, 0.0
      %v4197 = vsel %vm843, %v4189, 0.0
      %v4198 = vsel %vm842, %v4190, 0.0
      %v4199 = vsel %vm843, %v4191, 0.0
      %4200 = vst [vmem:[#allocation3 + $0x60] sm:$0xff] %v4196
      %4201 = vst [vmem:[#allocation3 + $0x68] sm:$0xff] %v4197
      %4202 = vst [vmem:[#allocation3 + $0x70] sm:$0xff] %v4198
      %4203 = vst [vmem:[#allocation3 + $0x78] sm:$0xff] %v4199
      %v4204 = vld [vmem:[#allocation2 + $0x8] sm:$0xff]
      %v4205 = vld [vmem:[#allocation2 + $0x10] sm:$0xff]
      %v4206 = vld [vmem:[#allocation2 + $0x28] sm:$0xff]
      %v4207 = vld [vmem:[#allocation2 + $0x30] sm:$0xff]
      %4208 = vst [vmem:[#allocation3 + $0x80] sm:$0xff] %v4204
      %4209 = vst [vmem:[#allocation3 + $0x88] sm:$0xff] %v4205
      %4210 = vst [vmem:[#allocation3 + $0x90] sm:$0xff] %v4206
      %4211 = vst [vmem:[#allocation3 + $0x98] sm:$0xff] %v4207
      %v4212 = vld [vmem:[#allocation2 + $0x8] sm:$0xff]
      %v4213 = vld [vmem:[#allocation2 + $0x10] sm:$0xff]
      %v4214 = vld [vmem:[#allocation2 + $0x18] sm:$0xff]
      %v4215 = vld [vmem:[#allocation2 + $0x28] sm:$0xff]
      %v4216 = vld [vmem:[#allocation2 + $0x30] sm:$0xff]
      %v4217 = vld [vmem:[#allocation2 + $0x38] sm:$0xff]
      %4224 = vrot.lane.b32.xlu0 %v4212, 127
      %v4225 = vpop.permute.xlu0 %4224
      %4226 = vrot.lane.b32.xlu0 %v4213, 127
      %v4227 = vpop.permute.xlu0 %4226
      %4228 = vrot.lane.b32.xlu0 %v4214, 127
      %v4229 = vpop.permute.xlu0 %4228
      %4230 = vrot.lane.b32.xlu0 %v4215, 127
      %v4231 = vpop.permute.xlu0 %4230
      %4232 = vrot.lane.b32.xlu0 %v4216, 127
      %v4233 = vpop.permute.xlu0 %4232
      %4234 = vrot.lane.b32.xlu0 %v4217, 127
      %v4235 = vpop.permute.xlu0 %4234
      %v4236 = vsel %vm943, %v4225, %v4227
      %v4237 = vsel %vm943, %v4227, %v4229
      %v4238 = vsel %vm943, %v4231, %v4233
      %v4239 = vsel %vm943, %v4233, %v4235
      %v4244 = vsel %vm886, %v4236, 0.0
      %v4245 = vsel %vm887, %v4237, 0.0
      %v4246 = vsel %vm886, %v4238, 0.0
      %v4247 = vsel %vm887, %v4239, 0.0
      %4248 = vst [vmem:[#allocation3 + $0xa0] sm:$0xff] %v4244
      %4249 = vst [vmem:[#allocation3 + $0xa8] sm:$0xff] %v4245
      %4250 = vst [vmem:[#allocation3 + $0xb0] sm:$0xff] %v4246
      %4251 = vst [vmem:[#allocation3 + $0xb8] sm:$0xff] %v4247
      %v4252 = vld [vmem:[#allocation2 + $0x8] sm:$0xff]
      %v4253 = vld [vmem:[#allocation2 + $0x10] sm:$0xff]
      %v4254 = vld [vmem:[#allocation2 + $0x18] sm:$0xff]
      %v4255 = vld [vmem:[#allocation2 + $0x28] sm:$0xff]
      %v4256 = vld [vmem:[#allocation2 + $0x30] sm:$0xff]
      %v4257 = vld [vmem:[#allocation2 + $0x38] sm:$0xff]
      %4264 = vrot.lane.b32.xlu0 %v4252, 113
      %v4265 = vpop.permute.xlu0 %4264
      %4266 = vrot.lane.b32.xlu0 %v4253, 113
      %v4267 = vpop.permute.xlu0 %4266
      %4268 = vrot.lane.b32.xlu0 %v4254, 113
      %v4269 = vpop.permute.xlu0 %4268
      %4270 = vrot.lane.b32.xlu0 %v4255, 113
      %v4271 = vpop.permute.xlu0 %4270
      %4272 = vrot.lane.b32.xlu0 %v4256, 113
      %v4273 = vpop.permute.xlu0 %4272
      %4274 = vrot.lane.b32.xlu0 %v4257, 113
      %v4275 = vpop.permute.xlu0 %4274
      %v4276 = vsel %vm964, %v4265, %v4267
      %v4277 = vsel %vm964, %v4267, %v4269
      %v4278 = vsel %vm964, %v4271, %v4273
      %v4279 = vsel %vm964, %v4273, %v4275
      %v4284 = vsel %vm842, %v4276, 0.0
      %v4285 = vsel %vm843, %v4277, 0.0
      %v4286 = vsel %vm842, %v4278, 0.0
      %v4287 = vsel %vm843, %v4279, 0.0
      %4288 = vst [vmem:[#allocation3 + $0xc0] sm:$0xff] %v4284
      %4289 = vst [vmem:[#allocation3 + $0xc8] sm:$0xff] %v4285
      %4290 = vst [vmem:[#allocation3 + $0xd0] sm:$0xff] %v4286
      %4291 = vst [vmem:[#allocation3 + $0xd8] sm:$0xff] %v4287
      %v4292 = vld [vmem:[#allocation2 + $0x8] sm:$0xff]
      %v4293 = vld [vmem:[#allocation2 + $0x10] sm:$0xff]
      %v4294 = vld [vmem:[#allocation2 + $0x18] sm:$0xff]
      %v4295 = vld [vmem:[#allocation2 + $0x28] sm:$0xff]
      %v4296 = vld [vmem:[#allocation2 + $0x30] sm:$0xff]
      %v4297 = vld [vmem:[#allocation2 + $0x38] sm:$0xff]
      %4304 = vrot.lane.b32.xlu0 %v4292, 112
      %v4305 = vpop.permute.xlu0 %4304
      %4306 = vrot.lane.b32.xlu0 %v4293, 112
      %v4307 = vpop.permute.xlu0 %4306
      %4308 = vrot.lane.b32.xlu0 %v4294, 112
      %v4309 = vpop.permute.xlu0 %4308
      %4310 = vrot.lane.b32.xlu0 %v4295, 112
      %v4311 = vpop.permute.xlu0 %4310
      %4312 = vrot.lane.b32.xlu0 %v4296, 112
      %v4313 = vpop.permute.xlu0 %4312
      %4314 = vrot.lane.b32.xlu0 %v4297, 112
      %v4315 = vpop.permute.xlu0 %4314
      %v4316 = vsel %vm985, %v4305, %v4307
      %v4317 = vsel %vm985, %v4307, %v4309
      %v4318 = vsel %vm985, %v4311, %v4313
      %v4319 = vsel %vm985, %v4313, %v4315
      %4324 = vst [vmem:[#allocation3 + $0xe0] sm:$0xff] %v4316
      %4325 = vst [vmem:[#allocation3 + $0xe8] sm:$0xff] %v4317
      %4326 = vst [vmem:[#allocation3 + $0xf0] sm:$0xff] %v4318
      %4327 = vst [vmem:[#allocation3 + $0xf8] sm:$0xff] %v4319
      %v4328 = vld [vmem:[#allocation2 + $0x8] sm:$0xff]
      %v4329 = vld [vmem:[#allocation2 + $0x10] sm:$0xff]
      %v4330 = vld [vmem:[#allocation2 + $0x18] sm:$0xff]
      %v4331 = vld [vmem:[#allocation2 + $0x28] sm:$0xff]
      %v4332 = vld [vmem:[#allocation2 + $0x30] sm:$0xff]
      %v4333 = vld [vmem:[#allocation2 + $0x38] sm:$0xff]
      %4340 = vrot.lane.b32.xlu0 %v4328, 111
      %v4341 = vpop.permute.xlu0 %4340
      %4342 = vrot.lane.b32.xlu0 %v4329, 111
      %v4343 = vpop.permute.xlu0 %4342
      %4344 = vrot.lane.b32.xlu0 %v4330, 111
      %v4345 = vpop.permute.xlu0 %4344
      %4346 = vrot.lane.b32.xlu0 %v4331, 111
      %v4347 = vpop.permute.xlu0 %4346
      %4348 = vrot.lane.b32.xlu0 %v4332, 111
      %v4349 = vpop.permute.xlu0 %4348
      %4350 = vrot.lane.b32.xlu0 %v4333, 111
      %v4351 = vpop.permute.xlu0 %4350
      %v4352 = vsel %vm1004, %v4341, %v4343
      %v4353 = vsel %vm1004, %v4343, %v4345
      %v4354 = vsel %vm1004, %v4347, %v4349
      %v4355 = vsel %vm1004, %v4349, %v4351
      %v4360 = vsel %vm886, %v4352, 0.0
      %v4361 = vsel %vm887, %v4353, 0.0
      %v4362 = vsel %vm886, %v4354, 0.0
      %v4363 = vsel %vm887, %v4355, 0.0
      %4364 = vst [vmem:[#allocation3 + $0x100] sm:$0xff] %v4360
      %4365 = vst [vmem:[#allocation3 + $0x108] sm:$0xff] %v4361
      %4366 = vst [vmem:[#allocation3 + $0x110] sm:$0xff] %v4362
      %4367 = vst [vmem:[#allocation3 + $0x118] sm:$0xff] %v4363
      %v4368 = vld [vmem:[#allocation3] sm:$0xff]
      %v4369 = vld [vmem:[#allocation3 + $0x8] sm:$0xff]
      %v4370 = vld [vmem:[#allocation3 + $0x10] sm:$0xff]
      %v4371 = vld [vmem:[#allocation3 + $0x18] sm:$0xff]
      %v4372 = vld [vmem:[#allocation3 + $0x20] sm:$0xff]
      %v4373 = vld [vmem:[#allocation3 + $0x28] sm:$0xff]
      %v4374 = vld [vmem:[#allocation3 + $0x30] sm:$0xff]
      %v4375 = vld [vmem:[#allocation3 + $0x38] sm:$0xff]
      %v4376 = vld [vmem:[#allocation3 + $0x40] sm:$0xff]
      %v4377 = vld [vmem:[#allocation3 + $0x48] sm:$0xff]
      %v4378 = vld [vmem:[#allocation3 + $0x50] sm:$0xff]
      %v4379 = vld [vmem:[#allocation3 + $0x58] sm:$0xff]
      %v4380 = vld [vmem:[#allocation3 + $0x60] sm:$0xff]
      %v4381 = vld [vmem:[#allocation3 + $0x68] sm:$0xff]
      %v4382 = vld [vmem:[#allocation3 + $0x70] sm:$0xff]
      %v4383 = vld [vmem:[#allocation3 + $0x78] sm:$0xff]
      %v4384 = vld [vmem:[#allocation3 + $0x80] sm:$0xff]
      %v4385 = vld [vmem:[#allocation3 + $0x88] sm:$0xff]
      %v4386 = vld [vmem:[#allocation3 + $0x90] sm:$0xff]
      %v4387 = vld [vmem:[#allocation3 + $0x98] sm:$0xff]
      %v4388 = vld [vmem:[#allocation3 + $0xa0] sm:$0xff]
      %v4389 = vld [vmem:[#allocation3 + $0xa8] sm:$0xff]
      %v4390 = vld [vmem:[#allocation3 + $0xb0] sm:$0xff]
      %v4391 = vld [vmem:[#allocation3 + $0xb8] sm:$0xff]
      %v4392 = vld [vmem:[#allocation3 + $0xc0] sm:$0xff]
      %v4393 = vld [vmem:[#allocation3 + $0xc8] sm:$0xff]
      %v4394 = vld [vmem:[#allocation3 + $0xd0] sm:$0xff]
      %v4395 = vld [vmem:[#allocation3 + $0xd8] sm:$0xff]
      %v4396 = vld [vmem:[#allocation3 + $0xe0] sm:$0xff]
      %v4397 = vld [vmem:[#allocation3 + $0xe8] sm:$0xff]
      %v4398 = vld [vmem:[#allocation3 + $0xf0] sm:$0xff]
      %v4399 = vld [vmem:[#allocation3 + $0xf8] sm:$0xff]
      %v4400 = vld [vmem:[#allocation3 + $0x100] sm:$0xff]
      %v4401 = vld [vmem:[#allocation3 + $0x108] sm:$0xff]
      %v4402 = vld [vmem:[#allocation3 + $0x110] sm:$0xff]
      %v4403 = vld [vmem:[#allocation3 + $0x118] sm:$0xff]
      %v4404 = vpack.c.bf16 %v4370, %v4368
      %v4405 = vpack.c.bf16 %v4371, %v4369
      %v4406 = vpack.c.bf16 %v4374, %v4372
      %v4407 = vpack.c.bf16 %v4375, %v4373
      %v4408 = vpack.c.bf16 %v4378, %v4376
      %v4409 = vpack.c.bf16 %v4379, %v4377
      %v4410 = vpack.c.bf16 %v4382, %v4380
      %v4411 = vpack.c.bf16 %v4383, %v4381
      %v4412 = vpack.c.bf16 %v4386, %v4384
      %v4413 = vpack.c.bf16 %v4387, %v4385
      %v4414 = vpack.c.bf16 %v4390, %v4388
      %v4415 = vpack.c.bf16 %v4391, %v4389
      %v4416 = vpack.c.bf16 %v4394, %v4392
      %v4417 = vpack.c.bf16 %v4395, %v4393
      %v4418 = vpack.c.bf16 %v4398, %v4396
      %v4419 = vpack.c.bf16 %v4399, %v4397
      %v4420 = vpack.c.bf16 %v4402, %v4400
      %v4421 = vpack.c.bf16 %v4403, %v4401
      %v4423 = vunpack.c.l.b16 %v826
      %v4424 = vunpack.c.h.b16 %v826
      %v4425 = vpack.c.b16 %v4423, %v4423
      %v4426 = vpack.c.b16 %v4424, %v4424
      %v4429 = vsel %vm874, %v4426, 0
      %4431 = vmatprep.subr.bf16.mxu0 %v4405
      %4432 = vmatpush1.bf16.msra.mxu0 %v4404
      %4433 = vmatprep.subr.bf16.mxu0 %v4407
      %4434 = vmatpush1.bf16.msra.mxu0 %v4406
      %4435 = vmatprep.subr.bf16.mxu0 %v4409
      %4436 = vmatpush1.bf16.msra.mxu0 %v4408
      %4437 = vmatprep.subr.bf16.mxu0 %v4411
      %4438 = vmatpush1.bf16.msra.mxu0 %v4410
      %4439 = vmatprep.subr.bf16.mxu0 %v4413
      %4440 = vmatpush1.bf16.msra.mxu0 %v4412
      %4441 = vmatprep.subr.bf16.mxu0 %v4415
      %4442 = vmatpush1.bf16.msra.mxu0 %v4414
      %4443 = vmatprep.subr.bf16.mxu0 %v4417
      %4444 = vmatpush1.bf16.msra.mxu0 %v4416
      %4445 = vmatprep.subr.bf16.mxu0 %v4419
      %4446 = vmatpush1.bf16.msra.mxu0 %v4418
      %4447 = vmatprep.subr.bf16.mxu0 %v4421
      %4448 = vmatpush1.bf16.msra.mxu0 %v4420
      %4449 = vmatprep.subr.bf16.mxu0 0
      %4450 = vmatpush1.bf16.msra.mxu0 0
      %4451 = vmatprep.subr.bf16.mxu0 0
      %4452 = vmatpush1.bf16.msra.mxu0 0
      %4453 = vmatprep.subr.bf16.mxu0 0
      %4454 = vmatpush1.bf16.msra.mxu0 0
      %4455 = vmatprep.subr.bf16.mxu0 0
      %4456 = vmatpush1.bf16.msra.mxu0 0
      %4457 = vmatprep.subr.bf16.mxu0 0
      %4458 = vmatpush1.bf16.msra.mxu0 0
      %4459 = vmatprep.subr.bf16.mxu0 0
      %4460 = vmatpush1.bf16.msra.mxu0 0
      %4461 = vmatprep.subr.bf16.mxu0 0
      %4462 = vmatpush1.bf16.msra.mxu0 0
      %4463 = vmatprep.mubr.bf16.mxu0 %v4429
      %4464 = vmatmul.mubr.bf16.gmra.mrb[0].mxu0 %v4425
      %v4465 = vpop.f32.mrb[0].mxu0
      %v4466 = vadd.f32 0.0, %v4465
      %v4467 = vpop.f32.mrb[0].mxu0
      %v4468 = vadd.f32 0.0, %v4467
      %v4469 = vpop.f32.mrb[0].mxu0
      %v4470 = vpop.f32.mrb[0].mxu0
      %4471 = vdwg.mxu0
      %v4472 = vmax.f32 %v4466, 0.0
      %v4473 = vmax.f32 %v4468, 0.0
      %4474 = vst [vmem:[#allocation2 + $0x48] sm:$0xff] %v4472
      %4475 = vst [vmem:[#allocation2 + $0x50] sm:$0xff] %v4473
      %v4476 = vld [vmem:[#allocation2 + $0x8] sm:$0xff]
      %v4477 = vld [vmem:[#allocation2 + $0x10] sm:$0xff]
      %v4478 = vld [vmem:[#allocation2 + $0x28] sm:$0xff]
      %v4479 = vld [vmem:[#allocation2 + $0x30] sm:$0xff]
      %v4480 = vld [vmem:[#allocation2 + $0x48] sm:$0xff]
      %v4481 = vld [vmem:[#allocation2 + $0x50] sm:$0xff]
      %v4482 = vpack.c.bf16 %v4478, %v4476
      %v4483 = vpack.c.bf16 %v4479, %v4477
      %v4484 = vpack.c.bf16 %v4480, %v4480
      %v4485 = vpack.c.bf16 %v4481, %v4481
      %4487 = vset.pattern.permute.xlu0 0
      %4488 = vperm.xlu0 %4487, %v828
      %v4489 = vpop.permute.xlu0 %4488
      %v4492 = vsel %vm1540, %v827, 0
      %v4495 = vsel %vm1045, %v4484, 0
      %v4498 = vsel %vm1045, %v4485, 0
      %4500 = vmatprep.subr.bf16.mxu0 %v4483
      %4501 = vmatpush1.bf16.msra.mxu0 %v4482
      %4502 = vmatprep.subr.bf16.mxu0 %v4498
      %4503 = vmatpush1.bf16.msra.mxu0 %v4495
      %4504 = vmatprep.subr.bf16.mxu0 0
      %4505 = vmatpush1.bf16.msra.mxu0 0
      %4506 = vmatprep.subr.bf16.mxu0 0
      %4507 = vmatpush1.bf16.msra.mxu0 0
      %4508 = vmatprep.subr.bf16.mxu0 0
      %4509 = vmatpush1.bf16.msra.mxu0 0
      %4510 = vmatprep.subr.bf16.mxu0 0
      %4511 = vmatpush1.bf16.msra.mxu0 0
      %4512 = vmatprep.subr.bf16.mxu0 0
      %4513 = vmatpush1.bf16.msra.mxu0 0
      %4514 = vmatprep.subr.bf16.mxu0 0
      %4515 = vmatpush1.bf16.msra.mxu0 0
      %4516 = vmatprep.subr.bf16.mxu0 0
      %4517 = vmatpush1.bf16.msra.mxu0 0
      %4518 = vmatprep.subr.bf16.mxu0 0
      %4519 = vmatpush1.bf16.msra.mxu0 0
      %4520 = vmatprep.subr.bf16.mxu0 0
      %4521 = vmatpush1.bf16.msra.mxu0 0
      %4522 = vmatprep.subr.bf16.mxu0 0
      %4523 = vmatpush1.bf16.msra.mxu0 0
      %4524 = vmatprep.subr.bf16.mxu0 0
      %4525 = vmatpush1.bf16.msra.mxu0 0
      %4526 = vmatprep.subr.bf16.mxu0 0
      %4527 = vmatpush1.bf16.msra.mxu0 0
      %4528 = vmatprep.subr.bf16.mxu0 0
      %4529 = vmatpush1.bf16.msra.mxu0 0
      %4530 = vmatprep.subr.bf16.mxu0 0
      %4531 = vmatpush1.bf16.msra.mxu0 0
      %4532 = vmatprep.mubr.bf16.mxu0 0
      %4533 = vmatmul.mubr.bf16.gmra.mrb[0].mxu0 %v4492
      %v4534 = vpop.f32.mrb[0].mxu0
      %v4535 = vadd.f32 %v4489, %v4534
      %v4536 = vpop.f32.mrb[0].mxu0
      %v4537 = vadd.f32 %v4489, %v4536
      %v4538 = vpop.f32.mrb[0].mxu0
      %v4539 = vpop.f32.mrb[0].mxu0
      %4540 = vdwg.mxu0
      %v4541 = vadd.f32 %v4535, %v1585
      %v4542 = vadd.f32 %v4537, %v1587
      %4543 = vst [vmem:[#allocation2 + $0x8] sm:$0xff] %v4541
      %4544 = vst [vmem:[#allocation2 + $0x10] sm:$0xff] %v4542
      %v4545 = vld [vmem:[#allocation2] sm:$0xff]
      %v4546 = vld [vmem:[#allocation2 + $0x8] sm:$0xff]
      %v4547 = vld [vmem:[#allocation2 + $0x10] sm:$0xff]
      %4551 = vrot.lane.b32.xlu0 %v4545, 17
      %v4552 = vpop.permute.xlu0 %4551
      %4553 = vrot.lane.b32.xlu0 %v4546, 17
      %v4554 = vpop.permute.xlu0 %4553
      %4555 = vrot.lane.b32.xlu0 %v4547, 17
      %v4556 = vpop.permute.xlu0 %4555
      %v4557 = vsel %vm853, %v4552, %v4554
      %v4558 = vsel %vm853, %v4554, %v4556
      %v4561 = vsel %vm842, %v4557, 0.0
      %v4562 = vsel %vm843, %v4558, 0.0
      %4563 = vst [vmem:[#allocation3] sm:$0xff] %v4561
      %4564 = vst [vmem:[#allocation3 + $0x8] sm:$0xff] %v4562
      %v4565 = vld [vmem:[#allocation2] sm:$0xff]
      %v4566 = vld [vmem:[#allocation2 + $0x8] sm:$0xff]
      %v4567 = vld [vmem:[#allocation2 + $0x10] sm:$0xff]
      %4571 = vrot.lane.b32.xlu0 %v4565, 16
      %v4572 = vpop.permute.xlu0 %4571
      %4573 = vrot.lane.b32.xlu0 %v4566, 16
      %v4574 = vpop.permute.xlu0 %4573
      %4575 = vrot.lane.b32.xlu0 %v4567, 16
      %v4576 = vpop.permute.xlu0 %4575
      %v4577 = vsel %vm874, %v4572, %v4574
      %v4578 = vsel %vm874, %v4574, %v4576
      %4581 = vst [vmem:[#allocation3 + $0x10] sm:$0xff] %v4577
      %4582 = vst [vmem:[#allocation3 + $0x18] sm:$0xff] %v4578
      %v4583 = vld [vmem:[#allocation2] sm:$0xff]
      %v4584 = vld [vmem:[#allocation2 + $0x8] sm:$0xff]
      %v4585 = vld [vmem:[#allocation2 + $0x10] sm:$0xff]
      %4589 = vrot.lane.b32.xlu0 %v4583, 15
      %v4590 = vpop.permute.xlu0 %4589
      %4591 = vrot.lane.b32.xlu0 %v4584, 15
      %v4592 = vpop.permute.xlu0 %4591
      %4593 = vrot.lane.b32.xlu0 %v4585, 15
      %v4594 = vpop.permute.xlu0 %4593
      %v4595 = vsel %vm897, %v4590, %v4592
      %v4596 = vsel %vm897, %v4592, %v4594
      %v4599 = vsel %vm886, %v4595, 0.0
      %v4600 = vsel %vm887, %v4596, 0.0
      %4601 = vst [vmem:[#allocation3 + $0x20] sm:$0xff] %v4599
      %4602 = vst [vmem:[#allocation3 + $0x28] sm:$0xff] %v4600
      %v4603 = vld [vmem:[#allocation2] sm:$0xff]
      %v4604 = vld [vmem:[#allocation2 + $0x8] sm:$0xff]
      %v4605 = vld [vmem:[#allocation2 + $0x10] sm:$0xff]
      %4609 = vrot.lane.b32.xlu0 %v4603, 1
      %v4610 = vpop.permute.xlu0 %4609
      %4611 = vrot.lane.b32.xlu0 %v4604, 1
      %v4612 = vpop.permute.xlu0 %4611
      %4613 = vrot.lane.b32.xlu0 %v4605, 1
      %v4614 = vpop.permute.xlu0 %4613
      %v4615 = vsel %vm918, %v4610, %v4612
      %v4616 = vsel %vm918, %v4612, %v4614
      %v4619 = vsel %vm842, %v4615, 0.0
      %v4620 = vsel %vm843, %v4616, 0.0
      %4621 = vst [vmem:[#allocation3 + $0x30] sm:$0xff] %v4619
      %4622 = vst [vmem:[#allocation3 + $0x38] sm:$0xff] %v4620
      %v4623 = vld [vmem:[#allocation2 + $0x8] sm:$0xff]
      %v4624 = vld [vmem:[#allocation2 + $0x10] sm:$0xff]
      %4625 = vst [vmem:[#allocation3 + $0x40] sm:$0xff] %v4623
      %4626 = vst [vmem:[#allocation3 + $0x48] sm:$0xff] %v4624
      %v4627 = vld [vmem:[#allocation2 + $0x8] sm:$0xff]
      %v4628 = vld [vmem:[#allocation2 + $0x10] sm:$0xff]
      %v4629 = vld [vmem:[#allocation2 + $0x18] sm:$0xff]
      %4633 = vrot.lane.b32.xlu0 %v4627, 127
      %v4634 = vpop.permute.xlu0 %4633
      %4635 = vrot.lane.b32.xlu0 %v4628, 127
      %v4636 = vpop.permute.xlu0 %4635
      %4637 = vrot.lane.b32.xlu0 %v4629, 127
      %v4638 = vpop.permute.xlu0 %4637
      %v4639 = vsel %vm943, %v4634, %v4636
      %v4640 = vsel %vm943, %v4636, %v4638
      %v4643 = vsel %vm886, %v4639, 0.0
      %v4644 = vsel %vm887, %v4640, 0.0
      %4645 = vst [vmem:[#allocation3 + $0x50] sm:$0xff] %v4643
      %4646 = vst [vmem:[#allocation3 + $0x58] sm:$0xff] %v4644
      %v4647 = vld [vmem:[#allocation2 + $0x8] sm:$0xff]
      %v4648 = vld [vmem:[#allocation2 + $0x10] sm:$0xff]
      %v4649 = vld [vmem:[#allocation2 + $0x18] sm:$0xff]
      %4653 = vrot.lane.b32.xlu0 %v4647, 113
      %v4654 = vpop.permute.xlu0 %4653
      %4655 = vrot.lane.b32.xlu0 %v4648, 113
      %v4656 = vpop.permute.xlu0 %4655
      %4657 = vrot.lane.b32.xlu0 %v4649, 113
      %v4658 = vpop.permute.xlu0 %4657
      %v4659 = vsel %vm964, %v4654, %v4656
      %v4660 = vsel %vm964, %v4656, %v4658
      %v4663 = vsel %vm842, %v4659, 0.0
      %v4664 = vsel %vm843, %v4660, 0.0
      %4665 = vst [vmem:[#allocation3 + $0x60] sm:$0xff] %v4663
      %4666 = vst [vmem:[#allocation3 + $0x68] sm:$0xff] %v4664
      %v4667 = vld [vmem:[#allocation2 + $0x8] sm:$0xff]
      %v4668 = vld [vmem:[#allocation2 + $0x10] sm:$0xff]
      %v4669 = vld [vmem:[#allocation2 + $0x18] sm:$0xff]
      %4673 = vrot.lane.b32.xlu0 %v4667, 112
      %v4674 = vpop.permute.xlu0 %4673
      %4675 = vrot.lane.b32.xlu0 %v4668, 112
      %v4676 = vpop.permute.xlu0 %4675
      %4677 = vrot.lane.b32.xlu0 %v4669, 112
      %v4678 = vpop.permute.xlu0 %4677
      %v4679 = vsel %vm985, %v4674, %v4676
      %v4680 = vsel %vm985, %v4676, %v4678
      %4683 = vst [vmem:[#allocation3 + $0x70] sm:$0xff] %v4679
      %4684 = vst [vmem:[#allocation3 + $0x78] sm:$0xff] %v4680
      %v4685 = vld [vmem:[#allocation2 + $0x8] sm:$0xff]
      %v4686 = vld [vmem:[#allocation2 + $0x10] sm:$0xff]
      %v4687 = vld [vmem:[#allocation2 + $0x18] sm:$0xff]
      %4691 = vrot.lane.b32.xlu0 %v4685, 111
      %v4692 = vpop.permute.xlu0 %4691
      %4693 = vrot.lane.b32.xlu0 %v4686, 111
      %v4694 = vpop.permute.xlu0 %4693
      %4695 = vrot.lane.b32.xlu0 %v4687, 111
      %v4696 = vpop.permute.xlu0 %4695
      %v4697 = vsel %vm1004, %v4692, %v4694
      %v4698 = vsel %vm1004, %v4694, %v4696
      %v4701 = vsel %vm886, %v4697, 0.0
      %v4702 = vsel %vm887, %v4698, 0.0
      %4703 = vst [vmem:[#allocation3 + $0x80] sm:$0xff] %v4701
      %4704 = vst [vmem:[#allocation3 + $0x88] sm:$0xff] %v4702
      %v4705 = vld [vmem:[#allocation3] sm:$0xff]
      %v4706 = vld [vmem:[#allocation3 + $0x8] sm:$0xff]
      %v4707 = vld [vmem:[#allocation3 + $0x10] sm:$0xff]
      %v4708 = vld [vmem:[#allocation3 + $0x18] sm:$0xff]
      %v4709 = vld [vmem:[#allocation3 + $0x20] sm:$0xff]
      %v4710 = vld [vmem:[#allocation3 + $0x28] sm:$0xff]
      %v4711 = vld [vmem:[#allocation3 + $0x30] sm:$0xff]
      %v4712 = vld [vmem:[#allocation3 + $0x38] sm:$0xff]
      %v4713 = vld [vmem:[#allocation3 + $0x40] sm:$0xff]
      %v4714 = vld [vmem:[#allocation3 + $0x48] sm:$0xff]
      %v4715 = vld [vmem:[#allocation3 + $0x50] sm:$0xff]
      %v4716 = vld [vmem:[#allocation3 + $0x58] sm:$0xff]
      %v4717 = vld [vmem:[#allocation3 + $0x60] sm:$0xff]
      %v4718 = vld [vmem:[#allocation3 + $0x68] sm:$0xff]
      %v4719 = vld [vmem:[#allocation3 + $0x70] sm:$0xff]
      %v4720 = vld [vmem:[#allocation3 + $0x78] sm:$0xff]
      %v4721 = vld [vmem:[#allocation3 + $0x80] sm:$0xff]
      %v4722 = vld [vmem:[#allocation3 + $0x88] sm:$0xff]
      %v4723 = vpack.c.bf16 %v4707, %v4705
      %v4724 = vpack.c.bf16 %v4708, %v4706
      %v4725 = vpack.c.bf16 %v4711, %v4709
      %v4726 = vpack.c.bf16 %v4712, %v4710
      %v4727 = vpack.c.bf16 %v4715, %v4713
      %v4728 = vpack.c.bf16 %v4716, %v4714
      %v4729 = vpack.c.bf16 %v4719, %v4717
      %v4730 = vpack.c.bf16 %v4720, %v4718
      %v4731 = vpack.c.bf16 %v4721, %v4721
      %v4732 = vpack.c.bf16 %v4722, %v4722
      %v4734 = vsel %vm1041, %v829, 0
      %v4737 = vsel %vm1045, %v4731, 0
      %v4740 = vsel %vm1045, %v4732, 0
      %4742 = vmatprep.subr.bf16.mxu0 %v4724
      %4743 = vmatpush1.bf16.msra.mxu0 %v4723
      %4744 = vmatprep.subr.bf16.mxu0 %v4726
      %4745 = vmatpush1.bf16.msra.mxu0 %v4725
      %4746 = vmatprep.subr.bf16.mxu0 %v4728
      %4747 = vmatpush1.bf16.msra.mxu0 %v4727
      %4748 = vmatprep.subr.bf16.mxu0 %v4730
      %4749 = vmatpush1.bf16.msra.mxu0 %v4729
      %4750 = vmatprep.subr.bf16.mxu0 %v4740
      %4751 = vmatpush1.bf16.msra.mxu0 %v4737
      %4752 = vmatprep.subr.bf16.mxu0 0
      %4753 = vmatpush1.bf16.msra.mxu0 0
      %4754 = vmatprep.subr.bf16.mxu0 0
      %4755 = vmatpush1.bf16.msra.mxu0 0
      %4756 = vmatprep.subr.bf16.mxu0 0
      %4757 = vmatpush1.bf16.msra.mxu0 0
      %4758 = vmatprep.subr.bf16.mxu0 0
      %4759 = vmatpush1.bf16.msra.mxu0 0
      %4760 = vmatprep.subr.bf16.mxu0 0
      %4761 = vmatpush1.bf16.msra.mxu0 0
      %4762 = vmatprep.subr.bf16.mxu0 0
      %4763 = vmatpush1.bf16.msra.mxu0 0
      %4764 = vmatprep.subr.bf16.mxu0 0
      %4765 = vmatpush1.bf16.msra.mxu0 0
      %4766 = vmatprep.subr.bf16.mxu0 0
      %4767 = vmatpush1.bf16.msra.mxu0 0
      %4768 = vmatprep.subr.bf16.mxu0 0
      %4769 = vmatpush1.bf16.msra.mxu0 0
      %4770 = vmatprep.subr.bf16.mxu0 0
      %4771 = vmatpush1.bf16.msra.mxu0 0
      %4772 = vmatprep.subr.bf16.mxu0 0
      %4773 = vmatpush1.bf16.msra.mxu0 0
      %4774 = vmatprep.mubr.bf16.mxu0 0
      %4775 = vmatmul.mubr.bf16.gmra.mrb[0].mxu0 %v4734
      %v4776 = vpop.f32.mrb[0].mxu0
      %v4777 = vadd.f32 0.0, %v4776
      %v4778 = vpop.f32.mrb[0].mxu0
      %v4779 = vadd.f32 0.0, %v4778
      %v4780 = vpop.f32.mrb[0].mxu0
      %v4781 = vpop.f32.mrb[0].mxu0
      %4782 = vdwg.mxu0
      %v4783 = vmax.f32 %v4777, 0.0
      %v4784 = vmax.f32 %v4779, 0.0
      %4785 = vst [vmem:[#allocation2 + $0x28] sm:$0xff] %v4783
      %4786 = vst [vmem:[#allocation2 + $0x30] sm:$0xff] %v4784
      %v4787 = vld [vmem:[#allocation2] sm:$0xff]
      %v4788 = vld [vmem:[#allocation2 + $0x8] sm:$0xff]
      %v4789 = vld [vmem:[#allocation2 + $0x10] sm:$0xff]
      %v4790 = vld [vmem:[#allocation2 + $0x20] sm:$0xff]
      %v4791 = vld [vmem:[#allocation2 + $0x28] sm:$0xff]
      %v4792 = vld [vmem:[#allocation2 + $0x30] sm:$0xff]
      %4799 = vrot.lane.b32.xlu0 %v4787, 17
      %v4800 = vpop.permute.xlu0 %4799
      %4801 = vrot.lane.b32.xlu0 %v4788, 17
      %v4802 = vpop.permute.xlu0 %4801
      %4803 = vrot.lane.b32.xlu0 %v4789, 17
      %v4804 = vpop.permute.xlu0 %4803
      %4805 = vrot.lane.b32.xlu0 %v4790, 17
      %v4806 = vpop.permute.xlu0 %4805
      %4807 = vrot.lane.b32.xlu0 %v4791, 17
      %v4808 = vpop.permute.xlu0 %4807
      %4809 = vrot.lane.b32.xlu0 %v4792, 17
      %v4810 = vpop.permute.xlu0 %4809
      %v4811 = vsel %vm853, %v4800, %v4802
      %v4812 = vsel %vm853, %v4802, %v4804
      %v4813 = vsel %vm853, %v4806, %v4808
      %v4814 = vsel %vm853, %v4808, %v4810
      %v4819 = vsel %vm842, %v4811, 0.0
      %v4820 = vsel %vm843, %v4812, 0.0
      %v4821 = vsel %vm842, %v4813, 0.0
      %v4822 = vsel %vm843, %v4814, 0.0
      %4823 = vst [vmem:[#allocation3] sm:$0xff] %v4819
      %4824 = vst [vmem:[#allocation3 + $0x8] sm:$0xff] %v4820
      %4825 = vst [vmem:[#allocation3 + $0x10] sm:$0xff] %v4821
      %4826 = vst [vmem:[#allocation3 + $0x18] sm:$0xff] %v4822
      %v4827 = vld [vmem:[#allocation2] sm:$0xff]
      %v4828 = vld [vmem:[#allocation2 + $0x8] sm:$0xff]
      %v4829 = vld [vmem:[#allocation2 + $0x10] sm:$0xff]
      %v4830 = vld [vmem:[#allocation2 + $0x20] sm:$0xff]
      %v4831 = vld [vmem:[#allocation2 + $0x28] sm:$0xff]
      %v4832 = vld [vmem:[#allocation2 + $0x30] sm:$0xff]
      %4839 = vrot.lane.b32.xlu0 %v4827, 16
      %v4840 = vpop.permute.xlu0 %4839
      %4841 = vrot.lane.b32.xlu0 %v4828, 16
      %v4842 = vpop.permute.xlu0 %4841
      %4843 = vrot.lane.b32.xlu0 %v4829, 16
      %v4844 = vpop.permute.xlu0 %4843
      %4845 = vrot.lane.b32.xlu0 %v4830, 16
      %v4846 = vpop.permute.xlu0 %4845
      %4847 = vrot.lane.b32.xlu0 %v4831, 16
      %v4848 = vpop.permute.xlu0 %4847
      %4849 = vrot.lane.b32.xlu0 %v4832, 16
      %v4850 = vpop.permute.xlu0 %4849
      %v4851 = vsel %vm874, %v4840, %v4842
      %v4852 = vsel %vm874, %v4842, %v4844
      %v4853 = vsel %vm874, %v4846, %v4848
      %v4854 = vsel %vm874, %v4848, %v4850
      %4859 = vst [vmem:[#allocation3 + $0x20] sm:$0xff] %v4851
      %4860 = vst [vmem:[#allocation3 + $0x28] sm:$0xff] %v4852
      %4861 = vst [vmem:[#allocation3 + $0x30] sm:$0xff] %v4853
      %4862 = vst [vmem:[#allocation3 + $0x38] sm:$0xff] %v4854
      %v4863 = vld [vmem:[#allocation2] sm:$0xff]
      %v4864 = vld [vmem:[#allocation2 + $0x8] sm:$0xff]
      %v4865 = vld [vmem:[#allocation2 + $0x10] sm:$0xff]
      %v4866 = vld [vmem:[#allocation2 + $0x20] sm:$0xff]
      %v4867 = vld [vmem:[#allocation2 + $0x28] sm:$0xff]
      %v4868 = vld [vmem:[#allocation2 + $0x30] sm:$0xff]
      %4875 = vrot.lane.b32.xlu0 %v4863, 15
      %v4876 = vpop.permute.xlu0 %4875
      %4877 = vrot.lane.b32.xlu0 %v4864, 15
      %v4878 = vpop.permute.xlu0 %4877
      %4879 = vrot.lane.b32.xlu0 %v4865, 15
      %v4880 = vpop.permute.xlu0 %4879
      %4881 = vrot.lane.b32.xlu0 %v4866, 15
      %v4882 = vpop.permute.xlu0 %4881
      %4883 = vrot.lane.b32.xlu0 %v4867, 15
      %v4884 = vpop.permute.xlu0 %4883
      %4885 = vrot.lane.b32.xlu0 %v4868, 15
      %v4886 = vpop.permute.xlu0 %4885
      %v4887 = vsel %vm897, %v4876, %v4878
      %v4888 = vsel %vm897, %v4878, %v4880
      %v4889 = vsel %vm897, %v4882, %v4884
      %v4890 = vsel %vm897, %v4884, %v4886
      %v4895 = vsel %vm886, %v4887, 0.0
      %v4896 = vsel %vm887, %v4888, 0.0
      %v4897 = vsel %vm886, %v4889, 0.0
      %v4898 = vsel %vm887, %v4890, 0.0
      %4899 = vst [vmem:[#allocation3 + $0x40] sm:$0xff] %v4895
      %4900 = vst [vmem:[#allocation3 + $0x48] sm:$0xff] %v4896
      %4901 = vst [vmem:[#allocation3 + $0x50] sm:$0xff] %v4897
      %4902 = vst [vmem:[#allocation3 + $0x58] sm:$0xff] %v4898
      %v4903 = vld [vmem:[#allocation2] sm:$0xff]
      %v4904 = vld [vmem:[#allocation2 + $0x8] sm:$0xff]
      %v4905 = vld [vmem:[#allocation2 + $0x10] sm:$0xff]
      %v4906 = vld [vmem:[#allocation2 + $0x20] sm:$0xff]
      %v4907 = vld [vmem:[#allocation2 + $0x28] sm:$0xff]
      %v4908 = vld [vmem:[#allocation2 + $0x30] sm:$0xff]
      %4915 = vrot.lane.b32.xlu0 %v4903, 1
      %v4916 = vpop.permute.xlu0 %4915
      %4917 = vrot.lane.b32.xlu0 %v4904, 1
      %v4918 = vpop.permute.xlu0 %4917
      %4919 = vrot.lane.b32.xlu0 %v4905, 1
      %v4920 = vpop.permute.xlu0 %4919
      %4921 = vrot.lane.b32.xlu0 %v4906, 1
      %v4922 = vpop.permute.xlu0 %4921
      %4923 = vrot.lane.b32.xlu0 %v4907, 1
      %v4924 = vpop.permute.xlu0 %4923
      %4925 = vrot.lane.b32.xlu0 %v4908, 1
      %v4926 = vpop.permute.xlu0 %4925
      %v4927 = vsel %vm918, %v4916, %v4918
      %v4928 = vsel %vm918, %v4918, %v4920
      %v4929 = vsel %vm918, %v4922, %v4924
      %v4930 = vsel %vm918, %v4924, %v4926
      %v4935 = vsel %vm842, %v4927, 0.0
      %v4936 = vsel %vm843, %v4928, 0.0
      %v4937 = vsel %vm842, %v4929, 0.0
      %v4938 = vsel %vm843, %v4930, 0.0
      %4939 = vst [vmem:[#allocation3 + $0x60] sm:$0xff] %v4935
      %4940 = vst [vmem:[#allocation3 + $0x68] sm:$0xff] %v4936
      %4941 = vst [vmem:[#allocation3 + $0x70] sm:$0xff] %v4937
      %4942 = vst [vmem:[#allocation3 + $0x78] sm:$0xff] %v4938
      %v4943 = vld [vmem:[#allocation2 + $0x8] sm:$0xff]
      %v4944 = vld [vmem:[#allocation2 + $0x10] sm:$0xff]
      %v4945 = vld [vmem:[#allocation2 + $0x28] sm:$0xff]
      %v4946 = vld [vmem:[#allocation2 + $0x30] sm:$0xff]
      %4947 = vst [vmem:[#allocation3 + $0x80] sm:$0xff] %v4943
      %4948 = vst [vmem:[#allocation3 + $0x88] sm:$0xff] %v4944
      %4949 = vst [vmem:[#allocation3 + $0x90] sm:$0xff] %v4945
      %4950 = vst [vmem:[#allocation3 + $0x98] sm:$0xff] %v4946
      %v4951 = vld [vmem:[#allocation2 + $0x8] sm:$0xff]
      %v4952 = vld [vmem:[#allocation2 + $0x10] sm:$0xff]
      %v4953 = vld [vmem:[#allocation2 + $0x18] sm:$0xff]
      %v4954 = vld [vmem:[#allocation2 + $0x28] sm:$0xff]
      %v4955 = vld [vmem:[#allocation2 + $0x30] sm:$0xff]
      %v4956 = vld [vmem:[#allocation2 + $0x38] sm:$0xff]
      %4963 = vrot.lane.b32.xlu0 %v4951, 127
      %v4964 = vpop.permute.xlu0 %4963
      %4965 = vrot.lane.b32.xlu0 %v4952, 127
      %v4966 = vpop.permute.xlu0 %4965
      %4967 = vrot.lane.b32.xlu0 %v4953, 127
      %v4968 = vpop.permute.xlu0 %4967
      %4969 = vrot.lane.b32.xlu0 %v4954, 127
      %v4970 = vpop.permute.xlu0 %4969
      %4971 = vrot.lane.b32.xlu0 %v4955, 127
      %v4972 = vpop.permute.xlu0 %4971
      %4973 = vrot.lane.b32.xlu0 %v4956, 127
      %v4974 = vpop.permute.xlu0 %4973
      %v4975 = vsel %vm943, %v4964, %v4966
      %v4976 = vsel %vm943, %v4966, %v4968
      %v4977 = vsel %vm943, %v4970, %v4972
      %v4978 = vsel %vm943, %v4972, %v4974
      %v4983 = vsel %vm886, %v4975, 0.0
      %v4984 = vsel %vm887, %v4976, 0.0
      %v4985 = vsel %vm886, %v4977, 0.0
      %v4986 = vsel %vm887, %v4978, 0.0
      %4987 = vst [vmem:[#allocation3 + $0xa0] sm:$0xff] %v4983
      %4988 = vst [vmem:[#allocation3 + $0xa8] sm:$0xff] %v4984
      %4989 = vst [vmem:[#allocation3 + $0xb0] sm:$0xff] %v4985
      %4990 = vst [vmem:[#allocation3 + $0xb8] sm:$0xff] %v4986
      %v4991 = vld [vmem:[#allocation2 + $0x8] sm:$0xff]
      %v4992 = vld [vmem:[#allocation2 + $0x10] sm:$0xff]
      %v4993 = vld [vmem:[#allocation2 + $0x18] sm:$0xff]
      %v4994 = vld [vmem:[#allocation2 + $0x28] sm:$0xff]
      %v4995 = vld [vmem:[#allocation2 + $0x30] sm:$0xff]
      %v4996 = vld [vmem:[#allocation2 + $0x38] sm:$0xff]
      %5003 = vrot.lane.b32.xlu0 %v4991, 113
      %v5004 = vpop.permute.xlu0 %5003
      %5005 = vrot.lane.b32.xlu0 %v4992, 113
      %v5006 = vpop.permute.xlu0 %5005
      %5007 = vrot.lane.b32.xlu0 %v4993, 113
      %v5008 = vpop.permute.xlu0 %5007
      %5009 = vrot.lane.b32.xlu0 %v4994, 113
      %v5010 = vpop.permute.xlu0 %5009
      %5011 = vrot.lane.b32.xlu0 %v4995, 113
      %v5012 = vpop.permute.xlu0 %5011
      %5013 = vrot.lane.b32.xlu0 %v4996, 113
      %v5014 = vpop.permute.xlu0 %5013
      %v5015 = vsel %vm964, %v5004, %v5006
      %v5016 = vsel %vm964, %v5006, %v5008
      %v5017 = vsel %vm964, %v5010, %v5012
      %v5018 = vsel %vm964, %v5012, %v5014
      %v5023 = vsel %vm842, %v5015, 0.0
      %v5024 = vsel %vm843, %v5016, 0.0
      %v5025 = vsel %vm842, %v5017, 0.0
      %v5026 = vsel %vm843, %v5018, 0.0
      %5027 = vst [vmem:[#allocation3 + $0xc0] sm:$0xff] %v5023
      %5028 = vst [vmem:[#allocation3 + $0xc8] sm:$0xff] %v5024
      %5029 = vst [vmem:[#allocation3 + $0xd0] sm:$0xff] %v5025
      %5030 = vst [vmem:[#allocation3 + $0xd8] sm:$0xff] %v5026
      %v5031 = vld [vmem:[#allocation2 + $0x8] sm:$0xff]
      %v5032 = vld [vmem:[#allocation2 + $0x10] sm:$0xff]
      %v5033 = vld [vmem:[#allocation2 + $0x18] sm:$0xff]
      %v5034 = vld [vmem:[#allocation2 + $0x28] sm:$0xff]
      %v5035 = vld [vmem:[#allocation2 + $0x30] sm:$0xff]
      %v5036 = vld [vmem:[#allocation2 + $0x38] sm:$0xff]
      %5043 = vrot.lane.b32.xlu0 %v5031, 112
      %v5044 = vpop.permute.xlu0 %5043
      %5045 = vrot.lane.b32.xlu0 %v5032, 112
      %v5046 = vpop.permute.xlu0 %5045
      %5047 = vrot.lane.b32.xlu0 %v5033, 112
      %v5048 = vpop.permute.xlu0 %5047
      %5049 = vrot.lane.b32.xlu0 %v5034, 112
      %v5050 = vpop.permute.xlu0 %5049
      %5051 = vrot.lane.b32.xlu0 %v5035, 112
      %v5052 = vpop.permute.xlu0 %5051
      %5053 = vrot.lane.b32.xlu0 %v5036, 112
      %v5054 = vpop.permute.xlu0 %5053
      %v5055 = vsel %vm985, %v5044, %v5046
      %v5056 = vsel %vm985, %v5046, %v5048
      %v5057 = vsel %vm985, %v5050, %v5052
      %v5058 = vsel %vm985, %v5052, %v5054
      %5063 = vst [vmem:[#allocation3 + $0xe0] sm:$0xff] %v5055
      %5064 = vst [vmem:[#allocation3 + $0xe8] sm:$0xff] %v5056
      %5065 = vst [vmem:[#allocation3 + $0xf0] sm:$0xff] %v5057
      %5066 = vst [vmem:[#allocation3 + $0xf8] sm:$0xff] %v5058
      %v5067 = vld [vmem:[#allocation2 + $0x8] sm:$0xff]
      %v5068 = vld [vmem:[#allocation2 + $0x10] sm:$0xff]
      %v5069 = vld [vmem:[#allocation2 + $0x18] sm:$0xff]
      %v5070 = vld [vmem:[#allocation2 + $0x28] sm:$0xff]
      %v5071 = vld [vmem:[#allocation2 + $0x30] sm:$0xff]
      %v5072 = vld [vmem:[#allocation2 + $0x38] sm:$0xff]
      %5079 = vrot.lane.b32.xlu0 %v5067, 111
      %v5080 = vpop.permute.xlu0 %5079
      %5081 = vrot.lane.b32.xlu0 %v5068, 111
      %v5082 = vpop.permute.xlu0 %5081
      %5083 = vrot.lane.b32.xlu0 %v5069, 111
      %v5084 = vpop.permute.xlu0 %5083
      %5085 = vrot.lane.b32.xlu0 %v5070, 111
      %v5086 = vpop.permute.xlu0 %5085
      %5087 = vrot.lane.b32.xlu0 %v5071, 111
      %v5088 = vpop.permute.xlu0 %5087
      %5089 = vrot.lane.b32.xlu0 %v5072, 111
      %v5090 = vpop.permute.xlu0 %5089
      %v5091 = vsel %vm1004, %v5080, %v5082
      %v5092 = vsel %vm1004, %v5082, %v5084
      %v5093 = vsel %vm1004, %v5086, %v5088
      %v5094 = vsel %vm1004, %v5088, %v5090
      %v5099 = vsel %vm886, %v5091, 0.0
      %v5100 = vsel %vm887, %v5092, 0.0
      %v5101 = vsel %vm886, %v5093, 0.0
      %v5102 = vsel %vm887, %v5094, 0.0
      %5103 = vst [vmem:[#allocation3 + $0x100] sm:$0xff] %v5099
      %5104 = vst [vmem:[#allocation3 + $0x108] sm:$0xff] %v5100
      %5105 = vst [vmem:[#allocation3 + $0x110] sm:$0xff] %v5101
      %5106 = vst [vmem:[#allocation3 + $0x118] sm:$0xff] %v5102
      %v5107 = vld [vmem:[#allocation3] sm:$0xff]
      %v5108 = vld [vmem:[#allocation3 + $0x8] sm:$0xff]
      %v5109 = vld [vmem:[#allocation3 + $0x10] sm:$0xff]
      %v5110 = vld [vmem:[#allocation3 + $0x18] sm:$0xff]
      %v5111 = vld [vmem:[#allocation3 + $0x20] sm:$0xff]
      %v5112 = vld [vmem:[#allocation3 + $0x28] sm:$0xff]
      %v5113 = vld [vmem:[#allocation3 + $0x30] sm:$0xff]
      %v5114 = vld [vmem:[#allocation3 + $0x38] sm:$0xff]
      %v5115 = vld [vmem:[#allocation3 + $0x40] sm:$0xff]
      %v5116 = vld [vmem:[#allocation3 + $0x48] sm:$0xff]
      %v5117 = vld [vmem:[#allocation3 + $0x50] sm:$0xff]
      %v5118 = vld [vmem:[#allocation3 + $0x58] sm:$0xff]
      %v5119 = vld [vmem:[#allocation3 + $0x60] sm:$0xff]
      %v5120 = vld [vmem:[#allocation3 + $0x68] sm:$0xff]
      %v5121 = vld [vmem:[#allocation3 + $0x70] sm:$0xff]
      %v5122 = vld [vmem:[#allocation3 + $0x78] sm:$0xff]
      %v5123 = vld [vmem:[#allocation3 + $0x80] sm:$0xff]
      %v5124 = vld [vmem:[#allocation3 + $0x88] sm:$0xff]
      %v5125 = vld [vmem:[#allocation3 + $0x90] sm:$0xff]
      %v5126 = vld [vmem:[#allocation3 + $0x98] sm:$0xff]
      %v5127 = vld [vmem:[#allocation3 + $0xa0] sm:$0xff]
      %v5128 = vld [vmem:[#allocation3 + $0xa8] sm:$0xff]
      %v5129 = vld [vmem:[#allocation3 + $0xb0] sm:$0xff]
      %v5130 = vld [vmem:[#allocation3 + $0xb8] sm:$0xff]
      %v5131 = vld [vmem:[#allocation3 + $0xc0] sm:$0xff]
      %v5132 = vld [vmem:[#allocation3 + $0xc8] sm:$0xff]
      %v5133 = vld [vmem:[#allocation3 + $0xd0] sm:$0xff]
      %v5134 = vld [vmem:[#allocation3 + $0xd8] sm:$0xff]
      %v5135 = vld [vmem:[#allocation3 + $0xe0] sm:$0xff]
      %v5136 = vld [vmem:[#allocation3 + $0xe8] sm:$0xff]
      %v5137 = vld [vmem:[#allocation3 + $0xf0] sm:$0xff]
      %v5138 = vld [vmem:[#allocation3 + $0xf8] sm:$0xff]
      %v5139 = vld [vmem:[#allocation3 + $0x100] sm:$0xff]
      %v5140 = vld [vmem:[#allocation3 + $0x108] sm:$0xff]
      %v5141 = vld [vmem:[#allocation3 + $0x110] sm:$0xff]
      %v5142 = vld [vmem:[#allocation3 + $0x118] sm:$0xff]
      %v5143 = vpack.c.bf16 %v5109, %v5107
      %v5144 = vpack.c.bf16 %v5110, %v5108
      %v5145 = vpack.c.bf16 %v5113, %v5111
      %v5146 = vpack.c.bf16 %v5114, %v5112
      %v5147 = vpack.c.bf16 %v5117, %v5115
      %v5148 = vpack.c.bf16 %v5118, %v5116
      %v5149 = vpack.c.bf16 %v5121, %v5119
      %v5150 = vpack.c.bf16 %v5122, %v5120
      %v5151 = vpack.c.bf16 %v5125, %v5123
      %v5152 = vpack.c.bf16 %v5126, %v5124
      %v5153 = vpack.c.bf16 %v5129, %v5127
      %v5154 = vpack.c.bf16 %v5130, %v5128
      %v5155 = vpack.c.bf16 %v5133, %v5131
      %v5156 = vpack.c.bf16 %v5134, %v5132
      %v5157 = vpack.c.bf16 %v5137, %v5135
      %v5158 = vpack.c.bf16 %v5138, %v5136
      %v5159 = vpack.c.bf16 %v5141, %v5139
      %v5160 = vpack.c.bf16 %v5142, %v5140
      %v5162 = vunpack.c.l.b16 %v830
      %v5163 = vunpack.c.h.b16 %v830
      %v5164 = vpack.c.b16 %v5162, %v5162
      %v5165 = vpack.c.b16 %v5163, %v5163
      %v5168 = vsel %vm874, %v5165, 0
      %5170 = vmatprep.subr.bf16.mxu0 %v5144
      %5171 = vmatpush1.bf16.msra.mxu0 %v5143
      %5172 = vmatprep.subr.bf16.mxu0 %v5146
      %5173 = vmatpush1.bf16.msra.mxu0 %v5145
      %5174 = vmatprep.subr.bf16.mxu0 %v5148
      %5175 = vmatpush1.bf16.msra.mxu0 %v5147
      %5176 = vmatprep.subr.bf16.mxu0 %v5150
      %5177 = vmatpush1.bf16.msra.mxu0 %v5149
      %5178 = vmatprep.subr.bf16.mxu0 %v5152
      %5179 = vmatpush1.bf16.msra.mxu0 %v5151
      %5180 = vmatprep.subr.bf16.mxu0 %v5154
      %5181 = vmatpush1.bf16.msra.mxu0 %v5153
      %5182 = vmatprep.subr.bf16.mxu0 %v5156
      %5183 = vmatpush1.bf16.msra.mxu0 %v5155
      %5184 = vmatprep.subr.bf16.mxu0 %v5158
      %5185 = vmatpush1.bf16.msra.mxu0 %v5157
      %5186 = vmatprep.subr.bf16.mxu0 %v5160
      %5187 = vmatpush1.bf16.msra.mxu0 %v5159
      %5188 = vmatprep.subr.bf16.mxu0 0
      %5189 = vmatpush1.bf16.msra.mxu0 0
      %5190 = vmatprep.subr.bf16.mxu0 0
      %5191 = vmatpush1.bf16.msra.mxu0 0
      %5192 = vmatprep.subr.bf16.mxu0 0
      %5193 = vmatpush1.bf16.msra.mxu0 0
      %5194 = vmatprep.subr.bf16.mxu0 0
      %5195 = vmatpush1.bf16.msra.mxu0 0
      %5196 = vmatprep.subr.bf16.mxu0 0
      %5197 = vmatpush1.bf16.msra.mxu0 0
      %5198 = vmatprep.subr.bf16.mxu0 0
      %5199 = vmatpush1.bf16.msra.mxu0 0
      %5200 = vmatprep.subr.bf16.mxu0 0
      %5201 = vmatpush1.bf16.msra.mxu0 0
      %5202 = vmatprep.mubr.bf16.mxu0 %v5168
      %5203 = vmatmul.mubr.bf16.gmra.mrb[0].mxu0 %v5164
      %v5204 = vpop.f32.mrb[0].mxu0
      %v5205 = vadd.f32 0.0, %v5204
      %v5206 = vpop.f32.mrb[0].mxu0
      %v5207 = vadd.f32 0.0, %v5206
      %v5208 = vpop.f32.mrb[0].mxu0
      %v5209 = vpop.f32.mrb[0].mxu0
      %5210 = vdwg.mxu0
      %v5211 = vmax.f32 %v5205, 0.0
      %v5212 = vmax.f32 %v5207, 0.0
      %5213 = vst [vmem:[#allocation2 + $0x48] sm:$0xff] %v5211
      %5214 = vst [vmem:[#allocation2 + $0x50] sm:$0xff] %v5212
      %v5215 = vld [vmem:[#allocation2 + $0x8] sm:$0xff]
      %v5216 = vld [vmem:[#allocation2 + $0x10] sm:$0xff]
      %v5217 = vld [vmem:[#allocation2 + $0x28] sm:$0xff]
      %v5218 = vld [vmem:[#allocation2 + $0x30] sm:$0xff]
      %v5219 = vld [vmem:[#allocation2 + $0x48] sm:$0xff]
      %v5220 = vld [vmem:[#allocation2 + $0x50] sm:$0xff]
      %v5221 = vpack.c.bf16 %v5217, %v5215
      %v5222 = vpack.c.bf16 %v5218, %v5216
      %v5223 = vpack.c.bf16 %v5219, %v5219
      %v5224 = vpack.c.bf16 %v5220, %v5220
      %5226 = vset.pattern.permute.xlu0 0
      %5227 = vperm.xlu0 %5226, %v832
      %v5228 = vpop.permute.xlu0 %5227
      %v5231 = vsel %vm1540, %v831, 0
      %v5234 = vsel %vm1045, %v5223, 0
      %v5237 = vsel %vm1045, %v5224, 0
      %5239 = vmatprep.subr.bf16.mxu0 %v5222
      %5240 = vmatpush1.bf16.msra.mxu0 %v5221
      %5241 = vmatprep.subr.bf16.mxu0 %v5237
      %5242 = vmatpush1.bf16.msra.mxu0 %v5234
      %5243 = vmatprep.subr.bf16.mxu0 0
      %5244 = vmatpush1.bf16.msra.mxu0 0
      %5245 = vmatprep.subr.bf16.mxu0 0
      %5246 = vmatpush1.bf16.msra.mxu0 0
      %5247 = vmatprep.subr.bf16.mxu0 0
      %5248 = vmatpush1.bf16.msra.mxu0 0
      %5249 = vmatprep.subr.bf16.mxu0 0
      %5250 = vmatpush1.bf16.msra.mxu0 0
      %5251 = vmatprep.subr.bf16.mxu0 0
      %5252 = vmatpush1.bf16.msra.mxu0 0
      %5253 = vmatprep.subr.bf16.mxu0 0
      %5254 = vmatpush1.bf16.msra.mxu0 0
      %5255 = vmatprep.subr.bf16.mxu0 0
      %5256 = vmatpush1.bf16.msra.mxu0 0
      %5257 = vmatprep.subr.bf16.mxu0 0
      %5258 = vmatpush1.bf16.msra.mxu0 0
      %5259 = vmatprep.subr.bf16.mxu0 0
      %5260 = vmatpush1.bf16.msra.mxu0 0
      %5261 = vmatprep.subr.bf16.mxu0 0
      %5262 = vmatpush1.bf16.msra.mxu0 0
      %5263 = vmatprep.subr.bf16.mxu0 0
      %5264 = vmatpush1.bf16.msra.mxu0 0
      %5265 = vmatprep.subr.bf16.mxu0 0
      %5266 = vmatpush1.bf16.msra.mxu0 0
      %5267 = vmatprep.subr.bf16.mxu0 0
      %5268 = vmatpush1.bf16.msra.mxu0 0
      %5269 = vmatprep.subr.bf16.mxu0 0
      %5270 = vmatpush1.bf16.msra.mxu0 0
      %5271 = vmatprep.mubr.bf16.mxu0 0
      %5272 = vmatmul.mubr.bf16.gmra.mrb[0].mxu0 %v5231
      %v5273 = vpop.f32.mrb[0].mxu0
      %v5274 = vadd.f32 %v5228, %v5273
      %v5275 = vpop.f32.mrb[0].mxu0
      %v5276 = vadd.f32 %v5228, %v5275
      %v5277 = vpop.f32.mrb[0].mxu0
      %v5278 = vpop.f32.mrb[0].mxu0
      %5279 = vdwg.mxu0
      %v5280 = vadd.f32 %v5274, %v833
      %v5281 = vadd.f32 %v5276, %v834
      %5282 = vst [vmem:[%s764] sm:$0xff] %v5280
      %5283 = vst [vmem:[%s764 + $0x8] sm:$0xff] %v5281
      %p5284 = scmp.lt.s32.totalorder %s36, 1
      %s5285 = scalar_select %p5284, %s36, 1
      %s5286 = smul.addr %s5285, 2
      %s5287 = smul.addr %s5286, 8
      %s5288 = scalar_lea.vmem %s25, %s5287
      // Predicated region
      $region121: #{uhdb_forward.1} parent=119 // pred_check
        %p5289 = pneg %p584
      $region122: #{uhdb_forward.1} parent=119 // pred_check_branch
        %5291 = sbr.rel (%p5289) target = $region124
      $region123: #{uhdb_forward.1} parent=119 // pred_region
        _
      $region124: #{uhdb_forward.1} parent=119 // pred_fallthru
        _
    $region120: #{uhdb_forward.1} parent=5 // pred_fallthru
      _
    %p5292 = scmp.le.s32.totalorder 2, %s31
    // Predicated region
    $region125: #{uhdb_forward.1} parent=5 // pred_check
      %p5293 = pneg %p5292
    $region126: #{uhdb_forward.1} parent=5 // pred_check_branch
      %5295 = sbr.rel (%p5293) target = $region128
    $region127: #{uhdb_forward.1} parent=5 // pred_region
      %s5296 = ssub.s32 %s31, 2
      // Predicated region
      $region129: #{uhdb_forward.1} parent=127 // pred_check
        %p5297 = pneg %p590
      $region130: #{uhdb_forward.1} parent=127 // pred_check_branch
        %5299 = sbr.rel (%p5297) target = $region132
      $region131: #{uhdb_forward.1} parent=127 // pred_region
        %p5300 = scmp.lt.s32.totalorder %s37, 1
        %s5301 = scalar_select %p5300, %s37, 1
        %s5302 = smul.addr %s5301, 2
        %s5303 = smul.addr %s5302, 8
        %s5304 = scalar_lea.vmem %s25, %s5303
      $region132: #{uhdb_forward.1} parent=127 // pred_fallthru
        _
    $region128: #{uhdb_forward.1} parent=5 // pred_fallthru
      _
  $region6: #{uhdb_forward.1} parent=0 // loop_footer
    %s35 = sadd.s32 1, %s31
  $region7: #{uhdb_forward.1} parent=0 // loop_footer_branch
    %30 = sbr.rel target = $region3
  $region8: #{uhdb_forward.1} parent=0 // loop_exit
    _

</llo_original>
